<compile_context>
chip_gen: v7x
topology: tpu7x:2x2x1
jax: 0.10.0
libtpu: 0.0.40
codegen_flags: <defaults>
</compile_context>

<pallas_src>
import jax
import jax.numpy as jnp
from jax.experimental import pallas as pl
from jax.experimental.pallas import tpu as pltpu


def _round_up(v, m):
    return ((v + m - 1) // m) * m


# ---------------------------------------------------------------------------
# In-kernel 3x3 conv on one spatial tile: 9 shifted matmuls, f32 accumulation.
# ---------------------------------------------------------------------------
def _conv_accumulate(x_ref, w_ref):
    # x_ref: (H+2, W+2, Cin)  bf16  (spatially padded activation tile)
    # w_ref: (9, Cin, Cout_pad) bf16
    # returns (H*W, Cout_pad) f32
    hp, wp, cin = x_ref.shape
    h, w = hp - 2, wp - 2
    cout_pad = w_ref.shape[-1]
    x = x_ref[...]                       # load tile once (bf16)
    wgt = w_ref[...]                     # tiny, resident weights
    acc = jnp.zeros((h * w, cout_pad), jnp.float32)
    for dy in range(3):
        for dx in range(3):
            xs = x[dy:dy + h, dx:dx + w, :].reshape(h * w, cin)
            acc = acc + jnp.dot(xs, wgt[3 * dy + dx],
                                preferred_element_type=jnp.float32)
    return acc


# ---------------------------------------------------------------------------
# Pass 1: per-channel sum / sum-of-squares of the conv output, accumulated
# across the batch grid axis into resident (1, Cout_pad) accumulator outputs.
# ---------------------------------------------------------------------------
def conv_stats_kernel(x_ref, w_ref, sum_ref, sumsq_ref):
    @pl.when(pl.program_id(0) == 0)
    def _init():
        sum_ref[...] = jnp.zeros_like(sum_ref)
        sumsq_ref[...] = jnp.zeros_like(sumsq_ref)

    acc = _conv_accumulate(x_ref, w_ref)
    sum_ref[...] += jnp.sum(acc, axis=0, keepdims=True)
    sumsq_ref[...] += jnp.sum(acc * acc, axis=0, keepdims=True)


# ---------------------------------------------------------------------------
# Pass 2: recompute conv, apply folded BatchNorm (scale/shift) + ReLU.
# ---------------------------------------------------------------------------
def conv_bn_relu_kernel(x_ref, w_ref, scale_ref, shift_ref, o_ref):
    acc = _conv_accumulate(x_ref, w_ref)
    y = acc * scale_ref[...] + shift_ref[...]
    o_ref[...] = jnp.maximum(y, 0.0).astype(o_ref.dtype)


# ---------------------------------------------------------------------------
# One Conv -> BN(train) -> ReLU layer (two pipelined pallas_calls).
# ---------------------------------------------------------------------------
def conv_bn_relu_layer(x_nhwc, w_pad_f32, gamma_pad, beta_pad, cout):
    n, h, w, cin = x_nhwc.shape
    cout_pad = w_pad_f32.shape[-1]
    m = n * h * w

    # bf16 operands for the MXU / DMA; accumulation stays f32 in the kernels.
    x_pad = jnp.pad(x_nhwc, ((0, 0), (1, 1), (1, 1), (0, 0))).astype(jnp.bfloat16)
    w_bf16 = w_pad_f32.astype(jnp.bfloat16)

    x_spec = pl.BlockSpec((None, h + 2, w + 2, cin), lambda i: (i, 0, 0, 0))
    w_spec = pl.BlockSpec((9, cin, cout_pad), lambda i: (0, 0, 0))
    vec_spec = pl.BlockSpec((1, cout_pad), lambda i: (0, 0))

    flops_conv = 2 * m * 9 * cin * cout_pad
    bytes_in = x_pad.size * 2 + w_bf16.size * 2

    # -------- pass 1: BN batch statistics (sum, sum of squares) --------
    ssum, ssq = pl.pallas_call(
        conv_stats_kernel,
        out_shape=(jax.ShapeDtypeStruct((1, cout_pad), jnp.float32),
                   jax.ShapeDtypeStruct((1, cout_pad), jnp.float32)),
        grid_spec=pltpu.PrefetchScalarGridSpec(
            num_scalar_prefetch=0,
            grid=(n,),
            in_specs=[x_spec, w_spec],
            out_specs=(vec_spec, vec_spec)),
        compiler_params=pltpu.CompilerParams(
            dimension_semantics=("arbitrary",),        # shared accumulator output
            vmem_limit_bytes=32 * 1024 * 1024),
        cost_estimate=pl.CostEstimate(
            flops=flops_conv,
            transcendentals=0,
            bytes_accessed=bytes_in + 2 * cout_pad * 4),
    )(x_pad, w_bf16)

    # Fold train-mode BN (biased variance, eps=1e-5) to per-channel scale/shift.
    mean = ssum / m
    var = ssq / m - mean * mean
    scale = gamma_pad * jax.lax.rsqrt(var + 1e-5)
    shift = beta_pad - mean * scale

    # -------- pass 2: conv (recomputed) + normalize + affine + ReLU --------
    out2d = pl.pallas_call(
        conv_bn_relu_kernel,
        out_shape=jax.ShapeDtypeStruct((m, cout_pad), jnp.float32),
        grid_spec=pltpu.PrefetchScalarGridSpec(
            num_scalar_prefetch=0,
            grid=(n,),
            in_specs=[x_spec, w_spec, vec_spec, vec_spec],
            out_specs=pl.BlockSpec((h * w, cout_pad), lambda i: (i, 0))),
        compiler_params=pltpu.CompilerParams(
            dimension_semantics=("parallel",),          # split across TCs on v7x
            vmem_limit_bytes=32 * 1024 * 1024),
        cost_estimate=pl.CostEstimate(
            flops=flops_conv + 3 * m * cout_pad,
            transcendentals=0,
            bytes_accessed=bytes_in + m * cout_pad * 4),
    )(x_pad, w_bf16, scale, shift)

    return out2d.reshape(n, h, w, cout_pad)[:, :, :, :cout]


# ---------------------------------------------------------------------------
# Module wrapper with deterministic synthetic parameters.
# ---------------------------------------------------------------------------
class AtrousBlockPallas:
    """JAX/Pallas equivalent of Atrous_Block(block_idx, n_input_channel,
    nb_filter, nb_conv)."""

    def __init__(self, block_idx, n_input_channel, nb_filter, nb_conv, key):
        del block_idx  # unused in the PyTorch module as well
        self.nb_filter = nb_filter
        self.cout_pad = _round_up(nb_filter, 128)      # lane-dense output channels
        self.layers = []
        cin = n_input_channel
        for _ in range(nb_conv):
            key, k_w, k_g, k_be = jax.random.split(key, 4)
            # PyTorch conv weight (Cout, Cin, 3, 3) -> (9, Cin, Cout_pad) for the
            # in-kernel shifted matmuls. Conv bias is dropped: BN's batch-mean
            # subtraction cancels any per-channel constant exactly.
            w = 0.1 * jax.random.normal(k_w, (nb_filter, cin, 3, 3), jnp.float32)
            w_k = jnp.transpose(w, (2, 3, 1, 0)).reshape(9, cin, nb_filter)
            w_pad = jnp.zeros((9, cin, self.cout_pad), jnp.float32)
            w_pad = w_pad.at[:, :, :nb_filter].set(w_k)
            gamma = 1.0 + 0.1 * jax.random.normal(k_g, (1, nb_filter), jnp.float32)
            beta = 0.05 * jax.random.normal(k_be, (1, nb_filter), jnp.float32)
            gamma_pad = jnp.ones((1, self.cout_pad), jnp.float32).at[:, :nb_filter].set(gamma)
            beta_pad = jnp.zeros((1, self.cout_pad), jnp.float32).at[:, :nb_filter].set(beta)
            self.layers.append((w_pad, gamma_pad, beta_pad))
            cin = nb_filter

    def __call__(self, x_nchw):
        # Accept NCHW (PyTorch convention), compute in NHWC, return NCHW.
        x = jnp.transpose(x_nchw, (0, 2, 3, 1)).astype(jnp.float32)
        for (w_pad, gamma_pad, beta_pad) in self.layers:
            x = conv_bn_relu_layer(x, w_pad, gamma_pad, beta_pad, self.nb_filter)
        return jnp.transpose(x, (0, 3, 1, 2))


# ---------------------------------------------------------------------------
# Pure-JAX f32 reference (lax.conv + train-mode BN + ReLU) for validation.
# ---------------------------------------------------------------------------
def _reference_forward(x_nchw, layers, nb_filter):
    x = jnp.transpose(x_nchw, (0, 2, 3, 1)).astype(jnp.float32)
    for (w_pad, gamma_pad, beta_pad) in layers:
        cin = x.shape[-1]
        w_hwio = w_pad[:, :, :nb_filter].reshape(3, 3, cin, nb_filter)
        y = jax.lax.conv_general_dilated(
            x, w_hwio, window_strides=(1, 1), padding=((1, 1), (1, 1)),
            dimension_numbers=("NHWC", "HWIO", "NHWC"))
        mean = jnp.mean(y, axis=(0, 1, 2), keepdims=True)
        var = jnp.mean((y - mean) ** 2, axis=(0, 1, 2), keepdims=True)
        g = gamma_pad[0, :nb_filter].reshape(1, 1, 1, nb_filter)
        b = beta_pad[0, :nb_filter].reshape(1, 1, 1, nb_filter)
        x = jnp.maximum((y - mean) * jax.lax.rsqrt(var + 1e-5) * g + b, 0.0)
    return jnp.transpose(x, (0, 3, 1, 2))


# ---------------------------------------------------------------------------
if __name__ == "__main__":
    key = jax.random.PRNGKey(0)
    k_in, k_params = jax.random.split(key)

    # Small shapes consistent with the module: batch=2, in_channels=4,
    # spatial 16x16, nb_filter=8, nb_conv=2.
    N, CIN, H, W = 2, 4, 16, 16
    NB_FILTER, NB_CONV = 8, 2

    x = jax.random.normal(k_in, (N, CIN, H, W), jnp.float32)   # NCHW like PyTorch

    block = AtrousBlockPallas(block_idx=0, n_input_channel=CIN,
                              nb_filter=NB_FILTER, nb_conv=NB_CONV, key=k_params)

    out = jax.jit(lambda v: block(v))(x)
    out = jax.block_until_ready(out)

    assert out.shape == (N, NB_FILTER, H, W), out.shape
    assert bool(jnp.all(jnp.isfinite(out)))
    assert bool(jnp.all(out >= 0.0))  # ReLU output is non-negative

    # Numerical check against the f32 reference (bf16 matmul operands => loose tol).
    ref = _reference_forward(x, block.layers, NB_FILTER)
    assert bool(jnp.allclose(out, ref, rtol=5e-2, atol=5e-2)), \
        float(jnp.max(jnp.abs(out - ref)))

    print("KERNEL_OK")
</pallas_src>

<mosaic_0001>
module attributes {stable_mosaic.version = 11 : i64} {
  func.func @conv_stats_kernel(%arg0: i32, %arg1: memref<1x18x18x4xbf16, #tpu.memory_space<vmem>>, %arg2: memref<9x4x128xbf16, #tpu.memory_space<vmem>>, %arg3: memref<1x128xf32, #tpu.memory_space<vmem>>, %arg4: memref<1x128xf32, #tpu.memory_space<vmem>>) attributes {dimension_semantics = [#tpu.dimension_semantics<arbitrary>], iteration_bounds = array<i64: 2>, scalar_prefetch = 0 : i64, scratch_operands = 0 : i64, tpu.core_type = #tpu.core_type<tc>, window_params = [{transform_indices = @transform_0, window_bounds = array<i64: 1, 18, 18, 4>}, {pipeline_mode = #tpu.pipeline_mode<synchronous>, transform_indices = @transform_1, window_bounds = array<i64: 9, 4, 128>}, {pipeline_mode = #tpu.pipeline_mode<synchronous>, transform_indices = @transform_2, window_bounds = array<i64: 1, 128>}, {pipeline_mode = #tpu.pipeline_mode<synchronous>, transform_indices = @transform_3, window_bounds = array<i64: 1, 128>}]} {
    %c0_i32 = arith.constant 0 : i32
    %0 = arith.cmpi eq, %arg0, %c0_i32 : i32
    %1 = arith.extui %0 : i1 to i32
    %c0_i32_0 = arith.constant 0 : i32
    %2 = arith.cmpi ne, %1, %c0_i32_0 : i32
    scf.if %2 {
      %cst_26 = arith.constant 0.000000e+00 : f32
      %72 = vector.broadcast %cst_26 : f32 to vector<1x128xf32>
      %c0_27 = arith.constant 0 : index
      %c0_28 = arith.constant 0 : index
      %73 = vector.load %arg3[%c0_27, %c0_28] : memref<1x128xf32, #tpu.memory_space<vmem>>, vector<1x128xf32>
      tpu.vector_store %arg3[%c0_27, %c0_28], %72 {strides = array<i32>} : memref<1x128xf32, #tpu.memory_space<vmem>>, vector<1x128xf32>,
      %cst_29 = arith.constant 0.000000e+00 : f32
      %74 = vector.broadcast %cst_29 : f32 to vector<1x128xf32>
      %c0_30 = arith.constant 0 : index
      %c0_31 = arith.constant 0 : index
      %75 = vector.load %arg4[%c0_30, %c0_31] : memref<1x128xf32, #tpu.memory_space<vmem>>, vector<1x128xf32>
      tpu.vector_store %arg4[%c0_30, %c0_31], %74 {strides = array<i32>} : memref<1x128xf32, #tpu.memory_space<vmem>>, vector<1x128xf32>,
    } else {
    }
    %c0 = arith.constant 0 : index
    %c0_1 = arith.constant 0 : index
    %c0_2 = arith.constant 0 : index
    %c0_3 = arith.constant 0 : index
    %3 = vector.load %arg1[%c0, %c0_1, %c0_2, %c0_3] : memref<1x18x18x4xbf16, #tpu.memory_space<vmem>>, vector<1x18x18x4xbf16>
    %4 = vector.shape_cast %3 : vector<1x18x18x4xbf16> to vector<18x18x4xbf16>
    %c0_4 = arith.constant 0 : index
    %c0_5 = arith.constant 0 : index
    %c0_6 = arith.constant 0 : index
    %5 = vector.load %arg2[%c0_4, %c0_5, %c0_6] : memref<9x4x128xbf16, #tpu.memory_space<vmem>>, vector<9x4x128xbf16>
    %cst = arith.constant 0.000000e+00 : f32
    %6 = vector.broadcast %cst : f32 to vector<256x128xf32>
    %7 = vector.extract_strided_slice %4 {offsets = [0, 0, 0], sizes = [16, 16, 4], strides = [1, 1, 1]} : vector<18x18x4xbf16> to vector<16x16x4xbf16>
    %8 = vector.shape_cast %7 : vector<16x16x4xbf16> to vector<256x4xbf16>
    %9 = vector.extract_strided_slice %5 {offsets = [0, 0, 0], sizes = [1, 4, 128], strides = [1, 1, 1]} : vector<9x4x128xbf16> to vector<1x4x128xbf16>
    %10 = vector.shape_cast %9 : vector<1x4x128xbf16> to vector<4x128xbf16>
    %cst_7 = arith.constant dense<0.000000e+00> : vector<256x128xf32>
    %11 = tpu.matmul %8, %10, %cst_7 {dimension_numbers = #tpu.dot_dimension_numbers<[1], [0], [0], [1], [0, 0, 1, 1], [], []>} : vector<256x4xbf16>, vector<4x128xbf16>, vector<256x128xf32> -> vector<256x128xf32>
    %12 = arith.addf %6, %11 : vector<256x128xf32>
    %13 = vector.extract_strided_slice %4 {offsets = [0, 1, 0], sizes = [16, 16, 4], strides = [1, 1, 1]} : vector<18x18x4xbf16> to vector<16x16x4xbf16>
    %14 = vector.shape_cast %13 : vector<16x16x4xbf16> to vector<256x4xbf16>
    %15 = vector.extract_strided_slice %5 {offsets = [1, 0, 0], sizes = [1, 4, 128], strides = [1, 1, 1]} : vector<9x4x128xbf16> to vector<1x4x128xbf16>
    %16 = vector.shape_cast %15 : vector<1x4x128xbf16> to vector<4x128xbf16>
    %cst_8 = arith.constant dense<0.000000e+00> : vector<256x128xf32>
    %17 = tpu.matmul %14, %16, %cst_8 {dimension_numbers = #tpu.dot_dimension_numbers<[1], [0], [0], [1], [0, 0, 1, 1], [], []>} : vector<256x4xbf16>, vector<4x128xbf16>, vector<256x128xf32> -> vector<256x128xf32>
    %18 = arith.addf %12, %17 : vector<256x128xf32>
    %19 = vector.extract_strided_slice %4 {offsets = [0, 2, 0], sizes = [16, 16, 4], strides = [1, 1, 1]} : vector<18x18x4xbf16> to vector<16x16x4xbf16>
    %20 = vector.shape_cast %19 : vector<16x16x4xbf16> to vector<256x4xbf16>
    %21 = vector.extract_strided_slice %5 {offsets = [2, 0, 0], sizes = [1, 4, 128], strides = [1, 1, 1]} : vector<9x4x128xbf16> to vector<1x4x128xbf16>
    %22 = vector.shape_cast %21 : vector<1x4x128xbf16> to vector<4x128xbf16>
    %cst_9 = arith.constant dense<0.000000e+00> : vector<256x128xf32>
    %23 = tpu.matmul %20, %22, %cst_9 {dimension_numbers = #tpu.dot_dimension_numbers<[1], [0], [0], [1], [0, 0, 1, 1], [], []>} : vector<256x4xbf16>, vector<4x128xbf16>, vector<256x128xf32> -> vector<256x128xf32>
    %24 = arith.addf %18, %23 : vector<256x128xf32>
    %25 = vector.extract_strided_slice %4 {offsets = [1, 0, 0], sizes = [16, 16, 4], strides = [1, 1, 1]} : vector<18x18x4xbf16> to vector<16x16x4xbf16>
    %26 = vector.shape_cast %25 : vector<16x16x4xbf16> to vector<256x4xbf16>
    %27 = vector.extract_strided_slice %5 {offsets = [3, 0, 0], sizes = [1, 4, 128], strides = [1, 1, 1]} : vector<9x4x128xbf16> to vector<1x4x128xbf16>
    %28 = vector.shape_cast %27 : vector<1x4x128xbf16> to vector<4x128xbf16>
    %cst_10 = arith.constant dense<0.000000e+00> : vector<256x128xf32>
    %29 = tpu.matmul %26, %28, %cst_10 {dimension_numbers = #tpu.dot_dimension_numbers<[1], [0], [0], [1], [0, 0, 1, 1], [], []>} : vector<256x4xbf16>, vector<4x128xbf16>, vector<256x128xf32> -> vector<256x128xf32>
    %30 = arith.addf %24, %29 : vector<256x128xf32>
    %31 = vector.extract_strided_slice %4 {offsets = [1, 1, 0], sizes = [16, 16, 4], strides = [1, 1, 1]} : vector<18x18x4xbf16> to vector<16x16x4xbf16>
    %32 = vector.shape_cast %31 : vector<16x16x4xbf16> to vector<256x4xbf16>
    %33 = vector.extract_strided_slice %5 {offsets = [4, 0, 0], sizes = [1, 4, 128], strides = [1, 1, 1]} : vector<9x4x128xbf16> to vector<1x4x128xbf16>
    %34 = vector.shape_cast %33 : vector<1x4x128xbf16> to vector<4x128xbf16>
    %cst_11 = arith.constant dense<0.000000e+00> : vector<256x128xf32>
    %35 = tpu.matmul %32, %34, %cst_11 {dimension_numbers = #tpu.dot_dimension_numbers<[1], [0], [0], [1], [0, 0, 1, 1], [], []>} : vector<256x4xbf16>, vector<4x128xbf16>, vector<256x128xf32> -> vector<256x128xf32>
    %36 = arith.addf %30, %35 : vector<256x128xf32>
    %37 = vector.extract_strided_slice %4 {offsets = [1, 2, 0], sizes = [16, 16, 4], strides = [1, 1, 1]} : vector<18x18x4xbf16> to vector<16x16x4xbf16>
    %38 = vector.shape_cast %37 : vector<16x16x4xbf16> to vector<256x4xbf16>
    %39 = vector.extract_strided_slice %5 {offsets = [5, 0, 0], sizes = [1, 4, 128], strides = [1, 1, 1]} : vector<9x4x128xbf16> to vector<1x4x128xbf16>
    %40 = vector.shape_cast %39 : vector<1x4x128xbf16> to vector<4x128xbf16>
    %cst_12 = arith.constant dense<0.000000e+00> : vector<256x128xf32>
    %41 = tpu.matmul %38, %40, %cst_12 {dimension_numbers = #tpu.dot_dimension_numbers<[1], [0], [0], [1], [0, 0, 1, 1], [], []>} : vector<256x4xbf16>, vector<4x128xbf16>, vector<256x128xf32> -> vector<256x128xf32>
    %42 = arith.addf %36, %41 : vector<256x128xf32>
    %43 = vector.extract_strided_slice %4 {offsets = [2, 0, 0], sizes = [16, 16, 4], strides = [1, 1, 1]} : vector<18x18x4xbf16> to vector<16x16x4xbf16>
    %44 = vector.shape_cast %43 : vector<16x16x4xbf16> to vector<256x4xbf16>
    %45 = vector.extract_strided_slice %5 {offsets = [6, 0, 0], sizes = [1, 4, 128], strides = [1, 1, 1]} : vector<9x4x128xbf16> to vector<1x4x128xbf16>
    %46 = vector.shape_cast %45 : vector<1x4x128xbf16> to vector<4x128xbf16>
    %cst_13 = arith.constant dense<0.000000e+00> : vector<256x128xf32>
    %47 = tpu.matmul %44, %46, %cst_13 {dimension_numbers = #tpu.dot_dimension_numbers<[1], [0], [0], [1], [0, 0, 1, 1], [], []>} : vector<256x4xbf16>, vector<4x128xbf16>, vector<256x128xf32> -> vector<256x128xf32>
    %48 = arith.addf %42, %47 : vector<256x128xf32>
    %49 = vector.extract_strided_slice %4 {offsets = [2, 1, 0], sizes = [16, 16, 4], strides = [1, 1, 1]} : vector<18x18x4xbf16> to vector<16x16x4xbf16>
    %50 = vector.shape_cast %49 : vector<16x16x4xbf16> to vector<256x4xbf16>
    %51 = vector.extract_strided_slice %5 {offsets = [7, 0, 0], sizes = [1, 4, 128], strides = [1, 1, 1]} : vector<9x4x128xbf16> to vector<1x4x128xbf16>
    %52 = vector.shape_cast %51 : vector<1x4x128xbf16> to vector<4x128xbf16>
    %cst_14 = arith.constant dense<0.000000e+00> : vector<256x128xf32>
    %53 = tpu.matmul %50, %52, %cst_14 {dimension_numbers = #tpu.dot_dimension_numbers<[1], [0], [0], [1], [0, 0, 1, 1], [], []>} : vector<256x4xbf16>, vector<4x128xbf16>, vector<256x128xf32> -> vector<256x128xf32>
    %54 = arith.addf %48, %53 : vector<256x128xf32>
    %55 = vector.extract_strided_slice %4 {offsets = [2, 2, 0], sizes = [16, 16, 4], strides = [1, 1, 1]} : vector<18x18x4xbf16> to vector<16x16x4xbf16>
    %56 = vector.shape_cast %55 : vector<16x16x4xbf16> to vector<256x4xbf16>
    %57 = vector.extract_strided_slice %5 {offsets = [8, 0, 0], sizes = [1, 4, 128], strides = [1, 1, 1]} : vector<9x4x128xbf16> to vector<1x4x128xbf16>
    %58 = vector.shape_cast %57 : vector<1x4x128xbf16> to vector<4x128xbf16>
    %cst_15 = arith.constant dense<0.000000e+00> : vector<256x128xf32>
    %59 = tpu.matmul %56, %58, %cst_15 {dimension_numbers = #tpu.dot_dimension_numbers<[1], [0], [0], [1], [0, 0, 1, 1], [], []>} : vector<256x4xbf16>, vector<4x128xbf16>, vector<256x128xf32> -> vector<256x128xf32>
    %60 = arith.addf %54, %59 : vector<256x128xf32>
    %c0_16 = arith.constant 0 : index
    %c0_17 = arith.constant 0 : index
    %61 = vector.load %arg3[%c0_16, %c0_17] : memref<1x128xf32, #tpu.memory_space<vmem>>, vector<1x128xf32>
    %cst_18 = arith.constant dense<0.000000e+00> : vector<128xf32>
    %62 = vector.multi_reduction <add>, %60, %cst_18 [0] : vector<256x128xf32> to vector<128xf32>
    %63 = vector.shape_cast %62 : vector<128xf32> to vector<1x128xf32>
    %64 = arith.addf %61, %63 : vector<1x128xf32>
    %c0_19 = arith.constant 0 : index
    %c0_20 = arith.constant 0 : index
    %65 = vector.load %arg3[%c0_19, %c0_20] : memref<1x128xf32, #tpu.memory_space<vmem>>, vector<1x128xf32>
    tpu.vector_store %arg3[%c0_19, %c0_20], %64 {strides = array<i32>} : memref<1x128xf32, #tpu.memory_space<vmem>>, vector<1x128xf32>,
    %c0_21 = arith.constant 0 : index
    %c0_22 = arith.constant 0 : index
    %66 = vector.load %arg4[%c0_21, %c0_22] : memref<1x128xf32, #tpu.memory_space<vmem>>, vector<1x128xf32>
    %67 = arith.mulf %60, %60 : vector<256x128xf32>
    %cst_23 = arith.constant dense<0.000000e+00> : vector<128xf32>
    %68 = vector.multi_reduction <add>, %67, %cst_23 [0] : vector<256x128xf32> to vector<128xf32>
    %69 = vector.shape_cast %68 : vector<128xf32> to vector<1x128xf32>
    %70 = arith.addf %66, %69 : vector<1x128xf32>
    %c0_24 = arith.constant 0 : index
    %c0_25 = arith.constant 0 : index
    %71 = vector.load %arg4[%c0_24, %c0_25] : memref<1x128xf32, #tpu.memory_space<vmem>>, vector<1x128xf32>
    tpu.vector_store %arg4[%c0_24, %c0_25], %70 {strides = array<i32>} : memref<1x128xf32, #tpu.memory_space<vmem>>, vector<1x128xf32>,
    return
  }
  func.func @transform_0(%arg0: i32) -> (i32, i32, i32, i32) {
    %c0_i32 = arith.constant 0 : i32
    %c0_i32_0 = arith.constant 0 : i32
    %c0_i32_1 = arith.constant 0 : i32
    %c0_i32_2 = arith.constant 0 : i32
    return %arg0, %c0_i32, %c0_i32_0, %c0_i32_1 : i32, i32, i32, i32
  }
  func.func @transform_1(%arg0: i32) -> (i32, i32, i32) {
    %c0_i32 = arith.constant 0 : i32
    %c0_i32_0 = arith.constant 0 : i32
    %c0_i32_1 = arith.constant 0 : i32
    %c0_i32_2 = arith.constant 0 : i32
    return %c0_i32, %c0_i32_0, %c0_i32_1 : i32, i32, i32
  }
  func.func @transform_2(%arg0: i32) -> (i32, i32) {
    %c0_i32 = arith.constant 0 : i32
    %c0_i32_0 = arith.constant 0 : i32
    %c0_i32_1 = arith.constant 0 : i32
    return %c0_i32, %c0_i32_0 : i32, i32
  }
  func.func @transform_3(%arg0: i32) -> (i32, i32) {
    %c0_i32 = arith.constant 0 : i32
    %c0_i32_0 = arith.constant 0 : i32
    %c0_i32_1 = arith.constant 0 : i32
    return %c0_i32, %c0_i32_0 : i32, i32
  }
}

module attributes {stable_mosaic.version = 11 : i64} {
  func.func @conv_bn_relu_kernel(%arg0: i32, %arg1: memref<1x18x18x4xbf16, #tpu.memory_space<vmem>>, %arg2: memref<9x4x128xbf16, #tpu.memory_space<vmem>>, %arg3: memref<1x128xf32, #tpu.memory_space<vmem>>, %arg4: memref<1x128xf32, #tpu.memory_space<vmem>>, %arg5: memref<256x128xf32, #tpu.memory_space<vmem>>) attributes {dimension_semantics = [#tpu.dimension_semantics<parallel>], iteration_bounds = array<i64: 2>, scalar_prefetch = 0 : i64, scratch_operands = 0 : i64, tpu.core_type = #tpu.core_type<tc>, window_params = [{transform_indices = @transform_0, window_bounds = array<i64: 1, 18, 18, 4>}, {pipeline_mode = #tpu.pipeline_mode<synchronous>, transform_indices = @transform_1, window_bounds = array<i64: 9, 4, 128>}, {pipeline_mode = #tpu.pipeline_mode<synchronous>, transform_indices = @transform_2, window_bounds = array<i64: 1, 128>}, {pipeline_mode = #tpu.pipeline_mode<synchronous>, transform_indices = @transform_3, window_bounds = array<i64: 1, 128>}, {transform_indices = @transform_4, window_bounds = array<i64: 256, 128>}]} {
    %c0 = arith.constant 0 : index
    %c0_0 = arith.constant 0 : index
    %c0_1 = arith.constant 0 : index
    %c0_2 = arith.constant 0 : index
    %0 = vector.load %arg1[%c0, %c0_0, %c0_1, %c0_2] : memref<1x18x18x4xbf16, #tpu.memory_space<vmem>>, vector<1x18x18x4xbf16>
    %1 = vector.shape_cast %0 : vector<1x18x18x4xbf16> to vector<18x18x4xbf16>
    %c0_3 = arith.constant 0 : index
    %c0_4 = arith.constant 0 : index
    %c0_5 = arith.constant 0 : index
    %2 = vector.load %arg2[%c0_3, %c0_4, %c0_5] : memref<9x4x128xbf16, #tpu.memory_space<vmem>>, vector<9x4x128xbf16>
    %cst = arith.constant 0.000000e+00 : f32
    %3 = vector.broadcast %cst : f32 to vector<256x128xf32>
    %4 = vector.extract_strided_slice %1 {offsets = [0, 0, 0], sizes = [16, 16, 4], strides = [1, 1, 1]} : vector<18x18x4xbf16> to vector<16x16x4xbf16>
    %5 = vector.shape_cast %4 : vector<16x16x4xbf16> to vector<256x4xbf16>
    %6 = vector.extract_strided_slice %2 {offsets = [0, 0, 0], sizes = [1, 4, 128], strides = [1, 1, 1]} : vector<9x4x128xbf16> to vector<1x4x128xbf16>
    %7 = vector.shape_cast %6 : vector<1x4x128xbf16> to vector<4x128xbf16>
    %cst_6 = arith.constant dense<0.000000e+00> : vector<256x128xf32>
    %8 = tpu.matmul %5, %7, %cst_6 {dimension_numbers = #tpu.dot_dimension_numbers<[1], [0], [0], [1], [0, 0, 1, 1], [], []>} : vector<256x4xbf16>, vector<4x128xbf16>, vector<256x128xf32> -> vector<256x128xf32>
    %9 = arith.addf %3, %8 : vector<256x128xf32>
    %10 = vector.extract_strided_slice %1 {offsets = [0, 1, 0], sizes = [16, 16, 4], strides = [1, 1, 1]} : vector<18x18x4xbf16> to vector<16x16x4xbf16>
    %11 = vector.shape_cast %10 : vector<16x16x4xbf16> to vector<256x4xbf16>
    %12 = vector.extract_strided_slice %2 {offsets = [1, 0, 0], sizes = [1, 4, 128], strides = [1, 1, 1]} : vector<9x4x128xbf16> to vector<1x4x128xbf16>
    %13 = vector.shape_cast %12 : vector<1x4x128xbf16> to vector<4x128xbf16>
    %cst_7 = arith.constant dense<0.000000e+00> : vector<256x128xf32>
    %14 = tpu.matmul %11, %13, %cst_7 {dimension_numbers = #tpu.dot_dimension_numbers<[1], [0], [0], [1], [0, 0, 1, 1], [], []>} : vector<256x4xbf16>, vector<4x128xbf16>, vector<256x128xf32> -> vector<256x128xf32>
    %15 = arith.addf %9, %14 : vector<256x128xf32>
    %16 = vector.extract_strided_slice %1 {offsets = [0, 2, 0], sizes = [16, 16, 4], strides = [1, 1, 1]} : vector<18x18x4xbf16> to vector<16x16x4xbf16>
    %17 = vector.shape_cast %16 : vector<16x16x4xbf16> to vector<256x4xbf16>
    %18 = vector.extract_strided_slice %2 {offsets = [2, 0, 0], sizes = [1, 4, 128], strides = [1, 1, 1]} : vector<9x4x128xbf16> to vector<1x4x128xbf16>
    %19 = vector.shape_cast %18 : vector<1x4x128xbf16> to vector<4x128xbf16>
    %cst_8 = arith.constant dense<0.000000e+00> : vector<256x128xf32>
    %20 = tpu.matmul %17, %19, %cst_8 {dimension_numbers = #tpu.dot_dimension_numbers<[1], [0], [0], [1], [0, 0, 1, 1], [], []>} : vector<256x4xbf16>, vector<4x128xbf16>, vector<256x128xf32> -> vector<256x128xf32>
    %21 = arith.addf %15, %20 : vector<256x128xf32>
    %22 = vector.extract_strided_slice %1 {offsets = [1, 0, 0], sizes = [16, 16, 4], strides = [1, 1, 1]} : vector<18x18x4xbf16> to vector<16x16x4xbf16>
    %23 = vector.shape_cast %22 : vector<16x16x4xbf16> to vector<256x4xbf16>
    %24 = vector.extract_strided_slice %2 {offsets = [3, 0, 0], sizes = [1, 4, 128], strides = [1, 1, 1]} : vector<9x4x128xbf16> to vector<1x4x128xbf16>
    %25 = vector.shape_cast %24 : vector<1x4x128xbf16> to vector<4x128xbf16>
    %cst_9 = arith.constant dense<0.000000e+00> : vector<256x128xf32>
    %26 = tpu.matmul %23, %25, %cst_9 {dimension_numbers = #tpu.dot_dimension_numbers<[1], [0], [0], [1], [0, 0, 1, 1], [], []>} : vector<256x4xbf16>, vector<4x128xbf16>, vector<256x128xf32> -> vector<256x128xf32>
    %27 = arith.addf %21, %26 : vector<256x128xf32>
    %28 = vector.extract_strided_slice %1 {offsets = [1, 1, 0], sizes = [16, 16, 4], strides = [1, 1, 1]} : vector<18x18x4xbf16> to vector<16x16x4xbf16>
    %29 = vector.shape_cast %28 : vector<16x16x4xbf16> to vector<256x4xbf16>
    %30 = vector.extract_strided_slice %2 {offsets = [4, 0, 0], sizes = [1, 4, 128], strides = [1, 1, 1]} : vector<9x4x128xbf16> to vector<1x4x128xbf16>
    %31 = vector.shape_cast %30 : vector<1x4x128xbf16> to vector<4x128xbf16>
    %cst_10 = arith.constant dense<0.000000e+00> : vector<256x128xf32>
    %32 = tpu.matmul %29, %31, %cst_10 {dimension_numbers = #tpu.dot_dimension_numbers<[1], [0], [0], [1], [0, 0, 1, 1], [], []>} : vector<256x4xbf16>, vector<4x128xbf16>, vector<256x128xf32> -> vector<256x128xf32>
    %33 = arith.addf %27, %32 : vector<256x128xf32>
    %34 = vector.extract_strided_slice %1 {offsets = [1, 2, 0], sizes = [16, 16, 4], strides = [1, 1, 1]} : vector<18x18x4xbf16> to vector<16x16x4xbf16>
    %35 = vector.shape_cast %34 : vector<16x16x4xbf16> to vector<256x4xbf16>
    %36 = vector.extract_strided_slice %2 {offsets = [5, 0, 0], sizes = [1, 4, 128], strides = [1, 1, 1]} : vector<9x4x128xbf16> to vector<1x4x128xbf16>
    %37 = vector.shape_cast %36 : vector<1x4x128xbf16> to vector<4x128xbf16>
    %cst_11 = arith.constant dense<0.000000e+00> : vector<256x128xf32>
    %38 = tpu.matmul %35, %37, %cst_11 {dimension_numbers = #tpu.dot_dimension_numbers<[1], [0], [0], [1], [0, 0, 1, 1], [], []>} : vector<256x4xbf16>, vector<4x128xbf16>, vector<256x128xf32> -> vector<256x128xf32>
    %39 = arith.addf %33, %38 : vector<256x128xf32>
    %40 = vector.extract_strided_slice %1 {offsets = [2, 0, 0], sizes = [16, 16, 4], strides = [1, 1, 1]} : vector<18x18x4xbf16> to vector<16x16x4xbf16>
    %41 = vector.shape_cast %40 : vector<16x16x4xbf16> to vector<256x4xbf16>
    %42 = vector.extract_strided_slice %2 {offsets = [6, 0, 0], sizes = [1, 4, 128], strides = [1, 1, 1]} : vector<9x4x128xbf16> to vector<1x4x128xbf16>
    %43 = vector.shape_cast %42 : vector<1x4x128xbf16> to vector<4x128xbf16>
    %cst_12 = arith.constant dense<0.000000e+00> : vector<256x128xf32>
    %44 = tpu.matmul %41, %43, %cst_12 {dimension_numbers = #tpu.dot_dimension_numbers<[1], [0], [0], [1], [0, 0, 1, 1], [], []>} : vector<256x4xbf16>, vector<4x128xbf16>, vector<256x128xf32> -> vector<256x128xf32>
    %45 = arith.addf %39, %44 : vector<256x128xf32>
    %46 = vector.extract_strided_slice %1 {offsets = [2, 1, 0], sizes = [16, 16, 4], strides = [1, 1, 1]} : vector<18x18x4xbf16> to vector<16x16x4xbf16>
    %47 = vector.shape_cast %46 : vector<16x16x4xbf16> to vector<256x4xbf16>
    %48 = vector.extract_strided_slice %2 {offsets = [7, 0, 0], sizes = [1, 4, 128], strides = [1, 1, 1]} : vector<9x4x128xbf16> to vector<1x4x128xbf16>
    %49 = vector.shape_cast %48 : vector<1x4x128xbf16> to vector<4x128xbf16>
    %cst_13 = arith.constant dense<0.000000e+00> : vector<256x128xf32>
    %50 = tpu.matmul %47, %49, %cst_13 {dimension_numbers = #tpu.dot_dimension_numbers<[1], [0], [0], [1], [0, 0, 1, 1], [], []>} : vector<256x4xbf16>, vector<4x128xbf16>, vector<256x128xf32> -> vector<256x128xf32>
    %51 = arith.addf %45, %50 : vector<256x128xf32>
    %52 = vector.extract_strided_slice %1 {offsets = [2, 2, 0], sizes = [16, 16, 4], strides = [1, 1, 1]} : vector<18x18x4xbf16> to vector<16x16x4xbf16>
    %53 = vector.shape_cast %52 : vector<16x16x4xbf16> to vector<256x4xbf16>
    %54 = vector.extract_strided_slice %2 {offsets = [8, 0, 0], sizes = [1, 4, 128], strides = [1, 1, 1]} : vector<9x4x128xbf16> to vector<1x4x128xbf16>
    %55 = vector.shape_cast %54 : vector<1x4x128xbf16> to vector<4x128xbf16>
    %cst_14 = arith.constant dense<0.000000e+00> : vector<256x128xf32>
    %56 = tpu.matmul %53, %55, %cst_14 {dimension_numbers = #tpu.dot_dimension_numbers<[1], [0], [0], [1], [0, 0, 1, 1], [], []>} : vector<256x4xbf16>, vector<4x128xbf16>, vector<256x128xf32> -> vector<256x128xf32>
    %57 = arith.addf %51, %56 : vector<256x128xf32>
    %c0_15 = arith.constant 0 : index
    %c0_16 = arith.constant 0 : index
    %58 = vector.load %arg3[%c0_15, %c0_16] : memref<1x128xf32, #tpu.memory_space<vmem>>, vector<1x128xf32>
    %59 = vector.broadcast %58 : vector<1x128xf32> to vector<256x128xf32>
    %60 = arith.mulf %57, %59 : vector<256x128xf32>
    %c0_17 = arith.constant 0 : index
    %c0_18 = arith.constant 0 : index
    %61 = vector.load %arg4[%c0_17, %c0_18] : memref<1x128xf32, #tpu.memory_space<vmem>>, vector<1x128xf32>
    %62 = vector.broadcast %61 : vector<1x128xf32> to vector<256x128xf32>
    %63 = arith.addf %60, %62 : vector<256x128xf32>
    %cst_19 = arith.constant 0.000000e+00 : f32
    %64 = vector.broadcast %cst_19 : f32 to vector<256x128xf32>
    %65 = arith.maximumf %63, %64 : vector<256x128xf32>
    %c0_20 = arith.constant 0 : index
    %c0_21 = arith.constant 0 : index
    %66 = vector.load %arg5[%c0_20, %c0_21] : memref<256x128xf32, #tpu.memory_space<vmem>>, vector<256x128xf32>
    tpu.vector_store %arg5[%c0_20, %c0_21], %65 {strides = array<i32>} : memref<256x128xf32, #tpu.memory_space<vmem>>, vector<256x128xf32>,
    return
  }
  func.func @transform_0(%arg0: i32) -> (i32, i32, i32, i32) {
    %c0_i32 = arith.constant 0 : i32
    %c0_i32_0 = arith.constant 0 : i32
    %c0_i32_1 = arith.constant 0 : i32
    %c0_i32_2 = arith.constant 0 : i32
    return %arg0, %c0_i32, %c0_i32_0, %c0_i32_1 : i32, i32, i32, i32
  }
  func.func @transform_1(%arg0: i32) -> (i32, i32, i32) {
    %c0_i32 = arith.constant 0 : i32
    %c0_i32_0 = arith.constant 0 : i32
    %c0_i32_1 = arith.constant 0 : i32
    %c0_i32_2 = arith.constant 0 : i32
    return %c0_i32, %c0_i32_0, %c0_i32_1 : i32, i32, i32
  }
  func.func @transform_2(%arg0: i32) -> (i32, i32) {
    %c0_i32 = arith.constant 0 : i32
    %c0_i32_0 = arith.constant 0 : i32
    %c0_i32_1 = arith.constant 0 : i32
    return %c0_i32, %c0_i32_0 : i32, i32
  }
  func.func @transform_3(%arg0: i32) -> (i32, i32) {
    %c0_i32 = arith.constant 0 : i32
    %c0_i32_0 = arith.constant 0 : i32
    %c0_i32_1 = arith.constant 0 : i32
    return %c0_i32, %c0_i32_0 : i32, i32
  }
  func.func @transform_4(%arg0: i32) -> (i32, i32) {
    %c0_i32 = arith.constant 0 : i32
    %c0_i32_0 = arith.constant 0 : i32
    return %arg0, %c0_i32 : i32, i32
  }
}

module attributes {stable_mosaic.version = 11 : i64} {
  func.func @conv_stats_kernel(%arg0: i32, %arg1: memref<1x18x18x8xbf16, #tpu.memory_space<vmem>>, %arg2: memref<9x8x128xbf16, #tpu.memory_space<vmem>>, %arg3: memref<1x128xf32, #tpu.memory_space<vmem>>, %arg4: memref<1x128xf32, #tpu.memory_space<vmem>>) attributes {dimension_semantics = [#tpu.dimension_semantics<arbitrary>], iteration_bounds = array<i64: 2>, scalar_prefetch = 0 : i64, scratch_operands = 0 : i64, tpu.core_type = #tpu.core_type<tc>, window_params = [{transform_indices = @transform_0, window_bounds = array<i64: 1, 18, 18, 8>}, {pipeline_mode = #tpu.pipeline_mode<synchronous>, transform_indices = @transform_1, window_bounds = array<i64: 9, 8, 128>}, {pipeline_mode = #tpu.pipeline_mode<synchronous>, transform_indices = @transform_2, window_bounds = array<i64: 1, 128>}, {pipeline_mode = #tpu.pipeline_mode<synchronous>, transform_indices = @transform_3, window_bounds = array<i64: 1, 128>}]} {
    %c0_i32 = arith.constant 0 : i32
    %0 = arith.cmpi eq, %arg0, %c0_i32 : i32
    %1 = arith.extui %0 : i1 to i32
    %c0_i32_0 = arith.constant 0 : i32
    %2 = arith.cmpi ne, %1, %c0_i32_0 : i32
    scf.if %2 {
      %cst_26 = arith.constant 0.000000e+00 : f32
      %72 = vector.broadcast %cst_26 : f32 to vector<1x128xf32>
      %c0_27 = arith.constant 0 : index
      %c0_28 = arith.constant 0 : index
      %73 = vector.load %arg3[%c0_27, %c0_28] : memref<1x128xf32, #tpu.memory_space<vmem>>, vector<1x128xf32>
      tpu.vector_store %arg3[%c0_27, %c0_28], %72 {strides = array<i32>} : memref<1x128xf32, #tpu.memory_space<vmem>>, vector<1x128xf32>,
      %cst_29 = arith.constant 0.000000e+00 : f32
      %74 = vector.broadcast %cst_29 : f32 to vector<1x128xf32>
      %c0_30 = arith.constant 0 : index
      %c0_31 = arith.constant 0 : index
      %75 = vector.load %arg4[%c0_30, %c0_31] : memref<1x128xf32, #tpu.memory_space<vmem>>, vector<1x128xf32>
      tpu.vector_store %arg4[%c0_30, %c0_31], %74 {strides = array<i32>} : memref<1x128xf32, #tpu.memory_space<vmem>>, vector<1x128xf32>,
    } else {
    }
    %c0 = arith.constant 0 : index
    %c0_1 = arith.constant 0 : index
    %c0_2 = arith.constant 0 : index
    %c0_3 = arith.constant 0 : index
    %3 = vector.load %arg1[%c0, %c0_1, %c0_2, %c0_3] : memref<1x18x18x8xbf16, #tpu.memory_space<vmem>>, vector<1x18x18x8xbf16>
    %4 = vector.shape_cast %3 : vector<1x18x18x8xbf16> to vector<18x18x8xbf16>
    %c0_4 = arith.constant 0 : index
    %c0_5 = arith.constant 0 : index
    %c0_6 = arith.constant 0 : index
    %5 = vector.load %arg2[%c0_4, %c0_5, %c0_6] : memref<9x8x128xbf16, #tpu.memory_space<vmem>>, vector<9x8x128xbf16>
    %cst = arith.constant 0.000000e+00 : f32
    %6 = vector.broadcast %cst : f32 to vector<256x128xf32>
    %7 = vector.extract_strided_slice %4 {offsets = [0, 0, 0], sizes = [16, 16, 8], strides = [1, 1, 1]} : vector<18x18x8xbf16> to vector<16x16x8xbf16>
    %8 = vector.shape_cast %7 : vector<16x16x8xbf16> to vector<256x8xbf16>
    %9 = vector.extract_strided_slice %5 {offsets = [0, 0, 0], sizes = [1, 8, 128], strides = [1, 1, 1]} : vector<9x8x128xbf16> to vector<1x8x128xbf16>
    %10 = vector.shape_cast %9 : vector<1x8x128xbf16> to vector<8x128xbf16>
    %cst_7 = arith.constant dense<0.000000e+00> : vector<256x128xf32>
    %11 = tpu.matmul %8, %10, %cst_7 {dimension_numbers = #tpu.dot_dimension_numbers<[1], [0], [0], [1], [0, 0, 1, 1], [], []>} : vector<256x8xbf16>, vector<8x128xbf16>, vector<256x128xf32> -> vector<256x128xf32>
    %12 = arith.addf %6, %11 : vector<256x128xf32>
    %13 = vector.extract_strided_slice %4 {offsets = [0, 1, 0], sizes = [16, 16, 8], strides = [1, 1, 1]} : vector<18x18x8xbf16> to vector<16x16x8xbf16>
    %14 = vector.shape_cast %13 : vector<16x16x8xbf16> to vector<256x8xbf16>
    %15 = vector.extract_strided_slice %5 {offsets = [1, 0, 0], sizes = [1, 8, 128], strides = [1, 1, 1]} : vector<9x8x128xbf16> to vector<1x8x128xbf16>
    %16 = vector.shape_cast %15 : vector<1x8x128xbf16> to vector<8x128xbf16>
    %cst_8 = arith.constant dense<0.000000e+00> : vector<256x128xf32>
    %17 = tpu.matmul %14, %16, %cst_8 {dimension_numbers = #tpu.dot_dimension_numbers<[1], [0], [0], [1], [0, 0, 1, 1], [], []>} : vector<256x8xbf16>, vector<8x128xbf16>, vector<256x128xf32> -> vector<256x128xf32>
    %18 = arith.addf %12, %17 : vector<256x128xf32>
    %19 = vector.extract_strided_slice %4 {offsets = [0, 2, 0], sizes = [16, 16, 8], strides = [1, 1, 1]} : vector<18x18x8xbf16> to vector<16x16x8xbf16>
    %20 = vector.shape_cast %19 : vector<16x16x8xbf16> to vector<256x8xbf16>
    %21 = vector.extract_strided_slice %5 {offsets = [2, 0, 0], sizes = [1, 8, 128], strides = [1, 1, 1]} : vector<9x8x128xbf16> to vector<1x8x128xbf16>
    %22 = vector.shape_cast %21 : vector<1x8x128xbf16> to vector<8x128xbf16>
    %cst_9 = arith.constant dense<0.000000e+00> : vector<256x128xf32>
    %23 = tpu.matmul %20, %22, %cst_9 {dimension_numbers = #tpu.dot_dimension_numbers<[1], [0], [0], [1], [0, 0, 1, 1], [], []>} : vector<256x8xbf16>, vector<8x128xbf16>, vector<256x128xf32> -> vector<256x128xf32>
    %24 = arith.addf %18, %23 : vector<256x128xf32>
    %25 = vector.extract_strided_slice %4 {offsets = [1, 0, 0], sizes = [16, 16, 8], strides = [1, 1, 1]} : vector<18x18x8xbf16> to vector<16x16x8xbf16>
    %26 = vector.shape_cast %25 : vector<16x16x8xbf16> to vector<256x8xbf16>
    %27 = vector.extract_strided_slice %5 {offsets = [3, 0, 0], sizes = [1, 8, 128], strides = [1, 1, 1]} : vector<9x8x128xbf16> to vector<1x8x128xbf16>
    %28 = vector.shape_cast %27 : vector<1x8x128xbf16> to vector<8x128xbf16>
    %cst_10 = arith.constant dense<0.000000e+00> : vector<256x128xf32>
    %29 = tpu.matmul %26, %28, %cst_10 {dimension_numbers = #tpu.dot_dimension_numbers<[1], [0], [0], [1], [0, 0, 1, 1], [], []>} : vector<256x8xbf16>, vector<8x128xbf16>, vector<256x128xf32> -> vector<256x128xf32>
    %30 = arith.addf %24, %29 : vector<256x128xf32>
    %31 = vector.extract_strided_slice %4 {offsets = [1, 1, 0], sizes = [16, 16, 8], strides = [1, 1, 1]} : vector<18x18x8xbf16> to vector<16x16x8xbf16>
    %32 = vector.shape_cast %31 : vector<16x16x8xbf16> to vector<256x8xbf16>
    %33 = vector.extract_strided_slice %5 {offsets = [4, 0, 0], sizes = [1, 8, 128], strides = [1, 1, 1]} : vector<9x8x128xbf16> to vector<1x8x128xbf16>
    %34 = vector.shape_cast %33 : vector<1x8x128xbf16> to vector<8x128xbf16>
    %cst_11 = arith.constant dense<0.000000e+00> : vector<256x128xf32>
    %35 = tpu.matmul %32, %34, %cst_11 {dimension_numbers = #tpu.dot_dimension_numbers<[1], [0], [0], [1], [0, 0, 1, 1], [], []>} : vector<256x8xbf16>, vector<8x128xbf16>, vector<256x128xf32> -> vector<256x128xf32>
    %36 = arith.addf %30, %35 : vector<256x128xf32>
    %37 = vector.extract_strided_slice %4 {offsets = [1, 2, 0], sizes = [16, 16, 8], strides = [1, 1, 1]} : vector<18x18x8xbf16> to vector<16x16x8xbf16>
    %38 = vector.shape_cast %37 : vector<16x16x8xbf16> to vector<256x8xbf16>
    %39 = vector.extract_strided_slice %5 {offsets = [5, 0, 0], sizes = [1, 8, 128], strides = [1, 1, 1]} : vector<9x8x128xbf16> to vector<1x8x128xbf16>
    %40 = vector.shape_cast %39 : vector<1x8x128xbf16> to vector<8x128xbf16>
    %cst_12 = arith.constant dense<0.000000e+00> : vector<256x128xf32>
    %41 = tpu.matmul %38, %40, %cst_12 {dimension_numbers = #tpu.dot_dimension_numbers<[1], [0], [0], [1], [0, 0, 1, 1], [], []>} : vector<256x8xbf16>, vector<8x128xbf16>, vector<256x128xf32> -> vector<256x128xf32>
    %42 = arith.addf %36, %41 : vector<256x128xf32>
    %43 = vector.extract_strided_slice %4 {offsets = [2, 0, 0], sizes = [16, 16, 8], strides = [1, 1, 1]} : vector<18x18x8xbf16> to vector<16x16x8xbf16>
    %44 = vector.shape_cast %43 : vector<16x16x8xbf16> to vector<256x8xbf16>
    %45 = vector.extract_strided_slice %5 {offsets = [6, 0, 0], sizes = [1, 8, 128], strides = [1, 1, 1]} : vector<9x8x128xbf16> to vector<1x8x128xbf16>
    %46 = vector.shape_cast %45 : vector<1x8x128xbf16> to vector<8x128xbf16>
    %cst_13 = arith.constant dense<0.000000e+00> : vector<256x128xf32>
    %47 = tpu.matmul %44, %46, %cst_13 {dimension_numbers = #tpu.dot_dimension_numbers<[1], [0], [0], [1], [0, 0, 1, 1], [], []>} : vector<256x8xbf16>, vector<8x128xbf16>, vector<256x128xf32> -> vector<256x128xf32>
    %48 = arith.addf %42, %47 : vector<256x128xf32>
    %49 = vector.extract_strided_slice %4 {offsets = [2, 1, 0], sizes = [16, 16, 8], strides = [1, 1, 1]} : vector<18x18x8xbf16> to vector<16x16x8xbf16>
    %50 = vector.shape_cast %49 : vector<16x16x8xbf16> to vector<256x8xbf16>
    %51 = vector.extract_strided_slice %5 {offsets = [7, 0, 0], sizes = [1, 8, 128], strides = [1, 1, 1]} : vector<9x8x128xbf16> to vector<1x8x128xbf16>
    %52 = vector.shape_cast %51 : vector<1x8x128xbf16> to vector<8x128xbf16>
    %cst_14 = arith.constant dense<0.000000e+00> : vector<256x128xf32>
    %53 = tpu.matmul %50, %52, %cst_14 {dimension_numbers = #tpu.dot_dimension_numbers<[1], [0], [0], [1], [0, 0, 1, 1], [], []>} : vector<256x8xbf16>, vector<8x128xbf16>, vector<256x128xf32> -> vector<256x128xf32>
    %54 = arith.addf %48, %53 : vector<256x128xf32>
    %55 = vector.extract_strided_slice %4 {offsets = [2, 2, 0], sizes = [16, 16, 8], strides = [1, 1, 1]} : vector<18x18x8xbf16> to vector<16x16x8xbf16>
    %56 = vector.shape_cast %55 : vector<16x16x8xbf16> to vector<256x8xbf16>
    %57 = vector.extract_strided_slice %5 {offsets = [8, 0, 0], sizes = [1, 8, 128], strides = [1, 1, 1]} : vector<9x8x128xbf16> to vector<1x8x128xbf16>
    %58 = vector.shape_cast %57 : vector<1x8x128xbf16> to vector<8x128xbf16>
    %cst_15 = arith.constant dense<0.000000e+00> : vector<256x128xf32>
    %59 = tpu.matmul %56, %58, %cst_15 {dimension_numbers = #tpu.dot_dimension_numbers<[1], [0], [0], [1], [0, 0, 1, 1], [], []>} : vector<256x8xbf16>, vector<8x128xbf16>, vector<256x128xf32> -> vector<256x128xf32>
    %60 = arith.addf %54, %59 : vector<256x128xf32>
    %c0_16 = arith.constant 0 : index
    %c0_17 = arith.constant 0 : index
    %61 = vector.load %arg3[%c0_16, %c0_17] : memref<1x128xf32, #tpu.memory_space<vmem>>, vector<1x128xf32>
    %cst_18 = arith.constant dense<0.000000e+00> : vector<128xf32>
    %62 = vector.multi_reduction <add>, %60, %cst_18 [0] : vector<256x128xf32> to vector<128xf32>
    %63 = vector.shape_cast %62 : vector<128xf32> to vector<1x128xf32>
    %64 = arith.addf %61, %63 : vector<1x128xf32>
    %c0_19 = arith.constant 0 : index
    %c0_20 = arith.constant 0 : index
    %65 = vector.load %arg3[%c0_19, %c0_20] : memref<1x128xf32, #tpu.memory_space<vmem>>, vector<1x128xf32>
    tpu.vector_store %arg3[%c0_19, %c0_20], %64 {strides = array<i32>} : memref<1x128xf32, #tpu.memory_space<vmem>>, vector<1x128xf32>,
    %c0_21 = arith.constant 0 : index
    %c0_22 = arith.constant 0 : index
    %66 = vector.load %arg4[%c0_21, %c0_22] : memref<1x128xf32, #tpu.memory_space<vmem>>, vector<1x128xf32>
    %67 = arith.mulf %60, %60 : vector<256x128xf32>
    %cst_23 = arith.constant dense<0.000000e+00> : vector<128xf32>
    %68 = vector.multi_reduction <add>, %67, %cst_23 [0] : vector<256x128xf32> to vector<128xf32>
    %69 = vector.shape_cast %68 : vector<128xf32> to vector<1x128xf32>
    %70 = arith.addf %66, %69 : vector<1x128xf32>
    %c0_24 = arith.constant 0 : index
    %c0_25 = arith.constant 0 : index
    %71 = vector.load %arg4[%c0_24, %c0_25] : memref<1x128xf32, #tpu.memory_space<vmem>>, vector<1x128xf32>
    tpu.vector_store %arg4[%c0_24, %c0_25], %70 {strides = array<i32>} : memref<1x128xf32, #tpu.memory_space<vmem>>, vector<1x128xf32>,
    return
  }
  func.func @transform_0(%arg0: i32) -> (i32, i32, i32, i32) {
    %c0_i32 = arith.constant 0 : i32
    %c0_i32_0 = arith.constant 0 : i32
    %c0_i32_1 = arith.constant 0 : i32
    %c0_i32_2 = arith.constant 0 : i32
    return %arg0, %c0_i32, %c0_i32_0, %c0_i32_1 : i32, i32, i32, i32
  }
  func.func @transform_1(%arg0: i32) -> (i32, i32, i32) {
    %c0_i32 = arith.constant 0 : i32
    %c0_i32_0 = arith.constant 0 : i32
    %c0_i32_1 = arith.constant 0 : i32
    %c0_i32_2 = arith.constant 0 : i32
    return %c0_i32, %c0_i32_0, %c0_i32_1 : i32, i32, i32
  }
  func.func @transform_2(%arg0: i32) -> (i32, i32) {
    %c0_i32 = arith.constant 0 : i32
    %c0_i32_0 = arith.constant 0 : i32
    %c0_i32_1 = arith.constant 0 : i32
    return %c0_i32, %c0_i32_0 : i32, i32
  }
  func.func @transform_3(%arg0: i32) -> (i32, i32) {
    %c0_i32 = arith.constant 0 : i32
    %c0_i32_0 = arith.constant 0 : i32
    %c0_i32_1 = arith.constant 0 : i32
    return %c0_i32, %c0_i32_0 : i32, i32
  }
}

module attributes {stable_mosaic.version = 11 : i64} {
  func.func @conv_bn_relu_kernel(%arg0: i32, %arg1: memref<1x18x18x8xbf16, #tpu.memory_space<vmem>>, %arg2: memref<9x8x128xbf16, #tpu.memory_space<vmem>>, %arg3: memref<1x128xf32, #tpu.memory_space<vmem>>, %arg4: memref<1x128xf32, #tpu.memory_space<vmem>>, %arg5: memref<256x128xf32, #tpu.memory_space<vmem>>) attributes {dimension_semantics = [#tpu.dimension_semantics<parallel>], iteration_bounds = array<i64: 2>, scalar_prefetch = 0 : i64, scratch_operands = 0 : i64, tpu.core_type = #tpu.core_type<tc>, window_params = [{transform_indices = @transform_0, window_bounds = array<i64: 1, 18, 18, 8>}, {pipeline_mode = #tpu.pipeline_mode<synchronous>, transform_indices = @transform_1, window_bounds = array<i64: 9, 8, 128>}, {pipeline_mode = #tpu.pipeline_mode<synchronous>, transform_indices = @transform_2, window_bounds = array<i64: 1, 128>}, {pipeline_mode = #tpu.pipeline_mode<synchronous>, transform_indices = @transform_3, window_bounds = array<i64: 1, 128>}, {transform_indices = @transform_4, window_bounds = array<i64: 256, 128>}]} {
    %c0 = arith.constant 0 : index
    %c0_0 = arith.constant 0 : index
    %c0_1 = arith.constant 0 : index
    %c0_2 = arith.constant 0 : index
    %0 = vector.load %arg1[%c0, %c0_0, %c0_1, %c0_2] : memref<1x18x18x8xbf16, #tpu.memory_space<vmem>>, vector<1x18x18x8xbf16>
    %1 = vector.shape_cast %0 : vector<1x18x18x8xbf16> to vector<18x18x8xbf16>
    %c0_3 = arith.constant 0 : index
    %c0_4 = arith.constant 0 : index
    %c0_5 = arith.constant 0 : index
    %2 = vector.load %arg2[%c0_3, %c0_4, %c0_5] : memref<9x8x128xbf16, #tpu.memory_space<vmem>>, vector<9x8x128xbf16>
    %cst = arith.constant 0.000000e+00 : f32
    %3 = vector.broadcast %cst : f32 to vector<256x128xf32>
    %4 = vector.extract_strided_slice %1 {offsets = [0, 0, 0], sizes = [16, 16, 8], strides = [1, 1, 1]} : vector<18x18x8xbf16> to vector<16x16x8xbf16>
    %5 = vector.shape_cast %4 : vector<16x16x8xbf16> to vector<256x8xbf16>
    %6 = vector.extract_strided_slice %2 {offsets = [0, 0, 0], sizes = [1, 8, 128], strides = [1, 1, 1]} : vector<9x8x128xbf16> to vector<1x8x128xbf16>
    %7 = vector.shape_cast %6 : vector<1x8x128xbf16> to vector<8x128xbf16>
    %cst_6 = arith.constant dense<0.000000e+00> : vector<256x128xf32>
    %8 = tpu.matmul %5, %7, %cst_6 {dimension_numbers = #tpu.dot_dimension_numbers<[1], [0], [0], [1], [0, 0, 1, 1], [], []>} : vector<256x8xbf16>, vector<8x128xbf16>, vector<256x128xf32> -> vector<256x128xf32>
    %9 = arith.addf %3, %8 : vector<256x128xf32>
    %10 = vector.extract_strided_slice %1 {offsets = [0, 1, 0], sizes = [16, 16, 8], strides = [1, 1, 1]} : vector<18x18x8xbf16> to vector<16x16x8xbf16>
    %11 = vector.shape_cast %10 : vector<16x16x8xbf16> to vector<256x8xbf16>
    %12 = vector.extract_strided_slice %2 {offsets = [1, 0, 0], sizes = [1, 8, 128], strides = [1, 1, 1]} : vector<9x8x128xbf16> to vector<1x8x128xbf16>
    %13 = vector.shape_cast %12 : vector<1x8x128xbf16> to vector<8x128xbf16>
    %cst_7 = arith.constant dense<0.000000e+00> : vector<256x128xf32>
    %14 = tpu.matmul %11, %13, %cst_7 {dimension_numbers = #tpu.dot_dimension_numbers<[1], [0], [0], [1], [0, 0, 1, 1], [], []>} : vector<256x8xbf16>, vector<8x128xbf16>, vector<256x128xf32> -> vector<256x128xf32>
    %15 = arith.addf %9, %14 : vector<256x128xf32>
    %16 = vector.extract_strided_slice %1 {offsets = [0, 2, 0], sizes = [16, 16, 8], strides = [1, 1, 1]} : vector<18x18x8xbf16> to vector<16x16x8xbf16>
    %17 = vector.shape_cast %16 : vector<16x16x8xbf16> to vector<256x8xbf16>
    %18 = vector.extract_strided_slice %2 {offsets = [2, 0, 0], sizes = [1, 8, 128], strides = [1, 1, 1]} : vector<9x8x128xbf16> to vector<1x8x128xbf16>
    %19 = vector.shape_cast %18 : vector<1x8x128xbf16> to vector<8x128xbf16>
    %cst_8 = arith.constant dense<0.000000e+00> : vector<256x128xf32>
    %20 = tpu.matmul %17, %19, %cst_8 {dimension_numbers = #tpu.dot_dimension_numbers<[1], [0], [0], [1], [0, 0, 1, 1], [], []>} : vector<256x8xbf16>, vector<8x128xbf16>, vector<256x128xf32> -> vector<256x128xf32>
    %21 = arith.addf %15, %20 : vector<256x128xf32>
    %22 = vector.extract_strided_slice %1 {offsets = [1, 0, 0], sizes = [16, 16, 8], strides = [1, 1, 1]} : vector<18x18x8xbf16> to vector<16x16x8xbf16>
    %23 = vector.shape_cast %22 : vector<16x16x8xbf16> to vector<256x8xbf16>
    %24 = vector.extract_strided_slice %2 {offsets = [3, 0, 0], sizes = [1, 8, 128], strides = [1, 1, 1]} : vector<9x8x128xbf16> to vector<1x8x128xbf16>
    %25 = vector.shape_cast %24 : vector<1x8x128xbf16> to vector<8x128xbf16>
    %cst_9 = arith.constant dense<0.000000e+00> : vector<256x128xf32>
    %26 = tpu.matmul %23, %25, %cst_9 {dimension_numbers = #tpu.dot_dimension_numbers<[1], [0], [0], [1], [0, 0, 1, 1], [], []>} : vector<256x8xbf16>, vector<8x128xbf16>, vector<256x128xf32> -> vector<256x128xf32>
    %27 = arith.addf %21, %26 : vector<256x128xf32>
    %28 = vector.extract_strided_slice %1 {offsets = [1, 1, 0], sizes = [16, 16, 8], strides = [1, 1, 1]} : vector<18x18x8xbf16> to vector<16x16x8xbf16>
    %29 = vector.shape_cast %28 : vector<16x16x8xbf16> to vector<256x8xbf16>
    %30 = vector.extract_strided_slice %2 {offsets = [4, 0, 0], sizes = [1, 8, 128], strides = [1, 1, 1]} : vector<9x8x128xbf16> to vector<1x8x128xbf16>
    %31 = vector.shape_cast %30 : vector<1x8x128xbf16> to vector<8x128xbf16>
    %cst_10 = arith.constant dense<0.000000e+00> : vector<256x128xf32>
    %32 = tpu.matmul %29, %31, %cst_10 {dimension_numbers = #tpu.dot_dimension_numbers<[1], [0], [0], [1], [0, 0, 1, 1], [], []>} : vector<256x8xbf16>, vector<8x128xbf16>, vector<256x128xf32> -> vector<256x128xf32>
    %33 = arith.addf %27, %32 : vector<256x128xf32>
    %34 = vector.extract_strided_slice %1 {offsets = [1, 2, 0], sizes = [16, 16, 8], strides = [1, 1, 1]} : vector<18x18x8xbf16> to vector<16x16x8xbf16>
    %35 = vector.shape_cast %34 : vector<16x16x8xbf16> to vector<256x8xbf16>
    %36 = vector.extract_strided_slice %2 {offsets = [5, 0, 0], sizes = [1, 8, 128], strides = [1, 1, 1]} : vector<9x8x128xbf16> to vector<1x8x128xbf16>
    %37 = vector.shape_cast %36 : vector<1x8x128xbf16> to vector<8x128xbf16>
    %cst_11 = arith.constant dense<0.000000e+00> : vector<256x128xf32>
    %38 = tpu.matmul %35, %37, %cst_11 {dimension_numbers = #tpu.dot_dimension_numbers<[1], [0], [0], [1], [0, 0, 1, 1], [], []>} : vector<256x8xbf16>, vector<8x128xbf16>, vector<256x128xf32> -> vector<256x128xf32>
    %39 = arith.addf %33, %38 : vector<256x128xf32>
    %40 = vector.extract_strided_slice %1 {offsets = [2, 0, 0], sizes = [16, 16, 8], strides = [1, 1, 1]} : vector<18x18x8xbf16> to vector<16x16x8xbf16>
    %41 = vector.shape_cast %40 : vector<16x16x8xbf16> to vector<256x8xbf16>
    %42 = vector.extract_strided_slice %2 {offsets = [6, 0, 0], sizes = [1, 8, 128], strides = [1, 1, 1]} : vector<9x8x128xbf16> to vector<1x8x128xbf16>
    %43 = vector.shape_cast %42 : vector<1x8x128xbf16> to vector<8x128xbf16>
    %cst_12 = arith.constant dense<0.000000e+00> : vector<256x128xf32>
    %44 = tpu.matmul %41, %43, %cst_12 {dimension_numbers = #tpu.dot_dimension_numbers<[1], [0], [0], [1], [0, 0, 1, 1], [], []>} : vector<256x8xbf16>, vector<8x128xbf16>, vector<256x128xf32> -> vector<256x128xf32>
    %45 = arith.addf %39, %44 : vector<256x128xf32>
    %46 = vector.extract_strided_slice %1 {offsets = [2, 1, 0], sizes = [16, 16, 8], strides = [1, 1, 1]} : vector<18x18x8xbf16> to vector<16x16x8xbf16>
    %47 = vector.shape_cast %46 : vector<16x16x8xbf16> to vector<256x8xbf16>
    %48 = vector.extract_strided_slice %2 {offsets = [7, 0, 0], sizes = [1, 8, 128], strides = [1, 1, 1]} : vector<9x8x128xbf16> to vector<1x8x128xbf16>
    %49 = vector.shape_cast %48 : vector<1x8x128xbf16> to vector<8x128xbf16>
    %cst_13 = arith.constant dense<0.000000e+00> : vector<256x128xf32>
    %50 = tpu.matmul %47, %49, %cst_13 {dimension_numbers = #tpu.dot_dimension_numbers<[1], [0], [0], [1], [0, 0, 1, 1], [], []>} : vector<256x8xbf16>, vector<8x128xbf16>, vector<256x128xf32> -> vector<256x128xf32>
    %51 = arith.addf %45, %50 : vector<256x128xf32>
    %52 = vector.extract_strided_slice %1 {offsets = [2, 2, 0], sizes = [16, 16, 8], strides = [1, 1, 1]} : vector<18x18x8xbf16> to vector<16x16x8xbf16>
    %53 = vector.shape_cast %52 : vector<16x16x8xbf16> to vector<256x8xbf16>
    %54 = vector.extract_strided_slice %2 {offsets = [8, 0, 0], sizes = [1, 8, 128], strides = [1, 1, 1]} : vector<9x8x128xbf16> to vector<1x8x128xbf16>
    %55 = vector.shape_cast %54 : vector<1x8x128xbf16> to vector<8x128xbf16>
    %cst_14 = arith.constant dense<0.000000e+00> : vector<256x128xf32>
    %56 = tpu.matmul %53, %55, %cst_14 {dimension_numbers = #tpu.dot_dimension_numbers<[1], [0], [0], [1], [0, 0, 1, 1], [], []>} : vector<256x8xbf16>, vector<8x128xbf16>, vector<256x128xf32> -> vector<256x128xf32>
    %57 = arith.addf %51, %56 : vector<256x128xf32>
    %c0_15 = arith.constant 0 : index
    %c0_16 = arith.constant 0 : index
    %58 = vector.load %arg3[%c0_15, %c0_16] : memref<1x128xf32, #tpu.memory_space<vmem>>, vector<1x128xf32>
    %59 = vector.broadcast %58 : vector<1x128xf32> to vector<256x128xf32>
    %60 = arith.mulf %57, %59 : vector<256x128xf32>
    %c0_17 = arith.constant 0 : index
    %c0_18 = arith.constant 0 : index
    %61 = vector.load %arg4[%c0_17, %c0_18] : memref<1x128xf32, #tpu.memory_space<vmem>>, vector<1x128xf32>
    %62 = vector.broadcast %61 : vector<1x128xf32> to vector<256x128xf32>
    %63 = arith.addf %60, %62 : vector<256x128xf32>
    %cst_19 = arith.constant 0.000000e+00 : f32
    %64 = vector.broadcast %cst_19 : f32 to vector<256x128xf32>
    %65 = arith.maximumf %63, %64 : vector<256x128xf32>
    %c0_20 = arith.constant 0 : index
    %c0_21 = arith.constant 0 : index
    %66 = vector.load %arg5[%c0_20, %c0_21] : memref<256x128xf32, #tpu.memory_space<vmem>>, vector<256x128xf32>
    tpu.vector_store %arg5[%c0_20, %c0_21], %65 {strides = array<i32>} : memref<256x128xf32, #tpu.memory_space<vmem>>, vector<256x128xf32>,
    return
  }
  func.func @transform_0(%arg0: i32) -> (i32, i32, i32, i32) {
    %c0_i32 = arith.constant 0 : i32
    %c0_i32_0 = arith.constant 0 : i32
    %c0_i32_1 = arith.constant 0 : i32
    %c0_i32_2 = arith.constant 0 : i32
    return %arg0, %c0_i32, %c0_i32_0, %c0_i32_1 : i32, i32, i32, i32
  }
  func.func @transform_1(%arg0: i32) -> (i32, i32, i32) {
    %c0_i32 = arith.constant 0 : i32
    %c0_i32_0 = arith.constant 0 : i32
    %c0_i32_1 = arith.constant 0 : i32
    %c0_i32_2 = arith.constant 0 : i32
    return %c0_i32, %c0_i32_0, %c0_i32_1 : i32, i32, i32
  }
  func.func @transform_2(%arg0: i32) -> (i32, i32) {
    %c0_i32 = arith.constant 0 : i32
    %c0_i32_0 = arith.constant 0 : i32
    %c0_i32_1 = arith.constant 0 : i32
    return %c0_i32, %c0_i32_0 : i32, i32
  }
  func.func @transform_3(%arg0: i32) -> (i32, i32) {
    %c0_i32 = arith.constant 0 : i32
    %c0_i32_0 = arith.constant 0 : i32
    %c0_i32_1 = arith.constant 0 : i32
    return %c0_i32, %c0_i32_0 : i32, i32
  }
  func.func @transform_4(%arg0: i32) -> (i32, i32) {
    %c0_i32 = arith.constant 0 : i32
    %c0_i32_0 = arith.constant 0 : i32
    return %arg0, %c0_i32 : i32, i32
  }
}

</mosaic_0001>

<llo_original>
// kernel: _lambda_.4
$region0: #{_lambda_.4}
  #allocation0 [shape = 'u32[]', space=smem, size = 0x4, offset = 0x4, fixed_abs, tag = 'smem constant byte address 0x4 - core index']
  #allocation1 [shape = 'u32[144,128]{1,0:T(1,128)}', space=vmem, size = 0x12000, scoped, tag = 'internal scratch']
  %s0 = inlined_call_operand.vmem [shape: bf16[2,18,18,4], index: 0, kind: input, shape index: {}]
  %s1 = inlined_call_operand.vmem [shape: bf16[9,4,128], index: 1, kind: input, shape index: {}]
  %s2 = inlined_call_operand.vmem [shape: f32[1,128], index: 2, kind: output, shape index: {0}]
  %s3 = inlined_call_operand.vmem [shape: f32[1,128], index: 3, kind: output, shape index: {1}]
  %4 = xla_tuple %s2, %s3
  %s5 = sld [smem:[#allocation0]]
  $region53: #{_lambda_.4} parent=0
    _
  %s7 = ssub.s32 1, %s5
  %s8 = scalar_select 0, %s7, %s5
  loop: start=0, step=1, limit=4
  $region2: #{_lambda_.4} parent=0 // loop_pre_header
    _
  $region3: #{_lambda_.4} parent=0 // loop_header
    %s10 = sphi 0, %s14
    %p11 = scmp.ge.s32.totalorder %s10, 4
    %s20 = sphi 0, %s22
    %s23 = sphi 0, %s20
    %s24 = sphi 0, %s23
    %s40 = sphi 0, %s24
    %s44 = sphi 0, %s44
    %s46 = sphi 0, %s44
    %s47 = sphi 0, %s46
    %s61 = sphi 0, %s47
    %s65 = sphi 0, %s65
    %s67 = sphi 0, %s65
    %s68 = sphi 0, %s67
    %s82 = sphi 0, %s68
    %s86 = sphi 0, %s86
    %s88 = sphi 0, %s86
    %s89 = sphi 0, %s88
    %s103 = sphi 0, %s89
  $region4: #{_lambda_.4} parent=0 // loop_header_branch
    %13 = sbr.rel (%p11) target = $region8
  $region5: #{_lambda_.4} parent=0 // loop_body
    %s15 = ssub.s32 %s10, 1
    %s16 = ssub.s32 %s10, 2
    %s17 = sadd.s32 %s10, 1
    %s18 = ssub.s32 %s10, %s17
    %p19 = scmp.eq.s32.totalorder %s18, 0
    %s21 = sadd.s32 %s20, 1
    %s22 = scalar_select %p19, %s20, %s21
    %p25 = pneg %p19
    %p26 = scmp.eq.s32.totalorder %s10, 1
    %p27 = por %p25, %p26
    %p28 = scmp.ne.s32.totalorder %s20, %s23
    %p29 = scmp.eq.s32.totalorder %s10, 0
    %p30 = por %p28, %p29
    %p31 = scmp.ne.s32.totalorder %s20, %s23
    %p32 = scmp.eq.s32.totalorder %s15, 1
    %p33 = por %p31, %p32
    %p34 = scmp.ne.s32.totalorder %s23, %s24
    %p35 = scmp.eq.s32.totalorder %s15, 0
    %p36 = por %p34, %p35
    %p37 = scmp.ne.s32.totalorder %s23, %s24
    %p38 = scmp.eq.s32.totalorder %s16, 1
    %p39 = por %p37, %p38
    %p41 = scmp.ne.s32.totalorder %s24, %s40
    %p42 = scmp.eq.s32.totalorder %s16, 0
    %p43 = por %p41, %p42
    %s45 = sadd.s32 %s44, 1
    %p48 = scmp.eq.s32.totalorder %s10, 1
    %p49 = scmp.ne.s32.totalorder %s44, %s46
    %p50 = scmp.eq.s32.totalorder %s10, 0
    %p51 = por %p49, %p50
    %p52 = scmp.ne.s32.totalorder %s44, %s46
    %p53 = scmp.eq.s32.totalorder %s15, 1
    %p54 = por %p52, %p53
    %p55 = scmp.ne.s32.totalorder %s46, %s47
    %p56 = scmp.eq.s32.totalorder %s15, 0
    %p57 = por %p55, %p56
    %p58 = scmp.ne.s32.totalorder %s46, %s47
    %p59 = scmp.eq.s32.totalorder %s16, 1
    %p60 = por %p58, %p59
    %p62 = scmp.ne.s32.totalorder %s47, %s61
    %p63 = scmp.eq.s32.totalorder %s16, 0
    %p64 = por %p62, %p63
    %s66 = sadd.s32 %s65, 1
    %p69 = scmp.eq.s32.totalorder %s10, 1
    %p70 = scmp.ne.s32.totalorder %s65, %s67
    %p71 = scmp.eq.s32.totalorder %s10, 0
    %p72 = por %p70, %p71
    %p73 = scmp.ne.s32.totalorder %s65, %s67
    %p74 = scmp.eq.s32.totalorder %s15, 1
    %p75 = por %p73, %p74
    %p76 = scmp.ne.s32.totalorder %s67, %s68
    %p77 = scmp.eq.s32.totalorder %s15, 0
    %p78 = por %p76, %p77
    %p79 = scmp.ne.s32.totalorder %s67, %s68
    %p80 = scmp.eq.s32.totalorder %s16, 1
    %p81 = por %p79, %p80
    %p83 = scmp.ne.s32.totalorder %s68, %s82
    %p84 = scmp.eq.s32.totalorder %s16, 0
    %p85 = por %p83, %p84
    %s87 = sadd.s32 %s86, 1
    %p90 = scmp.eq.s32.totalorder %s10, 1
    %p91 = scmp.ne.s32.totalorder %s86, %s88
    %p92 = scmp.eq.s32.totalorder %s10, 0
    %p93 = por %p91, %p92
    %p94 = scmp.ne.s32.totalorder %s86, %s88
    %p95 = scmp.eq.s32.totalorder %s15, 1
    %p96 = por %p94, %p95
    %p97 = scmp.ne.s32.totalorder %s88, %s89
    %p98 = scmp.eq.s32.totalorder %s15, 0
    %p99 = por %p97, %p98
    %p100 = scmp.ne.s32.totalorder %s88, %s89
    %p101 = scmp.eq.s32.totalorder %s16, 1
    %p102 = por %p100, %p101
    %p104 = scmp.ne.s32.totalorder %s89, %s103
    %p105 = scmp.eq.s32.totalorder %s16, 0
    %p106 = por %p104, %p105
    %p107 = scmp.le.s32.totalorder 1, %s10
    %p108 = scmp.lt.s32.totalorder %s10, 3
    %p109 = pnand %p107, %p108
    %p110 = pneg %p109
    // Predicated region
    $region9: #{_lambda_.4} parent=5 // pred_check
      _
    $region10: #{_lambda_.4} parent=5 // pred_check_branch
      %112 = sbr.rel (%p109) target = $region12
    $region11: #{_lambda_.4} parent=5 // pred_region
      %s113 = ssub.s32 %s10, 1
      // Predicated region
      $region13: #{_lambda_.4} parent=11 // pred_check
        %p114 = pneg %p57
      $region14: #{_lambda_.4} parent=11 // pred_check_branch
        %116 = sbr.rel (%p114) target = $region16
      $region15: #{_lambda_.4} parent=11 // pred_region
        _
      $region16: #{_lambda_.4} parent=11 // pred_fallthru
        _
    $region12: #{_lambda_.4} parent=5 // pred_fallthru
      _
    %p117 = scmp.lt.s32.totalorder %s10, 2
    // Predicated region
    $region17: #{_lambda_.4} parent=5 // pred_check
      %p118 = pneg %p117
    $region18: #{_lambda_.4} parent=5 // pred_check_branch
      %120 = sbr.rel (%p118) target = $region20
    $region19: #{_lambda_.4} parent=5 // pred_region
      // Predicated region
      $region21: #{_lambda_.4} parent=19 // pred_check
        %p121 = pneg %p30
      $region22: #{_lambda_.4} parent=19 // pred_check_branch
        %123 = sbr.rel (%p121) target = $region24
      $region23: #{_lambda_.4} parent=19 // pred_region
        %p124 = scmp.lt.s32.totalorder %s10, 1
        %s125 = scalar_select %p124, %s10, 1
        %s126 = smul.addr %s125, 54
        %s127 = smul.addr %s126, 4
        %s128 = scalar_lea.vmem %s0, %s127
      $region24: #{_lambda_.4} parent=19 // pred_fallthru
        _
    $region20: #{_lambda_.4} parent=5 // pred_fallthru
      _
    %p129 = scmp.le.s32.totalorder 1, %s10
    %p130 = scmp.lt.s32.totalorder %s10, 3
    %p131 = pnand %p129, %p130
    %p132 = pneg %p131
    // Predicated region
    $region25: #{_lambda_.4} parent=5 // pred_check
      _
    $region26: #{_lambda_.4} parent=5 // pred_check_branch
      %134 = sbr.rel (%p131) target = $region28
    $region27: #{_lambda_.4} parent=5 // pred_region
      %s135 = ssub.s32 %s10, 1
      %p136 = scmp.lt.s32.totalorder %s15, 1
      %s137 = scalar_select %p136, %s15, 1
      %s138 = smul.addr %s137, 54
      %s139 = smul.addr %s138, 4
      %s140 = scalar_lea.vmem %s0, %s139
      %p141 = pneg %p36
      %p142 = pneg %p33
      %p143 = pneg %p57
      %p144 = pneg %p54
      %p145 = pneg %p78
      %p146 = pneg %p75
      %p147 = pneg %p99
      %p148 = pneg %p96
      %p149 = scmp.lt.s32.totalorder %s15, 1
      %s150 = scalar_select %p149, %s15, 1
      %s151 = smul.addr %s150, 54
      %s152 = smul.addr %s151, 4
      %s153 = scalar_lea.vmem %s0, %s152
      %p155 = scmp.eq.s32.totalorder %s15, 0
      // Predicated region
      $region29: #{_lambda_.4} parent=27 // pred_check
        %p156 = pneg %p155
      $region30: #{_lambda_.4} parent=27 // pred_check_branch
        %158 = sbr.rel (%p156) target = $region32
      $region31: #{_lambda_.4} parent=27 // pred_region
        %159 = vst [vmem:[%s2] sm:$0x1] 0.0
        %160 = vst [vmem:[%s3] sm:$0x1] 0.0
      $region32: #{_lambda_.4} parent=27 // pred_fallthru
        _
      %v161 = vld [vmem:[%s153] sm:$0xf]
      %v162 = vld [vmem:[%s153 + $0x4] sm:$0xf]
      %v163 = vld [vmem:[%s153 + $0x8] sm:$0x1]
      %v164 = vld [vmem:[%s153 + $0xc] sm:$0xf]
      %v165 = vld [vmem:[%s153 + $0x10] sm:$0xf]
      %v166 = vld [vmem:[%s153 + $0x14] sm:$0x1]
      %v167 = vld [vmem:[%s153 + $0x18] sm:$0xf]
      %v168 = vld [vmem:[%s153 + $0x1c] sm:$0xf]
      %v169 = vld [vmem:[%s153 + $0x20] sm:$0x1]
      %v170 = vld [vmem:[%s153 + $0x24] sm:$0xf]
      %v171 = vld [vmem:[%s153 + $0x28] sm:$0xf]
      %v172 = vld [vmem:[%s153 + $0x2c] sm:$0x1]
      %v173 = vld [vmem:[%s153 + $0x30] sm:$0xf]
      %v174 = vld [vmem:[%s153 + $0x34] sm:$0xf]
      %v175 = vld [vmem:[%s153 + $0x38] sm:$0x1]
      %v176 = vld [vmem:[%s153 + $0x3c] sm:$0xf]
      %v177 = vld [vmem:[%s153 + $0x40] sm:$0xf]
      %v178 = vld [vmem:[%s153 + $0x44] sm:$0x1]
      %v179 = vld [vmem:[%s153 + $0x48] sm:$0xf]
      %v180 = vld [vmem:[%s153 + $0x4c] sm:$0xf]
      %v181 = vld [vmem:[%s153 + $0x50] sm:$0x1]
      %v182 = vld [vmem:[%s153 + $0x54] sm:$0xf]
      %v183 = vld [vmem:[%s153 + $0x58] sm:$0xf]
      %v184 = vld [vmem:[%s153 + $0x5c] sm:$0x1]
      %v185 = vld [vmem:[%s153 + $0x60] sm:$0xf]
      %v186 = vld [vmem:[%s153 + $0x64] sm:$0xf]
      %v187 = vld [vmem:[%s153 + $0x68] sm:$0x1]
      %v188 = vld [vmem:[%s153 + $0x6c] sm:$0xf]
      %v189 = vld [vmem:[%s153 + $0x70] sm:$0xf]
      %v190 = vld [vmem:[%s153 + $0x74] sm:$0x1]
      %v191 = vld [vmem:[%s153 + $0x78] sm:$0xf]
      %v192 = vld [vmem:[%s153 + $0x7c] sm:$0xf]
      %v193 = vld [vmem:[%s153 + $0x80] sm:$0x1]
      %v194 = vld [vmem:[%s153 + $0x84] sm:$0xf]
      %v195 = vld [vmem:[%s153 + $0x88] sm:$0xf]
      %v196 = vld [vmem:[%s153 + $0x8c] sm:$0x1]
      %v197 = vld [vmem:[%s153 + $0x90] sm:$0xf]
      %v198 = vld [vmem:[%s153 + $0x94] sm:$0xf]
      %v199 = vld [vmem:[%s153 + $0x98] sm:$0x1]
      %v200 = vld [vmem:[%s153 + $0x9c] sm:$0xf]
      %v201 = vld [vmem:[%s153 + $0xa0] sm:$0xf]
      %v202 = vld [vmem:[%s153 + $0xa4] sm:$0x1]
      %v203 = vld [vmem:[%s153 + $0xa8] sm:$0xf]
      %v204 = vld [vmem:[%s153 + $0xac] sm:$0xf]
      %v205 = vld [vmem:[%s153 + $0xb0] sm:$0x1]
      %v206 = vld [vmem:[%s153 + $0xb4] sm:$0xf]
      %v207 = vld [vmem:[%s153 + $0xb8] sm:$0xf]
      %v208 = vld [vmem:[%s153 + $0xbc] sm:$0x1]
      %v209 = vld [vmem:[%s153 + $0xc0] sm:$0xf]
      %v210 = vld [vmem:[%s153 + $0xc4] sm:$0xf]
      %v211 = vld [vmem:[%s153 + $0xc8] sm:$0x1]
      %v212 = vld [vmem:[%s153 + $0xcc] sm:$0xf]
      %v213 = vld [vmem:[%s153 + $0xd0] sm:$0xf]
      %v214 = vld [vmem:[%s153 + $0xd4] sm:$0x1]
      %v215 = vld [vmem:[%s1] sm:$0x3]
      %v216 = vld [vmem:[%s1 + $0x2] sm:$0x3]
      %v217 = vld [vmem:[%s1 + $0x4] sm:$0x3]
      %v218 = vld [vmem:[%s1 + $0x6] sm:$0x3]
      %v219 = vld [vmem:[%s1 + $0x8] sm:$0x3]
      %v220 = vld [vmem:[%s1 + $0xa] sm:$0x3]
      %v221 = vld [vmem:[%s1 + $0xc] sm:$0x3]
      %v222 = vld [vmem:[%s1 + $0xe] sm:$0x3]
      %v223 = vld [vmem:[%s1 + $0x10] sm:$0x3]
      %vm224 = vsmask.f32 3328
      %vm225 = vsmask.f32 7440
      %vm226 = vmor %vm224, %vm225
      %v228 = vshrl.u32 %v161, 16
      %v230 = vrot.slane %v228, 4
      %v231 = vshll.u32 %v161, 16
      %v233 = vrot.slane %v231, 5
      %v234 = vor.u32 %v230, %v233
      %v235 = vrot.slane %v234, 4
      %v237 = vshll.u32 %v162, 16
      %v239 = vrot.slane %v237, 5
      %v240 = vsel %vm226, %v235, %v239
      %v241 = vshrl.u32 %v162, 16
      %v243 = vrot.slane %v241, 4
      %v244 = vor.u32 %v243, %v239
      %v245 = vrot.slane %v244, 4
      %v247 = vshll.u32 %v163, 16
      %v249 = vrot.slane %v247, 5
      %v250 = vsel %vm226, %v245, %v249
      %v252 = vshrl.u32 %v164, 16
      %v254 = vrot.slane %v252, 4
      %v255 = vshll.u32 %v164, 16
      %v257 = vrot.slane %v255, 5
      %v258 = vor.u32 %v254, %v257
      %v259 = vrot.slane %v258, 4
      %v261 = vshll.u32 %v165, 16
      %v263 = vrot.slane %v261, 5
      %v264 = vsel %vm226, %v259, %v263
      %v265 = vshrl.u32 %v165, 16
      %v267 = vrot.slane %v265, 4
      %v268 = vor.u32 %v267, %v263
      %v269 = vrot.slane %v268, 4
      %v271 = vshll.u32 %v166, 16
      %v273 = vrot.slane %v271, 5
      %v274 = vsel %vm226, %v269, %v273
      %v276 = vshrl.u32 %v167, 16
      %v278 = vrot.slane %v276, 4
      %v279 = vshll.u32 %v167, 16
      %v281 = vrot.slane %v279, 5
      %v282 = vor.u32 %v278, %v281
      %v283 = vrot.slane %v282, 4
      %v285 = vshll.u32 %v168, 16
      %v287 = vrot.slane %v285, 5
      %v288 = vsel %vm226, %v283, %v287
      %v289 = vshrl.u32 %v168, 16
      %v291 = vrot.slane %v289, 4
      %v292 = vor.u32 %v291, %v287
      %v293 = vrot.slane %v292, 4
      %v295 = vshll.u32 %v169, 16
      %v297 = vrot.slane %v295, 5
      %v298 = vsel %vm226, %v293, %v297
      %v300 = vshrl.u32 %v170, 16
      %v302 = vrot.slane %v300, 4
      %v303 = vshll.u32 %v170, 16
      %v305 = vrot.slane %v303, 5
      %v306 = vor.u32 %v302, %v305
      %v307 = vrot.slane %v306, 4
      %v309 = vshll.u32 %v171, 16
      %v311 = vrot.slane %v309, 5
      %v312 = vsel %vm226, %v307, %v311
      %v313 = vshrl.u32 %v171, 16
      %v315 = vrot.slane %v313, 4
      %v316 = vor.u32 %v315, %v311
      %v317 = vrot.slane %v316, 4
      %v319 = vshll.u32 %v172, 16
      %v321 = vrot.slane %v319, 5
      %v322 = vsel %vm226, %v317, %v321
      %v324 = vshrl.u32 %v173, 16
      %v326 = vrot.slane %v324, 4
      %v327 = vshll.u32 %v173, 16
      %v329 = vrot.slane %v327, 5
      %v330 = vor.u32 %v326, %v329
      %v331 = vrot.slane %v330, 4
      %v333 = vshll.u32 %v174, 16
      %v335 = vrot.slane %v333, 5
      %v336 = vsel %vm226, %v331, %v335
      %v337 = vshrl.u32 %v174, 16
      %v339 = vrot.slane %v337, 4
      %v340 = vor.u32 %v339, %v335
      %v341 = vrot.slane %v340, 4
      %v343 = vshll.u32 %v175, 16
      %v345 = vrot.slane %v343, 5
      %v346 = vsel %vm226, %v341, %v345
      %v348 = vshrl.u32 %v176, 16
      %v350 = vrot.slane %v348, 4
      %v351 = vshll.u32 %v176, 16
      %v353 = vrot.slane %v351, 5
      %v354 = vor.u32 %v350, %v353
      %v355 = vrot.slane %v354, 4
      %v357 = vshll.u32 %v177, 16
      %v359 = vrot.slane %v357, 5
      %v360 = vsel %vm226, %v355, %v359
      %v361 = vshrl.u32 %v177, 16
      %v363 = vrot.slane %v361, 4
      %v364 = vor.u32 %v363, %v359
      %v365 = vrot.slane %v364, 4
      %v367 = vshll.u32 %v178, 16
      %v369 = vrot.slane %v367, 5
      %v370 = vsel %vm226, %v365, %v369
      %v372 = vshrl.u32 %v179, 16
      %v374 = vrot.slane %v372, 4
      %v375 = vshll.u32 %v179, 16
      %v377 = vrot.slane %v375, 5
      %v378 = vor.u32 %v374, %v377
      %v379 = vrot.slane %v378, 4
      %v381 = vshll.u32 %v180, 16
      %v383 = vrot.slane %v381, 5
      %v384 = vsel %vm226, %v379, %v383
      %v385 = vshrl.u32 %v180, 16
      %v387 = vrot.slane %v385, 4
      %v388 = vor.u32 %v387, %v383
      %v389 = vrot.slane %v388, 4
      %v391 = vshll.u32 %v181, 16
      %v393 = vrot.slane %v391, 5
      %v394 = vsel %vm226, %v389, %v393
      %v396 = vshrl.u32 %v182, 16
      %v398 = vrot.slane %v396, 4
      %v399 = vshll.u32 %v182, 16
      %v401 = vrot.slane %v399, 5
      %v402 = vor.u32 %v398, %v401
      %v403 = vrot.slane %v402, 4
      %v405 = vshll.u32 %v183, 16
      %v407 = vrot.slane %v405, 5
      %v408 = vsel %vm226, %v403, %v407
      %v409 = vshrl.u32 %v183, 16
      %v411 = vrot.slane %v409, 4
      %v412 = vor.u32 %v411, %v407
      %v413 = vrot.slane %v412, 4
      %v415 = vshll.u32 %v184, 16
      %v417 = vrot.slane %v415, 5
      %v418 = vsel %vm226, %v413, %v417
      %v420 = vshrl.u32 %v185, 16
      %v422 = vrot.slane %v420, 4
      %v423 = vshll.u32 %v185, 16
      %v425 = vrot.slane %v423, 5
      %v426 = vor.u32 %v422, %v425
      %v427 = vrot.slane %v426, 4
      %v429 = vshll.u32 %v186, 16
      %v431 = vrot.slane %v429, 5
      %v432 = vsel %vm226, %v427, %v431
      %v433 = vshrl.u32 %v186, 16
      %v435 = vrot.slane %v433, 4
      %v436 = vor.u32 %v435, %v431
      %v437 = vrot.slane %v436, 4
      %v439 = vshll.u32 %v187, 16
      %v441 = vrot.slane %v439, 5
      %v442 = vsel %vm226, %v437, %v441
      %v444 = vshrl.u32 %v188, 16
      %v446 = vrot.slane %v444, 4
      %v447 = vshll.u32 %v188, 16
      %v449 = vrot.slane %v447, 5
      %v450 = vor.u32 %v446, %v449
      %v451 = vrot.slane %v450, 4
      %v453 = vshll.u32 %v189, 16
      %v455 = vrot.slane %v453, 5
      %v456 = vsel %vm226, %v451, %v455
      %v457 = vshrl.u32 %v189, 16
      %v459 = vrot.slane %v457, 4
      %v460 = vor.u32 %v459, %v455
      %v461 = vrot.slane %v460, 4
      %v463 = vshll.u32 %v190, 16
      %v465 = vrot.slane %v463, 5
      %v466 = vsel %vm226, %v461, %v465
      %v468 = vshrl.u32 %v191, 16
      %v470 = vrot.slane %v468, 4
      %v471 = vshll.u32 %v191, 16
      %v473 = vrot.slane %v471, 5
      %v474 = vor.u32 %v470, %v473
      %v475 = vrot.slane %v474, 4
      %v477 = vshll.u32 %v192, 16
      %v479 = vrot.slane %v477, 5
      %v480 = vsel %vm226, %v475, %v479
      %v481 = vshrl.u32 %v192, 16
      %v483 = vrot.slane %v481, 4
      %v484 = vor.u32 %v483, %v479
      %v485 = vrot.slane %v484, 4
      %v487 = vshll.u32 %v193, 16
      %v489 = vrot.slane %v487, 5
      %v490 = vsel %vm226, %v485, %v489
      %v492 = vshrl.u32 %v194, 16
      %v494 = vrot.slane %v492, 4
      %v495 = vshll.u32 %v194, 16
      %v497 = vrot.slane %v495, 5
      %v498 = vor.u32 %v494, %v497
      %v499 = vrot.slane %v498, 4
      %v501 = vshll.u32 %v195, 16
      %v503 = vrot.slane %v501, 5
      %v504 = vsel %vm226, %v499, %v503
      %v505 = vshrl.u32 %v195, 16
      %v507 = vrot.slane %v505, 4
      %v508 = vor.u32 %v507, %v503
      %v509 = vrot.slane %v508, 4
      %v511 = vshll.u32 %v196, 16
      %v513 = vrot.slane %v511, 5
      %v514 = vsel %vm226, %v509, %v513
      %v516 = vshrl.u32 %v197, 16
      %v518 = vrot.slane %v516, 4
      %v519 = vshll.u32 %v197, 16
      %v521 = vrot.slane %v519, 5
      %v522 = vor.u32 %v518, %v521
      %v523 = vrot.slane %v522, 4
      %v525 = vshll.u32 %v198, 16
      %v527 = vrot.slane %v525, 5
      %v528 = vsel %vm226, %v523, %v527
      %v529 = vshrl.u32 %v198, 16
      %v531 = vrot.slane %v529, 4
      %v532 = vor.u32 %v531, %v527
      %v533 = vrot.slane %v532, 4
      %v535 = vshll.u32 %v199, 16
      %v537 = vrot.slane %v535, 5
      %v538 = vsel %vm226, %v533, %v537
      %v540 = vshrl.u32 %v200, 16
      %v542 = vrot.slane %v540, 4
      %v543 = vshll.u32 %v200, 16
      %v545 = vrot.slane %v543, 5
      %v546 = vor.u32 %v542, %v545
      %v547 = vrot.slane %v546, 4
      %v549 = vshll.u32 %v201, 16
      %v551 = vrot.slane %v549, 5
      %v552 = vsel %vm226, %v547, %v551
      %v553 = vshrl.u32 %v201, 16
      %v555 = vrot.slane %v553, 4
      %v556 = vor.u32 %v555, %v551
      %v557 = vrot.slane %v556, 4
      %v559 = vshll.u32 %v202, 16
      %v561 = vrot.slane %v559, 5
      %v562 = vsel %vm226, %v557, %v561
      %v564 = vshrl.u32 %v203, 16
      %v566 = vrot.slane %v564, 4
      %v567 = vshll.u32 %v203, 16
      %v569 = vrot.slane %v567, 5
      %v570 = vor.u32 %v566, %v569
      %v571 = vrot.slane %v570, 4
      %v573 = vshll.u32 %v204, 16
      %v575 = vrot.slane %v573, 5
      %v576 = vsel %vm226, %v571, %v575
      %v577 = vshrl.u32 %v204, 16
      %v579 = vrot.slane %v577, 4
      %v580 = vor.u32 %v579, %v575
      %v581 = vrot.slane %v580, 4
      %v583 = vshll.u32 %v205, 16
      %v585 = vrot.slane %v583, 5
      %v586 = vsel %vm226, %v581, %v585
      %v588 = vshrl.u32 %v206, 16
      %v590 = vrot.slane %v588, 4
      %v591 = vshll.u32 %v206, 16
      %v593 = vrot.slane %v591, 5
      %v594 = vor.u32 %v590, %v593
      %v595 = vrot.slane %v594, 4
      %v597 = vshll.u32 %v207, 16
      %v599 = vrot.slane %v597, 5
      %v600 = vsel %vm226, %v595, %v599
      %v601 = vshrl.u32 %v207, 16
      %v603 = vrot.slane %v601, 4
      %v604 = vor.u32 %v603, %v599
      %v605 = vrot.slane %v604, 4
      %v607 = vshll.u32 %v208, 16
      %v609 = vrot.slane %v607, 5
      %v610 = vsel %vm226, %v605, %v609
      %v611 = vunpack.c.l.b16 %v240
      %v612 = vunpack.c.l.b16 %v250
      %v613 = vunpack.c.l.b16 %v264
      %v614 = vunpack.c.l.b16 %v274
      %v615 = vunpack.c.l.b16 %v288
      %v616 = vunpack.c.l.b16 %v298
      %v617 = vunpack.c.l.b16 %v312
      %v618 = vunpack.c.l.b16 %v322
      %v619 = vunpack.c.l.b16 %v336
      %v620 = vunpack.c.l.b16 %v346
      %v621 = vunpack.c.l.b16 %v360
      %v622 = vunpack.c.l.b16 %v370
      %v623 = vunpack.c.l.b16 %v384
      %v624 = vunpack.c.l.b16 %v394
      %v625 = vunpack.c.l.b16 %v408
      %v626 = vunpack.c.l.b16 %v418
      %v627 = vunpack.c.l.b16 %v432
      %v628 = vunpack.c.l.b16 %v442
      %v629 = vunpack.c.l.b16 %v456
      %v630 = vunpack.c.l.b16 %v466
      %v631 = vunpack.c.l.b16 %v480
      %v632 = vunpack.c.l.b16 %v490
      %v633 = vunpack.c.l.b16 %v504
      %v634 = vunpack.c.l.b16 %v514
      %v635 = vunpack.c.l.b16 %v528
      %v636 = vunpack.c.l.b16 %v538
      %v637 = vunpack.c.l.b16 %v552
      %v638 = vunpack.c.l.b16 %v562
      %v639 = vunpack.c.l.b16 %v576
      %v640 = vunpack.c.l.b16 %v586
      %v641 = vunpack.c.l.b16 %v600
      %v642 = vunpack.c.l.b16 %v610
      %v643 = vpack.c.b16 %v612, %v611
      %v644 = vpack.c.b16 %v614, %v613
      %v645 = vpack.c.b16 %v616, %v615
      %v646 = vpack.c.b16 %v618, %v617
      %v647 = vpack.c.b16 %v620, %v619
      %v648 = vpack.c.b16 %v622, %v621
      %v649 = vpack.c.b16 %v624, %v623
      %v650 = vpack.c.b16 %v626, %v625
      %v651 = vpack.c.b16 %v628, %v627
      %v652 = vpack.c.b16 %v630, %v629
      %v653 = vpack.c.b16 %v632, %v631
      %v654 = vpack.c.b16 %v634, %v633
      %v655 = vpack.c.b16 %v636, %v635
      %v656 = vpack.c.b16 %v638, %v637
      %v657 = vpack.c.b16 %v640, %v639
      %v658 = vpack.c.b16 %v642, %v641
      %vm659 = vcmask 31744
      %v661 = vsel %vm659, %v643, 0
      %v664 = vsel %vm659, %v644, 0
      %v667 = vsel %vm659, %v645, 0
      %v670 = vsel %vm659, %v646, 0
      %v673 = vsel %vm659, %v647, 0
      %v676 = vsel %vm659, %v648, 0
      %v679 = vsel %vm659, %v649, 0
      %v682 = vsel %vm659, %v650, 0
      %v685 = vsel %vm659, %v651, 0
      %v688 = vsel %vm659, %v652, 0
      %v691 = vsel %vm659, %v653, 0
      %v694 = vsel %vm659, %v654, 0
      %v697 = vsel %vm659, %v655, 0
      %v700 = vsel %vm659, %v656, 0
      %v703 = vsel %vm659, %v657, 0
      %v706 = vsel %vm659, %v658, 0
      %vm708 = vcmask 1041408
      %v710 = vsel %vm708, %v216, 0
      %712 = vmatprep.subr.bf16.mxu0 0
      %713 = vmatpush1.bf16.msra.mxu0 %v710
      %714 = vmatprep.subr.bf16.mxu0 0
      %715 = vmatpush1.bf16.msra.mxu0 0
      %716 = vmatprep.subr.bf16.mxu0 0
      %717 = vmatpush1.bf16.msra.mxu0 0
      %718 = vmatprep.subr.bf16.mxu0 0
      %719 = vmatpush1.bf16.msra.mxu0 0
      %720 = vmatprep.subr.bf16.mxu0 0
      %721 = vmatpush1.bf16.msra.mxu0 0
      %722 = vmatprep.subr.bf16.mxu0 0
      %723 = vmatpush1.bf16.msra.mxu0 0
      %724 = vmatprep.subr.bf16.mxu0 0
      %725 = vmatpush1.bf16.msra.mxu0 0
      %726 = vmatprep.subr.bf16.mxu0 0
      %727 = vmatpush1.bf16.msra.mxu0 0
      %728 = vmatprep.subr.bf16.mxu0 0
      %729 = vmatpush1.bf16.msra.mxu0 0
      %730 = vmatprep.subr.bf16.mxu0 0
      %731 = vmatpush1.bf16.msra.mxu0 0
      %732 = vmatprep.subr.bf16.mxu0 0
      %733 = vmatpush1.bf16.msra.mxu0 0
      %734 = vmatprep.subr.bf16.mxu0 0
      %735 = vmatpush1.bf16.msra.mxu0 0
      %736 = vmatprep.subr.bf16.mxu0 0
      %737 = vmatpush1.bf16.msra.mxu0 0
      %738 = vmatprep.subr.bf16.mxu0 0
      %739 = vmatpush1.bf16.msra.mxu0 0
      %740 = vmatprep.subr.bf16.mxu0 0
      %741 = vmatpush1.bf16.msra.mxu0 0
      %742 = vmatprep.subr.bf16.mxu0 0
      %743 = vmatpush1.bf16.msra.mxu0 0
      %744 = vmatprep.mubr.bf16.mxu0 0
      %745 = vmatmul.mubr.bf16.gmra.mrb[0].mxu0 %v661
      %v746 = vpop.f32.mrb[0].mxu0
      %v747 = vadd.f32 0.0, %v746
      %v748 = vpop.f32.mrb[0].mxu0
      %v749 = vpop.f32.mrb[0].mxu0
      %v750 = vadd.f32 0.0, %v749
      %v751 = vpop.f32.mrb[0].mxu0
      %752 = vmatprep.mubr.bf16.mxu0 0
      %753 = vmatmul.mubr.bf16.gmra.mrb[0].mxu0 %v664
      %v754 = vpop.f32.mrb[0].mxu0
      %v755 = vadd.f32 0.0, %v754
      %v756 = vpop.f32.mrb[0].mxu0
      %v757 = vpop.f32.mrb[0].mxu0
      %v758 = vadd.f32 0.0, %v757
      %v759 = vpop.f32.mrb[0].mxu0
      %760 = vmatprep.mubr.bf16.mxu0 0
      %761 = vmatmul.mubr.bf16.gmra.mrb[0].mxu0 %v667
      %v762 = vpop.f32.mrb[0].mxu0
      %v763 = vadd.f32 0.0, %v762
      %v764 = vpop.f32.mrb[0].mxu0
      %v765 = vpop.f32.mrb[0].mxu0
      %v766 = vadd.f32 0.0, %v765
      %v767 = vpop.f32.mrb[0].mxu0
      %768 = vmatprep.mubr.bf16.mxu0 0
      %769 = vmatmul.mubr.bf16.gmra.mrb[0].mxu0 %v670
      %v770 = vpop.f32.mrb[0].mxu0
      %v771 = vadd.f32 0.0, %v770
      %v772 = vpop.f32.mrb[0].mxu0
      %v773 = vpop.f32.mrb[0].mxu0
      %v774 = vadd.f32 0.0, %v773
      %v775 = vpop.f32.mrb[0].mxu0
      %776 = vmatprep.mubr.bf16.mxu0 0
      %777 = vmatmul.mubr.bf16.gmra.mrb[0].mxu0 %v673
      %v778 = vpop.f32.mrb[0].mxu0
      %v779 = vadd.f32 0.0, %v778
      %v780 = vpop.f32.mrb[0].mxu0
      %v781 = vpop.f32.mrb[0].mxu0
      %v782 = vadd.f32 0.0, %v781
      %v783 = vpop.f32.mrb[0].mxu0
      %784 = vmatprep.mubr.bf16.mxu0 0
      %785 = vmatmul.mubr.bf16.gmra.mrb[0].mxu0 %v676
      %v786 = vpop.f32.mrb[0].mxu0
      %v787 = vadd.f32 0.0, %v786
      %v788 = vpop.f32.mrb[0].mxu0
      %v789 = vpop.f32.mrb[0].mxu0
      %v790 = vadd.f32 0.0, %v789
      %v791 = vpop.f32.mrb[0].mxu0
      %792 = vmatprep.mubr.bf16.mxu0 0
      %793 = vmatmul.mubr.bf16.gmra.mrb[0].mxu0 %v679
      %v794 = vpop.f32.mrb[0].mxu0
      %v795 = vadd.f32 0.0, %v794
      %v796 = vpop.f32.mrb[0].mxu0
      %v797 = vpop.f32.mrb[0].mxu0
      %v798 = vadd.f32 0.0, %v797
      %v799 = vpop.f32.mrb[0].mxu0
      %800 = vmatprep.mubr.bf16.mxu0 0
      %801 = vmatmul.mubr.bf16.gmra.mrb[0].mxu0 %v682
      %v802 = vpop.f32.mrb[0].mxu0
      %v803 = vadd.f32 0.0, %v802
      %v804 = vpop.f32.mrb[0].mxu0
      %v805 = vpop.f32.mrb[0].mxu0
      %v806 = vadd.f32 0.0, %v805
      %v807 = vpop.f32.mrb[0].mxu0
      %808 = vmatprep.mubr.bf16.mxu0 0
      %809 = vmatmul.mubr.bf16.gmra.mrb[0].mxu0 %v685
      %v810 = vpop.f32.mrb[0].mxu0
      %v811 = vadd.f32 0.0, %v810
      %v812 = vpop.f32.mrb[0].mxu0
      %v813 = vpop.f32.mrb[0].mxu0
      %v814 = vadd.f32 0.0, %v813
      %v815 = vpop.f32.mrb[0].mxu0
      %816 = vmatprep.mubr.bf16.mxu0 0
      %817 = vmatmul.mubr.bf16.gmra.mrb[0].mxu0 %v688
      %v818 = vpop.f32.mrb[0].mxu0
      %v819 = vadd.f32 0.0, %v818
      %v820 = vpop.f32.mrb[0].mxu0
      %v821 = vpop.f32.mrb[0].mxu0
      %v822 = vadd.f32 0.0, %v821
      %v823 = vpop.f32.mrb[0].mxu0
      %824 = vmatprep.mubr.bf16.mxu0 0
      %825 = vmatmul.mubr.bf16.gmra.mrb[0].mxu0 %v691
      %v826 = vpop.f32.mrb[0].mxu0
      %v827 = vadd.f32 0.0, %v826
      %v828 = vpop.f32.mrb[0].mxu0
      %v829 = vpop.f32.mrb[0].mxu0
      %v830 = vadd.f32 0.0, %v829
      %v831 = vpop.f32.mrb[0].mxu0
      %832 = vmatprep.mubr.bf16.mxu0 0
      %833 = vmatmul.mubr.bf16.gmra.mrb[0].mxu0 %v694
      %v834 = vpop.f32.mrb[0].mxu0
      %v835 = vadd.f32 0.0, %v834
      %v836 = vpop.f32.mrb[0].mxu0
      %v837 = vpop.f32.mrb[0].mxu0
      %v838 = vadd.f32 0.0, %v837
      %v839 = vpop.f32.mrb[0].mxu0
      %840 = vmatprep.mubr.bf16.mxu0 0
      %841 = vmatmul.mubr.bf16.gmra.mrb[0].mxu0 %v697
      %v842 = vpop.f32.mrb[0].mxu0
      %v843 = vadd.f32 0.0, %v842
      %v844 = vpop.f32.mrb[0].mxu0
      %v845 = vpop.f32.mrb[0].mxu0
      %v846 = vadd.f32 0.0, %v845
      %v847 = vpop.f32.mrb[0].mxu0
      %848 = vmatprep.mubr.bf16.mxu0 0
      %849 = vmatmul.mubr.bf16.gmra.mrb[0].mxu0 %v700
      %v850 = vpop.f32.mrb[0].mxu0
      %v851 = vadd.f32 0.0, %v850
      %v852 = vpop.f32.mrb[0].mxu0
      %v853 = vpop.f32.mrb[0].mxu0
      %v854 = vadd.f32 0.0, %v853
      %v855 = vpop.f32.mrb[0].mxu0
      %856 = vmatprep.mubr.bf16.mxu0 0
      %857 = vmatmul.mubr.bf16.gmra.mrb[0].mxu0 %v703
      %v858 = vpop.f32.mrb[0].mxu0
      %v859 = vadd.f32 0.0, %v858
      %v860 = vpop.f32.mrb[0].mxu0
      %v861 = vpop.f32.mrb[0].mxu0
      %v862 = vadd.f32 0.0, %v861
      %v863 = vpop.f32.mrb[0].mxu0
      %864 = vmatprep.mubr.bf16.mxu0 0
      %865 = vmatmul.mubr.bf16.gmra.mrb[0].mxu0 %v706
      %v866 = vpop.f32.mrb[0].mxu0
      %v867 = vadd.f32 0.0, %v866
      %v868 = vpop.f32.mrb[0].mxu0
      %v869 = vpop.f32.mrb[0].mxu0
      %v870 = vadd.f32 0.0, %v869
      %v871 = vpop.f32.mrb[0].mxu0
      %872 = vdwg.mxu0
      %v905 = vunpack.c.l.b16 %v161
      %v906 = vunpack.c.l.b16 %v162
      %v907 = vunpack.c.l.b16 %v164
      %v908 = vunpack.c.l.b16 %v165
      %v909 = vunpack.c.l.b16 %v167
      %v910 = vunpack.c.l.b16 %v168
      %v911 = vunpack.c.l.b16 %v170
      %v912 = vunpack.c.l.b16 %v171
      %v913 = vunpack.c.l.b16 %v173
      %v914 = vunpack.c.l.b16 %v174
      %v915 = vunpack.c.l.b16 %v176
      %v916 = vunpack.c.l.b16 %v177
      %v917 = vunpack.c.l.b16 %v179
      %v918 = vunpack.c.l.b16 %v180
      %v919 = vunpack.c.l.b16 %v182
      %v920 = vunpack.c.l.b16 %v183
      %v921 = vunpack.c.l.b16 %v185
      %v922 = vunpack.c.l.b16 %v186
      %v923 = vunpack.c.l.b16 %v188
      %v924 = vunpack.c.l.b16 %v189
      %v925 = vunpack.c.l.b16 %v191
      %v926 = vunpack.c.l.b16 %v192
      %v927 = vunpack.c.l.b16 %v194
      %v928 = vunpack.c.l.b16 %v195
      %v929 = vunpack.c.l.b16 %v197
      %v930 = vunpack.c.l.b16 %v198
      %v931 = vunpack.c.l.b16 %v200
      %v932 = vunpack.c.l.b16 %v201
      %v933 = vunpack.c.l.b16 %v203
      %v934 = vunpack.c.l.b16 %v204
      %v935 = vunpack.c.l.b16 %v206
      %v936 = vunpack.c.l.b16 %v207
      %v937 = vpack.c.b16 %v906, %v905
      %v938 = vpack.c.b16 %v908, %v907
      %v939 = vpack.c.b16 %v910, %v909
      %v940 = vpack.c.b16 %v912, %v911
      %v941 = vpack.c.b16 %v914, %v913
      %v942 = vpack.c.b16 %v916, %v915
      %v943 = vpack.c.b16 %v918, %v917
      %v944 = vpack.c.b16 %v920, %v919
      %v945 = vpack.c.b16 %v922, %v921
      %v946 = vpack.c.b16 %v924, %v923
      %v947 = vpack.c.b16 %v926, %v925
      %v948 = vpack.c.b16 %v928, %v927
      %v949 = vpack.c.b16 %v930, %v929
      %v950 = vpack.c.b16 %v932, %v931
      %v951 = vpack.c.b16 %v934, %v933
      %v952 = vpack.c.b16 %v936, %v935
      %v954 = vsel %vm659, %v937, 0
      %v957 = vsel %vm659, %v938, 0
      %v960 = vsel %vm659, %v939, 0
      %v963 = vsel %vm659, %v940, 0
      %v966 = vsel %vm659, %v941, 0
      %v969 = vsel %vm659, %v942, 0
      %v972 = vsel %vm659, %v943, 0
      %v975 = vsel %vm659, %v944, 0
      %v978 = vsel %vm659, %v945, 0
      %v981 = vsel %vm659, %v946, 0
      %v984 = vsel %vm659, %v947, 0
      %v987 = vsel %vm659, %v948, 0
      %v990 = vsel %vm659, %v949, 0
      %v993 = vsel %vm659, %v950, 0
      %v996 = vsel %vm659, %v951, 0
      %v999 = vsel %vm659, %v952, 0
      %v1002 = vsel %vm708, %v215, 0
      %1004 = vmatprep.subr.bf16.mxu0 0
      %1005 = vmatpush1.bf16.msra.mxu0 %v1002
      %1006 = vmatprep.subr.bf16.mxu0 0
      %1007 = vmatpush1.bf16.msra.mxu0 0
      %1008 = vmatprep.subr.bf16.mxu0 0
      %1009 = vmatpush1.bf16.msra.mxu0 0
      %1010 = vmatprep.subr.bf16.mxu0 0
      %1011 = vmatpush1.bf16.msra.mxu0 0
      %1012 = vmatprep.subr.bf16.mxu0 0
      %1013 = vmatpush1.bf16.msra.mxu0 0
      %1014 = vmatprep.subr.bf16.mxu0 0
      %1015 = vmatpush1.bf16.msra.mxu0 0
      %1016 = vmatprep.subr.bf16.mxu0 0
      %1017 = vmatpush1.bf16.msra.mxu0 0
      %1018 = vmatprep.subr.bf16.mxu0 0
      %1019 = vmatpush1.bf16.msra.mxu0 0
      %1020 = vmatprep.subr.bf16.mxu0 0
      %1021 = vmatpush1.bf16.msra.mxu0 0
      %1022 = vmatprep.subr.bf16.mxu0 0
      %1023 = vmatpush1.bf16.msra.mxu0 0
      %1024 = vmatprep.subr.bf16.mxu0 0
      %1025 = vmatpush1.bf16.msra.mxu0 0
      %1026 = vmatprep.subr.bf16.mxu0 0
      %1027 = vmatpush1.bf16.msra.mxu0 0
      %1028 = vmatprep.subr.bf16.mxu0 0
      %1029 = vmatpush1.bf16.msra.mxu0 0
      %1030 = vmatprep.subr.bf16.mxu0 0
      %1031 = vmatpush1.bf16.msra.mxu0 0
      %1032 = vmatprep.subr.bf16.mxu0 0
      %1033 = vmatpush1.bf16.msra.mxu0 0
      %1034 = vmatprep.subr.bf16.mxu0 0
      %1035 = vmatpush1.bf16.msra.mxu0 0
      %1036 = vmatprep.mubr.bf16.mxu0 0
      %1037 = vmatmul.mubr.bf16.gmra.mrb[0].mxu0 %v954
      %v1038 = vpop.f32.mrb[0].mxu0
      %v1039 = vadd.f32 %v747, %v1038
      %v1040 = vpop.f32.mrb[0].mxu0
      %v1041 = vpop.f32.mrb[0].mxu0
      %v1042 = vadd.f32 %v750, %v1041
      %v1043 = vpop.f32.mrb[0].mxu0
      %1044 = vmatprep.mubr.bf16.mxu0 0
      %1045 = vmatmul.mubr.bf16.gmra.mrb[0].mxu0 %v957
      %v1046 = vpop.f32.mrb[0].mxu0
      %v1047 = vadd.f32 %v755, %v1046
      %v1048 = vpop.f32.mrb[0].mxu0
      %v1049 = vpop.f32.mrb[0].mxu0
      %v1050 = vadd.f32 %v758, %v1049
      %v1051 = vpop.f32.mrb[0].mxu0
      %1052 = vmatprep.mubr.bf16.mxu0 0
      %1053 = vmatmul.mubr.bf16.gmra.mrb[0].mxu0 %v960
      %v1054 = vpop.f32.mrb[0].mxu0
      %v1055 = vadd.f32 %v763, %v1054
      %v1056 = vpop.f32.mrb[0].mxu0
      %v1057 = vpop.f32.mrb[0].mxu0
      %v1058 = vadd.f32 %v766, %v1057
      %v1059 = vpop.f32.mrb[0].mxu0
      %1060 = vmatprep.mubr.bf16.mxu0 0
      %1061 = vmatmul.mubr.bf16.gmra.mrb[0].mxu0 %v963
      %v1062 = vpop.f32.mrb[0].mxu0
      %v1063 = vadd.f32 %v771, %v1062
      %v1064 = vpop.f32.mrb[0].mxu0
      %v1065 = vpop.f32.mrb[0].mxu0
      %v1066 = vadd.f32 %v774, %v1065
      %v1067 = vpop.f32.mrb[0].mxu0
      %1068 = vmatprep.mubr.bf16.mxu0 0
      %1069 = vmatmul.mubr.bf16.gmra.mrb[0].mxu0 %v966
      %v1070 = vpop.f32.mrb[0].mxu0
      %v1071 = vadd.f32 %v779, %v1070
      %v1072 = vpop.f32.mrb[0].mxu0
      %v1073 = vpop.f32.mrb[0].mxu0
      %v1074 = vadd.f32 %v782, %v1073
      %v1075 = vpop.f32.mrb[0].mxu0
      %1076 = vmatprep.mubr.bf16.mxu0 0
      %1077 = vmatmul.mubr.bf16.gmra.mrb[0].mxu0 %v969
      %v1078 = vpop.f32.mrb[0].mxu0
      %v1079 = vadd.f32 %v787, %v1078
      %v1080 = vpop.f32.mrb[0].mxu0
      %v1081 = vpop.f32.mrb[0].mxu0
      %v1082 = vadd.f32 %v790, %v1081
      %v1083 = vpop.f32.mrb[0].mxu0
      %1084 = vmatprep.mubr.bf16.mxu0 0
      %1085 = vmatmul.mubr.bf16.gmra.mrb[0].mxu0 %v972
      %v1086 = vpop.f32.mrb[0].mxu0
      %v1087 = vadd.f32 %v795, %v1086
      %v1088 = vpop.f32.mrb[0].mxu0
      %v1089 = vpop.f32.mrb[0].mxu0
      %v1090 = vadd.f32 %v798, %v1089
      %v1091 = vpop.f32.mrb[0].mxu0
      %1092 = vmatprep.mubr.bf16.mxu0 0
      %1093 = vmatmul.mubr.bf16.gmra.mrb[0].mxu0 %v975
      %v1094 = vpop.f32.mrb[0].mxu0
      %v1095 = vadd.f32 %v803, %v1094
      %v1096 = vpop.f32.mrb[0].mxu0
      %v1097 = vpop.f32.mrb[0].mxu0
      %v1098 = vadd.f32 %v806, %v1097
      %v1099 = vpop.f32.mrb[0].mxu0
      %1100 = vmatprep.mubr.bf16.mxu0 0
      %1101 = vmatmul.mubr.bf16.gmra.mrb[0].mxu0 %v978
      %v1102 = vpop.f32.mrb[0].mxu0
      %v1103 = vadd.f32 %v811, %v1102
      %v1104 = vpop.f32.mrb[0].mxu0
      %v1105 = vpop.f32.mrb[0].mxu0
      %v1106 = vadd.f32 %v814, %v1105
      %v1107 = vpop.f32.mrb[0].mxu0
      %1108 = vmatprep.mubr.bf16.mxu0 0
      %1109 = vmatmul.mubr.bf16.gmra.mrb[0].mxu0 %v981
      %v1110 = vpop.f32.mrb[0].mxu0
      %v1111 = vadd.f32 %v819, %v1110
      %v1112 = vpop.f32.mrb[0].mxu0
      %v1113 = vpop.f32.mrb[0].mxu0
      %v1114 = vadd.f32 %v822, %v1113
      %v1115 = vpop.f32.mrb[0].mxu0
      %1116 = vmatprep.mubr.bf16.mxu0 0
      %1117 = vmatmul.mubr.bf16.gmra.mrb[0].mxu0 %v984
      %v1118 = vpop.f32.mrb[0].mxu0
      %v1119 = vadd.f32 %v827, %v1118
      %v1120 = vpop.f32.mrb[0].mxu0
      %v1121 = vpop.f32.mrb[0].mxu0
      %v1122 = vadd.f32 %v830, %v1121
      %v1123 = vpop.f32.mrb[0].mxu0
      %1124 = vmatprep.mubr.bf16.mxu0 0
      %1125 = vmatmul.mubr.bf16.gmra.mrb[0].mxu0 %v987
      %v1126 = vpop.f32.mrb[0].mxu0
      %v1127 = vadd.f32 %v835, %v1126
      %v1128 = vpop.f32.mrb[0].mxu0
      %v1129 = vpop.f32.mrb[0].mxu0
      %v1130 = vadd.f32 %v838, %v1129
      %v1131 = vpop.f32.mrb[0].mxu0
      %1132 = vmatprep.mubr.bf16.mxu0 0
      %1133 = vmatmul.mubr.bf16.gmra.mrb[0].mxu0 %v990
      %v1134 = vpop.f32.mrb[0].mxu0
      %v1135 = vadd.f32 %v843, %v1134
      %v1136 = vpop.f32.mrb[0].mxu0
      %v1137 = vpop.f32.mrb[0].mxu0
      %v1138 = vadd.f32 %v846, %v1137
      %v1139 = vpop.f32.mrb[0].mxu0
      %1140 = vmatprep.mubr.bf16.mxu0 0
      %1141 = vmatmul.mubr.bf16.gmra.mrb[0].mxu0 %v993
      %v1142 = vpop.f32.mrb[0].mxu0
      %v1143 = vadd.f32 %v851, %v1142
      %v1144 = vpop.f32.mrb[0].mxu0
      %v1145 = vpop.f32.mrb[0].mxu0
      %v1146 = vadd.f32 %v854, %v1145
      %v1147 = vpop.f32.mrb[0].mxu0
      %1148 = vmatprep.mubr.bf16.mxu0 0
      %1149 = vmatmul.mubr.bf16.gmra.mrb[0].mxu0 %v996
      %v1150 = vpop.f32.mrb[0].mxu0
      %v1151 = vadd.f32 %v859, %v1150
      %v1152 = vpop.f32.mrb[0].mxu0
      %v1153 = vpop.f32.mrb[0].mxu0
      %v1154 = vadd.f32 %v862, %v1153
      %v1155 = vpop.f32.mrb[0].mxu0
      %1156 = vmatprep.mubr.bf16.mxu0 0
      %1157 = vmatmul.mubr.bf16.gmra.mrb[0].mxu0 %v999
      %v1158 = vpop.f32.mrb[0].mxu0
      %v1159 = vadd.f32 %v867, %v1158
      %v1160 = vpop.f32.mrb[0].mxu0
      %v1161 = vpop.f32.mrb[0].mxu0
      %v1162 = vadd.f32 %v870, %v1161
      %v1163 = vpop.f32.mrb[0].mxu0
      %1164 = vdwg.mxu0
      %vm1181 = vcmask 1042432
      %vm1182 = vcmask 1046532
      %vm1183 = vmor %vm1181, %vm1182
      %v1184 = vrot.slane %v161, 5
      %v1185 = vrot.slane %v1184, 4
      %v1186 = vrot.slane %v162, 5
      %v1187 = vsel %vm1183, %v1185, %v1186
      %v1188 = vrot.slane %v1186, 4
      %v1189 = vrot.slane %v163, 5
      %v1190 = vsel %vm1183, %v1188, %v1189
      %v1191 = vrot.slane %v164, 5
      %v1192 = vrot.slane %v1191, 4
      %v1193 = vrot.slane %v165, 5
      %v1194 = vsel %vm1183, %v1192, %v1193
      %v1195 = vrot.slane %v1193, 4
      %v1196 = vrot.slane %v166, 5
      %v1197 = vsel %vm1183, %v1195, %v1196
      %v1198 = vrot.slane %v167, 5
      %v1199 = vrot.slane %v1198, 4
      %v1200 = vrot.slane %v168, 5
      %v1201 = vsel %vm1183, %v1199, %v1200
      %v1202 = vrot.slane %v1200, 4
      %v1203 = vrot.slane %v169, 5
      %v1204 = vsel %vm1183, %v1202, %v1203
      %v1205 = vrot.slane %v170, 5
      %v1206 = vrot.slane %v1205, 4
      %v1207 = vrot.slane %v171, 5
      %v1208 = vsel %vm1183, %v1206, %v1207
      %v1209 = vrot.slane %v1207, 4
      %v1210 = vrot.slane %v172, 5
      %v1211 = vsel %vm1183, %v1209, %v1210
      %v1212 = vrot.slane %v173, 5
      %v1213 = vrot.slane %v1212, 4
      %v1214 = vrot.slane %v174, 5
      %v1215 = vsel %vm1183, %v1213, %v1214
      %v1216 = vrot.slane %v1214, 4
      %v1217 = vrot.slane %v175, 5
      %v1218 = vsel %vm1183, %v1216, %v1217
      %v1219 = vrot.slane %v176, 5
      %v1220 = vrot.slane %v1219, 4
      %v1221 = vrot.slane %v177, 5
      %v1222 = vsel %vm1183, %v1220, %v1221
      %v1223 = vrot.slane %v1221, 4
      %v1224 = vrot.slane %v178, 5
      %v1225 = vsel %vm1183, %v1223, %v1224
      %v1226 = vrot.slane %v179, 5
      %v1227 = vrot.slane %v1226, 4
      %v1228 = vrot.slane %v180, 5
      %v1229 = vsel %vm1183, %v1227, %v1228
      %v1230 = vrot.slane %v1228, 4
      %v1231 = vrot.slane %v181, 5
      %v1232 = vsel %vm1183, %v1230, %v1231
      %v1233 = vrot.slane %v182, 5
      %v1234 = vrot.slane %v1233, 4
      %v1235 = vrot.slane %v183, 5
      %v1236 = vsel %vm1183, %v1234, %v1235
      %v1237 = vrot.slane %v1235, 4
      %v1238 = vrot.slane %v184, 5
      %v1239 = vsel %vm1183, %v1237, %v1238
      %v1240 = vrot.slane %v185, 5
      %v1241 = vrot.slane %v1240, 4
      %v1242 = vrot.slane %v186, 5
      %v1243 = vsel %vm1183, %v1241, %v1242
      %v1244 = vrot.slane %v1242, 4
      %v1245 = vrot.slane %v187, 5
      %v1246 = vsel %vm1183, %v1244, %v1245
      %v1247 = vrot.slane %v188, 5
      %v1248 = vrot.slane %v1247, 4
      %v1249 = vrot.slane %v189, 5
      %v1250 = vsel %vm1183, %v1248, %v1249
      %v1251 = vrot.slane %v1249, 4
      %v1252 = vrot.slane %v190, 5
      %v1253 = vsel %vm1183, %v1251, %v1252
      %v1254 = vrot.slane %v191, 5
      %v1255 = vrot.slane %v1254, 4
      %v1256 = vrot.slane %v192, 5
      %v1257 = vsel %vm1183, %v1255, %v1256
      %v1258 = vrot.slane %v1256, 4
      %v1259 = vrot.slane %v193, 5
      %v1260 = vsel %vm1183, %v1258, %v1259
      %v1261 = vrot.slane %v194, 5
      %v1262 = vrot.slane %v1261, 4
      %v1263 = vrot.slane %v195, 5
      %v1264 = vsel %vm1183, %v1262, %v1263
      %v1265 = vrot.slane %v1263, 4
      %v1266 = vrot.slane %v196, 5
      %v1267 = vsel %vm1183, %v1265, %v1266
      %v1268 = vrot.slane %v197, 5
      %v1269 = vrot.slane %v1268, 4
      %v1270 = vrot.slane %v198, 5
      %v1271 = vsel %vm1183, %v1269, %v1270
      %v1272 = vrot.slane %v1270, 4
      %v1273 = vrot.slane %v199, 5
      %v1274 = vsel %vm1183, %v1272, %v1273
      %v1275 = vrot.slane %v200, 5
      %v1276 = vrot.slane %v1275, 4
      %v1277 = vrot.slane %v201, 5
      %v1278 = vsel %vm1183, %v1276, %v1277
      %v1279 = vrot.slane %v1277, 4
      %v1280 = vrot.slane %v202, 5
      %v1281 = vsel %vm1183, %v1279, %v1280
      %v1282 = vrot.slane %v203, 5
      %v1283 = vrot.slane %v1282, 4
      %v1284 = vrot.slane %v204, 5
      %v1285 = vsel %vm1183, %v1283, %v1284
      %v1286 = vrot.slane %v1284, 4
      %v1287 = vrot.slane %v205, 5
      %v1288 = vsel %vm1183, %v1286, %v1287
      %v1289 = vrot.slane %v206, 5
      %v1290 = vrot.slane %v1289, 4
      %v1291 = vrot.slane %v207, 5
      %v1292 = vsel %vm1183, %v1290, %v1291
      %v1293 = vrot.slane %v1291, 4
      %v1294 = vrot.slane %v208, 5
      %v1295 = vsel %vm1183, %v1293, %v1294
      %v1296 = vunpack.c.l.b16 %v1187
      %v1297 = vunpack.c.l.b16 %v1190
      %v1298 = vunpack.c.l.b16 %v1194
      %v1299 = vunpack.c.l.b16 %v1197
      %v1300 = vunpack.c.l.b16 %v1201
      %v1301 = vunpack.c.l.b16 %v1204
      %v1302 = vunpack.c.l.b16 %v1208
      %v1303 = vunpack.c.l.b16 %v1211
      %v1304 = vunpack.c.l.b16 %v1215
      %v1305 = vunpack.c.l.b16 %v1218
      %v1306 = vunpack.c.l.b16 %v1222
      %v1307 = vunpack.c.l.b16 %v1225
      %v1308 = vunpack.c.l.b16 %v1229
      %v1309 = vunpack.c.l.b16 %v1232
      %v1310 = vunpack.c.l.b16 %v1236
      %v1311 = vunpack.c.l.b16 %v1239
      %v1312 = vunpack.c.l.b16 %v1243
      %v1313 = vunpack.c.l.b16 %v1246
      %v1314 = vunpack.c.l.b16 %v1250
      %v1315 = vunpack.c.l.b16 %v1253
      %v1316 = vunpack.c.l.b16 %v1257
      %v1317 = vunpack.c.l.b16 %v1260
      %v1318 = vunpack.c.l.b16 %v1264
      %v1319 = vunpack.c.l.b16 %v1267
      %v1320 = vunpack.c.l.b16 %v1271
      %v1321 = vunpack.c.l.b16 %v1274
      %v1322 = vunpack.c.l.b16 %v1278
      %v1323 = vunpack.c.l.b16 %v1281
      %v1324 = vunpack.c.l.b16 %v1285
      %v1325 = vunpack.c.l.b16 %v1288
      %v1326 = vunpack.c.l.b16 %v1292
      %v1327 = vunpack.c.l.b16 %v1295
      %v1328 = vpack.c.b16 %v1297, %v1296
      %v1329 = vpack.c.b16 %v1299, %v1298
      %v1330 = vpack.c.b16 %v1301, %v1300
      %v1331 = vpack.c.b16 %v1303, %v1302
      %v1332 = vpack.c.b16 %v1305, %v1304
      %v1333 = vpack.c.b16 %v1307, %v1306
      %v1334 = vpack.c.b16 %v1309, %v1308
      %v1335 = vpack.c.b16 %v1311, %v1310
      %v1336 = vpack.c.b16 %v1313, %v1312
      %v1337 = vpack.c.b16 %v1315, %v1314
      %v1338 = vpack.c.b16 %v1317, %v1316
      %v1339 = vpack.c.b16 %v1319, %v1318
      %v1340 = vpack.c.b16 %v1321, %v1320
      %v1341 = vpack.c.b16 %v1323, %v1322
      %v1342 = vpack.c.b16 %v1325, %v1324
      %v1343 = vpack.c.b16 %v1327, %v1326
      %v1345 = vsel %vm659, %v1328, 0
      %v1348 = vsel %vm659, %v1329, 0
      %v1351 = vsel %vm659, %v1330, 0
      %v1354 = vsel %vm659, %v1331, 0
      %v1357 = vsel %vm659, %v1332, 0
      %v1360 = vsel %vm659, %v1333, 0
      %v1363 = vsel %vm659, %v1334, 0
      %v1366 = vsel %vm659, %v1335, 0
      %v1369 = vsel %vm659, %v1336, 0
      %v1372 = vsel %vm659, %v1337, 0
      %v1375 = vsel %vm659, %v1338, 0
      %v1378 = vsel %vm659, %v1339, 0
      %v1381 = vsel %vm659, %v1340, 0
      %v1384 = vsel %vm659, %v1341, 0
      %v1387 = vsel %vm659, %v1342, 0
      %v1390 = vsel %vm659, %v1343, 0
      %v1393 = vsel %vm708, %v217, 0
      %1395 = vmatprep.subr.bf16.mxu0 0
      %1396 = vmatpush1.bf16.msra.mxu0 %v1393
      %1397 = vmatprep.subr.bf16.mxu0 0
      %1398 = vmatpush1.bf16.msra.mxu0 0
      %1399 = vmatprep.subr.bf16.mxu0 0
      %1400 = vmatpush1.bf16.msra.mxu0 0
      %1401 = vmatprep.subr.bf16.mxu0 0
      %1402 = vmatpush1.bf16.msra.mxu0 0
      %1403 = vmatprep.subr.bf16.mxu0 0
      %1404 = vmatpush1.bf16.msra.mxu0 0
      %1405 = vmatprep.subr.bf16.mxu0 0
      %1406 = vmatpush1.bf16.msra.mxu0 0
      %1407 = vmatprep.subr.bf16.mxu0 0
      %1408 = vmatpush1.bf16.msra.mxu0 0
      %1409 = vmatprep.subr.bf16.mxu0 0
      %1410 = vmatpush1.bf16.msra.mxu0 0
      %1411 = vmatprep.subr.bf16.mxu0 0
      %1412 = vmatpush1.bf16.msra.mxu0 0
      %1413 = vmatprep.subr.bf16.mxu0 0
      %1414 = vmatpush1.bf16.msra.mxu0 0
      %1415 = vmatprep.subr.bf16.mxu0 0
      %1416 = vmatpush1.bf16.msra.mxu0 0
      %1417 = vmatprep.subr.bf16.mxu0 0
      %1418 = vmatpush1.bf16.msra.mxu0 0
      %1419 = vmatprep.subr.bf16.mxu0 0
      %1420 = vmatpush1.bf16.msra.mxu0 0
      %1421 = vmatprep.subr.bf16.mxu0 0
      %1422 = vmatpush1.bf16.msra.mxu0 0
      %1423 = vmatprep.subr.bf16.mxu0 0
      %1424 = vmatpush1.bf16.msra.mxu0 0
      %1425 = vmatprep.subr.bf16.mxu0 0
      %1426 = vmatpush1.bf16.msra.mxu0 0
      %1427 = vmatprep.mubr.bf16.mxu0 0
      %1428 = vmatmul.mubr.bf16.gmra.mrb[0].mxu0 %v1345
      %v1429 = vpop.f32.mrb[0].mxu0
      %v1430 = vadd.f32 0.0, %v1429
      %v1431 = vpop.f32.mrb[0].mxu0
      %v1432 = vpop.f32.mrb[0].mxu0
      %v1433 = vadd.f32 0.0, %v1432
      %v1434 = vpop.f32.mrb[0].mxu0
      %1435 = vmatprep.mubr.bf16.mxu0 0
      %1436 = vmatmul.mubr.bf16.gmra.mrb[0].mxu0 %v1348
      %v1437 = vpop.f32.mrb[0].mxu0
      %v1438 = vadd.f32 0.0, %v1437
      %v1439 = vpop.f32.mrb[0].mxu0
      %v1440 = vpop.f32.mrb[0].mxu0
      %v1441 = vadd.f32 0.0, %v1440
      %v1442 = vpop.f32.mrb[0].mxu0
      %1443 = vmatprep.mubr.bf16.mxu0 0
      %1444 = vmatmul.mubr.bf16.gmra.mrb[0].mxu0 %v1351
      %v1445 = vpop.f32.mrb[0].mxu0
      %v1446 = vadd.f32 0.0, %v1445
      %v1447 = vpop.f32.mrb[0].mxu0
      %v1448 = vpop.f32.mrb[0].mxu0
      %v1449 = vadd.f32 0.0, %v1448
      %v1450 = vpop.f32.mrb[0].mxu0
      %1451 = vmatprep.mubr.bf16.mxu0 0
      %1452 = vmatmul.mubr.bf16.gmra.mrb[0].mxu0 %v1354
      %v1453 = vpop.f32.mrb[0].mxu0
      %v1454 = vadd.f32 0.0, %v1453
      %v1455 = vpop.f32.mrb[0].mxu0
      %v1456 = vpop.f32.mrb[0].mxu0
      %v1457 = vadd.f32 0.0, %v1456
      %v1458 = vpop.f32.mrb[0].mxu0
      %1459 = vmatprep.mubr.bf16.mxu0 0
      %1460 = vmatmul.mubr.bf16.gmra.mrb[0].mxu0 %v1357
      %v1461 = vpop.f32.mrb[0].mxu0
      %v1462 = vadd.f32 0.0, %v1461
      %v1463 = vpop.f32.mrb[0].mxu0
      %v1464 = vpop.f32.mrb[0].mxu0
      %v1465 = vadd.f32 0.0, %v1464
      %v1466 = vpop.f32.mrb[0].mxu0
      %1467 = vmatprep.mubr.bf16.mxu0 0
      %1468 = vmatmul.mubr.bf16.gmra.mrb[0].mxu0 %v1360
      %v1469 = vpop.f32.mrb[0].mxu0
      %v1470 = vadd.f32 0.0, %v1469
      %v1471 = vpop.f32.mrb[0].mxu0
      %v1472 = vpop.f32.mrb[0].mxu0
      %v1473 = vadd.f32 0.0, %v1472
      %v1474 = vpop.f32.mrb[0].mxu0
      %1475 = vmatprep.mubr.bf16.mxu0 0
      %1476 = vmatmul.mubr.bf16.gmra.mrb[0].mxu0 %v1363
      %v1477 = vpop.f32.mrb[0].mxu0
      %v1478 = vadd.f32 0.0, %v1477
      %v1479 = vpop.f32.mrb[0].mxu0
      %v1480 = vpop.f32.mrb[0].mxu0
      %v1481 = vadd.f32 0.0, %v1480
      %v1482 = vpop.f32.mrb[0].mxu0
      %1483 = vmatprep.mubr.bf16.mxu0 0
      %1484 = vmatmul.mubr.bf16.gmra.mrb[0].mxu0 %v1366
      %v1485 = vpop.f32.mrb[0].mxu0
      %v1486 = vadd.f32 0.0, %v1485
      %v1487 = vpop.f32.mrb[0].mxu0
      %v1488 = vpop.f32.mrb[0].mxu0
      %v1489 = vadd.f32 0.0, %v1488
      %v1490 = vpop.f32.mrb[0].mxu0
      %1491 = vmatprep.mubr.bf16.mxu0 0
      %1492 = vmatmul.mubr.bf16.gmra.mrb[0].mxu0 %v1369
      %v1493 = vpop.f32.mrb[0].mxu0
      %v1494 = vadd.f32 0.0, %v1493
      %v1495 = vpop.f32.mrb[0].mxu0
      %v1496 = vpop.f32.mrb[0].mxu0
      %v1497 = vadd.f32 0.0, %v1496
      %v1498 = vpop.f32.mrb[0].mxu0
      %1499 = vmatprep.mubr.bf16.mxu0 0
      %1500 = vmatmul.mubr.bf16.gmra.mrb[0].mxu0 %v1372
      %v1501 = vpop.f32.mrb[0].mxu0
      %v1502 = vadd.f32 0.0, %v1501
      %v1503 = vpop.f32.mrb[0].mxu0
      %v1504 = vpop.f32.mrb[0].mxu0
      %v1505 = vadd.f32 0.0, %v1504
      %v1506 = vpop.f32.mrb[0].mxu0
      %1507 = vmatprep.mubr.bf16.mxu0 0
      %1508 = vmatmul.mubr.bf16.gmra.mrb[0].mxu0 %v1375
      %v1509 = vpop.f32.mrb[0].mxu0
      %v1510 = vadd.f32 0.0, %v1509
      %v1511 = vpop.f32.mrb[0].mxu0
      %v1512 = vpop.f32.mrb[0].mxu0
      %v1513 = vadd.f32 0.0, %v1512
      %v1514 = vpop.f32.mrb[0].mxu0
      %1515 = vmatprep.mubr.bf16.mxu0 0
      %1516 = vmatmul.mubr.bf16.gmra.mrb[0].mxu0 %v1378
      %v1517 = vpop.f32.mrb[0].mxu0
      %v1518 = vadd.f32 0.0, %v1517
      %v1519 = vpop.f32.mrb[0].mxu0
      %v1520 = vpop.f32.mrb[0].mxu0
      %v1521 = vadd.f32 0.0, %v1520
      %v1522 = vpop.f32.mrb[0].mxu0
      %1523 = vmatprep.mubr.bf16.mxu0 0
      %1524 = vmatmul.mubr.bf16.gmra.mrb[0].mxu0 %v1381
      %v1525 = vpop.f32.mrb[0].mxu0
      %v1526 = vadd.f32 0.0, %v1525
      %v1527 = vpop.f32.mrb[0].mxu0
      %v1528 = vpop.f32.mrb[0].mxu0
      %v1529 = vadd.f32 0.0, %v1528
      %v1530 = vpop.f32.mrb[0].mxu0
      %1531 = vmatprep.mubr.bf16.mxu0 0
      %1532 = vmatmul.mubr.bf16.gmra.mrb[0].mxu0 %v1384
      %v1533 = vpop.f32.mrb[0].mxu0
      %v1534 = vadd.f32 0.0, %v1533
      %v1535 = vpop.f32.mrb[0].mxu0
      %v1536 = vpop.f32.mrb[0].mxu0
      %v1537 = vadd.f32 0.0, %v1536
      %v1538 = vpop.f32.mrb[0].mxu0
      %1539 = vmatprep.mubr.bf16.mxu0 0
      %1540 = vmatmul.mubr.bf16.gmra.mrb[0].mxu0 %v1387
      %v1541 = vpop.f32.mrb[0].mxu0
      %v1542 = vadd.f32 0.0, %v1541
      %v1543 = vpop.f32.mrb[0].mxu0
      %v1544 = vpop.f32.mrb[0].mxu0
      %v1545 = vadd.f32 0.0, %v1544
      %v1546 = vpop.f32.mrb[0].mxu0
      %1547 = vmatprep.mubr.bf16.mxu0 0
      %1548 = vmatmul.mubr.bf16.gmra.mrb[0].mxu0 %v1390
      %v1549 = vpop.f32.mrb[0].mxu0
      %v1550 = vadd.f32 0.0, %v1549
      %v1551 = vpop.f32.mrb[0].mxu0
      %v1552 = vpop.f32.mrb[0].mxu0
      %v1553 = vadd.f32 0.0, %v1552
      %v1554 = vpop.f32.mrb[0].mxu0
      %1555 = vdwg.mxu0
      %v1556 = vadd.f32 %v1039, %v1430
      %v1557 = vadd.f32 %v1042, %v1433
      %v1558 = vadd.f32 %v1047, %v1438
      %v1559 = vadd.f32 %v1050, %v1441
      %v1560 = vadd.f32 %v1055, %v1446
      %v1561 = vadd.f32 %v1058, %v1449
      %v1562 = vadd.f32 %v1063, %v1454
      %v1563 = vadd.f32 %v1066, %v1457
      %v1564 = vadd.f32 %v1071, %v1462
      %v1565 = vadd.f32 %v1074, %v1465
      %v1566 = vadd.f32 %v1079, %v1470
      %v1567 = vadd.f32 %v1082, %v1473
      %v1568 = vadd.f32 %v1087, %v1478
      %v1569 = vadd.f32 %v1090, %v1481
      %v1570 = vadd.f32 %v1095, %v1486
      %v1571 = vadd.f32 %v1098, %v1489
      %v1572 = vadd.f32 %v1103, %v1494
      %v1573 = vadd.f32 %v1106, %v1497
      %v1574 = vadd.f32 %v1111, %v1502
      %v1575 = vadd.f32 %v1114, %v1505
      %v1576 = vadd.f32 %v1119, %v1510
      %v1577 = vadd.f32 %v1122, %v1513
      %v1578 = vadd.f32 %v1127, %v1518
      %v1579 = vadd.f32 %v1130, %v1521
      %v1580 = vadd.f32 %v1135, %v1526
      %v1581 = vadd.f32 %v1138, %v1529
      %v1582 = vadd.f32 %v1143, %v1534
      %v1583 = vadd.f32 %v1146, %v1537
      %v1584 = vadd.f32 %v1151, %v1542
      %v1585 = vadd.f32 %v1154, %v1545
      %v1586 = vadd.f32 %v1159, %v1550
      %v1587 = vadd.f32 %v1162, %v1553
      %v1590 = vunpack.c.l.b16 %v209
      %v1591 = vunpack.c.l.b16 %v210
      %v1592 = vpack.c.b16 %v1591, %v1590
      %v1594 = vsel %vm659, %v1592, 0
      %v1597 = vsel %vm708, %v218, 0
      %1599 = vmatprep.subr.bf16.mxu0 0
      %1600 = vmatpush1.bf16.msra.mxu0 %v1597
      %1601 = vmatprep.subr.bf16.mxu0 0
      %1602 = vmatpush1.bf16.msra.mxu0 0
      %1603 = vmatprep.subr.bf16.mxu0 0
      %1604 = vmatpush1.bf16.msra.mxu0 0
      %1605 = vmatprep.subr.bf16.mxu0 0
      %1606 = vmatpush1.bf16.msra.mxu0 0
      %1607 = vmatprep.subr.bf16.mxu0 0
      %1608 = vmatpush1.bf16.msra.mxu0 0
      %1609 = vmatprep.subr.bf16.mxu0 0
      %1610 = vmatpush1.bf16.msra.mxu0 0
      %1611 = vmatprep.subr.bf16.mxu0 0
      %1612 = vmatpush1.bf16.msra.mxu0 0
      %1613 = vmatprep.subr.bf16.mxu0 0
      %1614 = vmatpush1.bf16.msra.mxu0 0
      %1615 = vmatprep.subr.bf16.mxu0 0
      %1616 = vmatpush1.bf16.msra.mxu0 0
      %1617 = vmatprep.subr.bf16.mxu0 0
      %1618 = vmatpush1.bf16.msra.mxu0 0
      %1619 = vmatprep.subr.bf16.mxu0 0
      %1620 = vmatpush1.bf16.msra.mxu0 0
      %1621 = vmatprep.subr.bf16.mxu0 0
      %1622 = vmatpush1.bf16.msra.mxu0 0
      %1623 = vmatprep.subr.bf16.mxu0 0
      %1624 = vmatpush1.bf16.msra.mxu0 0
      %1625 = vmatprep.subr.bf16.mxu0 0
      %1626 = vmatpush1.bf16.msra.mxu0 0
      %1627 = vmatprep.subr.bf16.mxu0 0
      %1628 = vmatpush1.bf16.msra.mxu0 0
      %1629 = vmatprep.subr.bf16.mxu0 0
      %1630 = vmatpush1.bf16.msra.mxu0 0
      %1631 = vmatprep.mubr.bf16.mxu0 0
      %1632 = vmatmul.mubr.bf16.gmra.mrb[0].mxu0 %v957
      %v1633 = vpop.f32.mrb[0].mxu0
      %v1634 = vadd.f32 0.0, %v1633
      %v1635 = vpop.f32.mrb[0].mxu0
      %v1636 = vpop.f32.mrb[0].mxu0
      %v1637 = vadd.f32 0.0, %v1636
      %v1638 = vpop.f32.mrb[0].mxu0
      %1639 = vmatprep.mubr.bf16.mxu0 0
      %1640 = vmatmul.mubr.bf16.gmra.mrb[0].mxu0 %v960
      %v1641 = vpop.f32.mrb[0].mxu0
      %v1642 = vadd.f32 0.0, %v1641
      %v1643 = vpop.f32.mrb[0].mxu0
      %v1644 = vpop.f32.mrb[0].mxu0
      %v1645 = vadd.f32 0.0, %v1644
      %v1646 = vpop.f32.mrb[0].mxu0
      %1647 = vmatprep.mubr.bf16.mxu0 0
      %1648 = vmatmul.mubr.bf16.gmra.mrb[0].mxu0 %v963
      %v1649 = vpop.f32.mrb[0].mxu0
      %v1650 = vadd.f32 0.0, %v1649
      %v1651 = vpop.f32.mrb[0].mxu0
      %v1652 = vpop.f32.mrb[0].mxu0
      %v1653 = vadd.f32 0.0, %v1652
      %v1654 = vpop.f32.mrb[0].mxu0
      %1655 = vmatprep.mubr.bf16.mxu0 0
      %1656 = vmatmul.mubr.bf16.gmra.mrb[0].mxu0 %v966
      %v1657 = vpop.f32.mrb[0].mxu0
      %v1658 = vadd.f32 0.0, %v1657
      %v1659 = vpop.f32.mrb[0].mxu0
      %v1660 = vpop.f32.mrb[0].mxu0
      %v1661 = vadd.f32 0.0, %v1660
      %v1662 = vpop.f32.mrb[0].mxu0
      %1663 = vmatprep.mubr.bf16.mxu0 0
      %1664 = vmatmul.mubr.bf16.gmra.mrb[0].mxu0 %v969
      %v1665 = vpop.f32.mrb[0].mxu0
      %v1666 = vadd.f32 0.0, %v1665
      %v1667 = vpop.f32.mrb[0].mxu0
      %v1668 = vpop.f32.mrb[0].mxu0
      %v1669 = vadd.f32 0.0, %v1668
      %v1670 = vpop.f32.mrb[0].mxu0
      %1671 = vmatprep.mubr.bf16.mxu0 0
      %1672 = vmatmul.mubr.bf16.gmra.mrb[0].mxu0 %v972
      %v1673 = vpop.f32.mrb[0].mxu0
      %v1674 = vadd.f32 0.0, %v1673
      %v1675 = vpop.f32.mrb[0].mxu0
      %v1676 = vpop.f32.mrb[0].mxu0
      %v1677 = vadd.f32 0.0, %v1676
      %v1678 = vpop.f32.mrb[0].mxu0
      %1679 = vmatprep.mubr.bf16.mxu0 0
      %1680 = vmatmul.mubr.bf16.gmra.mrb[0].mxu0 %v975
      %v1681 = vpop.f32.mrb[0].mxu0
      %v1682 = vadd.f32 0.0, %v1681
      %v1683 = vpop.f32.mrb[0].mxu0
      %v1684 = vpop.f32.mrb[0].mxu0
      %v1685 = vadd.f32 0.0, %v1684
      %v1686 = vpop.f32.mrb[0].mxu0
      %1687 = vmatprep.mubr.bf16.mxu0 0
      %1688 = vmatmul.mubr.bf16.gmra.mrb[0].mxu0 %v978
      %v1689 = vpop.f32.mrb[0].mxu0
      %v1690 = vadd.f32 0.0, %v1689
      %v1691 = vpop.f32.mrb[0].mxu0
      %v1692 = vpop.f32.mrb[0].mxu0
      %v1693 = vadd.f32 0.0, %v1692
      %v1694 = vpop.f32.mrb[0].mxu0
      %1695 = vmatprep.mubr.bf16.mxu0 0
      %1696 = vmatmul.mubr.bf16.gmra.mrb[0].mxu0 %v981
      %v1697 = vpop.f32.mrb[0].mxu0
      %v1698 = vadd.f32 0.0, %v1697
      %v1699 = vpop.f32.mrb[0].mxu0
      %v1700 = vpop.f32.mrb[0].mxu0
      %v1701 = vadd.f32 0.0, %v1700
      %v1702 = vpop.f32.mrb[0].mxu0
      %1703 = vmatprep.mubr.bf16.mxu0 0
      %1704 = vmatmul.mubr.bf16.gmra.mrb[0].mxu0 %v984
      %v1705 = vpop.f32.mrb[0].mxu0
      %v1706 = vadd.f32 0.0, %v1705
      %v1707 = vpop.f32.mrb[0].mxu0
      %v1708 = vpop.f32.mrb[0].mxu0
      %v1709 = vadd.f32 0.0, %v1708
      %v1710 = vpop.f32.mrb[0].mxu0
      %1711 = vmatprep.mubr.bf16.mxu0 0
      %1712 = vmatmul.mubr.bf16.gmra.mrb[0].mxu0 %v987
      %v1713 = vpop.f32.mrb[0].mxu0
      %v1714 = vadd.f32 0.0, %v1713
      %v1715 = vpop.f32.mrb[0].mxu0
      %v1716 = vpop.f32.mrb[0].mxu0
      %v1717 = vadd.f32 0.0, %v1716
      %v1718 = vpop.f32.mrb[0].mxu0
      %1719 = vmatprep.mubr.bf16.mxu0 0
      %1720 = vmatmul.mubr.bf16.gmra.mrb[0].mxu0 %v990
      %v1721 = vpop.f32.mrb[0].mxu0
      %v1722 = vadd.f32 0.0, %v1721
      %v1723 = vpop.f32.mrb[0].mxu0
      %v1724 = vpop.f32.mrb[0].mxu0
      %v1725 = vadd.f32 0.0, %v1724
      %v1726 = vpop.f32.mrb[0].mxu0
      %1727 = vmatprep.mubr.bf16.mxu0 0
      %1728 = vmatmul.mubr.bf16.gmra.mrb[0].mxu0 %v993
      %v1729 = vpop.f32.mrb[0].mxu0
      %v1730 = vadd.f32 0.0, %v1729
      %v1731 = vpop.f32.mrb[0].mxu0
      %v1732 = vpop.f32.mrb[0].mxu0
      %v1733 = vadd.f32 0.0, %v1732
      %v1734 = vpop.f32.mrb[0].mxu0
      %1735 = vmatprep.mubr.bf16.mxu0 0
      %1736 = vmatmul.mubr.bf16.gmra.mrb[0].mxu0 %v996
      %v1737 = vpop.f32.mrb[0].mxu0
      %v1738 = vadd.f32 0.0, %v1737
      %v1739 = vpop.f32.mrb[0].mxu0
      %v1740 = vpop.f32.mrb[0].mxu0
      %v1741 = vadd.f32 0.0, %v1740
      %v1742 = vpop.f32.mrb[0].mxu0
      %1743 = vmatprep.mubr.bf16.mxu0 0
      %1744 = vmatmul.mubr.bf16.gmra.mrb[0].mxu0 %v999
      %v1745 = vpop.f32.mrb[0].mxu0
      %v1746 = vadd.f32 0.0, %v1745
      %v1747 = vpop.f32.mrb[0].mxu0
      %v1748 = vpop.f32.mrb[0].mxu0
      %v1749 = vadd.f32 0.0, %v1748
      %v1750 = vpop.f32.mrb[0].mxu0
      %1751 = vmatprep.mubr.bf16.mxu0 0
      %1752 = vmatmul.mubr.bf16.gmra.mrb[0].mxu0 %v1594
      %v1753 = vpop.f32.mrb[0].mxu0
      %v1754 = vadd.f32 0.0, %v1753
      %v1755 = vpop.f32.mrb[0].mxu0
      %v1756 = vpop.f32.mrb[0].mxu0
      %v1757 = vadd.f32 0.0, %v1756
      %v1758 = vpop.f32.mrb[0].mxu0
      %1759 = vdwg.mxu0
      %v1760 = vadd.f32 %v1556, %v1634
      %v1761 = vadd.f32 %v1557, %v1637
      %v1762 = vadd.f32 %v1558, %v1642
      %v1763 = vadd.f32 %v1559, %v1645
      %v1764 = vadd.f32 %v1560, %v1650
      %v1765 = vadd.f32 %v1561, %v1653
      %v1766 = vadd.f32 %v1562, %v1658
      %v1767 = vadd.f32 %v1563, %v1661
      %v1768 = vadd.f32 %v1564, %v1666
      %v1769 = vadd.f32 %v1565, %v1669
      %v1770 = vadd.f32 %v1566, %v1674
      %v1771 = vadd.f32 %v1567, %v1677
      %v1772 = vadd.f32 %v1568, %v1682
      %v1773 = vadd.f32 %v1569, %v1685
      %v1774 = vadd.f32 %v1570, %v1690
      %v1775 = vadd.f32 %v1571, %v1693
      %v1776 = vadd.f32 %v1572, %v1698
      %v1777 = vadd.f32 %v1573, %v1701
      %v1778 = vadd.f32 %v1574, %v1706
      %v1779 = vadd.f32 %v1575, %v1709
      %v1780 = vadd.f32 %v1576, %v1714
      %v1781 = vadd.f32 %v1577, %v1717
      %v1782 = vadd.f32 %v1578, %v1722
      %v1783 = vadd.f32 %v1579, %v1725
      %v1784 = vadd.f32 %v1580, %v1730
      %v1785 = vadd.f32 %v1581, %v1733
      %v1786 = vadd.f32 %v1582, %v1738
      %v1787 = vadd.f32 %v1583, %v1741
      %v1788 = vadd.f32 %v1584, %v1746
      %v1789 = vadd.f32 %v1585, %v1749
      %v1790 = vadd.f32 %v1586, %v1754
      %v1791 = vadd.f32 %v1587, %v1757
      %v1793 = vshrl.u32 %v209, 16
      %v1795 = vrot.slane %v1793, 4
      %v1796 = vshll.u32 %v209, 16
      %v1798 = vrot.slane %v1796, 5
      %v1799 = vor.u32 %v1795, %v1798
      %v1800 = vrot.slane %v1799, 4
      %v1802 = vshll.u32 %v210, 16
      %v1804 = vrot.slane %v1802, 5
      %v1805 = vsel %vm226, %v1800, %v1804
      %v1806 = vshrl.u32 %v210, 16
      %v1808 = vrot.slane %v1806, 4
      %v1809 = vor.u32 %v1808, %v1804
      %v1810 = vrot.slane %v1809, 4
      %v1812 = vshll.u32 %v211, 16
      %v1814 = vrot.slane %v1812, 5
      %v1815 = vsel %vm226, %v1810, %v1814
      %v1816 = vunpack.c.l.b16 %v1805
      %v1817 = vunpack.c.l.b16 %v1815
      %v1818 = vpack.c.b16 %v1817, %v1816
      %v1820 = vsel %vm659, %v1818, 0
      %v1823 = vsel %vm708, %v219, 0
      %1825 = vmatprep.subr.bf16.mxu0 0
      %1826 = vmatpush1.bf16.msra.mxu0 %v1823
      %1827 = vmatprep.subr.bf16.mxu0 0
      %1828 = vmatpush1.bf16.msra.mxu0 0
      %1829 = vmatprep.subr.bf16.mxu0 0
      %1830 = vmatpush1.bf16.msra.mxu0 0
      %1831 = vmatprep.subr.bf16.mxu0 0
      %1832 = vmatpush1.bf16.msra.mxu0 0
      %1833 = vmatprep.subr.bf16.mxu0 0
      %1834 = vmatpush1.bf16.msra.mxu0 0
      %1835 = vmatprep.subr.bf16.mxu0 0
      %1836 = vmatpush1.bf16.msra.mxu0 0
      %1837 = vmatprep.subr.bf16.mxu0 0
      %1838 = vmatpush1.bf16.msra.mxu0 0
      %1839 = vmatprep.subr.bf16.mxu0 0
      %1840 = vmatpush1.bf16.msra.mxu0 0
      %1841 = vmatprep.subr.bf16.mxu0 0
      %1842 = vmatpush1.bf16.msra.mxu0 0
      %1843 = vmatprep.subr.bf16.mxu0 0
      %1844 = vmatpush1.bf16.msra.mxu0 0
      %1845 = vmatprep.subr.bf16.mxu0 0
      %1846 = vmatpush1.bf16.msra.mxu0 0
      %1847 = vmatprep.subr.bf16.mxu0 0
      %1848 = vmatpush1.bf16.msra.mxu0 0
      %1849 = vmatprep.subr.bf16.mxu0 0
      %1850 = vmatpush1.bf16.msra.mxu0 0
      %1851 = vmatprep.subr.bf16.mxu0 0
      %1852 = vmatpush1.bf16.msra.mxu0 0
      %1853 = vmatprep.subr.bf16.mxu0 0
      %1854 = vmatpush1.bf16.msra.mxu0 0
      %1855 = vmatprep.subr.bf16.mxu0 0
      %1856 = vmatpush1.bf16.msra.mxu0 0
      %1857 = vmatprep.mubr.bf16.mxu0 0
      %1858 = vmatmul.mubr.bf16.gmra.mrb[0].mxu0 %v664
      %v1859 = vpop.f32.mrb[0].mxu0
      %v1860 = vadd.f32 0.0, %v1859
      %v1861 = vpop.f32.mrb[0].mxu0
      %v1862 = vpop.f32.mrb[0].mxu0
      %v1863 = vadd.f32 0.0, %v1862
      %v1864 = vpop.f32.mrb[0].mxu0
      %1865 = vmatprep.mubr.bf16.mxu0 0
      %1866 = vmatmul.mubr.bf16.gmra.mrb[0].mxu0 %v667
      %v1867 = vpop.f32.mrb[0].mxu0
      %v1868 = vadd.f32 0.0, %v1867
      %v1869 = vpop.f32.mrb[0].mxu0
      %v1870 = vpop.f32.mrb[0].mxu0
      %v1871 = vadd.f32 0.0, %v1870
      %v1872 = vpop.f32.mrb[0].mxu0
      %1873 = vmatprep.mubr.bf16.mxu0 0
      %1874 = vmatmul.mubr.bf16.gmra.mrb[0].mxu0 %v670
      %v1875 = vpop.f32.mrb[0].mxu0
      %v1876 = vadd.f32 0.0, %v1875
      %v1877 = vpop.f32.mrb[0].mxu0
      %v1878 = vpop.f32.mrb[0].mxu0
      %v1879 = vadd.f32 0.0, %v1878
      %v1880 = vpop.f32.mrb[0].mxu0
      %1881 = vmatprep.mubr.bf16.mxu0 0
      %1882 = vmatmul.mubr.bf16.gmra.mrb[0].mxu0 %v673
      %v1883 = vpop.f32.mrb[0].mxu0
      %v1884 = vadd.f32 0.0, %v1883
      %v1885 = vpop.f32.mrb[0].mxu0
      %v1886 = vpop.f32.mrb[0].mxu0
      %v1887 = vadd.f32 0.0, %v1886
      %v1888 = vpop.f32.mrb[0].mxu0
      %1889 = vmatprep.mubr.bf16.mxu0 0
      %1890 = vmatmul.mubr.bf16.gmra.mrb[0].mxu0 %v676
      %v1891 = vpop.f32.mrb[0].mxu0
      %v1892 = vadd.f32 0.0, %v1891
      %v1893 = vpop.f32.mrb[0].mxu0
      %v1894 = vpop.f32.mrb[0].mxu0
      %v1895 = vadd.f32 0.0, %v1894
      %v1896 = vpop.f32.mrb[0].mxu0
      %1897 = vmatprep.mubr.bf16.mxu0 0
      %1898 = vmatmul.mubr.bf16.gmra.mrb[0].mxu0 %v679
      %v1899 = vpop.f32.mrb[0].mxu0
      %v1900 = vadd.f32 0.0, %v1899
      %v1901 = vpop.f32.mrb[0].mxu0
      %v1902 = vpop.f32.mrb[0].mxu0
      %v1903 = vadd.f32 0.0, %v1902
      %v1904 = vpop.f32.mrb[0].mxu0
      %1905 = vmatprep.mubr.bf16.mxu0 0
      %1906 = vmatmul.mubr.bf16.gmra.mrb[0].mxu0 %v682
      %v1907 = vpop.f32.mrb[0].mxu0
      %v1908 = vadd.f32 0.0, %v1907
      %v1909 = vpop.f32.mrb[0].mxu0
      %v1910 = vpop.f32.mrb[0].mxu0
      %v1911 = vadd.f32 0.0, %v1910
      %v1912 = vpop.f32.mrb[0].mxu0
      %1913 = vmatprep.mubr.bf16.mxu0 0
      %1914 = vmatmul.mubr.bf16.gmra.mrb[0].mxu0 %v685
      %v1915 = vpop.f32.mrb[0].mxu0
      %v1916 = vadd.f32 0.0, %v1915
      %v1917 = vpop.f32.mrb[0].mxu0
      %v1918 = vpop.f32.mrb[0].mxu0
      %v1919 = vadd.f32 0.0, %v1918
      %v1920 = vpop.f32.mrb[0].mxu0
      %1921 = vmatprep.mubr.bf16.mxu0 0
      %1922 = vmatmul.mubr.bf16.gmra.mrb[0].mxu0 %v688
      %v1923 = vpop.f32.mrb[0].mxu0
      %v1924 = vadd.f32 0.0, %v1923
      %v1925 = vpop.f32.mrb[0].mxu0
      %v1926 = vpop.f32.mrb[0].mxu0
      %v1927 = vadd.f32 0.0, %v1926
      %v1928 = vpop.f32.mrb[0].mxu0
      %1929 = vmatprep.mubr.bf16.mxu0 0
      %1930 = vmatmul.mubr.bf16.gmra.mrb[0].mxu0 %v691
      %v1931 = vpop.f32.mrb[0].mxu0
      %v1932 = vadd.f32 0.0, %v1931
      %v1933 = vpop.f32.mrb[0].mxu0
      %v1934 = vpop.f32.mrb[0].mxu0
      %v1935 = vadd.f32 0.0, %v1934
      %v1936 = vpop.f32.mrb[0].mxu0
      %1937 = vmatprep.mubr.bf16.mxu0 0
      %1938 = vmatmul.mubr.bf16.gmra.mrb[0].mxu0 %v694
      %v1939 = vpop.f32.mrb[0].mxu0
      %v1940 = vadd.f32 0.0, %v1939
      %v1941 = vpop.f32.mrb[0].mxu0
      %v1942 = vpop.f32.mrb[0].mxu0
      %v1943 = vadd.f32 0.0, %v1942
      %v1944 = vpop.f32.mrb[0].mxu0
      %1945 = vmatprep.mubr.bf16.mxu0 0
      %1946 = vmatmul.mubr.bf16.gmra.mrb[0].mxu0 %v697
      %v1947 = vpop.f32.mrb[0].mxu0
      %v1948 = vadd.f32 0.0, %v1947
      %v1949 = vpop.f32.mrb[0].mxu0
      %v1950 = vpop.f32.mrb[0].mxu0
      %v1951 = vadd.f32 0.0, %v1950
      %v1952 = vpop.f32.mrb[0].mxu0
      %1953 = vmatprep.mubr.bf16.mxu0 0
      %1954 = vmatmul.mubr.bf16.gmra.mrb[0].mxu0 %v700
      %v1955 = vpop.f32.mrb[0].mxu0
      %v1956 = vadd.f32 0.0, %v1955
      %v1957 = vpop.f32.mrb[0].mxu0
      %v1958 = vpop.f32.mrb[0].mxu0
      %v1959 = vadd.f32 0.0, %v1958
      %v1960 = vpop.f32.mrb[0].mxu0
      %1961 = vmatprep.mubr.bf16.mxu0 0
      %1962 = vmatmul.mubr.bf16.gmra.mrb[0].mxu0 %v703
      %v1963 = vpop.f32.mrb[0].mxu0
      %v1964 = vadd.f32 0.0, %v1963
      %v1965 = vpop.f32.mrb[0].mxu0
      %v1966 = vpop.f32.mrb[0].mxu0
      %v1967 = vadd.f32 0.0, %v1966
      %v1968 = vpop.f32.mrb[0].mxu0
      %1969 = vmatprep.mubr.bf16.mxu0 0
      %1970 = vmatmul.mubr.bf16.gmra.mrb[0].mxu0 %v706
      %v1971 = vpop.f32.mrb[0].mxu0
      %v1972 = vadd.f32 0.0, %v1971
      %v1973 = vpop.f32.mrb[0].mxu0
      %v1974 = vpop.f32.mrb[0].mxu0
      %v1975 = vadd.f32 0.0, %v1974
      %v1976 = vpop.f32.mrb[0].mxu0
      %1977 = vmatprep.mubr.bf16.mxu0 0
      %1978 = vmatmul.mubr.bf16.gmra.mrb[0].mxu0 %v1820
      %v1979 = vpop.f32.mrb[0].mxu0
      %v1980 = vadd.f32 0.0, %v1979
      %v1981 = vpop.f32.mrb[0].mxu0
      %v1982 = vpop.f32.mrb[0].mxu0
      %v1983 = vadd.f32 0.0, %v1982
      %v1984 = vpop.f32.mrb[0].mxu0
      %1985 = vdwg.mxu0
      %v1986 = vadd.f32 %v1760, %v1860
      %v1987 = vadd.f32 %v1761, %v1863
      %v1988 = vadd.f32 %v1762, %v1868
      %v1989 = vadd.f32 %v1763, %v1871
      %v1990 = vadd.f32 %v1764, %v1876
      %v1991 = vadd.f32 %v1765, %v1879
      %v1992 = vadd.f32 %v1766, %v1884
      %v1993 = vadd.f32 %v1767, %v1887
      %v1994 = vadd.f32 %v1768, %v1892
      %v1995 = vadd.f32 %v1769, %v1895
      %v1996 = vadd.f32 %v1770, %v1900
      %v1997 = vadd.f32 %v1771, %v1903
      %v1998 = vadd.f32 %v1772, %v1908
      %v1999 = vadd.f32 %v1773, %v1911
      %v2000 = vadd.f32 %v1774, %v1916
      %v2001 = vadd.f32 %v1775, %v1919
      %v2002 = vadd.f32 %v1776, %v1924
      %v2003 = vadd.f32 %v1777, %v1927
      %v2004 = vadd.f32 %v1778, %v1932
      %v2005 = vadd.f32 %v1779, %v1935
      %v2006 = vadd.f32 %v1780, %v1940
      %v2007 = vadd.f32 %v1781, %v1943
      %v2008 = vadd.f32 %v1782, %v1948
      %v2009 = vadd.f32 %v1783, %v1951
      %v2010 = vadd.f32 %v1784, %v1956
      %v2011 = vadd.f32 %v1785, %v1959
      %v2012 = vadd.f32 %v1786, %v1964
      %v2013 = vadd.f32 %v1787, %v1967
      %v2014 = vadd.f32 %v1788, %v1972
      %v2015 = vadd.f32 %v1789, %v1975
      %v2016 = vadd.f32 %v1790, %v1980
      %v2017 = vadd.f32 %v1791, %v1983
      %v2019 = vrot.slane %v209, 5
      %v2020 = vrot.slane %v2019, 4
      %v2021 = vrot.slane %v210, 5
      %v2022 = vsel %vm1183, %v2020, %v2021
      %v2023 = vrot.slane %v2021, 4
      %v2024 = vrot.slane %v211, 5
      %v2025 = vsel %vm1183, %v2023, %v2024
      %v2026 = vunpack.c.l.b16 %v2022
      %v2027 = vunpack.c.l.b16 %v2025
      %v2028 = vpack.c.b16 %v2027, %v2026
      %v2030 = vsel %vm659, %v2028, 0
      %v2033 = vsel %vm708, %v220, 0
      %2035 = vmatprep.subr.bf16.mxu0 0
      %2036 = vmatpush1.bf16.msra.mxu0 %v2033
      %2037 = vmatprep.subr.bf16.mxu0 0
      %2038 = vmatpush1.bf16.msra.mxu0 0
      %2039 = vmatprep.subr.bf16.mxu0 0
      %2040 = vmatpush1.bf16.msra.mxu0 0
      %2041 = vmatprep.subr.bf16.mxu0 0
      %2042 = vmatpush1.bf16.msra.mxu0 0
      %2043 = vmatprep.subr.bf16.mxu0 0
      %2044 = vmatpush1.bf16.msra.mxu0 0
      %2045 = vmatprep.subr.bf16.mxu0 0
      %2046 = vmatpush1.bf16.msra.mxu0 0
      %2047 = vmatprep.subr.bf16.mxu0 0
      %2048 = vmatpush1.bf16.msra.mxu0 0
      %2049 = vmatprep.subr.bf16.mxu0 0
      %2050 = vmatpush1.bf16.msra.mxu0 0
      %2051 = vmatprep.subr.bf16.mxu0 0
      %2052 = vmatpush1.bf16.msra.mxu0 0
      %2053 = vmatprep.subr.bf16.mxu0 0
      %2054 = vmatpush1.bf16.msra.mxu0 0
      %2055 = vmatprep.subr.bf16.mxu0 0
      %2056 = vmatpush1.bf16.msra.mxu0 0
      %2057 = vmatprep.subr.bf16.mxu0 0
      %2058 = vmatpush1.bf16.msra.mxu0 0
      %2059 = vmatprep.subr.bf16.mxu0 0
      %2060 = vmatpush1.bf16.msra.mxu0 0
      %2061 = vmatprep.subr.bf16.mxu0 0
      %2062 = vmatpush1.bf16.msra.mxu0 0
      %2063 = vmatprep.subr.bf16.mxu0 0
      %2064 = vmatpush1.bf16.msra.mxu0 0
      %2065 = vmatprep.subr.bf16.mxu0 0
      %2066 = vmatpush1.bf16.msra.mxu0 0
      %2067 = vmatprep.mubr.bf16.mxu0 0
      %2068 = vmatmul.mubr.bf16.gmra.mrb[0].mxu0 %v1348
      %v2069 = vpop.f32.mrb[0].mxu0
      %v2070 = vadd.f32 0.0, %v2069
      %v2071 = vpop.f32.mrb[0].mxu0
      %v2072 = vpop.f32.mrb[0].mxu0
      %v2073 = vadd.f32 0.0, %v2072
      %v2074 = vpop.f32.mrb[0].mxu0
      %2075 = vmatprep.mubr.bf16.mxu0 0
      %2076 = vmatmul.mubr.bf16.gmra.mrb[0].mxu0 %v1351
      %v2077 = vpop.f32.mrb[0].mxu0
      %v2078 = vadd.f32 0.0, %v2077
      %v2079 = vpop.f32.mrb[0].mxu0
      %v2080 = vpop.f32.mrb[0].mxu0
      %v2081 = vadd.f32 0.0, %v2080
      %v2082 = vpop.f32.mrb[0].mxu0
      %2083 = vmatprep.mubr.bf16.mxu0 0
      %2084 = vmatmul.mubr.bf16.gmra.mrb[0].mxu0 %v1354
      %v2085 = vpop.f32.mrb[0].mxu0
      %v2086 = vadd.f32 0.0, %v2085
      %v2087 = vpop.f32.mrb[0].mxu0
      %v2088 = vpop.f32.mrb[0].mxu0
      %v2089 = vadd.f32 0.0, %v2088
      %v2090 = vpop.f32.mrb[0].mxu0
      %2091 = vmatprep.mubr.bf16.mxu0 0
      %2092 = vmatmul.mubr.bf16.gmra.mrb[0].mxu0 %v1357
      %v2093 = vpop.f32.mrb[0].mxu0
      %v2094 = vadd.f32 0.0, %v2093
      %v2095 = vpop.f32.mrb[0].mxu0
      %v2096 = vpop.f32.mrb[0].mxu0
      %v2097 = vadd.f32 0.0, %v2096
      %v2098 = vpop.f32.mrb[0].mxu0
      %2099 = vmatprep.mubr.bf16.mxu0 0
      %2100 = vmatmul.mubr.bf16.gmra.mrb[0].mxu0 %v1360
      %v2101 = vpop.f32.mrb[0].mxu0
      %v2102 = vadd.f32 0.0, %v2101
      %v2103 = vpop.f32.mrb[0].mxu0
      %v2104 = vpop.f32.mrb[0].mxu0
      %v2105 = vadd.f32 0.0, %v2104
      %v2106 = vpop.f32.mrb[0].mxu0
      %2107 = vmatprep.mubr.bf16.mxu0 0
      %2108 = vmatmul.mubr.bf16.gmra.mrb[0].mxu0 %v1363
      %v2109 = vpop.f32.mrb[0].mxu0
      %v2110 = vadd.f32 0.0, %v2109
      %v2111 = vpop.f32.mrb[0].mxu0
      %v2112 = vpop.f32.mrb[0].mxu0
      %v2113 = vadd.f32 0.0, %v2112
      %v2114 = vpop.f32.mrb[0].mxu0
      %2115 = vmatprep.mubr.bf16.mxu0 0
      %2116 = vmatmul.mubr.bf16.gmra.mrb[0].mxu0 %v1366
      %v2117 = vpop.f32.mrb[0].mxu0
      %v2118 = vadd.f32 0.0, %v2117
      %v2119 = vpop.f32.mrb[0].mxu0
      %v2120 = vpop.f32.mrb[0].mxu0
      %v2121 = vadd.f32 0.0, %v2120
      %v2122 = vpop.f32.mrb[0].mxu0
      %2123 = vmatprep.mubr.bf16.mxu0 0
      %2124 = vmatmul.mubr.bf16.gmra.mrb[0].mxu0 %v1369
      %v2125 = vpop.f32.mrb[0].mxu0
      %v2126 = vadd.f32 0.0, %v2125
      %v2127 = vpop.f32.mrb[0].mxu0
      %v2128 = vpop.f32.mrb[0].mxu0
      %v2129 = vadd.f32 0.0, %v2128
      %v2130 = vpop.f32.mrb[0].mxu0
      %2131 = vmatprep.mubr.bf16.mxu0 0
      %2132 = vmatmul.mubr.bf16.gmra.mrb[0].mxu0 %v1372
      %v2133 = vpop.f32.mrb[0].mxu0
      %v2134 = vadd.f32 0.0, %v2133
      %v2135 = vpop.f32.mrb[0].mxu0
      %v2136 = vpop.f32.mrb[0].mxu0
      %v2137 = vadd.f32 0.0, %v2136
      %v2138 = vpop.f32.mrb[0].mxu0
      %2139 = vmatprep.mubr.bf16.mxu0 0
      %2140 = vmatmul.mubr.bf16.gmra.mrb[0].mxu0 %v1375
      %v2141 = vpop.f32.mrb[0].mxu0
      %v2142 = vadd.f32 0.0, %v2141
      %v2143 = vpop.f32.mrb[0].mxu0
      %v2144 = vpop.f32.mrb[0].mxu0
      %v2145 = vadd.f32 0.0, %v2144
      %v2146 = vpop.f32.mrb[0].mxu0
      %2147 = vmatprep.mubr.bf16.mxu0 0
      %2148 = vmatmul.mubr.bf16.gmra.mrb[0].mxu0 %v1378
      %v2149 = vpop.f32.mrb[0].mxu0
      %v2150 = vadd.f32 0.0, %v2149
      %v2151 = vpop.f32.mrb[0].mxu0
      %v2152 = vpop.f32.mrb[0].mxu0
      %v2153 = vadd.f32 0.0, %v2152
      %v2154 = vpop.f32.mrb[0].mxu0
      %2155 = vmatprep.mubr.bf16.mxu0 0
      %2156 = vmatmul.mubr.bf16.gmra.mrb[0].mxu0 %v1381
      %v2157 = vpop.f32.mrb[0].mxu0
      %v2158 = vadd.f32 0.0, %v2157
      %v2159 = vpop.f32.mrb[0].mxu0
      %v2160 = vpop.f32.mrb[0].mxu0
      %v2161 = vadd.f32 0.0, %v2160
      %v2162 = vpop.f32.mrb[0].mxu0
      %2163 = vmatprep.mubr.bf16.mxu0 0
      %2164 = vmatmul.mubr.bf16.gmra.mrb[0].mxu0 %v1384
      %v2165 = vpop.f32.mrb[0].mxu0
      %v2166 = vadd.f32 0.0, %v2165
      %v2167 = vpop.f32.mrb[0].mxu0
      %v2168 = vpop.f32.mrb[0].mxu0
      %v2169 = vadd.f32 0.0, %v2168
      %v2170 = vpop.f32.mrb[0].mxu0
      %2171 = vmatprep.mubr.bf16.mxu0 0
      %2172 = vmatmul.mubr.bf16.gmra.mrb[0].mxu0 %v1387
      %v2173 = vpop.f32.mrb[0].mxu0
      %v2174 = vadd.f32 0.0, %v2173
      %v2175 = vpop.f32.mrb[0].mxu0
      %v2176 = vpop.f32.mrb[0].mxu0
      %v2177 = vadd.f32 0.0, %v2176
      %v2178 = vpop.f32.mrb[0].mxu0
      %2179 = vmatprep.mubr.bf16.mxu0 0
      %2180 = vmatmul.mubr.bf16.gmra.mrb[0].mxu0 %v1390
      %v2181 = vpop.f32.mrb[0].mxu0
      %v2182 = vadd.f32 0.0, %v2181
      %v2183 = vpop.f32.mrb[0].mxu0
      %v2184 = vpop.f32.mrb[0].mxu0
      %v2185 = vadd.f32 0.0, %v2184
      %v2186 = vpop.f32.mrb[0].mxu0
      %2187 = vmatprep.mubr.bf16.mxu0 0
      %2188 = vmatmul.mubr.bf16.gmra.mrb[0].mxu0 %v2030
      %v2189 = vpop.f32.mrb[0].mxu0
      %v2190 = vadd.f32 0.0, %v2189
      %v2191 = vpop.f32.mrb[0].mxu0
      %v2192 = vpop.f32.mrb[0].mxu0
      %v2193 = vadd.f32 0.0, %v2192
      %v2194 = vpop.f32.mrb[0].mxu0
      %2195 = vdwg.mxu0
      %v2196 = vadd.f32 %v1986, %v2070
      %v2197 = vadd.f32 %v1987, %v2073
      %v2198 = vadd.f32 %v1988, %v2078
      %v2199 = vadd.f32 %v1989, %v2081
      %v2200 = vadd.f32 %v1990, %v2086
      %v2201 = vadd.f32 %v1991, %v2089
      %v2202 = vadd.f32 %v1992, %v2094
      %v2203 = vadd.f32 %v1993, %v2097
      %v2204 = vadd.f32 %v1994, %v2102
      %v2205 = vadd.f32 %v1995, %v2105
      %v2206 = vadd.f32 %v1996, %v2110
      %v2207 = vadd.f32 %v1997, %v2113
      %v2208 = vadd.f32 %v1998, %v2118
      %v2209 = vadd.f32 %v1999, %v2121
      %v2210 = vadd.f32 %v2000, %v2126
      %v2211 = vadd.f32 %v2001, %v2129
      %v2212 = vadd.f32 %v2002, %v2134
      %v2213 = vadd.f32 %v2003, %v2137
      %v2214 = vadd.f32 %v2004, %v2142
      %v2215 = vadd.f32 %v2005, %v2145
      %v2216 = vadd.f32 %v2006, %v2150
      %v2217 = vadd.f32 %v2007, %v2153
      %v2218 = vadd.f32 %v2008, %v2158
      %v2219 = vadd.f32 %v2009, %v2161
      %v2220 = vadd.f32 %v2010, %v2166
      %v2221 = vadd.f32 %v2011, %v2169
      %v2222 = vadd.f32 %v2012, %v2174
      %v2223 = vadd.f32 %v2013, %v2177
      %v2224 = vadd.f32 %v2014, %v2182
      %v2225 = vadd.f32 %v2015, %v2185
      %v2226 = vadd.f32 %v2016, %v2190
      %v2227 = vadd.f32 %v2017, %v2193
      %v2230 = vunpack.c.l.b16 %v212
      %v2231 = vunpack.c.l.b16 %v213
      %v2232 = vpack.c.b16 %v2231, %v2230
      %v2234 = vsel %vm659, %v2232, 0
      %v2237 = vsel %vm708, %v221, 0
      %2239 = vmatprep.subr.bf16.mxu0 0
      %2240 = vmatpush1.bf16.msra.mxu0 %v2237
      %2241 = vmatprep.subr.bf16.mxu0 0
      %2242 = vmatpush1.bf16.msra.mxu0 0
      %2243 = vmatprep.subr.bf16.mxu0 0
      %2244 = vmatpush1.bf16.msra.mxu0 0
      %2245 = vmatprep.subr.bf16.mxu0 0
      %2246 = vmatpush1.bf16.msra.mxu0 0
      %2247 = vmatprep.subr.bf16.mxu0 0
      %2248 = vmatpush1.bf16.msra.mxu0 0
      %2249 = vmatprep.subr.bf16.mxu0 0
      %2250 = vmatpush1.bf16.msra.mxu0 0
      %2251 = vmatprep.subr.bf16.mxu0 0
      %2252 = vmatpush1.bf16.msra.mxu0 0
      %2253 = vmatprep.subr.bf16.mxu0 0
      %2254 = vmatpush1.bf16.msra.mxu0 0
      %2255 = vmatprep.subr.bf16.mxu0 0
      %2256 = vmatpush1.bf16.msra.mxu0 0
      %2257 = vmatprep.subr.bf16.mxu0 0
      %2258 = vmatpush1.bf16.msra.mxu0 0
      %2259 = vmatprep.subr.bf16.mxu0 0
      %2260 = vmatpush1.bf16.msra.mxu0 0
      %2261 = vmatprep.subr.bf16.mxu0 0
      %2262 = vmatpush1.bf16.msra.mxu0 0
      %2263 = vmatprep.subr.bf16.mxu0 0
      %2264 = vmatpush1.bf16.msra.mxu0 0
      %2265 = vmatprep.subr.bf16.mxu0 0
      %2266 = vmatpush1.bf16.msra.mxu0 0
      %2267 = vmatprep.subr.bf16.mxu0 0
      %2268 = vmatpush1.bf16.msra.mxu0 0
      %2269 = vmatprep.subr.bf16.mxu0 0
      %2270 = vmatpush1.bf16.msra.mxu0 0
      %2271 = vmatprep.mubr.bf16.mxu0 0
      %2272 = vmatmul.mubr.bf16.gmra.mrb[0].mxu0 %v960
      %v2273 = vpop.f32.mrb[0].mxu0
      %v2274 = vadd.f32 0.0, %v2273
      %v2275 = vpop.f32.mrb[0].mxu0
      %v2276 = vpop.f32.mrb[0].mxu0
      %v2277 = vadd.f32 0.0, %v2276
      %v2278 = vpop.f32.mrb[0].mxu0
      %2279 = vmatprep.mubr.bf16.mxu0 0
      %2280 = vmatmul.mubr.bf16.gmra.mrb[0].mxu0 %v963
      %v2281 = vpop.f32.mrb[0].mxu0
      %v2282 = vadd.f32 0.0, %v2281
      %v2283 = vpop.f32.mrb[0].mxu0
      %v2284 = vpop.f32.mrb[0].mxu0
      %v2285 = vadd.f32 0.0, %v2284
      %v2286 = vpop.f32.mrb[0].mxu0
      %2287 = vmatprep.mubr.bf16.mxu0 0
      %2288 = vmatmul.mubr.bf16.gmra.mrb[0].mxu0 %v966
      %v2289 = vpop.f32.mrb[0].mxu0
      %v2290 = vadd.f32 0.0, %v2289
      %v2291 = vpop.f32.mrb[0].mxu0
      %v2292 = vpop.f32.mrb[0].mxu0
      %v2293 = vadd.f32 0.0, %v2292
      %v2294 = vpop.f32.mrb[0].mxu0
      %2295 = vmatprep.mubr.bf16.mxu0 0
      %2296 = vmatmul.mubr.bf16.gmra.mrb[0].mxu0 %v969
      %v2297 = vpop.f32.mrb[0].mxu0
      %v2298 = vadd.f32 0.0, %v2297
      %v2299 = vpop.f32.mrb[0].mxu0
      %v2300 = vpop.f32.mrb[0].mxu0
      %v2301 = vadd.f32 0.0, %v2300
      %v2302 = vpop.f32.mrb[0].mxu0
      %2303 = vmatprep.mubr.bf16.mxu0 0
      %2304 = vmatmul.mubr.bf16.gmra.mrb[0].mxu0 %v972
      %v2305 = vpop.f32.mrb[0].mxu0
      %v2306 = vadd.f32 0.0, %v2305
      %v2307 = vpop.f32.mrb[0].mxu0
      %v2308 = vpop.f32.mrb[0].mxu0
      %v2309 = vadd.f32 0.0, %v2308
      %v2310 = vpop.f32.mrb[0].mxu0
      %2311 = vmatprep.mubr.bf16.mxu0 0
      %2312 = vmatmul.mubr.bf16.gmra.mrb[0].mxu0 %v975
      %v2313 = vpop.f32.mrb[0].mxu0
      %v2314 = vadd.f32 0.0, %v2313
      %v2315 = vpop.f32.mrb[0].mxu0
      %v2316 = vpop.f32.mrb[0].mxu0
      %v2317 = vadd.f32 0.0, %v2316
      %v2318 = vpop.f32.mrb[0].mxu0
      %2319 = vmatprep.mubr.bf16.mxu0 0
      %2320 = vmatmul.mubr.bf16.gmra.mrb[0].mxu0 %v978
      %v2321 = vpop.f32.mrb[0].mxu0
      %v2322 = vadd.f32 0.0, %v2321
      %v2323 = vpop.f32.mrb[0].mxu0
      %v2324 = vpop.f32.mrb[0].mxu0
      %v2325 = vadd.f32 0.0, %v2324
      %v2326 = vpop.f32.mrb[0].mxu0
      %2327 = vmatprep.mubr.bf16.mxu0 0
      %2328 = vmatmul.mubr.bf16.gmra.mrb[0].mxu0 %v981
      %v2329 = vpop.f32.mrb[0].mxu0
      %v2330 = vadd.f32 0.0, %v2329
      %v2331 = vpop.f32.mrb[0].mxu0
      %v2332 = vpop.f32.mrb[0].mxu0
      %v2333 = vadd.f32 0.0, %v2332
      %v2334 = vpop.f32.mrb[0].mxu0
      %2335 = vmatprep.mubr.bf16.mxu0 0
      %2336 = vmatmul.mubr.bf16.gmra.mrb[0].mxu0 %v984
      %v2337 = vpop.f32.mrb[0].mxu0
      %v2338 = vadd.f32 0.0, %v2337
      %v2339 = vpop.f32.mrb[0].mxu0
      %v2340 = vpop.f32.mrb[0].mxu0
      %v2341 = vadd.f32 0.0, %v2340
      %v2342 = vpop.f32.mrb[0].mxu0
      %2343 = vmatprep.mubr.bf16.mxu0 0
      %2344 = vmatmul.mubr.bf16.gmra.mrb[0].mxu0 %v987
      %v2345 = vpop.f32.mrb[0].mxu0
      %v2346 = vadd.f32 0.0, %v2345
      %v2347 = vpop.f32.mrb[0].mxu0
      %v2348 = vpop.f32.mrb[0].mxu0
      %v2349 = vadd.f32 0.0, %v2348
      %v2350 = vpop.f32.mrb[0].mxu0
      %2351 = vmatprep.mubr.bf16.mxu0 0
      %2352 = vmatmul.mubr.bf16.gmra.mrb[0].mxu0 %v990
      %v2353 = vpop.f32.mrb[0].mxu0
      %v2354 = vadd.f32 0.0, %v2353
      %v2355 = vpop.f32.mrb[0].mxu0
      %v2356 = vpop.f32.mrb[0].mxu0
      %v2357 = vadd.f32 0.0, %v2356
      %v2358 = vpop.f32.mrb[0].mxu0
      %2359 = vmatprep.mubr.bf16.mxu0 0
      %2360 = vmatmul.mubr.bf16.gmra.mrb[0].mxu0 %v993
      %v2361 = vpop.f32.mrb[0].mxu0
      %v2362 = vadd.f32 0.0, %v2361
      %v2363 = vpop.f32.mrb[0].mxu0
      %v2364 = vpop.f32.mrb[0].mxu0
      %v2365 = vadd.f32 0.0, %v2364
      %v2366 = vpop.f32.mrb[0].mxu0
      %2367 = vmatprep.mubr.bf16.mxu0 0
      %2368 = vmatmul.mubr.bf16.gmra.mrb[0].mxu0 %v996
      %v2369 = vpop.f32.mrb[0].mxu0
      %v2370 = vadd.f32 0.0, %v2369
      %v2371 = vpop.f32.mrb[0].mxu0
      %v2372 = vpop.f32.mrb[0].mxu0
      %v2373 = vadd.f32 0.0, %v2372
      %v2374 = vpop.f32.mrb[0].mxu0
      %2375 = vmatprep.mubr.bf16.mxu0 0
      %2376 = vmatmul.mubr.bf16.gmra.mrb[0].mxu0 %v999
      %v2377 = vpop.f32.mrb[0].mxu0
      %v2378 = vadd.f32 0.0, %v2377
      %v2379 = vpop.f32.mrb[0].mxu0
      %v2380 = vpop.f32.mrb[0].mxu0
      %v2381 = vadd.f32 0.0, %v2380
      %v2382 = vpop.f32.mrb[0].mxu0
      %2383 = vmatprep.mubr.bf16.mxu0 0
      %2384 = vmatmul.mubr.bf16.gmra.mrb[0].mxu0 %v1594
      %v2385 = vpop.f32.mrb[0].mxu0
      %v2386 = vadd.f32 0.0, %v2385
      %v2387 = vpop.f32.mrb[0].mxu0
      %v2388 = vpop.f32.mrb[0].mxu0
      %v2389 = vadd.f32 0.0, %v2388
      %v2390 = vpop.f32.mrb[0].mxu0
      %2391 = vmatprep.mubr.bf16.mxu0 0
      %2392 = vmatmul.mubr.bf16.gmra.mrb[0].mxu0 %v2234
      %v2393 = vpop.f32.mrb[0].mxu0
      %v2394 = vadd.f32 0.0, %v2393
      %v2395 = vpop.f32.mrb[0].mxu0
      %v2396 = vpop.f32.mrb[0].mxu0
      %v2397 = vadd.f32 0.0, %v2396
      %v2398 = vpop.f32.mrb[0].mxu0
      %2399 = vdwg.mxu0
      %v2400 = vadd.f32 %v2196, %v2274
      %v2401 = vadd.f32 %v2197, %v2277
      %v2402 = vadd.f32 %v2198, %v2282
      %v2403 = vadd.f32 %v2199, %v2285
      %v2404 = vadd.f32 %v2200, %v2290
      %v2405 = vadd.f32 %v2201, %v2293
      %v2406 = vadd.f32 %v2202, %v2298
      %v2407 = vadd.f32 %v2203, %v2301
      %v2408 = vadd.f32 %v2204, %v2306
      %v2409 = vadd.f32 %v2205, %v2309
      %v2410 = vadd.f32 %v2206, %v2314
      %v2411 = vadd.f32 %v2207, %v2317
      %v2412 = vadd.f32 %v2208, %v2322
      %v2413 = vadd.f32 %v2209, %v2325
      %v2414 = vadd.f32 %v2210, %v2330
      %v2415 = vadd.f32 %v2211, %v2333
      %v2416 = vadd.f32 %v2212, %v2338
      %v2417 = vadd.f32 %v2213, %v2341
      %v2418 = vadd.f32 %v2214, %v2346
      %v2419 = vadd.f32 %v2215, %v2349
      %v2420 = vadd.f32 %v2216, %v2354
      %v2421 = vadd.f32 %v2217, %v2357
      %v2422 = vadd.f32 %v2218, %v2362
      %v2423 = vadd.f32 %v2219, %v2365
      %v2424 = vadd.f32 %v2220, %v2370
      %v2425 = vadd.f32 %v2221, %v2373
      %v2426 = vadd.f32 %v2222, %v2378
      %v2427 = vadd.f32 %v2223, %v2381
      %v2428 = vadd.f32 %v2224, %v2386
      %v2429 = vadd.f32 %v2225, %v2389
      %v2430 = vadd.f32 %v2226, %v2394
      %v2431 = vadd.f32 %v2227, %v2397
      %v2433 = vshrl.u32 %v212, 16
      %v2435 = vrot.slane %v2433, 4
      %v2436 = vshll.u32 %v212, 16
      %v2438 = vrot.slane %v2436, 5
      %v2439 = vor.u32 %v2435, %v2438
      %v2440 = vrot.slane %v2439, 4
      %v2442 = vshll.u32 %v213, 16
      %v2444 = vrot.slane %v2442, 5
      %v2445 = vsel %vm226, %v2440, %v2444
      %v2446 = vshrl.u32 %v213, 16
      %v2448 = vrot.slane %v2446, 4
      %v2449 = vor.u32 %v2448, %v2444
      %v2450 = vrot.slane %v2449, 4
      %v2452 = vshll.u32 %v214, 16
      %v2454 = vrot.slane %v2452, 5
      %v2455 = vsel %vm226, %v2450, %v2454
      %v2456 = vunpack.c.l.b16 %v2445
      %v2457 = vunpack.c.l.b16 %v2455
      %v2458 = vpack.c.b16 %v2457, %v2456
      %v2460 = vsel %vm659, %v2458, 0
      %v2463 = vsel %vm708, %v222, 0
      %2465 = vmatprep.subr.bf16.mxu0 0
      %2466 = vmatpush1.bf16.msra.mxu0 %v2463
      %2467 = vmatprep.subr.bf16.mxu0 0
      %2468 = vmatpush1.bf16.msra.mxu0 0
      %2469 = vmatprep.subr.bf16.mxu0 0
      %2470 = vmatpush1.bf16.msra.mxu0 0
      %2471 = vmatprep.subr.bf16.mxu0 0
      %2472 = vmatpush1.bf16.msra.mxu0 0
      %2473 = vmatprep.subr.bf16.mxu0 0
      %2474 = vmatpush1.bf16.msra.mxu0 0
      %2475 = vmatprep.subr.bf16.mxu0 0
      %2476 = vmatpush1.bf16.msra.mxu0 0
      %2477 = vmatprep.subr.bf16.mxu0 0
      %2478 = vmatpush1.bf16.msra.mxu0 0
      %2479 = vmatprep.subr.bf16.mxu0 0
      %2480 = vmatpush1.bf16.msra.mxu0 0
      %2481 = vmatprep.subr.bf16.mxu0 0
      %2482 = vmatpush1.bf16.msra.mxu0 0
      %2483 = vmatprep.subr.bf16.mxu0 0
      %2484 = vmatpush1.bf16.msra.mxu0 0
      %2485 = vmatprep.subr.bf16.mxu0 0
      %2486 = vmatpush1.bf16.msra.mxu0 0
      %2487 = vmatprep.subr.bf16.mxu0 0
      %2488 = vmatpush1.bf16.msra.mxu0 0
      %2489 = vmatprep.subr.bf16.mxu0 0
      %2490 = vmatpush1.bf16.msra.mxu0 0
      %2491 = vmatprep.subr.bf16.mxu0 0
      %2492 = vmatpush1.bf16.msra.mxu0 0
      %2493 = vmatprep.subr.bf16.mxu0 0
      %2494 = vmatpush1.bf16.msra.mxu0 0
      %2495 = vmatprep.subr.bf16.mxu0 0
      %2496 = vmatpush1.bf16.msra.mxu0 0
      %2497 = vmatprep.mubr.bf16.mxu0 0
      %2498 = vmatmul.mubr.bf16.gmra.mrb[0].mxu0 %v667
      %v2499 = vpop.f32.mrb[0].mxu0
      %v2500 = vadd.f32 0.0, %v2499
      %v2501 = vpop.f32.mrb[0].mxu0
      %v2502 = vpop.f32.mrb[0].mxu0
      %v2503 = vadd.f32 0.0, %v2502
      %v2504 = vpop.f32.mrb[0].mxu0
      %2505 = vmatprep.mubr.bf16.mxu0 0
      %2506 = vmatmul.mubr.bf16.gmra.mrb[0].mxu0 %v670
      %v2507 = vpop.f32.mrb[0].mxu0
      %v2508 = vadd.f32 0.0, %v2507
      %v2509 = vpop.f32.mrb[0].mxu0
      %v2510 = vpop.f32.mrb[0].mxu0
      %v2511 = vadd.f32 0.0, %v2510
      %v2512 = vpop.f32.mrb[0].mxu0
      %2513 = vmatprep.mubr.bf16.mxu0 0
      %2514 = vmatmul.mubr.bf16.gmra.mrb[0].mxu0 %v673
      %v2515 = vpop.f32.mrb[0].mxu0
      %v2516 = vadd.f32 0.0, %v2515
      %v2517 = vpop.f32.mrb[0].mxu0
      %v2518 = vpop.f32.mrb[0].mxu0
      %v2519 = vadd.f32 0.0, %v2518
      %v2520 = vpop.f32.mrb[0].mxu0
      %2521 = vmatprep.mubr.bf16.mxu0 0
      %2522 = vmatmul.mubr.bf16.gmra.mrb[0].mxu0 %v676
      %v2523 = vpop.f32.mrb[0].mxu0
      %v2524 = vadd.f32 0.0, %v2523
      %v2525 = vpop.f32.mrb[0].mxu0
      %v2526 = vpop.f32.mrb[0].mxu0
      %v2527 = vadd.f32 0.0, %v2526
      %v2528 = vpop.f32.mrb[0].mxu0
      %2529 = vmatprep.mubr.bf16.mxu0 0
      %2530 = vmatmul.mubr.bf16.gmra.mrb[0].mxu0 %v679
      %v2531 = vpop.f32.mrb[0].mxu0
      %v2532 = vadd.f32 0.0, %v2531
      %v2533 = vpop.f32.mrb[0].mxu0
      %v2534 = vpop.f32.mrb[0].mxu0
      %v2535 = vadd.f32 0.0, %v2534
      %v2536 = vpop.f32.mrb[0].mxu0
      %2537 = vmatprep.mubr.bf16.mxu0 0
      %2538 = vmatmul.mubr.bf16.gmra.mrb[0].mxu0 %v682
      %v2539 = vpop.f32.mrb[0].mxu0
      %v2540 = vadd.f32 0.0, %v2539
      %v2541 = vpop.f32.mrb[0].mxu0
      %v2542 = vpop.f32.mrb[0].mxu0
      %v2543 = vadd.f32 0.0, %v2542
      %v2544 = vpop.f32.mrb[0].mxu0
      %2545 = vmatprep.mubr.bf16.mxu0 0
      %2546 = vmatmul.mubr.bf16.gmra.mrb[0].mxu0 %v685
      %v2547 = vpop.f32.mrb[0].mxu0
      %v2548 = vadd.f32 0.0, %v2547
      %v2549 = vpop.f32.mrb[0].mxu0
      %v2550 = vpop.f32.mrb[0].mxu0
      %v2551 = vadd.f32 0.0, %v2550
      %v2552 = vpop.f32.mrb[0].mxu0
      %2553 = vmatprep.mubr.bf16.mxu0 0
      %2554 = vmatmul.mubr.bf16.gmra.mrb[0].mxu0 %v688
      %v2555 = vpop.f32.mrb[0].mxu0
      %v2556 = vadd.f32 0.0, %v2555
      %v2557 = vpop.f32.mrb[0].mxu0
      %v2558 = vpop.f32.mrb[0].mxu0
      %v2559 = vadd.f32 0.0, %v2558
      %v2560 = vpop.f32.mrb[0].mxu0
      %2561 = vmatprep.mubr.bf16.mxu0 0
      %2562 = vmatmul.mubr.bf16.gmra.mrb[0].mxu0 %v691
      %v2563 = vpop.f32.mrb[0].mxu0
      %v2564 = vadd.f32 0.0, %v2563
      %v2565 = vpop.f32.mrb[0].mxu0
      %v2566 = vpop.f32.mrb[0].mxu0
      %v2567 = vadd.f32 0.0, %v2566
      %v2568 = vpop.f32.mrb[0].mxu0
      %2569 = vmatprep.mubr.bf16.mxu0 0
      %2570 = vmatmul.mubr.bf16.gmra.mrb[0].mxu0 %v694
      %v2571 = vpop.f32.mrb[0].mxu0
      %v2572 = vadd.f32 0.0, %v2571
      %v2573 = vpop.f32.mrb[0].mxu0
      %v2574 = vpop.f32.mrb[0].mxu0
      %v2575 = vadd.f32 0.0, %v2574
      %v2576 = vpop.f32.mrb[0].mxu0
      %2577 = vmatprep.mubr.bf16.mxu0 0
      %2578 = vmatmul.mubr.bf16.gmra.mrb[0].mxu0 %v697
      %v2579 = vpop.f32.mrb[0].mxu0
      %v2580 = vadd.f32 0.0, %v2579
      %v2581 = vpop.f32.mrb[0].mxu0
      %v2582 = vpop.f32.mrb[0].mxu0
      %v2583 = vadd.f32 0.0, %v2582
      %v2584 = vpop.f32.mrb[0].mxu0
      %2585 = vmatprep.mubr.bf16.mxu0 0
      %2586 = vmatmul.mubr.bf16.gmra.mrb[0].mxu0 %v700
      %v2587 = vpop.f32.mrb[0].mxu0
      %v2588 = vadd.f32 0.0, %v2587
      %v2589 = vpop.f32.mrb[0].mxu0
      %v2590 = vpop.f32.mrb[0].mxu0
      %v2591 = vadd.f32 0.0, %v2590
      %v2592 = vpop.f32.mrb[0].mxu0
      %2593 = vmatprep.mubr.bf16.mxu0 0
      %2594 = vmatmul.mubr.bf16.gmra.mrb[0].mxu0 %v703
      %v2595 = vpop.f32.mrb[0].mxu0
      %v2596 = vadd.f32 0.0, %v2595
      %v2597 = vpop.f32.mrb[0].mxu0
      %v2598 = vpop.f32.mrb[0].mxu0
      %v2599 = vadd.f32 0.0, %v2598
      %v2600 = vpop.f32.mrb[0].mxu0
      %2601 = vmatprep.mubr.bf16.mxu0 0
      %2602 = vmatmul.mubr.bf16.gmra.mrb[0].mxu0 %v706
      %v2603 = vpop.f32.mrb[0].mxu0
      %v2604 = vadd.f32 0.0, %v2603
      %v2605 = vpop.f32.mrb[0].mxu0
      %v2606 = vpop.f32.mrb[0].mxu0
      %v2607 = vadd.f32 0.0, %v2606
      %v2608 = vpop.f32.mrb[0].mxu0
      %2609 = vmatprep.mubr.bf16.mxu0 0
      %2610 = vmatmul.mubr.bf16.gmra.mrb[0].mxu0 %v1820
      %v2611 = vpop.f32.mrb[0].mxu0
      %v2612 = vadd.f32 0.0, %v2611
      %v2613 = vpop.f32.mrb[0].mxu0
      %v2614 = vpop.f32.mrb[0].mxu0
      %v2615 = vadd.f32 0.0, %v2614
      %v2616 = vpop.f32.mrb[0].mxu0
      %2617 = vmatprep.mubr.bf16.mxu0 0
      %2618 = vmatmul.mubr.bf16.gmra.mrb[0].mxu0 %v2460
      %v2619 = vpop.f32.mrb[0].mxu0
      %v2620 = vadd.f32 0.0, %v2619
      %v2621 = vpop.f32.mrb[0].mxu0
      %v2622 = vpop.f32.mrb[0].mxu0
      %v2623 = vadd.f32 0.0, %v2622
      %v2624 = vpop.f32.mrb[0].mxu0
      %2625 = vdwg.mxu0
      %v2626 = vadd.f32 %v2400, %v2500
      %v2627 = vadd.f32 %v2401, %v2503
      %v2628 = vadd.f32 %v2402, %v2508
      %v2629 = vadd.f32 %v2403, %v2511
      %v2630 = vadd.f32 %v2404, %v2516
      %v2631 = vadd.f32 %v2405, %v2519
      %v2632 = vadd.f32 %v2406, %v2524
      %v2633 = vadd.f32 %v2407, %v2527
      %v2634 = vadd.f32 %v2408, %v2532
      %v2635 = vadd.f32 %v2409, %v2535
      %v2636 = vadd.f32 %v2410, %v2540
      %v2637 = vadd.f32 %v2411, %v2543
      %v2638 = vadd.f32 %v2412, %v2548
      %v2639 = vadd.f32 %v2413, %v2551
      %v2640 = vadd.f32 %v2414, %v2556
      %v2641 = vadd.f32 %v2415, %v2559
      %v2642 = vadd.f32 %v2416, %v2564
      %v2643 = vadd.f32 %v2417, %v2567
      %v2644 = vadd.f32 %v2418, %v2572
      %v2645 = vadd.f32 %v2419, %v2575
      %v2646 = vadd.f32 %v2420, %v2580
      %v2647 = vadd.f32 %v2421, %v2583
      %v2648 = vadd.f32 %v2422, %v2588
      %v2649 = vadd.f32 %v2423, %v2591
      %v2650 = vadd.f32 %v2424, %v2596
      %v2651 = vadd.f32 %v2425, %v2599
      %v2652 = vadd.f32 %v2426, %v2604
      %v2653 = vadd.f32 %v2427, %v2607
      %v2654 = vadd.f32 %v2428, %v2612
      %v2655 = vadd.f32 %v2429, %v2615
      %v2656 = vadd.f32 %v2430, %v2620
      %v2657 = vadd.f32 %v2431, %v2623
      %v2659 = vrot.slane %v212, 5
      %v2660 = vrot.slane %v2659, 4
      %v2661 = vrot.slane %v213, 5
      %v2662 = vsel %vm1183, %v2660, %v2661
      %v2663 = vrot.slane %v2661, 4
      %v2664 = vrot.slane %v214, 5
      %v2665 = vsel %vm1183, %v2663, %v2664
      %v2666 = vunpack.c.l.b16 %v2662
      %v2667 = vunpack.c.l.b16 %v2665
      %v2668 = vpack.c.b16 %v2667, %v2666
      %v2670 = vsel %vm659, %v2668, 0
      %v2673 = vsel %vm708, %v223, 0
      %2675 = vmatprep.subr.bf16.mxu0 0
      %2676 = vmatpush1.bf16.msra.mxu0 %v2673
      %2677 = vmatprep.subr.bf16.mxu0 0
      %2678 = vmatpush1.bf16.msra.mxu0 0
      %2679 = vmatprep.subr.bf16.mxu0 0
      %2680 = vmatpush1.bf16.msra.mxu0 0
      %2681 = vmatprep.subr.bf16.mxu0 0
      %2682 = vmatpush1.bf16.msra.mxu0 0
      %2683 = vmatprep.subr.bf16.mxu0 0
      %2684 = vmatpush1.bf16.msra.mxu0 0
      %2685 = vmatprep.subr.bf16.mxu0 0
      %2686 = vmatpush1.bf16.msra.mxu0 0
      %2687 = vmatprep.subr.bf16.mxu0 0
      %2688 = vmatpush1.bf16.msra.mxu0 0
      %2689 = vmatprep.subr.bf16.mxu0 0
      %2690 = vmatpush1.bf16.msra.mxu0 0
      %2691 = vmatprep.subr.bf16.mxu0 0
      %2692 = vmatpush1.bf16.msra.mxu0 0
      %2693 = vmatprep.subr.bf16.mxu0 0
      %2694 = vmatpush1.bf16.msra.mxu0 0
      %2695 = vmatprep.subr.bf16.mxu0 0
      %2696 = vmatpush1.bf16.msra.mxu0 0
      %2697 = vmatprep.subr.bf16.mxu0 0
      %2698 = vmatpush1.bf16.msra.mxu0 0
      %2699 = vmatprep.subr.bf16.mxu0 0
      %2700 = vmatpush1.bf16.msra.mxu0 0
      %2701 = vmatprep.subr.bf16.mxu0 0
      %2702 = vmatpush1.bf16.msra.mxu0 0
      %2703 = vmatprep.subr.bf16.mxu0 0
      %2704 = vmatpush1.bf16.msra.mxu0 0
      %2705 = vmatprep.subr.bf16.mxu0 0
      %2706 = vmatpush1.bf16.msra.mxu0 0
      %2707 = vmatprep.mubr.bf16.mxu0 0
      %2708 = vmatmul.mubr.bf16.gmra.mrb[0].mxu0 %v1351
      %v2709 = vpop.f32.mrb[0].mxu0
      %v2710 = vadd.f32 0.0, %v2709
      %v2711 = vpop.f32.mrb[0].mxu0
      %v2712 = vpop.f32.mrb[0].mxu0
      %v2713 = vadd.f32 0.0, %v2712
      %v2714 = vpop.f32.mrb[0].mxu0
      %2715 = vmatprep.mubr.bf16.mxu0 0
      %2716 = vmatmul.mubr.bf16.gmra.mrb[0].mxu0 %v1354
      %v2717 = vpop.f32.mrb[0].mxu0
      %v2718 = vadd.f32 0.0, %v2717
      %v2719 = vpop.f32.mrb[0].mxu0
      %v2720 = vpop.f32.mrb[0].mxu0
      %v2721 = vadd.f32 0.0, %v2720
      %v2722 = vpop.f32.mrb[0].mxu0
      %2723 = vmatprep.mubr.bf16.mxu0 0
      %2724 = vmatmul.mubr.bf16.gmra.mrb[0].mxu0 %v1357
      %v2725 = vpop.f32.mrb[0].mxu0
      %v2726 = vadd.f32 0.0, %v2725
      %v2727 = vpop.f32.mrb[0].mxu0
      %v2728 = vpop.f32.mrb[0].mxu0
      %v2729 = vadd.f32 0.0, %v2728
      %v2730 = vpop.f32.mrb[0].mxu0
      %2731 = vmatprep.mubr.bf16.mxu0 0
      %2732 = vmatmul.mubr.bf16.gmra.mrb[0].mxu0 %v1360
      %v2733 = vpop.f32.mrb[0].mxu0
      %v2734 = vadd.f32 0.0, %v2733
      %v2735 = vpop.f32.mrb[0].mxu0
      %v2736 = vpop.f32.mrb[0].mxu0
      %v2737 = vadd.f32 0.0, %v2736
      %v2738 = vpop.f32.mrb[0].mxu0
      %2739 = vmatprep.mubr.bf16.mxu0 0
      %2740 = vmatmul.mubr.bf16.gmra.mrb[0].mxu0 %v1363
      %v2741 = vpop.f32.mrb[0].mxu0
      %v2742 = vadd.f32 0.0, %v2741
      %v2743 = vpop.f32.mrb[0].mxu0
      %v2744 = vpop.f32.mrb[0].mxu0
      %v2745 = vadd.f32 0.0, %v2744
      %v2746 = vpop.f32.mrb[0].mxu0
      %2747 = vmatprep.mubr.bf16.mxu0 0
      %2748 = vmatmul.mubr.bf16.gmra.mrb[0].mxu0 %v1366
      %v2749 = vpop.f32.mrb[0].mxu0
      %v2750 = vadd.f32 0.0, %v2749
      %v2751 = vpop.f32.mrb[0].mxu0
      %v2752 = vpop.f32.mrb[0].mxu0
      %v2753 = vadd.f32 0.0, %v2752
      %v2754 = vpop.f32.mrb[0].mxu0
      %2755 = vmatprep.mubr.bf16.mxu0 0
      %2756 = vmatmul.mubr.bf16.gmra.mrb[0].mxu0 %v1369
      %v2757 = vpop.f32.mrb[0].mxu0
      %v2758 = vadd.f32 0.0, %v2757
      %v2759 = vpop.f32.mrb[0].mxu0
      %v2760 = vpop.f32.mrb[0].mxu0
      %v2761 = vadd.f32 0.0, %v2760
      %v2762 = vpop.f32.mrb[0].mxu0
      %2763 = vmatprep.mubr.bf16.mxu0 0
      %2764 = vmatmul.mubr.bf16.gmra.mrb[0].mxu0 %v1372
      %v2765 = vpop.f32.mrb[0].mxu0
      %v2766 = vadd.f32 0.0, %v2765
      %v2767 = vpop.f32.mrb[0].mxu0
      %v2768 = vpop.f32.mrb[0].mxu0
      %v2769 = vadd.f32 0.0, %v2768
      %v2770 = vpop.f32.mrb[0].mxu0
      %2771 = vmatprep.mubr.bf16.mxu0 0
      %2772 = vmatmul.mubr.bf16.gmra.mrb[0].mxu0 %v1375
      %v2773 = vpop.f32.mrb[0].mxu0
      %v2774 = vadd.f32 0.0, %v2773
      %v2775 = vpop.f32.mrb[0].mxu0
      %v2776 = vpop.f32.mrb[0].mxu0
      %v2777 = vadd.f32 0.0, %v2776
      %v2778 = vpop.f32.mrb[0].mxu0
      %2779 = vmatprep.mubr.bf16.mxu0 0
      %2780 = vmatmul.mubr.bf16.gmra.mrb[0].mxu0 %v1378
      %v2781 = vpop.f32.mrb[0].mxu0
      %v2782 = vadd.f32 0.0, %v2781
      %v2783 = vpop.f32.mrb[0].mxu0
      %v2784 = vpop.f32.mrb[0].mxu0
      %v2785 = vadd.f32 0.0, %v2784
      %v2786 = vpop.f32.mrb[0].mxu0
      %2787 = vmatprep.mubr.bf16.mxu0 0
      %2788 = vmatmul.mubr.bf16.gmra.mrb[0].mxu0 %v1381
      %v2789 = vpop.f32.mrb[0].mxu0
      %v2790 = vadd.f32 0.0, %v2789
      %v2791 = vpop.f32.mrb[0].mxu0
      %v2792 = vpop.f32.mrb[0].mxu0
      %v2793 = vadd.f32 0.0, %v2792
      %v2794 = vpop.f32.mrb[0].mxu0
      %2795 = vmatprep.mubr.bf16.mxu0 0
      %2796 = vmatmul.mubr.bf16.gmra.mrb[0].mxu0 %v1384
      %v2797 = vpop.f32.mrb[0].mxu0
      %v2798 = vadd.f32 0.0, %v2797
      %v2799 = vpop.f32.mrb[0].mxu0
      %v2800 = vpop.f32.mrb[0].mxu0
      %v2801 = vadd.f32 0.0, %v2800
      %v2802 = vpop.f32.mrb[0].mxu0
      %2803 = vmatprep.mubr.bf16.mxu0 0
      %2804 = vmatmul.mubr.bf16.gmra.mrb[0].mxu0 %v1387
      %v2805 = vpop.f32.mrb[0].mxu0
      %v2806 = vadd.f32 0.0, %v2805
      %v2807 = vpop.f32.mrb[0].mxu0
      %v2808 = vpop.f32.mrb[0].mxu0
      %v2809 = vadd.f32 0.0, %v2808
      %v2810 = vpop.f32.mrb[0].mxu0
      %2811 = vmatprep.mubr.bf16.mxu0 0
      %2812 = vmatmul.mubr.bf16.gmra.mrb[0].mxu0 %v1390
      %v2813 = vpop.f32.mrb[0].mxu0
      %v2814 = vadd.f32 0.0, %v2813
      %v2815 = vpop.f32.mrb[0].mxu0
      %v2816 = vpop.f32.mrb[0].mxu0
      %v2817 = vadd.f32 0.0, %v2816
      %v2818 = vpop.f32.mrb[0].mxu0
      %2819 = vmatprep.mubr.bf16.mxu0 0
      %2820 = vmatmul.mubr.bf16.gmra.mrb[0].mxu0 %v2030
      %v2821 = vpop.f32.mrb[0].mxu0
      %v2822 = vadd.f32 0.0, %v2821
      %v2823 = vpop.f32.mrb[0].mxu0
      %v2824 = vpop.f32.mrb[0].mxu0
      %v2825 = vadd.f32 0.0, %v2824
      %v2826 = vpop.f32.mrb[0].mxu0
      %2827 = vmatprep.mubr.bf16.mxu0 0
      %2828 = vmatmul.mubr.bf16.gmra.mrb[0].mxu0 %v2670
      %v2829 = vpop.f32.mrb[0].mxu0
      %v2830 = vadd.f32 0.0, %v2829
      %v2831 = vpop.f32.mrb[0].mxu0
      %v2832 = vpop.f32.mrb[0].mxu0
      %v2833 = vadd.f32 0.0, %v2832
      %v2834 = vpop.f32.mrb[0].mxu0
      %2835 = vdwg.mxu0
      %v2836 = vadd.f32 %v2626, %v2710
      %v2837 = vadd.f32 %v2627, %v2713
      %v2838 = vadd.f32 %v2628, %v2718
      %v2839 = vadd.f32 %v2629, %v2721
      %v2840 = vadd.f32 %v2630, %v2726
      %v2841 = vadd.f32 %v2631, %v2729
      %v2842 = vadd.f32 %v2632, %v2734
      %v2843 = vadd.f32 %v2633, %v2737
      %v2844 = vadd.f32 %v2634, %v2742
      %v2845 = vadd.f32 %v2635, %v2745
      %v2846 = vadd.f32 %v2636, %v2750
      %v2847 = vadd.f32 %v2637, %v2753
      %v2848 = vadd.f32 %v2638, %v2758
      %v2849 = vadd.f32 %v2639, %v2761
      %v2850 = vadd.f32 %v2640, %v2766
      %v2851 = vadd.f32 %v2641, %v2769
      %v2852 = vadd.f32 %v2642, %v2774
      %v2853 = vadd.f32 %v2643, %v2777
      %v2854 = vadd.f32 %v2644, %v2782
      %v2855 = vadd.f32 %v2645, %v2785
      %v2856 = vadd.f32 %v2646, %v2790
      %v2857 = vadd.f32 %v2647, %v2793
      %v2858 = vadd.f32 %v2648, %v2798
      %v2859 = vadd.f32 %v2649, %v2801
      %v2860 = vadd.f32 %v2650, %v2806
      %v2861 = vadd.f32 %v2651, %v2809
      %v2862 = vadd.f32 %v2652, %v2814
      %v2863 = vadd.f32 %v2653, %v2817
      %v2864 = vadd.f32 %v2654, %v2822
      %v2865 = vadd.f32 %v2655, %v2825
      %v2866 = vadd.f32 %v2656, %v2830
      %v2867 = vadd.f32 %v2657, %v2833
      %v2868 = vld [vmem:[%s2] sm:$0x1]
      %v2869 = vadd.f32 %v2836, %v2837
      %v2870 = vadd.f32 %v2869, %v2838
      %v2871 = vadd.f32 %v2870, %v2839
      %v2872 = vadd.f32 %v2871, %v2840
      %v2873 = vadd.f32 %v2872, %v2841
      %v2874 = vadd.f32 %v2873, %v2842
      %v2875 = vadd.f32 %v2874, %v2843
      %v2876 = vadd.f32 %v2875, %v2844
      %v2877 = vadd.f32 %v2876, %v2845
      %v2878 = vadd.f32 %v2877, %v2846
      %v2879 = vadd.f32 %v2878, %v2847
      %v2880 = vadd.f32 %v2879, %v2848
      %v2881 = vadd.f32 %v2880, %v2849
      %v2882 = vadd.f32 %v2881, %v2850
      %v2883 = vadd.f32 %v2882, %v2851
      %v2884 = vadd.f32 %v2883, %v2852
      %v2885 = vadd.f32 %v2884, %v2853
      %v2886 = vadd.f32 %v2885, %v2854
      %v2887 = vadd.f32 %v2886, %v2855
      %v2888 = vadd.f32 %v2887, %v2856
      %v2889 = vadd.f32 %v2888, %v2857
      %v2890 = vadd.f32 %v2889, %v2858
      %v2891 = vadd.f32 %v2890, %v2859
      %v2892 = vadd.f32 %v2891, %v2860
      %v2893 = vadd.f32 %v2892, %v2861
      %v2894 = vadd.f32 %v2893, %v2862
      %v2895 = vadd.f32 %v2894, %v2863
      %v2896 = vadd.f32 %v2895, %v2864
      %v2897 = vadd.f32 %v2896, %v2865
      %v2898 = vadd.f32 %v2897, %v2866
      %v2899 = vadd.f32 %v2898, %v2867
      %v2900 = vrot.slane %v2899, 4
      %v2901 = vadd.f32 %v2899, %v2900
      %v2902 = vrot.slane %v2901, 2
      %v2903 = vadd.f32 %v2901, %v2902
      %v2904 = vrot.slane %v2903, 1
      %v2905 = vadd.f32 %v2903, %v2904
      %v2906 = vadd.f32 %v2868, %v2905
      %2907 = vst [vmem:[%s2] sm:$0x1] %v2906
      %v2908 = vld [vmem:[%s3] sm:$0x1]
      %v2909 = vmul.f32 %v2836, %v2836
      %v2910 = vmul.f32 %v2837, %v2837
      %v2911 = vmul.f32 %v2838, %v2838
      %v2912 = vmul.f32 %v2839, %v2839
      %v2913 = vmul.f32 %v2840, %v2840
      %v2914 = vmul.f32 %v2841, %v2841
      %v2915 = vmul.f32 %v2842, %v2842
      %v2916 = vmul.f32 %v2843, %v2843
      %v2917 = vmul.f32 %v2844, %v2844
      %v2918 = vmul.f32 %v2845, %v2845
      %v2919 = vmul.f32 %v2846, %v2846
      %v2920 = vmul.f32 %v2847, %v2847
      %v2921 = vmul.f32 %v2848, %v2848
      %v2922 = vmul.f32 %v2849, %v2849
      %v2923 = vmul.f32 %v2850, %v2850
      %v2924 = vmul.f32 %v2851, %v2851
      %v2925 = vmul.f32 %v2852, %v2852
      %v2926 = vmul.f32 %v2853, %v2853
      %v2927 = vmul.f32 %v2854, %v2854
      %v2928 = vmul.f32 %v2855, %v2855
      %v2929 = vmul.f32 %v2856, %v2856
      %v2930 = vmul.f32 %v2857, %v2857
      %v2931 = vmul.f32 %v2858, %v2858
      %v2932 = vmul.f32 %v2859, %v2859
      %v2933 = vmul.f32 %v2860, %v2860
      %v2934 = vmul.f32 %v2861, %v2861
      %v2935 = vmul.f32 %v2862, %v2862
      %v2936 = vmul.f32 %v2863, %v2863
      %v2937 = vmul.f32 %v2864, %v2864
      %v2938 = vmul.f32 %v2865, %v2865
      %v2939 = vmul.f32 %v2866, %v2866
      %v2940 = vmul.f32 %v2867, %v2867
      %v2941 = vadd.f32 %v2909, %v2910
      %v2942 = vadd.f32 %v2941, %v2911
      %v2943 = vadd.f32 %v2942, %v2912
      %v2944 = vadd.f32 %v2943, %v2913
      %v2945 = vadd.f32 %v2944, %v2914
      %v2946 = vadd.f32 %v2945, %v2915
      %v2947 = vadd.f32 %v2946, %v2916
      %v2948 = vadd.f32 %v2947, %v2917
      %v2949 = vadd.f32 %v2948, %v2918
      %v2950 = vadd.f32 %v2949, %v2919
      %v2951 = vadd.f32 %v2950, %v2920
      %v2952 = vadd.f32 %v2951, %v2921
      %v2953 = vadd.f32 %v2952, %v2922
      %v2954 = vadd.f32 %v2953, %v2923
      %v2955 = vadd.f32 %v2954, %v2924
      %v2956 = vadd.f32 %v2955, %v2925
      %v2957 = vadd.f32 %v2956, %v2926
      %v2958 = vadd.f32 %v2957, %v2927
      %v2959 = vadd.f32 %v2958, %v2928
      %v2960 = vadd.f32 %v2959, %v2929
      %v2961 = vadd.f32 %v2960, %v2930
      %v2962 = vadd.f32 %v2961, %v2931
      %v2963 = vadd.f32 %v2962, %v2932
      %v2964 = vadd.f32 %v2963, %v2933
      %v2965 = vadd.f32 %v2964, %v2934
      %v2966 = vadd.f32 %v2965, %v2935
      %v2967 = vadd.f32 %v2966, %v2936
      %v2968 = vadd.f32 %v2967, %v2937
      %v2969 = vadd.f32 %v2968, %v2938
      %v2970 = vadd.f32 %v2969, %v2939
      %v2971 = vadd.f32 %v2970, %v2940
      %v2972 = vrot.slane %v2971, 4
      %v2973 = vadd.f32 %v2971, %v2972
      %v2974 = vrot.slane %v2973, 2
      %v2975 = vadd.f32 %v2973, %v2974
      %v2976 = vrot.slane %v2975, 1
      %v2977 = vadd.f32 %v2975, %v2976
      %v2978 = vadd.f32 %v2908, %v2977
      %2979 = vst [vmem:[%s3] sm:$0x1] %v2978
      // Predicated region
      $region33: #{_lambda_.4} parent=27 // pred_check
        %p2980 = pneg %p75
      $region34: #{_lambda_.4} parent=27 // pred_check_branch
        %2982 = sbr.rel (%p2980) target = $region36
      $region35: #{_lambda_.4} parent=27 // pred_region
        _
      $region36: #{_lambda_.4} parent=27 // pred_fallthru
        _
      // Predicated region
      $region37: #{_lambda_.4} parent=27 // pred_check
        %p2983 = pneg %p96
      $region38: #{_lambda_.4} parent=27 // pred_check_branch
        %2985 = sbr.rel (%p2983) target = $region40
      $region39: #{_lambda_.4} parent=27 // pred_region
        _
      $region40: #{_lambda_.4} parent=27 // pred_fallthru
        _
      // Predicated region
      $region41: #{_lambda_.4} parent=27 // pred_check
        %p2986 = pneg %p75
      $region42: #{_lambda_.4} parent=27 // pred_check_branch
        %2988 = sbr.rel (%p2986) target = $region44
      $region43: #{_lambda_.4} parent=27 // pred_region
        _
      $region44: #{_lambda_.4} parent=27 // pred_fallthru
        _
      // Predicated region
      $region45: #{_lambda_.4} parent=27 // pred_check
        %p2989 = pneg %p96
      $region46: #{_lambda_.4} parent=27 // pred_check_branch
        %2991 = sbr.rel (%p2989) target = $region48
      $region47: #{_lambda_.4} parent=27 // pred_region
        _
      $region48: #{_lambda_.4} parent=27 // pred_fallthru
        _
    $region28: #{_lambda_.4} parent=5 // pred_fallthru
      _
    %p2992 = scmp.le.s32.totalorder 2, %s10
    // Predicated region
    $region49: #{_lambda_.4} parent=5 // pred_check
      %p2993 = pneg %p2992
    $region50: #{_lambda_.4} parent=5 // pred_check_branch
      %2995 = sbr.rel (%p2993) target = $region52
    $region51: #{_lambda_.4} parent=5 // pred_region
      %s2996 = ssub.s32 %s10, 2
    $region52: #{_lambda_.4} parent=5 // pred_fallthru
      _
  $region6: #{_lambda_.4} parent=0 // loop_footer
    %s14 = sadd.s32 1, %s10
  $region7: #{_lambda_.4} parent=0 // loop_footer_branch
    %9 = sbr.rel target = $region3
  $region8: #{_lambda_.4} parent=0 // loop_exit
    _

// kernel: _lambda_.5
$region0: #{_lambda_.5}
  #allocation0 [shape = 'u32[]', space=smem, size = 0x4, offset = 0x4, fixed_abs, tag = 'smem constant byte address 0x4 - core index']
  #allocation1 [shape = 'u32[144,128]{1,0:T(1,128)}', space=vmem, size = 0x12000, scoped, tag = 'internal scratch']
  %s0 = inlined_call_operand.vmem [shape: bf16[2,18,18,4], index: 0, kind: input, shape index: {}]
  %s1 = inlined_call_operand.vmem [shape: bf16[9,4,128], index: 1, kind: input, shape index: {}]
  %s2 = inlined_call_operand.vmem [shape: f32[1,128], index: 2, kind: input, shape index: {}]
  %s3 = inlined_call_operand.vmem [shape: f32[1,128], index: 3, kind: input, shape index: {}]
  %s4 = inlined_call_operand.vmem [shape: f32[512,128], index: 4, kind: output, shape index: {}]
  %s5 = sld [smem:[#allocation0]]
  $region49: #{_lambda_.5} parent=0
    _
  %s7 = ssub.s32 1, %s5
  %s8 = scalar_select 0, %s7, %s5
  loop: start=0, step=1, limit=4
  $region2: #{_lambda_.5} parent=0 // loop_pre_header
    _
  $region3: #{_lambda_.5} parent=0 // loop_header
    %s10 = sphi 0, %s14
    %p11 = scmp.ge.s32.totalorder %s10, 4
    %s20 = sphi 0, %s22
    %s23 = sphi 0, %s20
    %s24 = sphi 0, %s23
    %s40 = sphi 0, %s24
    %s44 = sphi 0, %s44
    %s46 = sphi 0, %s44
    %s47 = sphi 0, %s46
    %s61 = sphi 0, %s47
    %s65 = sphi 0, %s65
    %s67 = sphi 0, %s65
    %s68 = sphi 0, %s67
    %s82 = sphi 0, %s68
    %s86 = sphi 0, %s86
    %s88 = sphi 0, %s86
    %s89 = sphi 0, %s88
    %s103 = sphi 0, %s89
    %s109 = sphi 0, %s111
    %s112 = sphi 0, %s109
    %s113 = sphi 0, %s112
    %s129 = sphi 0, %s113
  $region4: #{_lambda_.5} parent=0 // loop_header_branch
    %13 = sbr.rel (%p11) target = $region8
  $region5: #{_lambda_.5} parent=0 // loop_body
    %s15 = ssub.s32 %s10, 1
    %s16 = ssub.s32 %s10, 2
    %s17 = sadd.s32 %s10, 1
    %s18 = ssub.s32 %s10, %s17
    %p19 = scmp.eq.s32.totalorder %s18, 0
    %s21 = sadd.s32 %s20, 1
    %s22 = scalar_select %p19, %s20, %s21
    %p25 = pneg %p19
    %p26 = scmp.eq.s32.totalorder %s10, 1
    %p27 = por %p25, %p26
    %p28 = scmp.ne.s32.totalorder %s20, %s23
    %p29 = scmp.eq.s32.totalorder %s10, 0
    %p30 = por %p28, %p29
    %p31 = scmp.ne.s32.totalorder %s20, %s23
    %p32 = scmp.eq.s32.totalorder %s15, 1
    %p33 = por %p31, %p32
    %p34 = scmp.ne.s32.totalorder %s23, %s24
    %p35 = scmp.eq.s32.totalorder %s15, 0
    %p36 = por %p34, %p35
    %p37 = scmp.ne.s32.totalorder %s23, %s24
    %p38 = scmp.eq.s32.totalorder %s16, 1
    %p39 = por %p37, %p38
    %p41 = scmp.ne.s32.totalorder %s24, %s40
    %p42 = scmp.eq.s32.totalorder %s16, 0
    %p43 = por %p41, %p42
    %s45 = sadd.s32 %s44, 1
    %p48 = scmp.eq.s32.totalorder %s10, 1
    %p49 = scmp.ne.s32.totalorder %s44, %s46
    %p50 = scmp.eq.s32.totalorder %s10, 0
    %p51 = por %p49, %p50
    %p52 = scmp.ne.s32.totalorder %s44, %s46
    %p53 = scmp.eq.s32.totalorder %s15, 1
    %p54 = por %p52, %p53
    %p55 = scmp.ne.s32.totalorder %s46, %s47
    %p56 = scmp.eq.s32.totalorder %s15, 0
    %p57 = por %p55, %p56
    %p58 = scmp.ne.s32.totalorder %s46, %s47
    %p59 = scmp.eq.s32.totalorder %s16, 1
    %p60 = por %p58, %p59
    %p62 = scmp.ne.s32.totalorder %s47, %s61
    %p63 = scmp.eq.s32.totalorder %s16, 0
    %p64 = por %p62, %p63
    %s66 = sadd.s32 %s65, 1
    %p69 = scmp.eq.s32.totalorder %s10, 1
    %p70 = scmp.ne.s32.totalorder %s65, %s67
    %p71 = scmp.eq.s32.totalorder %s10, 0
    %p72 = por %p70, %p71
    %p73 = scmp.ne.s32.totalorder %s65, %s67
    %p74 = scmp.eq.s32.totalorder %s15, 1
    %p75 = por %p73, %p74
    %p76 = scmp.ne.s32.totalorder %s67, %s68
    %p77 = scmp.eq.s32.totalorder %s15, 0
    %p78 = por %p76, %p77
    %p79 = scmp.ne.s32.totalorder %s67, %s68
    %p80 = scmp.eq.s32.totalorder %s16, 1
    %p81 = por %p79, %p80
    %p83 = scmp.ne.s32.totalorder %s68, %s82
    %p84 = scmp.eq.s32.totalorder %s16, 0
    %p85 = por %p83, %p84
    %s87 = sadd.s32 %s86, 1
    %p90 = scmp.eq.s32.totalorder %s10, 1
    %p91 = scmp.ne.s32.totalorder %s86, %s88
    %p92 = scmp.eq.s32.totalorder %s10, 0
    %p93 = por %p91, %p92
    %p94 = scmp.ne.s32.totalorder %s86, %s88
    %p95 = scmp.eq.s32.totalorder %s15, 1
    %p96 = por %p94, %p95
    %p97 = scmp.ne.s32.totalorder %s88, %s89
    %p98 = scmp.eq.s32.totalorder %s15, 0
    %p99 = por %p97, %p98
    %p100 = scmp.ne.s32.totalorder %s88, %s89
    %p101 = scmp.eq.s32.totalorder %s16, 1
    %p102 = por %p100, %p101
    %p104 = scmp.ne.s32.totalorder %s89, %s103
    %p105 = scmp.eq.s32.totalorder %s16, 0
    %p106 = por %p104, %p105
    %s107 = ssub.s32 %s10, %s17
    %p108 = scmp.eq.s32.totalorder %s107, 0
    %s110 = sadd.s32 %s109, 1
    %s111 = scalar_select %p108, %s109, %s110
    %p114 = pneg %p108
    %p115 = scmp.eq.s32.totalorder %s10, 1
    %p116 = por %p114, %p115
    %p117 = scmp.ne.s32.totalorder %s109, %s112
    %p118 = scmp.eq.s32.totalorder %s10, 0
    %p119 = por %p117, %p118
    %p120 = scmp.ne.s32.totalorder %s109, %s112
    %p121 = scmp.eq.s32.totalorder %s15, 1
    %p122 = por %p120, %p121
    %p123 = scmp.ne.s32.totalorder %s112, %s113
    %p124 = scmp.eq.s32.totalorder %s15, 0
    %p125 = por %p123, %p124
    %p126 = scmp.ne.s32.totalorder %s112, %s113
    %p127 = scmp.eq.s32.totalorder %s16, 1
    %p128 = por %p126, %p127
    %p130 = scmp.ne.s32.totalorder %s113, %s129
    %p131 = scmp.eq.s32.totalorder %s16, 0
    %p132 = por %p130, %p131
    %p133 = scmp.le.s32.totalorder 1, %s10
    %p134 = scmp.lt.s32.totalorder %s10, 3
    %p135 = pnand %p133, %p134
    %p136 = pneg %p135
    // Predicated region
    $region9: #{_lambda_.5} parent=5 // pred_check
      _
    $region10: #{_lambda_.5} parent=5 // pred_check_branch
      %138 = sbr.rel (%p135) target = $region12
    $region11: #{_lambda_.5} parent=5 // pred_region
      %s139 = ssub.s32 %s10, 1
      // Predicated region
      $region13: #{_lambda_.5} parent=11 // pred_check
        %p140 = pneg %p57
      $region14: #{_lambda_.5} parent=11 // pred_check_branch
        %142 = sbr.rel (%p140) target = $region16
      $region15: #{_lambda_.5} parent=11 // pred_region
        _
      $region16: #{_lambda_.5} parent=11 // pred_fallthru
        _
      // Predicated region
      $region17: #{_lambda_.5} parent=11 // pred_check
        %p143 = pneg %p78
      $region18: #{_lambda_.5} parent=11 // pred_check_branch
        %145 = sbr.rel (%p143) target = $region20
      $region19: #{_lambda_.5} parent=11 // pred_region
        _
      $region20: #{_lambda_.5} parent=11 // pred_fallthru
        _
      // Predicated region
      $region21: #{_lambda_.5} parent=11 // pred_check
        %p146 = pneg %p99
      $region22: #{_lambda_.5} parent=11 // pred_check_branch
        %148 = sbr.rel (%p146) target = $region24
      $region23: #{_lambda_.5} parent=11 // pred_region
        _
      $region24: #{_lambda_.5} parent=11 // pred_fallthru
        _
    $region12: #{_lambda_.5} parent=5 // pred_fallthru
      _
    %p149 = scmp.lt.s32.totalorder %s10, 2
    // Predicated region
    $region25: #{_lambda_.5} parent=5 // pred_check
      %p150 = pneg %p149
    $region26: #{_lambda_.5} parent=5 // pred_check_branch
      %152 = sbr.rel (%p150) target = $region28
    $region27: #{_lambda_.5} parent=5 // pred_region
      // Predicated region
      $region29: #{_lambda_.5} parent=27 // pred_check
        %p153 = pneg %p30
      $region30: #{_lambda_.5} parent=27 // pred_check_branch
        %155 = sbr.rel (%p153) target = $region32
      $region31: #{_lambda_.5} parent=27 // pred_region
        %p156 = scmp.lt.s32.totalorder %s10, 1
        %s157 = scalar_select %p156, %s10, 1
        %s158 = smul.addr %s157, 54
        %s159 = smul.addr %s158, 4
        %s160 = scalar_lea.vmem %s0, %s159
      $region32: #{_lambda_.5} parent=27 // pred_fallthru
        _
    $region28: #{_lambda_.5} parent=5 // pred_fallthru
      _
    %p161 = scmp.le.s32.totalorder 1, %s10
    %p162 = scmp.lt.s32.totalorder %s10, 3
    %p163 = pnand %p161, %p162
    %p164 = pneg %p163
    // Predicated region
    $region33: #{_lambda_.5} parent=5 // pred_check
      _
    $region34: #{_lambda_.5} parent=5 // pred_check_branch
      %166 = sbr.rel (%p163) target = $region36
    $region35: #{_lambda_.5} parent=5 // pred_region
      %s167 = ssub.s32 %s10, 1
      %p168 = scmp.lt.s32.totalorder %s15, 1
      %s169 = scalar_select %p168, %s15, 1
      %s170 = smul.addr %s169, 54
      %s171 = smul.addr %s170, 4
      %s172 = scalar_lea.vmem %s0, %s171
      %p173 = pneg %p36
      %p174 = pneg %p33
      %p175 = pneg %p57
      %p176 = pneg %p54
      %p177 = pneg %p78
      %p178 = pneg %p75
      %p179 = pneg %p99
      %p180 = pneg %p96
      %p181 = pneg %p125
      %p182 = pneg %p122
      %s183 = smul.u32 32, %s15
      %p184 = scmp.lt.s32.totalorder %s183, 63
      %s185 = scalar_select %p184, %s183, 63
      %s186 = smul.addr %s185, 8
      %s187 = scalar_lea.vmem %s4, %s186
      %p188 = scmp.lt.s32.totalorder %s15, 1
      %s189 = scalar_select %p188, %s15, 1
      %s190 = smul.addr %s189, 54
      %s191 = smul.addr %s190, 4
      %s192 = scalar_lea.vmem %s0, %s191
      %s193 = smul.u32 32, %s15
      %p194 = scmp.lt.s32.totalorder %s193, 63
      %s195 = scalar_select %p194, %s193, 63
      %s196 = smul.addr %s195, 8
      %s197 = scalar_lea.vmem %s4, %s196
      %s198 = smul.u32 32, %s15
      %v200 = vld [vmem:[%s192] sm:$0xf]
      %v201 = vld [vmem:[%s192 + $0x4] sm:$0xf]
      %v202 = vld [vmem:[%s192 + $0x8] sm:$0x1]
      %v203 = vld [vmem:[%s192 + $0xc] sm:$0xf]
      %v204 = vld [vmem:[%s192 + $0x10] sm:$0xf]
      %v205 = vld [vmem:[%s192 + $0x14] sm:$0x1]
      %v206 = vld [vmem:[%s192 + $0x18] sm:$0xf]
      %v207 = vld [vmem:[%s192 + $0x1c] sm:$0xf]
      %v208 = vld [vmem:[%s192 + $0x20] sm:$0x1]
      %v209 = vld [vmem:[%s192 + $0x24] sm:$0xf]
      %v210 = vld [vmem:[%s192 + $0x28] sm:$0xf]
      %v211 = vld [vmem:[%s192 + $0x2c] sm:$0x1]
      %v212 = vld [vmem:[%s192 + $0x30] sm:$0xf]
      %v213 = vld [vmem:[%s192 + $0x34] sm:$0xf]
      %v214 = vld [vmem:[%s192 + $0x38] sm:$0x1]
      %v215 = vld [vmem:[%s192 + $0x3c] sm:$0xf]
      %v216 = vld [vmem:[%s192 + $0x40] sm:$0xf]
      %v217 = vld [vmem:[%s192 + $0x44] sm:$0x1]
      %v218 = vld [vmem:[%s192 + $0x48] sm:$0xf]
      %v219 = vld [vmem:[%s192 + $0x4c] sm:$0xf]
      %v220 = vld [vmem:[%s192 + $0x50] sm:$0x1]
      %v221 = vld [vmem:[%s192 + $0x54] sm:$0xf]
      %v222 = vld [vmem:[%s192 + $0x58] sm:$0xf]
      %v223 = vld [vmem:[%s192 + $0x5c] sm:$0x1]
      %v224 = vld [vmem:[%s192 + $0x60] sm:$0xf]
      %v225 = vld [vmem:[%s192 + $0x64] sm:$0xf]
      %v226 = vld [vmem:[%s192 + $0x68] sm:$0x1]
      %v227 = vld [vmem:[%s192 + $0x6c] sm:$0xf]
      %v228 = vld [vmem:[%s192 + $0x70] sm:$0xf]
      %v229 = vld [vmem:[%s192 + $0x74] sm:$0x1]
      %v230 = vld [vmem:[%s192 + $0x78] sm:$0xf]
      %v231 = vld [vmem:[%s192 + $0x7c] sm:$0xf]
      %v232 = vld [vmem:[%s192 + $0x80] sm:$0x1]
      %v233 = vld [vmem:[%s192 + $0x84] sm:$0xf]
      %v234 = vld [vmem:[%s192 + $0x88] sm:$0xf]
      %v235 = vld [vmem:[%s192 + $0x8c] sm:$0x1]
      %v236 = vld [vmem:[%s192 + $0x90] sm:$0xf]
      %v237 = vld [vmem:[%s192 + $0x94] sm:$0xf]
      %v238 = vld [vmem:[%s192 + $0x98] sm:$0x1]
      %v239 = vld [vmem:[%s192 + $0x9c] sm:$0xf]
      %v240 = vld [vmem:[%s192 + $0xa0] sm:$0xf]
      %v241 = vld [vmem:[%s192 + $0xa4] sm:$0x1]
      %v242 = vld [vmem:[%s192 + $0xa8] sm:$0xf]
      %v243 = vld [vmem:[%s192 + $0xac] sm:$0xf]
      %v244 = vld [vmem:[%s192 + $0xb0] sm:$0x1]
      %v245 = vld [vmem:[%s192 + $0xb4] sm:$0xf]
      %v246 = vld [vmem:[%s192 + $0xb8] sm:$0xf]
      %v247 = vld [vmem:[%s192 + $0xbc] sm:$0x1]
      %v248 = vld [vmem:[%s192 + $0xc0] sm:$0xf]
      %v249 = vld [vmem:[%s192 + $0xc4] sm:$0xf]
      %v250 = vld [vmem:[%s192 + $0xc8] sm:$0x1]
      %v251 = vld [vmem:[%s192 + $0xcc] sm:$0xf]
      %v252 = vld [vmem:[%s192 + $0xd0] sm:$0xf]
      %v253 = vld [vmem:[%s192 + $0xd4] sm:$0x1]
      %v254 = vld [vmem:[%s1] sm:$0x3]
      %v255 = vld [vmem:[%s1 + $0x2] sm:$0x3]
      %v256 = vld [vmem:[%s1 + $0x4] sm:$0x3]
      %v257 = vld [vmem:[%s1 + $0x6] sm:$0x3]
      %v258 = vld [vmem:[%s1 + $0x8] sm:$0x3]
      %v259 = vld [vmem:[%s1 + $0xa] sm:$0x3]
      %v260 = vld [vmem:[%s1 + $0xc] sm:$0x3]
      %v261 = vld [vmem:[%s1 + $0xe] sm:$0x3]
      %v262 = vld [vmem:[%s1 + $0x10] sm:$0x3]
      %vm263 = vsmask.f32 3328
      %vm264 = vsmask.f32 7440
      %vm265 = vmor %vm263, %vm264
      %v267 = vshrl.u32 %v200, 16
      %v269 = vrot.slane %v267, 4
      %v270 = vshll.u32 %v200, 16
      %v272 = vrot.slane %v270, 5
      %v273 = vor.u32 %v269, %v272
      %v274 = vrot.slane %v273, 4
      %v276 = vshll.u32 %v201, 16
      %v278 = vrot.slane %v276, 5
      %v279 = vsel %vm265, %v274, %v278
      %v280 = vshrl.u32 %v201, 16
      %v282 = vrot.slane %v280, 4
      %v283 = vor.u32 %v282, %v278
      %v284 = vrot.slane %v283, 4
      %v286 = vshll.u32 %v202, 16
      %v288 = vrot.slane %v286, 5
      %v289 = vsel %vm265, %v284, %v288
      %v291 = vshrl.u32 %v203, 16
      %v293 = vrot.slane %v291, 4
      %v294 = vshll.u32 %v203, 16
      %v296 = vrot.slane %v294, 5
      %v297 = vor.u32 %v293, %v296
      %v298 = vrot.slane %v297, 4
      %v300 = vshll.u32 %v204, 16
      %v302 = vrot.slane %v300, 5
      %v303 = vsel %vm265, %v298, %v302
      %v304 = vshrl.u32 %v204, 16
      %v306 = vrot.slane %v304, 4
      %v307 = vor.u32 %v306, %v302
      %v308 = vrot.slane %v307, 4
      %v310 = vshll.u32 %v205, 16
      %v312 = vrot.slane %v310, 5
      %v313 = vsel %vm265, %v308, %v312
      %v315 = vshrl.u32 %v206, 16
      %v317 = vrot.slane %v315, 4
      %v318 = vshll.u32 %v206, 16
      %v320 = vrot.slane %v318, 5
      %v321 = vor.u32 %v317, %v320
      %v322 = vrot.slane %v321, 4
      %v324 = vshll.u32 %v207, 16
      %v326 = vrot.slane %v324, 5
      %v327 = vsel %vm265, %v322, %v326
      %v328 = vshrl.u32 %v207, 16
      %v330 = vrot.slane %v328, 4
      %v331 = vor.u32 %v330, %v326
      %v332 = vrot.slane %v331, 4
      %v334 = vshll.u32 %v208, 16
      %v336 = vrot.slane %v334, 5
      %v337 = vsel %vm265, %v332, %v336
      %v339 = vshrl.u32 %v209, 16
      %v341 = vrot.slane %v339, 4
      %v342 = vshll.u32 %v209, 16
      %v344 = vrot.slane %v342, 5
      %v345 = vor.u32 %v341, %v344
      %v346 = vrot.slane %v345, 4
      %v348 = vshll.u32 %v210, 16
      %v350 = vrot.slane %v348, 5
      %v351 = vsel %vm265, %v346, %v350
      %v352 = vshrl.u32 %v210, 16
      %v354 = vrot.slane %v352, 4
      %v355 = vor.u32 %v354, %v350
      %v356 = vrot.slane %v355, 4
      %v358 = vshll.u32 %v211, 16
      %v360 = vrot.slane %v358, 5
      %v361 = vsel %vm265, %v356, %v360
      %v363 = vshrl.u32 %v212, 16
      %v365 = vrot.slane %v363, 4
      %v366 = vshll.u32 %v212, 16
      %v368 = vrot.slane %v366, 5
      %v369 = vor.u32 %v365, %v368
      %v370 = vrot.slane %v369, 4
      %v372 = vshll.u32 %v213, 16
      %v374 = vrot.slane %v372, 5
      %v375 = vsel %vm265, %v370, %v374
      %v376 = vshrl.u32 %v213, 16
      %v378 = vrot.slane %v376, 4
      %v379 = vor.u32 %v378, %v374
      %v380 = vrot.slane %v379, 4
      %v382 = vshll.u32 %v214, 16
      %v384 = vrot.slane %v382, 5
      %v385 = vsel %vm265, %v380, %v384
      %v387 = vshrl.u32 %v215, 16
      %v389 = vrot.slane %v387, 4
      %v390 = vshll.u32 %v215, 16
      %v392 = vrot.slane %v390, 5
      %v393 = vor.u32 %v389, %v392
      %v394 = vrot.slane %v393, 4
      %v396 = vshll.u32 %v216, 16
      %v398 = vrot.slane %v396, 5
      %v399 = vsel %vm265, %v394, %v398
      %v400 = vshrl.u32 %v216, 16
      %v402 = vrot.slane %v400, 4
      %v403 = vor.u32 %v402, %v398
      %v404 = vrot.slane %v403, 4
      %v406 = vshll.u32 %v217, 16
      %v408 = vrot.slane %v406, 5
      %v409 = vsel %vm265, %v404, %v408
      %v411 = vshrl.u32 %v218, 16
      %v413 = vrot.slane %v411, 4
      %v414 = vshll.u32 %v218, 16
      %v416 = vrot.slane %v414, 5
      %v417 = vor.u32 %v413, %v416
      %v418 = vrot.slane %v417, 4
      %v420 = vshll.u32 %v219, 16
      %v422 = vrot.slane %v420, 5
      %v423 = vsel %vm265, %v418, %v422
      %v424 = vshrl.u32 %v219, 16
      %v426 = vrot.slane %v424, 4
      %v427 = vor.u32 %v426, %v422
      %v428 = vrot.slane %v427, 4
      %v430 = vshll.u32 %v220, 16
      %v432 = vrot.slane %v430, 5
      %v433 = vsel %vm265, %v428, %v432
      %v435 = vshrl.u32 %v221, 16
      %v437 = vrot.slane %v435, 4
      %v438 = vshll.u32 %v221, 16
      %v440 = vrot.slane %v438, 5
      %v441 = vor.u32 %v437, %v440
      %v442 = vrot.slane %v441, 4
      %v444 = vshll.u32 %v222, 16
      %v446 = vrot.slane %v444, 5
      %v447 = vsel %vm265, %v442, %v446
      %v448 = vshrl.u32 %v222, 16
      %v450 = vrot.slane %v448, 4
      %v451 = vor.u32 %v450, %v446
      %v452 = vrot.slane %v451, 4
      %v454 = vshll.u32 %v223, 16
      %v456 = vrot.slane %v454, 5
      %v457 = vsel %vm265, %v452, %v456
      %v459 = vshrl.u32 %v224, 16
      %v461 = vrot.slane %v459, 4
      %v462 = vshll.u32 %v224, 16
      %v464 = vrot.slane %v462, 5
      %v465 = vor.u32 %v461, %v464
      %v466 = vrot.slane %v465, 4
      %v468 = vshll.u32 %v225, 16
      %v470 = vrot.slane %v468, 5
      %v471 = vsel %vm265, %v466, %v470
      %v472 = vshrl.u32 %v225, 16
      %v474 = vrot.slane %v472, 4
      %v475 = vor.u32 %v474, %v470
      %v476 = vrot.slane %v475, 4
      %v478 = vshll.u32 %v226, 16
      %v480 = vrot.slane %v478, 5
      %v481 = vsel %vm265, %v476, %v480
      %v483 = vshrl.u32 %v227, 16
      %v485 = vrot.slane %v483, 4
      %v486 = vshll.u32 %v227, 16
      %v488 = vrot.slane %v486, 5
      %v489 = vor.u32 %v485, %v488
      %v490 = vrot.slane %v489, 4
      %v492 = vshll.u32 %v228, 16
      %v494 = vrot.slane %v492, 5
      %v495 = vsel %vm265, %v490, %v494
      %v496 = vshrl.u32 %v228, 16
      %v498 = vrot.slane %v496, 4
      %v499 = vor.u32 %v498, %v494
      %v500 = vrot.slane %v499, 4
      %v502 = vshll.u32 %v229, 16
      %v504 = vrot.slane %v502, 5
      %v505 = vsel %vm265, %v500, %v504
      %v507 = vshrl.u32 %v230, 16
      %v509 = vrot.slane %v507, 4
      %v510 = vshll.u32 %v230, 16
      %v512 = vrot.slane %v510, 5
      %v513 = vor.u32 %v509, %v512
      %v514 = vrot.slane %v513, 4
      %v516 = vshll.u32 %v231, 16
      %v518 = vrot.slane %v516, 5
      %v519 = vsel %vm265, %v514, %v518
      %v520 = vshrl.u32 %v231, 16
      %v522 = vrot.slane %v520, 4
      %v523 = vor.u32 %v522, %v518
      %v524 = vrot.slane %v523, 4
      %v526 = vshll.u32 %v232, 16
      %v528 = vrot.slane %v526, 5
      %v529 = vsel %vm265, %v524, %v528
      %v531 = vshrl.u32 %v233, 16
      %v533 = vrot.slane %v531, 4
      %v534 = vshll.u32 %v233, 16
      %v536 = vrot.slane %v534, 5
      %v537 = vor.u32 %v533, %v536
      %v538 = vrot.slane %v537, 4
      %v540 = vshll.u32 %v234, 16
      %v542 = vrot.slane %v540, 5
      %v543 = vsel %vm265, %v538, %v542
      %v544 = vshrl.u32 %v234, 16
      %v546 = vrot.slane %v544, 4
      %v547 = vor.u32 %v546, %v542
      %v548 = vrot.slane %v547, 4
      %v550 = vshll.u32 %v235, 16
      %v552 = vrot.slane %v550, 5
      %v553 = vsel %vm265, %v548, %v552
      %v555 = vshrl.u32 %v236, 16
      %v557 = vrot.slane %v555, 4
      %v558 = vshll.u32 %v236, 16
      %v560 = vrot.slane %v558, 5
      %v561 = vor.u32 %v557, %v560
      %v562 = vrot.slane %v561, 4
      %v564 = vshll.u32 %v237, 16
      %v566 = vrot.slane %v564, 5
      %v567 = vsel %vm265, %v562, %v566
      %v568 = vshrl.u32 %v237, 16
      %v570 = vrot.slane %v568, 4
      %v571 = vor.u32 %v570, %v566
      %v572 = vrot.slane %v571, 4
      %v574 = vshll.u32 %v238, 16
      %v576 = vrot.slane %v574, 5
      %v577 = vsel %vm265, %v572, %v576
      %v579 = vshrl.u32 %v239, 16
      %v581 = vrot.slane %v579, 4
      %v582 = vshll.u32 %v239, 16
      %v584 = vrot.slane %v582, 5
      %v585 = vor.u32 %v581, %v584
      %v586 = vrot.slane %v585, 4
      %v588 = vshll.u32 %v240, 16
      %v590 = vrot.slane %v588, 5
      %v591 = vsel %vm265, %v586, %v590
      %v592 = vshrl.u32 %v240, 16
      %v594 = vrot.slane %v592, 4
      %v595 = vor.u32 %v594, %v590
      %v596 = vrot.slane %v595, 4
      %v598 = vshll.u32 %v241, 16
      %v600 = vrot.slane %v598, 5
      %v601 = vsel %vm265, %v596, %v600
      %v603 = vshrl.u32 %v242, 16
      %v605 = vrot.slane %v603, 4
      %v606 = vshll.u32 %v242, 16
      %v608 = vrot.slane %v606, 5
      %v609 = vor.u32 %v605, %v608
      %v610 = vrot.slane %v609, 4
      %v612 = vshll.u32 %v243, 16
      %v614 = vrot.slane %v612, 5
      %v615 = vsel %vm265, %v610, %v614
      %v616 = vshrl.u32 %v243, 16
      %v618 = vrot.slane %v616, 4
      %v619 = vor.u32 %v618, %v614
      %v620 = vrot.slane %v619, 4
      %v622 = vshll.u32 %v244, 16
      %v624 = vrot.slane %v622, 5
      %v625 = vsel %vm265, %v620, %v624
      %v627 = vshrl.u32 %v245, 16
      %v629 = vrot.slane %v627, 4
      %v630 = vshll.u32 %v245, 16
      %v632 = vrot.slane %v630, 5
      %v633 = vor.u32 %v629, %v632
      %v634 = vrot.slane %v633, 4
      %v636 = vshll.u32 %v246, 16
      %v638 = vrot.slane %v636, 5
      %v639 = vsel %vm265, %v634, %v638
      %v640 = vshrl.u32 %v246, 16
      %v642 = vrot.slane %v640, 4
      %v643 = vor.u32 %v642, %v638
      %v644 = vrot.slane %v643, 4
      %v646 = vshll.u32 %v247, 16
      %v648 = vrot.slane %v646, 5
      %v649 = vsel %vm265, %v644, %v648
      %v650 = vunpack.c.l.b16 %v279
      %v651 = vunpack.c.l.b16 %v289
      %v652 = vunpack.c.l.b16 %v303
      %v653 = vunpack.c.l.b16 %v313
      %v654 = vunpack.c.l.b16 %v327
      %v655 = vunpack.c.l.b16 %v337
      %v656 = vunpack.c.l.b16 %v351
      %v657 = vunpack.c.l.b16 %v361
      %v658 = vunpack.c.l.b16 %v375
      %v659 = vunpack.c.l.b16 %v385
      %v660 = vunpack.c.l.b16 %v399
      %v661 = vunpack.c.l.b16 %v409
      %v662 = vunpack.c.l.b16 %v423
      %v663 = vunpack.c.l.b16 %v433
      %v664 = vunpack.c.l.b16 %v447
      %v665 = vunpack.c.l.b16 %v457
      %v666 = vunpack.c.l.b16 %v471
      %v667 = vunpack.c.l.b16 %v481
      %v668 = vunpack.c.l.b16 %v495
      %v669 = vunpack.c.l.b16 %v505
      %v670 = vunpack.c.l.b16 %v519
      %v671 = vunpack.c.l.b16 %v529
      %v672 = vunpack.c.l.b16 %v543
      %v673 = vunpack.c.l.b16 %v553
      %v674 = vunpack.c.l.b16 %v567
      %v675 = vunpack.c.l.b16 %v577
      %v676 = vunpack.c.l.b16 %v591
      %v677 = vunpack.c.l.b16 %v601
      %v678 = vunpack.c.l.b16 %v615
      %v679 = vunpack.c.l.b16 %v625
      %v680 = vunpack.c.l.b16 %v639
      %v681 = vunpack.c.l.b16 %v649
      %v682 = vpack.c.b16 %v651, %v650
      %v683 = vpack.c.b16 %v653, %v652
      %v684 = vpack.c.b16 %v655, %v654
      %v685 = vpack.c.b16 %v657, %v656
      %v686 = vpack.c.b16 %v659, %v658
      %v687 = vpack.c.b16 %v661, %v660
      %v688 = vpack.c.b16 %v663, %v662
      %v689 = vpack.c.b16 %v665, %v664
      %v690 = vpack.c.b16 %v667, %v666
      %v691 = vpack.c.b16 %v669, %v668
      %v692 = vpack.c.b16 %v671, %v670
      %v693 = vpack.c.b16 %v673, %v672
      %v694 = vpack.c.b16 %v675, %v674
      %v695 = vpack.c.b16 %v677, %v676
      %v696 = vpack.c.b16 %v679, %v678
      %v697 = vpack.c.b16 %v681, %v680
      %vm698 = vcmask 31744
      %v700 = vsel %vm698, %v682, 0
      %v703 = vsel %vm698, %v683, 0
      %v706 = vsel %vm698, %v684, 0
      %v709 = vsel %vm698, %v685, 0
      %v712 = vsel %vm698, %v686, 0
      %v715 = vsel %vm698, %v687, 0
      %v718 = vsel %vm698, %v688, 0
      %v721 = vsel %vm698, %v689, 0
      %v724 = vsel %vm698, %v690, 0
      %v727 = vsel %vm698, %v691, 0
      %v730 = vsel %vm698, %v692, 0
      %v733 = vsel %vm698, %v693, 0
      %v736 = vsel %vm698, %v694, 0
      %v739 = vsel %vm698, %v695, 0
      %v742 = vsel %vm698, %v696, 0
      %v745 = vsel %vm698, %v697, 0
      %vm747 = vcmask 1041408
      %v749 = vsel %vm747, %v255, 0
      %751 = vmatprep.subr.bf16.mxu0 0
      %752 = vmatpush1.bf16.msra.mxu0 %v749
      %753 = vmatprep.subr.bf16.mxu0 0
      %754 = vmatpush1.bf16.msra.mxu0 0
      %755 = vmatprep.subr.bf16.mxu0 0
      %756 = vmatpush1.bf16.msra.mxu0 0
      %757 = vmatprep.subr.bf16.mxu0 0
      %758 = vmatpush1.bf16.msra.mxu0 0
      %759 = vmatprep.subr.bf16.mxu0 0
      %760 = vmatpush1.bf16.msra.mxu0 0
      %761 = vmatprep.subr.bf16.mxu0 0
      %762 = vmatpush1.bf16.msra.mxu0 0
      %763 = vmatprep.subr.bf16.mxu0 0
      %764 = vmatpush1.bf16.msra.mxu0 0
      %765 = vmatprep.subr.bf16.mxu0 0
      %766 = vmatpush1.bf16.msra.mxu0 0
      %767 = vmatprep.subr.bf16.mxu0 0
      %768 = vmatpush1.bf16.msra.mxu0 0
      %769 = vmatprep.subr.bf16.mxu0 0
      %770 = vmatpush1.bf16.msra.mxu0 0
      %771 = vmatprep.subr.bf16.mxu0 0
      %772 = vmatpush1.bf16.msra.mxu0 0
      %773 = vmatprep.subr.bf16.mxu0 0
      %774 = vmatpush1.bf16.msra.mxu0 0
      %775 = vmatprep.subr.bf16.mxu0 0
      %776 = vmatpush1.bf16.msra.mxu0 0
      %777 = vmatprep.subr.bf16.mxu0 0
      %778 = vmatpush1.bf16.msra.mxu0 0
      %779 = vmatprep.subr.bf16.mxu0 0
      %780 = vmatpush1.bf16.msra.mxu0 0
      %781 = vmatprep.subr.bf16.mxu0 0
      %782 = vmatpush1.bf16.msra.mxu0 0
      %783 = vmatprep.mubr.bf16.mxu0 0
      %784 = vmatmul.mubr.bf16.gmra.mrb[0].mxu0 %v700
      %v785 = vpop.f32.mrb[0].mxu0
      %v786 = vadd.f32 0.0, %v785
      %v787 = vpop.f32.mrb[0].mxu0
      %v788 = vpop.f32.mrb[0].mxu0
      %v789 = vadd.f32 0.0, %v788
      %v790 = vpop.f32.mrb[0].mxu0
      %791 = vmatprep.mubr.bf16.mxu0 0
      %792 = vmatmul.mubr.bf16.gmra.mrb[0].mxu0 %v703
      %v793 = vpop.f32.mrb[0].mxu0
      %v794 = vadd.f32 0.0, %v793
      %v795 = vpop.f32.mrb[0].mxu0
      %v796 = vpop.f32.mrb[0].mxu0
      %v797 = vadd.f32 0.0, %v796
      %v798 = vpop.f32.mrb[0].mxu0
      %799 = vmatprep.mubr.bf16.mxu0 0
      %800 = vmatmul.mubr.bf16.gmra.mrb[0].mxu0 %v706
      %v801 = vpop.f32.mrb[0].mxu0
      %v802 = vadd.f32 0.0, %v801
      %v803 = vpop.f32.mrb[0].mxu0
      %v804 = vpop.f32.mrb[0].mxu0
      %v805 = vadd.f32 0.0, %v804
      %v806 = vpop.f32.mrb[0].mxu0
      %807 = vmatprep.mubr.bf16.mxu0 0
      %808 = vmatmul.mubr.bf16.gmra.mrb[0].mxu0 %v709
      %v809 = vpop.f32.mrb[0].mxu0
      %v810 = vadd.f32 0.0, %v809
      %v811 = vpop.f32.mrb[0].mxu0
      %v812 = vpop.f32.mrb[0].mxu0
      %v813 = vadd.f32 0.0, %v812
      %v814 = vpop.f32.mrb[0].mxu0
      %815 = vmatprep.mubr.bf16.mxu0 0
      %816 = vmatmul.mubr.bf16.gmra.mrb[0].mxu0 %v712
      %v817 = vpop.f32.mrb[0].mxu0
      %v818 = vadd.f32 0.0, %v817
      %v819 = vpop.f32.mrb[0].mxu0
      %v820 = vpop.f32.mrb[0].mxu0
      %v821 = vadd.f32 0.0, %v820
      %v822 = vpop.f32.mrb[0].mxu0
      %823 = vmatprep.mubr.bf16.mxu0 0
      %824 = vmatmul.mubr.bf16.gmra.mrb[0].mxu0 %v715
      %v825 = vpop.f32.mrb[0].mxu0
      %v826 = vadd.f32 0.0, %v825
      %v827 = vpop.f32.mrb[0].mxu0
      %v828 = vpop.f32.mrb[0].mxu0
      %v829 = vadd.f32 0.0, %v828
      %v830 = vpop.f32.mrb[0].mxu0
      %831 = vmatprep.mubr.bf16.mxu0 0
      %832 = vmatmul.mubr.bf16.gmra.mrb[0].mxu0 %v718
      %v833 = vpop.f32.mrb[0].mxu0
      %v834 = vadd.f32 0.0, %v833
      %v835 = vpop.f32.mrb[0].mxu0
      %v836 = vpop.f32.mrb[0].mxu0
      %v837 = vadd.f32 0.0, %v836
      %v838 = vpop.f32.mrb[0].mxu0
      %839 = vmatprep.mubr.bf16.mxu0 0
      %840 = vmatmul.mubr.bf16.gmra.mrb[0].mxu0 %v721
      %v841 = vpop.f32.mrb[0].mxu0
      %v842 = vadd.f32 0.0, %v841
      %v843 = vpop.f32.mrb[0].mxu0
      %v844 = vpop.f32.mrb[0].mxu0
      %v845 = vadd.f32 0.0, %v844
      %v846 = vpop.f32.mrb[0].mxu0
      %847 = vmatprep.mubr.bf16.mxu0 0
      %848 = vmatmul.mubr.bf16.gmra.mrb[0].mxu0 %v724
      %v849 = vpop.f32.mrb[0].mxu0
      %v850 = vadd.f32 0.0, %v849
      %v851 = vpop.f32.mrb[0].mxu0
      %v852 = vpop.f32.mrb[0].mxu0
      %v853 = vadd.f32 0.0, %v852
      %v854 = vpop.f32.mrb[0].mxu0
      %855 = vmatprep.mubr.bf16.mxu0 0
      %856 = vmatmul.mubr.bf16.gmra.mrb[0].mxu0 %v727
      %v857 = vpop.f32.mrb[0].mxu0
      %v858 = vadd.f32 0.0, %v857
      %v859 = vpop.f32.mrb[0].mxu0
      %v860 = vpop.f32.mrb[0].mxu0
      %v861 = vadd.f32 0.0, %v860
      %v862 = vpop.f32.mrb[0].mxu0
      %863 = vmatprep.mubr.bf16.mxu0 0
      %864 = vmatmul.mubr.bf16.gmra.mrb[0].mxu0 %v730
      %v865 = vpop.f32.mrb[0].mxu0
      %v866 = vadd.f32 0.0, %v865
      %v867 = vpop.f32.mrb[0].mxu0
      %v868 = vpop.f32.mrb[0].mxu0
      %v869 = vadd.f32 0.0, %v868
      %v870 = vpop.f32.mrb[0].mxu0
      %871 = vmatprep.mubr.bf16.mxu0 0
      %872 = vmatmul.mubr.bf16.gmra.mrb[0].mxu0 %v733
      %v873 = vpop.f32.mrb[0].mxu0
      %v874 = vadd.f32 0.0, %v873
      %v875 = vpop.f32.mrb[0].mxu0
      %v876 = vpop.f32.mrb[0].mxu0
      %v877 = vadd.f32 0.0, %v876
      %v878 = vpop.f32.mrb[0].mxu0
      %879 = vmatprep.mubr.bf16.mxu0 0
      %880 = vmatmul.mubr.bf16.gmra.mrb[0].mxu0 %v736
      %v881 = vpop.f32.mrb[0].mxu0
      %v882 = vadd.f32 0.0, %v881
      %v883 = vpop.f32.mrb[0].mxu0
      %v884 = vpop.f32.mrb[0].mxu0
      %v885 = vadd.f32 0.0, %v884
      %v886 = vpop.f32.mrb[0].mxu0
      %887 = vmatprep.mubr.bf16.mxu0 0
      %888 = vmatmul.mubr.bf16.gmra.mrb[0].mxu0 %v739
      %v889 = vpop.f32.mrb[0].mxu0
      %v890 = vadd.f32 0.0, %v889
      %v891 = vpop.f32.mrb[0].mxu0
      %v892 = vpop.f32.mrb[0].mxu0
      %v893 = vadd.f32 0.0, %v892
      %v894 = vpop.f32.mrb[0].mxu0
      %895 = vmatprep.mubr.bf16.mxu0 0
      %896 = vmatmul.mubr.bf16.gmra.mrb[0].mxu0 %v742
      %v897 = vpop.f32.mrb[0].mxu0
      %v898 = vadd.f32 0.0, %v897
      %v899 = vpop.f32.mrb[0].mxu0
      %v900 = vpop.f32.mrb[0].mxu0
      %v901 = vadd.f32 0.0, %v900
      %v902 = vpop.f32.mrb[0].mxu0
      %903 = vmatprep.mubr.bf16.mxu0 0
      %904 = vmatmul.mubr.bf16.gmra.mrb[0].mxu0 %v745
      %v905 = vpop.f32.mrb[0].mxu0
      %v906 = vadd.f32 0.0, %v905
      %v907 = vpop.f32.mrb[0].mxu0
      %v908 = vpop.f32.mrb[0].mxu0
      %v909 = vadd.f32 0.0, %v908
      %v910 = vpop.f32.mrb[0].mxu0
      %911 = vdwg.mxu0
      %v944 = vunpack.c.l.b16 %v200
      %v945 = vunpack.c.l.b16 %v201
      %v946 = vunpack.c.l.b16 %v203
      %v947 = vunpack.c.l.b16 %v204
      %v948 = vunpack.c.l.b16 %v206
      %v949 = vunpack.c.l.b16 %v207
      %v950 = vunpack.c.l.b16 %v209
      %v951 = vunpack.c.l.b16 %v210
      %v952 = vunpack.c.l.b16 %v212
      %v953 = vunpack.c.l.b16 %v213
      %v954 = vunpack.c.l.b16 %v215
      %v955 = vunpack.c.l.b16 %v216
      %v956 = vunpack.c.l.b16 %v218
      %v957 = vunpack.c.l.b16 %v219
      %v958 = vunpack.c.l.b16 %v221
      %v959 = vunpack.c.l.b16 %v222
      %v960 = vunpack.c.l.b16 %v224
      %v961 = vunpack.c.l.b16 %v225
      %v962 = vunpack.c.l.b16 %v227
      %v963 = vunpack.c.l.b16 %v228
      %v964 = vunpack.c.l.b16 %v230
      %v965 = vunpack.c.l.b16 %v231
      %v966 = vunpack.c.l.b16 %v233
      %v967 = vunpack.c.l.b16 %v234
      %v968 = vunpack.c.l.b16 %v236
      %v969 = vunpack.c.l.b16 %v237
      %v970 = vunpack.c.l.b16 %v239
      %v971 = vunpack.c.l.b16 %v240
      %v972 = vunpack.c.l.b16 %v242
      %v973 = vunpack.c.l.b16 %v243
      %v974 = vunpack.c.l.b16 %v245
      %v975 = vunpack.c.l.b16 %v246
      %v976 = vpack.c.b16 %v945, %v944
      %v977 = vpack.c.b16 %v947, %v946
      %v978 = vpack.c.b16 %v949, %v948
      %v979 = vpack.c.b16 %v951, %v950
      %v980 = vpack.c.b16 %v953, %v952
      %v981 = vpack.c.b16 %v955, %v954
      %v982 = vpack.c.b16 %v957, %v956
      %v983 = vpack.c.b16 %v959, %v958
      %v984 = vpack.c.b16 %v961, %v960
      %v985 = vpack.c.b16 %v963, %v962
      %v986 = vpack.c.b16 %v965, %v964
      %v987 = vpack.c.b16 %v967, %v966
      %v988 = vpack.c.b16 %v969, %v968
      %v989 = vpack.c.b16 %v971, %v970
      %v990 = vpack.c.b16 %v973, %v972
      %v991 = vpack.c.b16 %v975, %v974
      %v993 = vsel %vm698, %v976, 0
      %v996 = vsel %vm698, %v977, 0
      %v999 = vsel %vm698, %v978, 0
      %v1002 = vsel %vm698, %v979, 0
      %v1005 = vsel %vm698, %v980, 0
      %v1008 = vsel %vm698, %v981, 0
      %v1011 = vsel %vm698, %v982, 0
      %v1014 = vsel %vm698, %v983, 0
      %v1017 = vsel %vm698, %v984, 0
      %v1020 = vsel %vm698, %v985, 0
      %v1023 = vsel %vm698, %v986, 0
      %v1026 = vsel %vm698, %v987, 0
      %v1029 = vsel %vm698, %v988, 0
      %v1032 = vsel %vm698, %v989, 0
      %v1035 = vsel %vm698, %v990, 0
      %v1038 = vsel %vm698, %v991, 0
      %v1041 = vsel %vm747, %v254, 0
      %1043 = vmatprep.subr.bf16.mxu0 0
      %1044 = vmatpush1.bf16.msra.mxu0 %v1041
      %1045 = vmatprep.subr.bf16.mxu0 0
      %1046 = vmatpush1.bf16.msra.mxu0 0
      %1047 = vmatprep.subr.bf16.mxu0 0
      %1048 = vmatpush1.bf16.msra.mxu0 0
      %1049 = vmatprep.subr.bf16.mxu0 0
      %1050 = vmatpush1.bf16.msra.mxu0 0
      %1051 = vmatprep.subr.bf16.mxu0 0
      %1052 = vmatpush1.bf16.msra.mxu0 0
      %1053 = vmatprep.subr.bf16.mxu0 0
      %1054 = vmatpush1.bf16.msra.mxu0 0
      %1055 = vmatprep.subr.bf16.mxu0 0
      %1056 = vmatpush1.bf16.msra.mxu0 0
      %1057 = vmatprep.subr.bf16.mxu0 0
      %1058 = vmatpush1.bf16.msra.mxu0 0
      %1059 = vmatprep.subr.bf16.mxu0 0
      %1060 = vmatpush1.bf16.msra.mxu0 0
      %1061 = vmatprep.subr.bf16.mxu0 0
      %1062 = vmatpush1.bf16.msra.mxu0 0
      %1063 = vmatprep.subr.bf16.mxu0 0
      %1064 = vmatpush1.bf16.msra.mxu0 0
      %1065 = vmatprep.subr.bf16.mxu0 0
      %1066 = vmatpush1.bf16.msra.mxu0 0
      %1067 = vmatprep.subr.bf16.mxu0 0
      %1068 = vmatpush1.bf16.msra.mxu0 0
      %1069 = vmatprep.subr.bf16.mxu0 0
      %1070 = vmatpush1.bf16.msra.mxu0 0
      %1071 = vmatprep.subr.bf16.mxu0 0
      %1072 = vmatpush1.bf16.msra.mxu0 0
      %1073 = vmatprep.subr.bf16.mxu0 0
      %1074 = vmatpush1.bf16.msra.mxu0 0
      %1075 = vmatprep.mubr.bf16.mxu0 0
      %1076 = vmatmul.mubr.bf16.gmra.mrb[0].mxu0 %v993
      %v1077 = vpop.f32.mrb[0].mxu0
      %v1078 = vadd.f32 %v786, %v1077
      %v1079 = vpop.f32.mrb[0].mxu0
      %v1080 = vpop.f32.mrb[0].mxu0
      %v1081 = vadd.f32 %v789, %v1080
      %v1082 = vpop.f32.mrb[0].mxu0
      %1083 = vmatprep.mubr.bf16.mxu0 0
      %1084 = vmatmul.mubr.bf16.gmra.mrb[0].mxu0 %v996
      %v1085 = vpop.f32.mrb[0].mxu0
      %v1086 = vadd.f32 %v794, %v1085
      %v1087 = vpop.f32.mrb[0].mxu0
      %v1088 = vpop.f32.mrb[0].mxu0
      %v1089 = vadd.f32 %v797, %v1088
      %v1090 = vpop.f32.mrb[0].mxu0
      %1091 = vmatprep.mubr.bf16.mxu0 0
      %1092 = vmatmul.mubr.bf16.gmra.mrb[0].mxu0 %v999
      %v1093 = vpop.f32.mrb[0].mxu0
      %v1094 = vadd.f32 %v802, %v1093
      %v1095 = vpop.f32.mrb[0].mxu0
      %v1096 = vpop.f32.mrb[0].mxu0
      %v1097 = vadd.f32 %v805, %v1096
      %v1098 = vpop.f32.mrb[0].mxu0
      %1099 = vmatprep.mubr.bf16.mxu0 0
      %1100 = vmatmul.mubr.bf16.gmra.mrb[0].mxu0 %v1002
      %v1101 = vpop.f32.mrb[0].mxu0
      %v1102 = vadd.f32 %v810, %v1101
      %v1103 = vpop.f32.mrb[0].mxu0
      %v1104 = vpop.f32.mrb[0].mxu0
      %v1105 = vadd.f32 %v813, %v1104
      %v1106 = vpop.f32.mrb[0].mxu0
      %1107 = vmatprep.mubr.bf16.mxu0 0
      %1108 = vmatmul.mubr.bf16.gmra.mrb[0].mxu0 %v1005
      %v1109 = vpop.f32.mrb[0].mxu0
      %v1110 = vadd.f32 %v818, %v1109
      %v1111 = vpop.f32.mrb[0].mxu0
      %v1112 = vpop.f32.mrb[0].mxu0
      %v1113 = vadd.f32 %v821, %v1112
      %v1114 = vpop.f32.mrb[0].mxu0
      %1115 = vmatprep.mubr.bf16.mxu0 0
      %1116 = vmatmul.mubr.bf16.gmra.mrb[0].mxu0 %v1008
      %v1117 = vpop.f32.mrb[0].mxu0
      %v1118 = vadd.f32 %v826, %v1117
      %v1119 = vpop.f32.mrb[0].mxu0
      %v1120 = vpop.f32.mrb[0].mxu0
      %v1121 = vadd.f32 %v829, %v1120
      %v1122 = vpop.f32.mrb[0].mxu0
      %1123 = vmatprep.mubr.bf16.mxu0 0
      %1124 = vmatmul.mubr.bf16.gmra.mrb[0].mxu0 %v1011
      %v1125 = vpop.f32.mrb[0].mxu0
      %v1126 = vadd.f32 %v834, %v1125
      %v1127 = vpop.f32.mrb[0].mxu0
      %v1128 = vpop.f32.mrb[0].mxu0
      %v1129 = vadd.f32 %v837, %v1128
      %v1130 = vpop.f32.mrb[0].mxu0
      %1131 = vmatprep.mubr.bf16.mxu0 0
      %1132 = vmatmul.mubr.bf16.gmra.mrb[0].mxu0 %v1014
      %v1133 = vpop.f32.mrb[0].mxu0
      %v1134 = vadd.f32 %v842, %v1133
      %v1135 = vpop.f32.mrb[0].mxu0
      %v1136 = vpop.f32.mrb[0].mxu0
      %v1137 = vadd.f32 %v845, %v1136
      %v1138 = vpop.f32.mrb[0].mxu0
      %1139 = vmatprep.mubr.bf16.mxu0 0
      %1140 = vmatmul.mubr.bf16.gmra.mrb[0].mxu0 %v1017
      %v1141 = vpop.f32.mrb[0].mxu0
      %v1142 = vadd.f32 %v850, %v1141
      %v1143 = vpop.f32.mrb[0].mxu0
      %v1144 = vpop.f32.mrb[0].mxu0
      %v1145 = vadd.f32 %v853, %v1144
      %v1146 = vpop.f32.mrb[0].mxu0
      %1147 = vmatprep.mubr.bf16.mxu0 0
      %1148 = vmatmul.mubr.bf16.gmra.mrb[0].mxu0 %v1020
      %v1149 = vpop.f32.mrb[0].mxu0
      %v1150 = vadd.f32 %v858, %v1149
      %v1151 = vpop.f32.mrb[0].mxu0
      %v1152 = vpop.f32.mrb[0].mxu0
      %v1153 = vadd.f32 %v861, %v1152
      %v1154 = vpop.f32.mrb[0].mxu0
      %1155 = vmatprep.mubr.bf16.mxu0 0
      %1156 = vmatmul.mubr.bf16.gmra.mrb[0].mxu0 %v1023
      %v1157 = vpop.f32.mrb[0].mxu0
      %v1158 = vadd.f32 %v866, %v1157
      %v1159 = vpop.f32.mrb[0].mxu0
      %v1160 = vpop.f32.mrb[0].mxu0
      %v1161 = vadd.f32 %v869, %v1160
      %v1162 = vpop.f32.mrb[0].mxu0
      %1163 = vmatprep.mubr.bf16.mxu0 0
      %1164 = vmatmul.mubr.bf16.gmra.mrb[0].mxu0 %v1026
      %v1165 = vpop.f32.mrb[0].mxu0
      %v1166 = vadd.f32 %v874, %v1165
      %v1167 = vpop.f32.mrb[0].mxu0
      %v1168 = vpop.f32.mrb[0].mxu0
      %v1169 = vadd.f32 %v877, %v1168
      %v1170 = vpop.f32.mrb[0].mxu0
      %1171 = vmatprep.mubr.bf16.mxu0 0
      %1172 = vmatmul.mubr.bf16.gmra.mrb[0].mxu0 %v1029
      %v1173 = vpop.f32.mrb[0].mxu0
      %v1174 = vadd.f32 %v882, %v1173
      %v1175 = vpop.f32.mrb[0].mxu0
      %v1176 = vpop.f32.mrb[0].mxu0
      %v1177 = vadd.f32 %v885, %v1176
      %v1178 = vpop.f32.mrb[0].mxu0
      %1179 = vmatprep.mubr.bf16.mxu0 0
      %1180 = vmatmul.mubr.bf16.gmra.mrb[0].mxu0 %v1032
      %v1181 = vpop.f32.mrb[0].mxu0
      %v1182 = vadd.f32 %v890, %v1181
      %v1183 = vpop.f32.mrb[0].mxu0
      %v1184 = vpop.f32.mrb[0].mxu0
      %v1185 = vadd.f32 %v893, %v1184
      %v1186 = vpop.f32.mrb[0].mxu0
      %1187 = vmatprep.mubr.bf16.mxu0 0
      %1188 = vmatmul.mubr.bf16.gmra.mrb[0].mxu0 %v1035
      %v1189 = vpop.f32.mrb[0].mxu0
      %v1190 = vadd.f32 %v898, %v1189
      %v1191 = vpop.f32.mrb[0].mxu0
      %v1192 = vpop.f32.mrb[0].mxu0
      %v1193 = vadd.f32 %v901, %v1192
      %v1194 = vpop.f32.mrb[0].mxu0
      %1195 = vmatprep.mubr.bf16.mxu0 0
      %1196 = vmatmul.mubr.bf16.gmra.mrb[0].mxu0 %v1038
      %v1197 = vpop.f32.mrb[0].mxu0
      %v1198 = vadd.f32 %v906, %v1197
      %v1199 = vpop.f32.mrb[0].mxu0
      %v1200 = vpop.f32.mrb[0].mxu0
      %v1201 = vadd.f32 %v909, %v1200
      %v1202 = vpop.f32.mrb[0].mxu0
      %1203 = vdwg.mxu0
      %vm1220 = vcmask 1042432
      %vm1221 = vcmask 1046532
      %vm1222 = vmor %vm1220, %vm1221
      %v1223 = vrot.slane %v200, 5
      %v1224 = vrot.slane %v1223, 4
      %v1225 = vrot.slane %v201, 5
      %v1226 = vsel %vm1222, %v1224, %v1225
      %v1227 = vrot.slane %v1225, 4
      %v1228 = vrot.slane %v202, 5
      %v1229 = vsel %vm1222, %v1227, %v1228
      %v1230 = vrot.slane %v203, 5
      %v1231 = vrot.slane %v1230, 4
      %v1232 = vrot.slane %v204, 5
      %v1233 = vsel %vm1222, %v1231, %v1232
      %v1234 = vrot.slane %v1232, 4
      %v1235 = vrot.slane %v205, 5
      %v1236 = vsel %vm1222, %v1234, %v1235
      %v1237 = vrot.slane %v206, 5
      %v1238 = vrot.slane %v1237, 4
      %v1239 = vrot.slane %v207, 5
      %v1240 = vsel %vm1222, %v1238, %v1239
      %v1241 = vrot.slane %v1239, 4
      %v1242 = vrot.slane %v208, 5
      %v1243 = vsel %vm1222, %v1241, %v1242
      %v1244 = vrot.slane %v209, 5
      %v1245 = vrot.slane %v1244, 4
      %v1246 = vrot.slane %v210, 5
      %v1247 = vsel %vm1222, %v1245, %v1246
      %v1248 = vrot.slane %v1246, 4
      %v1249 = vrot.slane %v211, 5
      %v1250 = vsel %vm1222, %v1248, %v1249
      %v1251 = vrot.slane %v212, 5
      %v1252 = vrot.slane %v1251, 4
      %v1253 = vrot.slane %v213, 5
      %v1254 = vsel %vm1222, %v1252, %v1253
      %v1255 = vrot.slane %v1253, 4
      %v1256 = vrot.slane %v214, 5
      %v1257 = vsel %vm1222, %v1255, %v1256
      %v1258 = vrot.slane %v215, 5
      %v1259 = vrot.slane %v1258, 4
      %v1260 = vrot.slane %v216, 5
      %v1261 = vsel %vm1222, %v1259, %v1260
      %v1262 = vrot.slane %v1260, 4
      %v1263 = vrot.slane %v217, 5
      %v1264 = vsel %vm1222, %v1262, %v1263
      %v1265 = vrot.slane %v218, 5
      %v1266 = vrot.slane %v1265, 4
      %v1267 = vrot.slane %v219, 5
      %v1268 = vsel %vm1222, %v1266, %v1267
      %v1269 = vrot.slane %v1267, 4
      %v1270 = vrot.slane %v220, 5
      %v1271 = vsel %vm1222, %v1269, %v1270
      %v1272 = vrot.slane %v221, 5
      %v1273 = vrot.slane %v1272, 4
      %v1274 = vrot.slane %v222, 5
      %v1275 = vsel %vm1222, %v1273, %v1274
      %v1276 = vrot.slane %v1274, 4
      %v1277 = vrot.slane %v223, 5
      %v1278 = vsel %vm1222, %v1276, %v1277
      %v1279 = vrot.slane %v224, 5
      %v1280 = vrot.slane %v1279, 4
      %v1281 = vrot.slane %v225, 5
      %v1282 = vsel %vm1222, %v1280, %v1281
      %v1283 = vrot.slane %v1281, 4
      %v1284 = vrot.slane %v226, 5
      %v1285 = vsel %vm1222, %v1283, %v1284
      %v1286 = vrot.slane %v227, 5
      %v1287 = vrot.slane %v1286, 4
      %v1288 = vrot.slane %v228, 5
      %v1289 = vsel %vm1222, %v1287, %v1288
      %v1290 = vrot.slane %v1288, 4
      %v1291 = vrot.slane %v229, 5
      %v1292 = vsel %vm1222, %v1290, %v1291
      %v1293 = vrot.slane %v230, 5
      %v1294 = vrot.slane %v1293, 4
      %v1295 = vrot.slane %v231, 5
      %v1296 = vsel %vm1222, %v1294, %v1295
      %v1297 = vrot.slane %v1295, 4
      %v1298 = vrot.slane %v232, 5
      %v1299 = vsel %vm1222, %v1297, %v1298
      %v1300 = vrot.slane %v233, 5
      %v1301 = vrot.slane %v1300, 4
      %v1302 = vrot.slane %v234, 5
      %v1303 = vsel %vm1222, %v1301, %v1302
      %v1304 = vrot.slane %v1302, 4
      %v1305 = vrot.slane %v235, 5
      %v1306 = vsel %vm1222, %v1304, %v1305
      %v1307 = vrot.slane %v236, 5
      %v1308 = vrot.slane %v1307, 4
      %v1309 = vrot.slane %v237, 5
      %v1310 = vsel %vm1222, %v1308, %v1309
      %v1311 = vrot.slane %v1309, 4
      %v1312 = vrot.slane %v238, 5
      %v1313 = vsel %vm1222, %v1311, %v1312
      %v1314 = vrot.slane %v239, 5
      %v1315 = vrot.slane %v1314, 4
      %v1316 = vrot.slane %v240, 5
      %v1317 = vsel %vm1222, %v1315, %v1316
      %v1318 = vrot.slane %v1316, 4
      %v1319 = vrot.slane %v241, 5
      %v1320 = vsel %vm1222, %v1318, %v1319
      %v1321 = vrot.slane %v242, 5
      %v1322 = vrot.slane %v1321, 4
      %v1323 = vrot.slane %v243, 5
      %v1324 = vsel %vm1222, %v1322, %v1323
      %v1325 = vrot.slane %v1323, 4
      %v1326 = vrot.slane %v244, 5
      %v1327 = vsel %vm1222, %v1325, %v1326
      %v1328 = vrot.slane %v245, 5
      %v1329 = vrot.slane %v1328, 4
      %v1330 = vrot.slane %v246, 5
      %v1331 = vsel %vm1222, %v1329, %v1330
      %v1332 = vrot.slane %v1330, 4
      %v1333 = vrot.slane %v247, 5
      %v1334 = vsel %vm1222, %v1332, %v1333
      %v1335 = vunpack.c.l.b16 %v1226
      %v1336 = vunpack.c.l.b16 %v1229
      %v1337 = vunpack.c.l.b16 %v1233
      %v1338 = vunpack.c.l.b16 %v1236
      %v1339 = vunpack.c.l.b16 %v1240
      %v1340 = vunpack.c.l.b16 %v1243
      %v1341 = vunpack.c.l.b16 %v1247
      %v1342 = vunpack.c.l.b16 %v1250
      %v1343 = vunpack.c.l.b16 %v1254
      %v1344 = vunpack.c.l.b16 %v1257
      %v1345 = vunpack.c.l.b16 %v1261
      %v1346 = vunpack.c.l.b16 %v1264
      %v1347 = vunpack.c.l.b16 %v1268
      %v1348 = vunpack.c.l.b16 %v1271
      %v1349 = vunpack.c.l.b16 %v1275
      %v1350 = vunpack.c.l.b16 %v1278
      %v1351 = vunpack.c.l.b16 %v1282
      %v1352 = vunpack.c.l.b16 %v1285
      %v1353 = vunpack.c.l.b16 %v1289
      %v1354 = vunpack.c.l.b16 %v1292
      %v1355 = vunpack.c.l.b16 %v1296
      %v1356 = vunpack.c.l.b16 %v1299
      %v1357 = vunpack.c.l.b16 %v1303
      %v1358 = vunpack.c.l.b16 %v1306
      %v1359 = vunpack.c.l.b16 %v1310
      %v1360 = vunpack.c.l.b16 %v1313
      %v1361 = vunpack.c.l.b16 %v1317
      %v1362 = vunpack.c.l.b16 %v1320
      %v1363 = vunpack.c.l.b16 %v1324
      %v1364 = vunpack.c.l.b16 %v1327
      %v1365 = vunpack.c.l.b16 %v1331
      %v1366 = vunpack.c.l.b16 %v1334
      %v1367 = vpack.c.b16 %v1336, %v1335
      %v1368 = vpack.c.b16 %v1338, %v1337
      %v1369 = vpack.c.b16 %v1340, %v1339
      %v1370 = vpack.c.b16 %v1342, %v1341
      %v1371 = vpack.c.b16 %v1344, %v1343
      %v1372 = vpack.c.b16 %v1346, %v1345
      %v1373 = vpack.c.b16 %v1348, %v1347
      %v1374 = vpack.c.b16 %v1350, %v1349
      %v1375 = vpack.c.b16 %v1352, %v1351
      %v1376 = vpack.c.b16 %v1354, %v1353
      %v1377 = vpack.c.b16 %v1356, %v1355
      %v1378 = vpack.c.b16 %v1358, %v1357
      %v1379 = vpack.c.b16 %v1360, %v1359
      %v1380 = vpack.c.b16 %v1362, %v1361
      %v1381 = vpack.c.b16 %v1364, %v1363
      %v1382 = vpack.c.b16 %v1366, %v1365
      %v1384 = vsel %vm698, %v1367, 0
      %v1387 = vsel %vm698, %v1368, 0
      %v1390 = vsel %vm698, %v1369, 0
      %v1393 = vsel %vm698, %v1370, 0
      %v1396 = vsel %vm698, %v1371, 0
      %v1399 = vsel %vm698, %v1372, 0
      %v1402 = vsel %vm698, %v1373, 0
      %v1405 = vsel %vm698, %v1374, 0
      %v1408 = vsel %vm698, %v1375, 0
      %v1411 = vsel %vm698, %v1376, 0
      %v1414 = vsel %vm698, %v1377, 0
      %v1417 = vsel %vm698, %v1378, 0
      %v1420 = vsel %vm698, %v1379, 0
      %v1423 = vsel %vm698, %v1380, 0
      %v1426 = vsel %vm698, %v1381, 0
      %v1429 = vsel %vm698, %v1382, 0
      %v1432 = vsel %vm747, %v256, 0
      %1434 = vmatprep.subr.bf16.mxu0 0
      %1435 = vmatpush1.bf16.msra.mxu0 %v1432
      %1436 = vmatprep.subr.bf16.mxu0 0
      %1437 = vmatpush1.bf16.msra.mxu0 0
      %1438 = vmatprep.subr.bf16.mxu0 0
      %1439 = vmatpush1.bf16.msra.mxu0 0
      %1440 = vmatprep.subr.bf16.mxu0 0
      %1441 = vmatpush1.bf16.msra.mxu0 0
      %1442 = vmatprep.subr.bf16.mxu0 0
      %1443 = vmatpush1.bf16.msra.mxu0 0
      %1444 = vmatprep.subr.bf16.mxu0 0
      %1445 = vmatpush1.bf16.msra.mxu0 0
      %1446 = vmatprep.subr.bf16.mxu0 0
      %1447 = vmatpush1.bf16.msra.mxu0 0
      %1448 = vmatprep.subr.bf16.mxu0 0
      %1449 = vmatpush1.bf16.msra.mxu0 0
      %1450 = vmatprep.subr.bf16.mxu0 0
      %1451 = vmatpush1.bf16.msra.mxu0 0
      %1452 = vmatprep.subr.bf16.mxu0 0
      %1453 = vmatpush1.bf16.msra.mxu0 0
      %1454 = vmatprep.subr.bf16.mxu0 0
      %1455 = vmatpush1.bf16.msra.mxu0 0
      %1456 = vmatprep.subr.bf16.mxu0 0
      %1457 = vmatpush1.bf16.msra.mxu0 0
      %1458 = vmatprep.subr.bf16.mxu0 0
      %1459 = vmatpush1.bf16.msra.mxu0 0
      %1460 = vmatprep.subr.bf16.mxu0 0
      %1461 = vmatpush1.bf16.msra.mxu0 0
      %1462 = vmatprep.subr.bf16.mxu0 0
      %1463 = vmatpush1.bf16.msra.mxu0 0
      %1464 = vmatprep.subr.bf16.mxu0 0
      %1465 = vmatpush1.bf16.msra.mxu0 0
      %1466 = vmatprep.mubr.bf16.mxu0 0
      %1467 = vmatmul.mubr.bf16.gmra.mrb[0].mxu0 %v1384
      %v1468 = vpop.f32.mrb[0].mxu0
      %v1469 = vadd.f32 0.0, %v1468
      %v1470 = vpop.f32.mrb[0].mxu0
      %v1471 = vpop.f32.mrb[0].mxu0
      %v1472 = vadd.f32 0.0, %v1471
      %v1473 = vpop.f32.mrb[0].mxu0
      %1474 = vmatprep.mubr.bf16.mxu0 0
      %1475 = vmatmul.mubr.bf16.gmra.mrb[0].mxu0 %v1387
      %v1476 = vpop.f32.mrb[0].mxu0
      %v1477 = vadd.f32 0.0, %v1476
      %v1478 = vpop.f32.mrb[0].mxu0
      %v1479 = vpop.f32.mrb[0].mxu0
      %v1480 = vadd.f32 0.0, %v1479
      %v1481 = vpop.f32.mrb[0].mxu0
      %1482 = vmatprep.mubr.bf16.mxu0 0
      %1483 = vmatmul.mubr.bf16.gmra.mrb[0].mxu0 %v1390
      %v1484 = vpop.f32.mrb[0].mxu0
      %v1485 = vadd.f32 0.0, %v1484
      %v1486 = vpop.f32.mrb[0].mxu0
      %v1487 = vpop.f32.mrb[0].mxu0
      %v1488 = vadd.f32 0.0, %v1487
      %v1489 = vpop.f32.mrb[0].mxu0
      %1490 = vmatprep.mubr.bf16.mxu0 0
      %1491 = vmatmul.mubr.bf16.gmra.mrb[0].mxu0 %v1393
      %v1492 = vpop.f32.mrb[0].mxu0
      %v1493 = vadd.f32 0.0, %v1492
      %v1494 = vpop.f32.mrb[0].mxu0
      %v1495 = vpop.f32.mrb[0].mxu0
      %v1496 = vadd.f32 0.0, %v1495
      %v1497 = vpop.f32.mrb[0].mxu0
      %1498 = vmatprep.mubr.bf16.mxu0 0
      %1499 = vmatmul.mubr.bf16.gmra.mrb[0].mxu0 %v1396
      %v1500 = vpop.f32.mrb[0].mxu0
      %v1501 = vadd.f32 0.0, %v1500
      %v1502 = vpop.f32.mrb[0].mxu0
      %v1503 = vpop.f32.mrb[0].mxu0
      %v1504 = vadd.f32 0.0, %v1503
      %v1505 = vpop.f32.mrb[0].mxu0
      %1506 = vmatprep.mubr.bf16.mxu0 0
      %1507 = vmatmul.mubr.bf16.gmra.mrb[0].mxu0 %v1399
      %v1508 = vpop.f32.mrb[0].mxu0
      %v1509 = vadd.f32 0.0, %v1508
      %v1510 = vpop.f32.mrb[0].mxu0
      %v1511 = vpop.f32.mrb[0].mxu0
      %v1512 = vadd.f32 0.0, %v1511
      %v1513 = vpop.f32.mrb[0].mxu0
      %1514 = vmatprep.mubr.bf16.mxu0 0
      %1515 = vmatmul.mubr.bf16.gmra.mrb[0].mxu0 %v1402
      %v1516 = vpop.f32.mrb[0].mxu0
      %v1517 = vadd.f32 0.0, %v1516
      %v1518 = vpop.f32.mrb[0].mxu0
      %v1519 = vpop.f32.mrb[0].mxu0
      %v1520 = vadd.f32 0.0, %v1519
      %v1521 = vpop.f32.mrb[0].mxu0
      %1522 = vmatprep.mubr.bf16.mxu0 0
      %1523 = vmatmul.mubr.bf16.gmra.mrb[0].mxu0 %v1405
      %v1524 = vpop.f32.mrb[0].mxu0
      %v1525 = vadd.f32 0.0, %v1524
      %v1526 = vpop.f32.mrb[0].mxu0
      %v1527 = vpop.f32.mrb[0].mxu0
      %v1528 = vadd.f32 0.0, %v1527
      %v1529 = vpop.f32.mrb[0].mxu0
      %1530 = vmatprep.mubr.bf16.mxu0 0
      %1531 = vmatmul.mubr.bf16.gmra.mrb[0].mxu0 %v1408
      %v1532 = vpop.f32.mrb[0].mxu0
      %v1533 = vadd.f32 0.0, %v1532
      %v1534 = vpop.f32.mrb[0].mxu0
      %v1535 = vpop.f32.mrb[0].mxu0
      %v1536 = vadd.f32 0.0, %v1535
      %v1537 = vpop.f32.mrb[0].mxu0
      %1538 = vmatprep.mubr.bf16.mxu0 0
      %1539 = vmatmul.mubr.bf16.gmra.mrb[0].mxu0 %v1411
      %v1540 = vpop.f32.mrb[0].mxu0
      %v1541 = vadd.f32 0.0, %v1540
      %v1542 = vpop.f32.mrb[0].mxu0
      %v1543 = vpop.f32.mrb[0].mxu0
      %v1544 = vadd.f32 0.0, %v1543
      %v1545 = vpop.f32.mrb[0].mxu0
      %1546 = vmatprep.mubr.bf16.mxu0 0
      %1547 = vmatmul.mubr.bf16.gmra.mrb[0].mxu0 %v1414
      %v1548 = vpop.f32.mrb[0].mxu0
      %v1549 = vadd.f32 0.0, %v1548
      %v1550 = vpop.f32.mrb[0].mxu0
      %v1551 = vpop.f32.mrb[0].mxu0
      %v1552 = vadd.f32 0.0, %v1551
      %v1553 = vpop.f32.mrb[0].mxu0
      %1554 = vmatprep.mubr.bf16.mxu0 0
      %1555 = vmatmul.mubr.bf16.gmra.mrb[0].mxu0 %v1417
      %v1556 = vpop.f32.mrb[0].mxu0
      %v1557 = vadd.f32 0.0, %v1556
      %v1558 = vpop.f32.mrb[0].mxu0
      %v1559 = vpop.f32.mrb[0].mxu0
      %v1560 = vadd.f32 0.0, %v1559
      %v1561 = vpop.f32.mrb[0].mxu0
      %1562 = vmatprep.mubr.bf16.mxu0 0
      %1563 = vmatmul.mubr.bf16.gmra.mrb[0].mxu0 %v1420
      %v1564 = vpop.f32.mrb[0].mxu0
      %v1565 = vadd.f32 0.0, %v1564
      %v1566 = vpop.f32.mrb[0].mxu0
      %v1567 = vpop.f32.mrb[0].mxu0
      %v1568 = vadd.f32 0.0, %v1567
      %v1569 = vpop.f32.mrb[0].mxu0
      %1570 = vmatprep.mubr.bf16.mxu0 0
      %1571 = vmatmul.mubr.bf16.gmra.mrb[0].mxu0 %v1423
      %v1572 = vpop.f32.mrb[0].mxu0
      %v1573 = vadd.f32 0.0, %v1572
      %v1574 = vpop.f32.mrb[0].mxu0
      %v1575 = vpop.f32.mrb[0].mxu0
      %v1576 = vadd.f32 0.0, %v1575
      %v1577 = vpop.f32.mrb[0].mxu0
      %1578 = vmatprep.mubr.bf16.mxu0 0
      %1579 = vmatmul.mubr.bf16.gmra.mrb[0].mxu0 %v1426
      %v1580 = vpop.f32.mrb[0].mxu0
      %v1581 = vadd.f32 0.0, %v1580
      %v1582 = vpop.f32.mrb[0].mxu0
      %v1583 = vpop.f32.mrb[0].mxu0
      %v1584 = vadd.f32 0.0, %v1583
      %v1585 = vpop.f32.mrb[0].mxu0
      %1586 = vmatprep.mubr.bf16.mxu0 0
      %1587 = vmatmul.mubr.bf16.gmra.mrb[0].mxu0 %v1429
      %v1588 = vpop.f32.mrb[0].mxu0
      %v1589 = vadd.f32 0.0, %v1588
      %v1590 = vpop.f32.mrb[0].mxu0
      %v1591 = vpop.f32.mrb[0].mxu0
      %v1592 = vadd.f32 0.0, %v1591
      %v1593 = vpop.f32.mrb[0].mxu0
      %1594 = vdwg.mxu0
      %v1595 = vadd.f32 %v1078, %v1469
      %v1596 = vadd.f32 %v1081, %v1472
      %v1597 = vadd.f32 %v1086, %v1477
      %v1598 = vadd.f32 %v1089, %v1480
      %v1599 = vadd.f32 %v1094, %v1485
      %v1600 = vadd.f32 %v1097, %v1488
      %v1601 = vadd.f32 %v1102, %v1493
      %v1602 = vadd.f32 %v1105, %v1496
      %v1603 = vadd.f32 %v1110, %v1501
      %v1604 = vadd.f32 %v1113, %v1504
      %v1605 = vadd.f32 %v1118, %v1509
      %v1606 = vadd.f32 %v1121, %v1512
      %v1607 = vadd.f32 %v1126, %v1517
      %v1608 = vadd.f32 %v1129, %v1520
      %v1609 = vadd.f32 %v1134, %v1525
      %v1610 = vadd.f32 %v1137, %v1528
      %v1611 = vadd.f32 %v1142, %v1533
      %v1612 = vadd.f32 %v1145, %v1536
      %v1613 = vadd.f32 %v1150, %v1541
      %v1614 = vadd.f32 %v1153, %v1544
      %v1615 = vadd.f32 %v1158, %v1549
      %v1616 = vadd.f32 %v1161, %v1552
      %v1617 = vadd.f32 %v1166, %v1557
      %v1618 = vadd.f32 %v1169, %v1560
      %v1619 = vadd.f32 %v1174, %v1565
      %v1620 = vadd.f32 %v1177, %v1568
      %v1621 = vadd.f32 %v1182, %v1573
      %v1622 = vadd.f32 %v1185, %v1576
      %v1623 = vadd.f32 %v1190, %v1581
      %v1624 = vadd.f32 %v1193, %v1584
      %v1625 = vadd.f32 %v1198, %v1589
      %v1626 = vadd.f32 %v1201, %v1592
      %v1629 = vunpack.c.l.b16 %v248
      %v1630 = vunpack.c.l.b16 %v249
      %v1631 = vpack.c.b16 %v1630, %v1629
      %v1633 = vsel %vm698, %v1631, 0
      %v1636 = vsel %vm747, %v257, 0
      %1638 = vmatprep.subr.bf16.mxu0 0
      %1639 = vmatpush1.bf16.msra.mxu0 %v1636
      %1640 = vmatprep.subr.bf16.mxu0 0
      %1641 = vmatpush1.bf16.msra.mxu0 0
      %1642 = vmatprep.subr.bf16.mxu0 0
      %1643 = vmatpush1.bf16.msra.mxu0 0
      %1644 = vmatprep.subr.bf16.mxu0 0
      %1645 = vmatpush1.bf16.msra.mxu0 0
      %1646 = vmatprep.subr.bf16.mxu0 0
      %1647 = vmatpush1.bf16.msra.mxu0 0
      %1648 = vmatprep.subr.bf16.mxu0 0
      %1649 = vmatpush1.bf16.msra.mxu0 0
      %1650 = vmatprep.subr.bf16.mxu0 0
      %1651 = vmatpush1.bf16.msra.mxu0 0
      %1652 = vmatprep.subr.bf16.mxu0 0
      %1653 = vmatpush1.bf16.msra.mxu0 0
      %1654 = vmatprep.subr.bf16.mxu0 0
      %1655 = vmatpush1.bf16.msra.mxu0 0
      %1656 = vmatprep.subr.bf16.mxu0 0
      %1657 = vmatpush1.bf16.msra.mxu0 0
      %1658 = vmatprep.subr.bf16.mxu0 0
      %1659 = vmatpush1.bf16.msra.mxu0 0
      %1660 = vmatprep.subr.bf16.mxu0 0
      %1661 = vmatpush1.bf16.msra.mxu0 0
      %1662 = vmatprep.subr.bf16.mxu0 0
      %1663 = vmatpush1.bf16.msra.mxu0 0
      %1664 = vmatprep.subr.bf16.mxu0 0
      %1665 = vmatpush1.bf16.msra.mxu0 0
      %1666 = vmatprep.subr.bf16.mxu0 0
      %1667 = vmatpush1.bf16.msra.mxu0 0
      %1668 = vmatprep.subr.bf16.mxu0 0
      %1669 = vmatpush1.bf16.msra.mxu0 0
      %1670 = vmatprep.mubr.bf16.mxu0 0
      %1671 = vmatmul.mubr.bf16.gmra.mrb[0].mxu0 %v996
      %v1672 = vpop.f32.mrb[0].mxu0
      %v1673 = vadd.f32 0.0, %v1672
      %v1674 = vpop.f32.mrb[0].mxu0
      %v1675 = vpop.f32.mrb[0].mxu0
      %v1676 = vadd.f32 0.0, %v1675
      %v1677 = vpop.f32.mrb[0].mxu0
      %1678 = vmatprep.mubr.bf16.mxu0 0
      %1679 = vmatmul.mubr.bf16.gmra.mrb[0].mxu0 %v999
      %v1680 = vpop.f32.mrb[0].mxu0
      %v1681 = vadd.f32 0.0, %v1680
      %v1682 = vpop.f32.mrb[0].mxu0
      %v1683 = vpop.f32.mrb[0].mxu0
      %v1684 = vadd.f32 0.0, %v1683
      %v1685 = vpop.f32.mrb[0].mxu0
      %1686 = vmatprep.mubr.bf16.mxu0 0
      %1687 = vmatmul.mubr.bf16.gmra.mrb[0].mxu0 %v1002
      %v1688 = vpop.f32.mrb[0].mxu0
      %v1689 = vadd.f32 0.0, %v1688
      %v1690 = vpop.f32.mrb[0].mxu0
      %v1691 = vpop.f32.mrb[0].mxu0
      %v1692 = vadd.f32 0.0, %v1691
      %v1693 = vpop.f32.mrb[0].mxu0
      %1694 = vmatprep.mubr.bf16.mxu0 0
      %1695 = vmatmul.mubr.bf16.gmra.mrb[0].mxu0 %v1005
      %v1696 = vpop.f32.mrb[0].mxu0
      %v1697 = vadd.f32 0.0, %v1696
      %v1698 = vpop.f32.mrb[0].mxu0
      %v1699 = vpop.f32.mrb[0].mxu0
      %v1700 = vadd.f32 0.0, %v1699
      %v1701 = vpop.f32.mrb[0].mxu0
      %1702 = vmatprep.mubr.bf16.mxu0 0
      %1703 = vmatmul.mubr.bf16.gmra.mrb[0].mxu0 %v1008
      %v1704 = vpop.f32.mrb[0].mxu0
      %v1705 = vadd.f32 0.0, %v1704
      %v1706 = vpop.f32.mrb[0].mxu0
      %v1707 = vpop.f32.mrb[0].mxu0
      %v1708 = vadd.f32 0.0, %v1707
      %v1709 = vpop.f32.mrb[0].mxu0
      %1710 = vmatprep.mubr.bf16.mxu0 0
      %1711 = vmatmul.mubr.bf16.gmra.mrb[0].mxu0 %v1011
      %v1712 = vpop.f32.mrb[0].mxu0
      %v1713 = vadd.f32 0.0, %v1712
      %v1714 = vpop.f32.mrb[0].mxu0
      %v1715 = vpop.f32.mrb[0].mxu0
      %v1716 = vadd.f32 0.0, %v1715
      %v1717 = vpop.f32.mrb[0].mxu0
      %1718 = vmatprep.mubr.bf16.mxu0 0
      %1719 = vmatmul.mubr.bf16.gmra.mrb[0].mxu0 %v1014
      %v1720 = vpop.f32.mrb[0].mxu0
      %v1721 = vadd.f32 0.0, %v1720
      %v1722 = vpop.f32.mrb[0].mxu0
      %v1723 = vpop.f32.mrb[0].mxu0
      %v1724 = vadd.f32 0.0, %v1723
      %v1725 = vpop.f32.mrb[0].mxu0
      %1726 = vmatprep.mubr.bf16.mxu0 0
      %1727 = vmatmul.mubr.bf16.gmra.mrb[0].mxu0 %v1017
      %v1728 = vpop.f32.mrb[0].mxu0
      %v1729 = vadd.f32 0.0, %v1728
      %v1730 = vpop.f32.mrb[0].mxu0
      %v1731 = vpop.f32.mrb[0].mxu0
      %v1732 = vadd.f32 0.0, %v1731
      %v1733 = vpop.f32.mrb[0].mxu0
      %1734 = vmatprep.mubr.bf16.mxu0 0
      %1735 = vmatmul.mubr.bf16.gmra.mrb[0].mxu0 %v1020
      %v1736 = vpop.f32.mrb[0].mxu0
      %v1737 = vadd.f32 0.0, %v1736
      %v1738 = vpop.f32.mrb[0].mxu0
      %v1739 = vpop.f32.mrb[0].mxu0
      %v1740 = vadd.f32 0.0, %v1739
      %v1741 = vpop.f32.mrb[0].mxu0
      %1742 = vmatprep.mubr.bf16.mxu0 0
      %1743 = vmatmul.mubr.bf16.gmra.mrb[0].mxu0 %v1023
      %v1744 = vpop.f32.mrb[0].mxu0
      %v1745 = vadd.f32 0.0, %v1744
      %v1746 = vpop.f32.mrb[0].mxu0
      %v1747 = vpop.f32.mrb[0].mxu0
      %v1748 = vadd.f32 0.0, %v1747
      %v1749 = vpop.f32.mrb[0].mxu0
      %1750 = vmatprep.mubr.bf16.mxu0 0
      %1751 = vmatmul.mubr.bf16.gmra.mrb[0].mxu0 %v1026
      %v1752 = vpop.f32.mrb[0].mxu0
      %v1753 = vadd.f32 0.0, %v1752
      %v1754 = vpop.f32.mrb[0].mxu0
      %v1755 = vpop.f32.mrb[0].mxu0
      %v1756 = vadd.f32 0.0, %v1755
      %v1757 = vpop.f32.mrb[0].mxu0
      %1758 = vmatprep.mubr.bf16.mxu0 0
      %1759 = vmatmul.mubr.bf16.gmra.mrb[0].mxu0 %v1029
      %v1760 = vpop.f32.mrb[0].mxu0
      %v1761 = vadd.f32 0.0, %v1760
      %v1762 = vpop.f32.mrb[0].mxu0
      %v1763 = vpop.f32.mrb[0].mxu0
      %v1764 = vadd.f32 0.0, %v1763
      %v1765 = vpop.f32.mrb[0].mxu0
      %1766 = vmatprep.mubr.bf16.mxu0 0
      %1767 = vmatmul.mubr.bf16.gmra.mrb[0].mxu0 %v1032
      %v1768 = vpop.f32.mrb[0].mxu0
      %v1769 = vadd.f32 0.0, %v1768
      %v1770 = vpop.f32.mrb[0].mxu0
      %v1771 = vpop.f32.mrb[0].mxu0
      %v1772 = vadd.f32 0.0, %v1771
      %v1773 = vpop.f32.mrb[0].mxu0
      %1774 = vmatprep.mubr.bf16.mxu0 0
      %1775 = vmatmul.mubr.bf16.gmra.mrb[0].mxu0 %v1035
      %v1776 = vpop.f32.mrb[0].mxu0
      %v1777 = vadd.f32 0.0, %v1776
      %v1778 = vpop.f32.mrb[0].mxu0
      %v1779 = vpop.f32.mrb[0].mxu0
      %v1780 = vadd.f32 0.0, %v1779
      %v1781 = vpop.f32.mrb[0].mxu0
      %1782 = vmatprep.mubr.bf16.mxu0 0
      %1783 = vmatmul.mubr.bf16.gmra.mrb[0].mxu0 %v1038
      %v1784 = vpop.f32.mrb[0].mxu0
      %v1785 = vadd.f32 0.0, %v1784
      %v1786 = vpop.f32.mrb[0].mxu0
      %v1787 = vpop.f32.mrb[0].mxu0
      %v1788 = vadd.f32 0.0, %v1787
      %v1789 = vpop.f32.mrb[0].mxu0
      %1790 = vmatprep.mubr.bf16.mxu0 0
      %1791 = vmatmul.mubr.bf16.gmra.mrb[0].mxu0 %v1633
      %v1792 = vpop.f32.mrb[0].mxu0
      %v1793 = vadd.f32 0.0, %v1792
      %v1794 = vpop.f32.mrb[0].mxu0
      %v1795 = vpop.f32.mrb[0].mxu0
      %v1796 = vadd.f32 0.0, %v1795
      %v1797 = vpop.f32.mrb[0].mxu0
      %1798 = vdwg.mxu0
      %v1799 = vadd.f32 %v1595, %v1673
      %v1800 = vadd.f32 %v1596, %v1676
      %v1801 = vadd.f32 %v1597, %v1681
      %v1802 = vadd.f32 %v1598, %v1684
      %v1803 = vadd.f32 %v1599, %v1689
      %v1804 = vadd.f32 %v1600, %v1692
      %v1805 = vadd.f32 %v1601, %v1697
      %v1806 = vadd.f32 %v1602, %v1700
      %v1807 = vadd.f32 %v1603, %v1705
      %v1808 = vadd.f32 %v1604, %v1708
      %v1809 = vadd.f32 %v1605, %v1713
      %v1810 = vadd.f32 %v1606, %v1716
      %v1811 = vadd.f32 %v1607, %v1721
      %v1812 = vadd.f32 %v1608, %v1724
      %v1813 = vadd.f32 %v1609, %v1729
      %v1814 = vadd.f32 %v1610, %v1732
      %v1815 = vadd.f32 %v1611, %v1737
      %v1816 = vadd.f32 %v1612, %v1740
      %v1817 = vadd.f32 %v1613, %v1745
      %v1818 = vadd.f32 %v1614, %v1748
      %v1819 = vadd.f32 %v1615, %v1753
      %v1820 = vadd.f32 %v1616, %v1756
      %v1821 = vadd.f32 %v1617, %v1761
      %v1822 = vadd.f32 %v1618, %v1764
      %v1823 = vadd.f32 %v1619, %v1769
      %v1824 = vadd.f32 %v1620, %v1772
      %v1825 = vadd.f32 %v1621, %v1777
      %v1826 = vadd.f32 %v1622, %v1780
      %v1827 = vadd.f32 %v1623, %v1785
      %v1828 = vadd.f32 %v1624, %v1788
      %v1829 = vadd.f32 %v1625, %v1793
      %v1830 = vadd.f32 %v1626, %v1796
      %v1832 = vshrl.u32 %v248, 16
      %v1834 = vrot.slane %v1832, 4
      %v1835 = vshll.u32 %v248, 16
      %v1837 = vrot.slane %v1835, 5
      %v1838 = vor.u32 %v1834, %v1837
      %v1839 = vrot.slane %v1838, 4
      %v1841 = vshll.u32 %v249, 16
      %v1843 = vrot.slane %v1841, 5
      %v1844 = vsel %vm265, %v1839, %v1843
      %v1845 = vshrl.u32 %v249, 16
      %v1847 = vrot.slane %v1845, 4
      %v1848 = vor.u32 %v1847, %v1843
      %v1849 = vrot.slane %v1848, 4
      %v1851 = vshll.u32 %v250, 16
      %v1853 = vrot.slane %v1851, 5
      %v1854 = vsel %vm265, %v1849, %v1853
      %v1855 = vunpack.c.l.b16 %v1844
      %v1856 = vunpack.c.l.b16 %v1854
      %v1857 = vpack.c.b16 %v1856, %v1855
      %v1859 = vsel %vm698, %v1857, 0
      %v1862 = vsel %vm747, %v258, 0
      %1864 = vmatprep.subr.bf16.mxu0 0
      %1865 = vmatpush1.bf16.msra.mxu0 %v1862
      %1866 = vmatprep.subr.bf16.mxu0 0
      %1867 = vmatpush1.bf16.msra.mxu0 0
      %1868 = vmatprep.subr.bf16.mxu0 0
      %1869 = vmatpush1.bf16.msra.mxu0 0
      %1870 = vmatprep.subr.bf16.mxu0 0
      %1871 = vmatpush1.bf16.msra.mxu0 0
      %1872 = vmatprep.subr.bf16.mxu0 0
      %1873 = vmatpush1.bf16.msra.mxu0 0
      %1874 = vmatprep.subr.bf16.mxu0 0
      %1875 = vmatpush1.bf16.msra.mxu0 0
      %1876 = vmatprep.subr.bf16.mxu0 0
      %1877 = vmatpush1.bf16.msra.mxu0 0
      %1878 = vmatprep.subr.bf16.mxu0 0
      %1879 = vmatpush1.bf16.msra.mxu0 0
      %1880 = vmatprep.subr.bf16.mxu0 0
      %1881 = vmatpush1.bf16.msra.mxu0 0
      %1882 = vmatprep.subr.bf16.mxu0 0
      %1883 = vmatpush1.bf16.msra.mxu0 0
      %1884 = vmatprep.subr.bf16.mxu0 0
      %1885 = vmatpush1.bf16.msra.mxu0 0
      %1886 = vmatprep.subr.bf16.mxu0 0
      %1887 = vmatpush1.bf16.msra.mxu0 0
      %1888 = vmatprep.subr.bf16.mxu0 0
      %1889 = vmatpush1.bf16.msra.mxu0 0
      %1890 = vmatprep.subr.bf16.mxu0 0
      %1891 = vmatpush1.bf16.msra.mxu0 0
      %1892 = vmatprep.subr.bf16.mxu0 0
      %1893 = vmatpush1.bf16.msra.mxu0 0
      %1894 = vmatprep.subr.bf16.mxu0 0
      %1895 = vmatpush1.bf16.msra.mxu0 0
      %1896 = vmatprep.mubr.bf16.mxu0 0
      %1897 = vmatmul.mubr.bf16.gmra.mrb[0].mxu0 %v703
      %v1898 = vpop.f32.mrb[0].mxu0
      %v1899 = vadd.f32 0.0, %v1898
      %v1900 = vpop.f32.mrb[0].mxu0
      %v1901 = vpop.f32.mrb[0].mxu0
      %v1902 = vadd.f32 0.0, %v1901
      %v1903 = vpop.f32.mrb[0].mxu0
      %1904 = vmatprep.mubr.bf16.mxu0 0
      %1905 = vmatmul.mubr.bf16.gmra.mrb[0].mxu0 %v706
      %v1906 = vpop.f32.mrb[0].mxu0
      %v1907 = vadd.f32 0.0, %v1906
      %v1908 = vpop.f32.mrb[0].mxu0
      %v1909 = vpop.f32.mrb[0].mxu0
      %v1910 = vadd.f32 0.0, %v1909
      %v1911 = vpop.f32.mrb[0].mxu0
      %1912 = vmatprep.mubr.bf16.mxu0 0
      %1913 = vmatmul.mubr.bf16.gmra.mrb[0].mxu0 %v709
      %v1914 = vpop.f32.mrb[0].mxu0
      %v1915 = vadd.f32 0.0, %v1914
      %v1916 = vpop.f32.mrb[0].mxu0
      %v1917 = vpop.f32.mrb[0].mxu0
      %v1918 = vadd.f32 0.0, %v1917
      %v1919 = vpop.f32.mrb[0].mxu0
      %1920 = vmatprep.mubr.bf16.mxu0 0
      %1921 = vmatmul.mubr.bf16.gmra.mrb[0].mxu0 %v712
      %v1922 = vpop.f32.mrb[0].mxu0
      %v1923 = vadd.f32 0.0, %v1922
      %v1924 = vpop.f32.mrb[0].mxu0
      %v1925 = vpop.f32.mrb[0].mxu0
      %v1926 = vadd.f32 0.0, %v1925
      %v1927 = vpop.f32.mrb[0].mxu0
      %1928 = vmatprep.mubr.bf16.mxu0 0
      %1929 = vmatmul.mubr.bf16.gmra.mrb[0].mxu0 %v715
      %v1930 = vpop.f32.mrb[0].mxu0
      %v1931 = vadd.f32 0.0, %v1930
      %v1932 = vpop.f32.mrb[0].mxu0
      %v1933 = vpop.f32.mrb[0].mxu0
      %v1934 = vadd.f32 0.0, %v1933
      %v1935 = vpop.f32.mrb[0].mxu0
      %1936 = vmatprep.mubr.bf16.mxu0 0
      %1937 = vmatmul.mubr.bf16.gmra.mrb[0].mxu0 %v718
      %v1938 = vpop.f32.mrb[0].mxu0
      %v1939 = vadd.f32 0.0, %v1938
      %v1940 = vpop.f32.mrb[0].mxu0
      %v1941 = vpop.f32.mrb[0].mxu0
      %v1942 = vadd.f32 0.0, %v1941
      %v1943 = vpop.f32.mrb[0].mxu0
      %1944 = vmatprep.mubr.bf16.mxu0 0
      %1945 = vmatmul.mubr.bf16.gmra.mrb[0].mxu0 %v721
      %v1946 = vpop.f32.mrb[0].mxu0
      %v1947 = vadd.f32 0.0, %v1946
      %v1948 = vpop.f32.mrb[0].mxu0
      %v1949 = vpop.f32.mrb[0].mxu0
      %v1950 = vadd.f32 0.0, %v1949
      %v1951 = vpop.f32.mrb[0].mxu0
      %1952 = vmatprep.mubr.bf16.mxu0 0
      %1953 = vmatmul.mubr.bf16.gmra.mrb[0].mxu0 %v724
      %v1954 = vpop.f32.mrb[0].mxu0
      %v1955 = vadd.f32 0.0, %v1954
      %v1956 = vpop.f32.mrb[0].mxu0
      %v1957 = vpop.f32.mrb[0].mxu0
      %v1958 = vadd.f32 0.0, %v1957
      %v1959 = vpop.f32.mrb[0].mxu0
      %1960 = vmatprep.mubr.bf16.mxu0 0
      %1961 = vmatmul.mubr.bf16.gmra.mrb[0].mxu0 %v727
      %v1962 = vpop.f32.mrb[0].mxu0
      %v1963 = vadd.f32 0.0, %v1962
      %v1964 = vpop.f32.mrb[0].mxu0
      %v1965 = vpop.f32.mrb[0].mxu0
      %v1966 = vadd.f32 0.0, %v1965
      %v1967 = vpop.f32.mrb[0].mxu0
      %1968 = vmatprep.mubr.bf16.mxu0 0
      %1969 = vmatmul.mubr.bf16.gmra.mrb[0].mxu0 %v730
      %v1970 = vpop.f32.mrb[0].mxu0
      %v1971 = vadd.f32 0.0, %v1970
      %v1972 = vpop.f32.mrb[0].mxu0
      %v1973 = vpop.f32.mrb[0].mxu0
      %v1974 = vadd.f32 0.0, %v1973
      %v1975 = vpop.f32.mrb[0].mxu0
      %1976 = vmatprep.mubr.bf16.mxu0 0
      %1977 = vmatmul.mubr.bf16.gmra.mrb[0].mxu0 %v733
      %v1978 = vpop.f32.mrb[0].mxu0
      %v1979 = vadd.f32 0.0, %v1978
      %v1980 = vpop.f32.mrb[0].mxu0
      %v1981 = vpop.f32.mrb[0].mxu0
      %v1982 = vadd.f32 0.0, %v1981
      %v1983 = vpop.f32.mrb[0].mxu0
      %1984 = vmatprep.mubr.bf16.mxu0 0
      %1985 = vmatmul.mubr.bf16.gmra.mrb[0].mxu0 %v736
      %v1986 = vpop.f32.mrb[0].mxu0
      %v1987 = vadd.f32 0.0, %v1986
      %v1988 = vpop.f32.mrb[0].mxu0
      %v1989 = vpop.f32.mrb[0].mxu0
      %v1990 = vadd.f32 0.0, %v1989
      %v1991 = vpop.f32.mrb[0].mxu0
      %1992 = vmatprep.mubr.bf16.mxu0 0
      %1993 = vmatmul.mubr.bf16.gmra.mrb[0].mxu0 %v739
      %v1994 = vpop.f32.mrb[0].mxu0
      %v1995 = vadd.f32 0.0, %v1994
      %v1996 = vpop.f32.mrb[0].mxu0
      %v1997 = vpop.f32.mrb[0].mxu0
      %v1998 = vadd.f32 0.0, %v1997
      %v1999 = vpop.f32.mrb[0].mxu0
      %2000 = vmatprep.mubr.bf16.mxu0 0
      %2001 = vmatmul.mubr.bf16.gmra.mrb[0].mxu0 %v742
      %v2002 = vpop.f32.mrb[0].mxu0
      %v2003 = vadd.f32 0.0, %v2002
      %v2004 = vpop.f32.mrb[0].mxu0
      %v2005 = vpop.f32.mrb[0].mxu0
      %v2006 = vadd.f32 0.0, %v2005
      %v2007 = vpop.f32.mrb[0].mxu0
      %2008 = vmatprep.mubr.bf16.mxu0 0
      %2009 = vmatmul.mubr.bf16.gmra.mrb[0].mxu0 %v745
      %v2010 = vpop.f32.mrb[0].mxu0
      %v2011 = vadd.f32 0.0, %v2010
      %v2012 = vpop.f32.mrb[0].mxu0
      %v2013 = vpop.f32.mrb[0].mxu0
      %v2014 = vadd.f32 0.0, %v2013
      %v2015 = vpop.f32.mrb[0].mxu0
      %2016 = vmatprep.mubr.bf16.mxu0 0
      %2017 = vmatmul.mubr.bf16.gmra.mrb[0].mxu0 %v1859
      %v2018 = vpop.f32.mrb[0].mxu0
      %v2019 = vadd.f32 0.0, %v2018
      %v2020 = vpop.f32.mrb[0].mxu0
      %v2021 = vpop.f32.mrb[0].mxu0
      %v2022 = vadd.f32 0.0, %v2021
      %v2023 = vpop.f32.mrb[0].mxu0
      %2024 = vdwg.mxu0
      %v2025 = vadd.f32 %v1799, %v1899
      %v2026 = vadd.f32 %v1800, %v1902
      %v2027 = vadd.f32 %v1801, %v1907
      %v2028 = vadd.f32 %v1802, %v1910
      %v2029 = vadd.f32 %v1803, %v1915
      %v2030 = vadd.f32 %v1804, %v1918
      %v2031 = vadd.f32 %v1805, %v1923
      %v2032 = vadd.f32 %v1806, %v1926
      %v2033 = vadd.f32 %v1807, %v1931
      %v2034 = vadd.f32 %v1808, %v1934
      %v2035 = vadd.f32 %v1809, %v1939
      %v2036 = vadd.f32 %v1810, %v1942
      %v2037 = vadd.f32 %v1811, %v1947
      %v2038 = vadd.f32 %v1812, %v1950
      %v2039 = vadd.f32 %v1813, %v1955
      %v2040 = vadd.f32 %v1814, %v1958
      %v2041 = vadd.f32 %v1815, %v1963
      %v2042 = vadd.f32 %v1816, %v1966
      %v2043 = vadd.f32 %v1817, %v1971
      %v2044 = vadd.f32 %v1818, %v1974
      %v2045 = vadd.f32 %v1819, %v1979
      %v2046 = vadd.f32 %v1820, %v1982
      %v2047 = vadd.f32 %v1821, %v1987
      %v2048 = vadd.f32 %v1822, %v1990
      %v2049 = vadd.f32 %v1823, %v1995
      %v2050 = vadd.f32 %v1824, %v1998
      %v2051 = vadd.f32 %v1825, %v2003
      %v2052 = vadd.f32 %v1826, %v2006
      %v2053 = vadd.f32 %v1827, %v2011
      %v2054 = vadd.f32 %v1828, %v2014
      %v2055 = vadd.f32 %v1829, %v2019
      %v2056 = vadd.f32 %v1830, %v2022
      %v2058 = vrot.slane %v248, 5
      %v2059 = vrot.slane %v2058, 4
      %v2060 = vrot.slane %v249, 5
      %v2061 = vsel %vm1222, %v2059, %v2060
      %v2062 = vrot.slane %v2060, 4
      %v2063 = vrot.slane %v250, 5
      %v2064 = vsel %vm1222, %v2062, %v2063
      %v2065 = vunpack.c.l.b16 %v2061
      %v2066 = vunpack.c.l.b16 %v2064
      %v2067 = vpack.c.b16 %v2066, %v2065
      %v2069 = vsel %vm698, %v2067, 0
      %v2072 = vsel %vm747, %v259, 0
      %2074 = vmatprep.subr.bf16.mxu0 0
      %2075 = vmatpush1.bf16.msra.mxu0 %v2072
      %2076 = vmatprep.subr.bf16.mxu0 0
      %2077 = vmatpush1.bf16.msra.mxu0 0
      %2078 = vmatprep.subr.bf16.mxu0 0
      %2079 = vmatpush1.bf16.msra.mxu0 0
      %2080 = vmatprep.subr.bf16.mxu0 0
      %2081 = vmatpush1.bf16.msra.mxu0 0
      %2082 = vmatprep.subr.bf16.mxu0 0
      %2083 = vmatpush1.bf16.msra.mxu0 0
      %2084 = vmatprep.subr.bf16.mxu0 0
      %2085 = vmatpush1.bf16.msra.mxu0 0
      %2086 = vmatprep.subr.bf16.mxu0 0
      %2087 = vmatpush1.bf16.msra.mxu0 0
      %2088 = vmatprep.subr.bf16.mxu0 0
      %2089 = vmatpush1.bf16.msra.mxu0 0
      %2090 = vmatprep.subr.bf16.mxu0 0
      %2091 = vmatpush1.bf16.msra.mxu0 0
      %2092 = vmatprep.subr.bf16.mxu0 0
      %2093 = vmatpush1.bf16.msra.mxu0 0
      %2094 = vmatprep.subr.bf16.mxu0 0
      %2095 = vmatpush1.bf16.msra.mxu0 0
      %2096 = vmatprep.subr.bf16.mxu0 0
      %2097 = vmatpush1.bf16.msra.mxu0 0
      %2098 = vmatprep.subr.bf16.mxu0 0
      %2099 = vmatpush1.bf16.msra.mxu0 0
      %2100 = vmatprep.subr.bf16.mxu0 0
      %2101 = vmatpush1.bf16.msra.mxu0 0
      %2102 = vmatprep.subr.bf16.mxu0 0
      %2103 = vmatpush1.bf16.msra.mxu0 0
      %2104 = vmatprep.subr.bf16.mxu0 0
      %2105 = vmatpush1.bf16.msra.mxu0 0
      %2106 = vmatprep.mubr.bf16.mxu0 0
      %2107 = vmatmul.mubr.bf16.gmra.mrb[0].mxu0 %v1387
      %v2108 = vpop.f32.mrb[0].mxu0
      %v2109 = vadd.f32 0.0, %v2108
      %v2110 = vpop.f32.mrb[0].mxu0
      %v2111 = vpop.f32.mrb[0].mxu0
      %v2112 = vadd.f32 0.0, %v2111
      %v2113 = vpop.f32.mrb[0].mxu0
      %2114 = vmatprep.mubr.bf16.mxu0 0
      %2115 = vmatmul.mubr.bf16.gmra.mrb[0].mxu0 %v1390
      %v2116 = vpop.f32.mrb[0].mxu0
      %v2117 = vadd.f32 0.0, %v2116
      %v2118 = vpop.f32.mrb[0].mxu0
      %v2119 = vpop.f32.mrb[0].mxu0
      %v2120 = vadd.f32 0.0, %v2119
      %v2121 = vpop.f32.mrb[0].mxu0
      %2122 = vmatprep.mubr.bf16.mxu0 0
      %2123 = vmatmul.mubr.bf16.gmra.mrb[0].mxu0 %v1393
      %v2124 = vpop.f32.mrb[0].mxu0
      %v2125 = vadd.f32 0.0, %v2124
      %v2126 = vpop.f32.mrb[0].mxu0
      %v2127 = vpop.f32.mrb[0].mxu0
      %v2128 = vadd.f32 0.0, %v2127
      %v2129 = vpop.f32.mrb[0].mxu0
      %2130 = vmatprep.mubr.bf16.mxu0 0
      %2131 = vmatmul.mubr.bf16.gmra.mrb[0].mxu0 %v1396
      %v2132 = vpop.f32.mrb[0].mxu0
      %v2133 = vadd.f32 0.0, %v2132
      %v2134 = vpop.f32.mrb[0].mxu0
      %v2135 = vpop.f32.mrb[0].mxu0
      %v2136 = vadd.f32 0.0, %v2135
      %v2137 = vpop.f32.mrb[0].mxu0
      %2138 = vmatprep.mubr.bf16.mxu0 0
      %2139 = vmatmul.mubr.bf16.gmra.mrb[0].mxu0 %v1399
      %v2140 = vpop.f32.mrb[0].mxu0
      %v2141 = vadd.f32 0.0, %v2140
      %v2142 = vpop.f32.mrb[0].mxu0
      %v2143 = vpop.f32.mrb[0].mxu0
      %v2144 = vadd.f32 0.0, %v2143
      %v2145 = vpop.f32.mrb[0].mxu0
      %2146 = vmatprep.mubr.bf16.mxu0 0
      %2147 = vmatmul.mubr.bf16.gmra.mrb[0].mxu0 %v1402
      %v2148 = vpop.f32.mrb[0].mxu0
      %v2149 = vadd.f32 0.0, %v2148
      %v2150 = vpop.f32.mrb[0].mxu0
      %v2151 = vpop.f32.mrb[0].mxu0
      %v2152 = vadd.f32 0.0, %v2151
      %v2153 = vpop.f32.mrb[0].mxu0
      %2154 = vmatprep.mubr.bf16.mxu0 0
      %2155 = vmatmul.mubr.bf16.gmra.mrb[0].mxu0 %v1405
      %v2156 = vpop.f32.mrb[0].mxu0
      %v2157 = vadd.f32 0.0, %v2156
      %v2158 = vpop.f32.mrb[0].mxu0
      %v2159 = vpop.f32.mrb[0].mxu0
      %v2160 = vadd.f32 0.0, %v2159
      %v2161 = vpop.f32.mrb[0].mxu0
      %2162 = vmatprep.mubr.bf16.mxu0 0
      %2163 = vmatmul.mubr.bf16.gmra.mrb[0].mxu0 %v1408
      %v2164 = vpop.f32.mrb[0].mxu0
      %v2165 = vadd.f32 0.0, %v2164
      %v2166 = vpop.f32.mrb[0].mxu0
      %v2167 = vpop.f32.mrb[0].mxu0
      %v2168 = vadd.f32 0.0, %v2167
      %v2169 = vpop.f32.mrb[0].mxu0
      %2170 = vmatprep.mubr.bf16.mxu0 0
      %2171 = vmatmul.mubr.bf16.gmra.mrb[0].mxu0 %v1411
      %v2172 = vpop.f32.mrb[0].mxu0
      %v2173 = vadd.f32 0.0, %v2172
      %v2174 = vpop.f32.mrb[0].mxu0
      %v2175 = vpop.f32.mrb[0].mxu0
      %v2176 = vadd.f32 0.0, %v2175
      %v2177 = vpop.f32.mrb[0].mxu0
      %2178 = vmatprep.mubr.bf16.mxu0 0
      %2179 = vmatmul.mubr.bf16.gmra.mrb[0].mxu0 %v1414
      %v2180 = vpop.f32.mrb[0].mxu0
      %v2181 = vadd.f32 0.0, %v2180
      %v2182 = vpop.f32.mrb[0].mxu0
      %v2183 = vpop.f32.mrb[0].mxu0
      %v2184 = vadd.f32 0.0, %v2183
      %v2185 = vpop.f32.mrb[0].mxu0
      %2186 = vmatprep.mubr.bf16.mxu0 0
      %2187 = vmatmul.mubr.bf16.gmra.mrb[0].mxu0 %v1417
      %v2188 = vpop.f32.mrb[0].mxu0
      %v2189 = vadd.f32 0.0, %v2188
      %v2190 = vpop.f32.mrb[0].mxu0
      %v2191 = vpop.f32.mrb[0].mxu0
      %v2192 = vadd.f32 0.0, %v2191
      %v2193 = vpop.f32.mrb[0].mxu0
      %2194 = vmatprep.mubr.bf16.mxu0 0
      %2195 = vmatmul.mubr.bf16.gmra.mrb[0].mxu0 %v1420
      %v2196 = vpop.f32.mrb[0].mxu0
      %v2197 = vadd.f32 0.0, %v2196
      %v2198 = vpop.f32.mrb[0].mxu0
      %v2199 = vpop.f32.mrb[0].mxu0
      %v2200 = vadd.f32 0.0, %v2199
      %v2201 = vpop.f32.mrb[0].mxu0
      %2202 = vmatprep.mubr.bf16.mxu0 0
      %2203 = vmatmul.mubr.bf16.gmra.mrb[0].mxu0 %v1423
      %v2204 = vpop.f32.mrb[0].mxu0
      %v2205 = vadd.f32 0.0, %v2204
      %v2206 = vpop.f32.mrb[0].mxu0
      %v2207 = vpop.f32.mrb[0].mxu0
      %v2208 = vadd.f32 0.0, %v2207
      %v2209 = vpop.f32.mrb[0].mxu0
      %2210 = vmatprep.mubr.bf16.mxu0 0
      %2211 = vmatmul.mubr.bf16.gmra.mrb[0].mxu0 %v1426
      %v2212 = vpop.f32.mrb[0].mxu0
      %v2213 = vadd.f32 0.0, %v2212
      %v2214 = vpop.f32.mrb[0].mxu0
      %v2215 = vpop.f32.mrb[0].mxu0
      %v2216 = vadd.f32 0.0, %v2215
      %v2217 = vpop.f32.mrb[0].mxu0
      %2218 = vmatprep.mubr.bf16.mxu0 0
      %2219 = vmatmul.mubr.bf16.gmra.mrb[0].mxu0 %v1429
      %v2220 = vpop.f32.mrb[0].mxu0
      %v2221 = vadd.f32 0.0, %v2220
      %v2222 = vpop.f32.mrb[0].mxu0
      %v2223 = vpop.f32.mrb[0].mxu0
      %v2224 = vadd.f32 0.0, %v2223
      %v2225 = vpop.f32.mrb[0].mxu0
      %2226 = vmatprep.mubr.bf16.mxu0 0
      %2227 = vmatmul.mubr.bf16.gmra.mrb[0].mxu0 %v2069
      %v2228 = vpop.f32.mrb[0].mxu0
      %v2229 = vadd.f32 0.0, %v2228
      %v2230 = vpop.f32.mrb[0].mxu0
      %v2231 = vpop.f32.mrb[0].mxu0
      %v2232 = vadd.f32 0.0, %v2231
      %v2233 = vpop.f32.mrb[0].mxu0
      %2234 = vdwg.mxu0
      %v2235 = vadd.f32 %v2025, %v2109
      %v2236 = vadd.f32 %v2026, %v2112
      %v2237 = vadd.f32 %v2027, %v2117
      %v2238 = vadd.f32 %v2028, %v2120
      %v2239 = vadd.f32 %v2029, %v2125
      %v2240 = vadd.f32 %v2030, %v2128
      %v2241 = vadd.f32 %v2031, %v2133
      %v2242 = vadd.f32 %v2032, %v2136
      %v2243 = vadd.f32 %v2033, %v2141
      %v2244 = vadd.f32 %v2034, %v2144
      %v2245 = vadd.f32 %v2035, %v2149
      %v2246 = vadd.f32 %v2036, %v2152
      %v2247 = vadd.f32 %v2037, %v2157
      %v2248 = vadd.f32 %v2038, %v2160
      %v2249 = vadd.f32 %v2039, %v2165
      %v2250 = vadd.f32 %v2040, %v2168
      %v2251 = vadd.f32 %v2041, %v2173
      %v2252 = vadd.f32 %v2042, %v2176
      %v2253 = vadd.f32 %v2043, %v2181
      %v2254 = vadd.f32 %v2044, %v2184
      %v2255 = vadd.f32 %v2045, %v2189
      %v2256 = vadd.f32 %v2046, %v2192
      %v2257 = vadd.f32 %v2047, %v2197
      %v2258 = vadd.f32 %v2048, %v2200
      %v2259 = vadd.f32 %v2049, %v2205
      %v2260 = vadd.f32 %v2050, %v2208
      %v2261 = vadd.f32 %v2051, %v2213
      %v2262 = vadd.f32 %v2052, %v2216
      %v2263 = vadd.f32 %v2053, %v2221
      %v2264 = vadd.f32 %v2054, %v2224
      %v2265 = vadd.f32 %v2055, %v2229
      %v2266 = vadd.f32 %v2056, %v2232
      %v2269 = vunpack.c.l.b16 %v251
      %v2270 = vunpack.c.l.b16 %v252
      %v2271 = vpack.c.b16 %v2270, %v2269
      %v2273 = vsel %vm698, %v2271, 0
      %v2276 = vsel %vm747, %v260, 0
      %2278 = vmatprep.subr.bf16.mxu0 0
      %2279 = vmatpush1.bf16.msra.mxu0 %v2276
      %2280 = vmatprep.subr.bf16.mxu0 0
      %2281 = vmatpush1.bf16.msra.mxu0 0
      %2282 = vmatprep.subr.bf16.mxu0 0
      %2283 = vmatpush1.bf16.msra.mxu0 0
      %2284 = vmatprep.subr.bf16.mxu0 0
      %2285 = vmatpush1.bf16.msra.mxu0 0
      %2286 = vmatprep.subr.bf16.mxu0 0
      %2287 = vmatpush1.bf16.msra.mxu0 0
      %2288 = vmatprep.subr.bf16.mxu0 0
      %2289 = vmatpush1.bf16.msra.mxu0 0
      %2290 = vmatprep.subr.bf16.mxu0 0
      %2291 = vmatpush1.bf16.msra.mxu0 0
      %2292 = vmatprep.subr.bf16.mxu0 0
      %2293 = vmatpush1.bf16.msra.mxu0 0
      %2294 = vmatprep.subr.bf16.mxu0 0
      %2295 = vmatpush1.bf16.msra.mxu0 0
      %2296 = vmatprep.subr.bf16.mxu0 0
      %2297 = vmatpush1.bf16.msra.mxu0 0
      %2298 = vmatprep.subr.bf16.mxu0 0
      %2299 = vmatpush1.bf16.msra.mxu0 0
      %2300 = vmatprep.subr.bf16.mxu0 0
      %2301 = vmatpush1.bf16.msra.mxu0 0
      %2302 = vmatprep.subr.bf16.mxu0 0
      %2303 = vmatpush1.bf16.msra.mxu0 0
      %2304 = vmatprep.subr.bf16.mxu0 0
      %2305 = vmatpush1.bf16.msra.mxu0 0
      %2306 = vmatprep.subr.bf16.mxu0 0
      %2307 = vmatpush1.bf16.msra.mxu0 0
      %2308 = vmatprep.subr.bf16.mxu0 0
      %2309 = vmatpush1.bf16.msra.mxu0 0
      %2310 = vmatprep.mubr.bf16.mxu0 0
      %2311 = vmatmul.mubr.bf16.gmra.mrb[0].mxu0 %v999
      %v2312 = vpop.f32.mrb[0].mxu0
      %v2313 = vadd.f32 0.0, %v2312
      %v2314 = vpop.f32.mrb[0].mxu0
      %v2315 = vpop.f32.mrb[0].mxu0
      %v2316 = vadd.f32 0.0, %v2315
      %v2317 = vpop.f32.mrb[0].mxu0
      %2318 = vmatprep.mubr.bf16.mxu0 0
      %2319 = vmatmul.mubr.bf16.gmra.mrb[0].mxu0 %v1002
      %v2320 = vpop.f32.mrb[0].mxu0
      %v2321 = vadd.f32 0.0, %v2320
      %v2322 = vpop.f32.mrb[0].mxu0
      %v2323 = vpop.f32.mrb[0].mxu0
      %v2324 = vadd.f32 0.0, %v2323
      %v2325 = vpop.f32.mrb[0].mxu0
      %2326 = vmatprep.mubr.bf16.mxu0 0
      %2327 = vmatmul.mubr.bf16.gmra.mrb[0].mxu0 %v1005
      %v2328 = vpop.f32.mrb[0].mxu0
      %v2329 = vadd.f32 0.0, %v2328
      %v2330 = vpop.f32.mrb[0].mxu0
      %v2331 = vpop.f32.mrb[0].mxu0
      %v2332 = vadd.f32 0.0, %v2331
      %v2333 = vpop.f32.mrb[0].mxu0
      %2334 = vmatprep.mubr.bf16.mxu0 0
      %2335 = vmatmul.mubr.bf16.gmra.mrb[0].mxu0 %v1008
      %v2336 = vpop.f32.mrb[0].mxu0
      %v2337 = vadd.f32 0.0, %v2336
      %v2338 = vpop.f32.mrb[0].mxu0
      %v2339 = vpop.f32.mrb[0].mxu0
      %v2340 = vadd.f32 0.0, %v2339
      %v2341 = vpop.f32.mrb[0].mxu0
      %2342 = vmatprep.mubr.bf16.mxu0 0
      %2343 = vmatmul.mubr.bf16.gmra.mrb[0].mxu0 %v1011
      %v2344 = vpop.f32.mrb[0].mxu0
      %v2345 = vadd.f32 0.0, %v2344
      %v2346 = vpop.f32.mrb[0].mxu0
      %v2347 = vpop.f32.mrb[0].mxu0
      %v2348 = vadd.f32 0.0, %v2347
      %v2349 = vpop.f32.mrb[0].mxu0
      %2350 = vmatprep.mubr.bf16.mxu0 0
      %2351 = vmatmul.mubr.bf16.gmra.mrb[0].mxu0 %v1014
      %v2352 = vpop.f32.mrb[0].mxu0
      %v2353 = vadd.f32 0.0, %v2352
      %v2354 = vpop.f32.mrb[0].mxu0
      %v2355 = vpop.f32.mrb[0].mxu0
      %v2356 = vadd.f32 0.0, %v2355
      %v2357 = vpop.f32.mrb[0].mxu0
      %2358 = vmatprep.mubr.bf16.mxu0 0
      %2359 = vmatmul.mubr.bf16.gmra.mrb[0].mxu0 %v1017
      %v2360 = vpop.f32.mrb[0].mxu0
      %v2361 = vadd.f32 0.0, %v2360
      %v2362 = vpop.f32.mrb[0].mxu0
      %v2363 = vpop.f32.mrb[0].mxu0
      %v2364 = vadd.f32 0.0, %v2363
      %v2365 = vpop.f32.mrb[0].mxu0
      %2366 = vmatprep.mubr.bf16.mxu0 0
      %2367 = vmatmul.mubr.bf16.gmra.mrb[0].mxu0 %v1020
      %v2368 = vpop.f32.mrb[0].mxu0
      %v2369 = vadd.f32 0.0, %v2368
      %v2370 = vpop.f32.mrb[0].mxu0
      %v2371 = vpop.f32.mrb[0].mxu0
      %v2372 = vadd.f32 0.0, %v2371
      %v2373 = vpop.f32.mrb[0].mxu0
      %2374 = vmatprep.mubr.bf16.mxu0 0
      %2375 = vmatmul.mubr.bf16.gmra.mrb[0].mxu0 %v1023
      %v2376 = vpop.f32.mrb[0].mxu0
      %v2377 = vadd.f32 0.0, %v2376
      %v2378 = vpop.f32.mrb[0].mxu0
      %v2379 = vpop.f32.mrb[0].mxu0
      %v2380 = vadd.f32 0.0, %v2379
      %v2381 = vpop.f32.mrb[0].mxu0
      %2382 = vmatprep.mubr.bf16.mxu0 0
      %2383 = vmatmul.mubr.bf16.gmra.mrb[0].mxu0 %v1026
      %v2384 = vpop.f32.mrb[0].mxu0
      %v2385 = vadd.f32 0.0, %v2384
      %v2386 = vpop.f32.mrb[0].mxu0
      %v2387 = vpop.f32.mrb[0].mxu0
      %v2388 = vadd.f32 0.0, %v2387
      %v2389 = vpop.f32.mrb[0].mxu0
      %2390 = vmatprep.mubr.bf16.mxu0 0
      %2391 = vmatmul.mubr.bf16.gmra.mrb[0].mxu0 %v1029
      %v2392 = vpop.f32.mrb[0].mxu0
      %v2393 = vadd.f32 0.0, %v2392
      %v2394 = vpop.f32.mrb[0].mxu0
      %v2395 = vpop.f32.mrb[0].mxu0
      %v2396 = vadd.f32 0.0, %v2395
      %v2397 = vpop.f32.mrb[0].mxu0
      %2398 = vmatprep.mubr.bf16.mxu0 0
      %2399 = vmatmul.mubr.bf16.gmra.mrb[0].mxu0 %v1032
      %v2400 = vpop.f32.mrb[0].mxu0
      %v2401 = vadd.f32 0.0, %v2400
      %v2402 = vpop.f32.mrb[0].mxu0
      %v2403 = vpop.f32.mrb[0].mxu0
      %v2404 = vadd.f32 0.0, %v2403
      %v2405 = vpop.f32.mrb[0].mxu0
      %2406 = vmatprep.mubr.bf16.mxu0 0
      %2407 = vmatmul.mubr.bf16.gmra.mrb[0].mxu0 %v1035
      %v2408 = vpop.f32.mrb[0].mxu0
      %v2409 = vadd.f32 0.0, %v2408
      %v2410 = vpop.f32.mrb[0].mxu0
      %v2411 = vpop.f32.mrb[0].mxu0
      %v2412 = vadd.f32 0.0, %v2411
      %v2413 = vpop.f32.mrb[0].mxu0
      %2414 = vmatprep.mubr.bf16.mxu0 0
      %2415 = vmatmul.mubr.bf16.gmra.mrb[0].mxu0 %v1038
      %v2416 = vpop.f32.mrb[0].mxu0
      %v2417 = vadd.f32 0.0, %v2416
      %v2418 = vpop.f32.mrb[0].mxu0
      %v2419 = vpop.f32.mrb[0].mxu0
      %v2420 = vadd.f32 0.0, %v2419
      %v2421 = vpop.f32.mrb[0].mxu0
      %2422 = vmatprep.mubr.bf16.mxu0 0
      %2423 = vmatmul.mubr.bf16.gmra.mrb[0].mxu0 %v1633
      %v2424 = vpop.f32.mrb[0].mxu0
      %v2425 = vadd.f32 0.0, %v2424
      %v2426 = vpop.f32.mrb[0].mxu0
      %v2427 = vpop.f32.mrb[0].mxu0
      %v2428 = vadd.f32 0.0, %v2427
      %v2429 = vpop.f32.mrb[0].mxu0
      %2430 = vmatprep.mubr.bf16.mxu0 0
      %2431 = vmatmul.mubr.bf16.gmra.mrb[0].mxu0 %v2273
      %v2432 = vpop.f32.mrb[0].mxu0
      %v2433 = vadd.f32 0.0, %v2432
      %v2434 = vpop.f32.mrb[0].mxu0
      %v2435 = vpop.f32.mrb[0].mxu0
      %v2436 = vadd.f32 0.0, %v2435
      %v2437 = vpop.f32.mrb[0].mxu0
      %2438 = vdwg.mxu0
      %v2439 = vadd.f32 %v2235, %v2313
      %v2440 = vadd.f32 %v2236, %v2316
      %v2441 = vadd.f32 %v2237, %v2321
      %v2442 = vadd.f32 %v2238, %v2324
      %v2443 = vadd.f32 %v2239, %v2329
      %v2444 = vadd.f32 %v2240, %v2332
      %v2445 = vadd.f32 %v2241, %v2337
      %v2446 = vadd.f32 %v2242, %v2340
      %v2447 = vadd.f32 %v2243, %v2345
      %v2448 = vadd.f32 %v2244, %v2348
      %v2449 = vadd.f32 %v2245, %v2353
      %v2450 = vadd.f32 %v2246, %v2356
      %v2451 = vadd.f32 %v2247, %v2361
      %v2452 = vadd.f32 %v2248, %v2364
      %v2453 = vadd.f32 %v2249, %v2369
      %v2454 = vadd.f32 %v2250, %v2372
      %v2455 = vadd.f32 %v2251, %v2377
      %v2456 = vadd.f32 %v2252, %v2380
      %v2457 = vadd.f32 %v2253, %v2385
      %v2458 = vadd.f32 %v2254, %v2388
      %v2459 = vadd.f32 %v2255, %v2393
      %v2460 = vadd.f32 %v2256, %v2396
      %v2461 = vadd.f32 %v2257, %v2401
      %v2462 = vadd.f32 %v2258, %v2404
      %v2463 = vadd.f32 %v2259, %v2409
      %v2464 = vadd.f32 %v2260, %v2412
      %v2465 = vadd.f32 %v2261, %v2417
      %v2466 = vadd.f32 %v2262, %v2420
      %v2467 = vadd.f32 %v2263, %v2425
      %v2468 = vadd.f32 %v2264, %v2428
      %v2469 = vadd.f32 %v2265, %v2433
      %v2470 = vadd.f32 %v2266, %v2436
      %v2472 = vshrl.u32 %v251, 16
      %v2474 = vrot.slane %v2472, 4
      %v2475 = vshll.u32 %v251, 16
      %v2477 = vrot.slane %v2475, 5
      %v2478 = vor.u32 %v2474, %v2477
      %v2479 = vrot.slane %v2478, 4
      %v2481 = vshll.u32 %v252, 16
      %v2483 = vrot.slane %v2481, 5
      %v2484 = vsel %vm265, %v2479, %v2483
      %v2485 = vshrl.u32 %v252, 16
      %v2487 = vrot.slane %v2485, 4
      %v2488 = vor.u32 %v2487, %v2483
      %v2489 = vrot.slane %v2488, 4
      %v2491 = vshll.u32 %v253, 16
      %v2493 = vrot.slane %v2491, 5
      %v2494 = vsel %vm265, %v2489, %v2493
      %v2495 = vunpack.c.l.b16 %v2484
      %v2496 = vunpack.c.l.b16 %v2494
      %v2497 = vpack.c.b16 %v2496, %v2495
      %v2499 = vsel %vm698, %v2497, 0
      %v2502 = vsel %vm747, %v261, 0
      %2504 = vmatprep.subr.bf16.mxu0 0
      %2505 = vmatpush1.bf16.msra.mxu0 %v2502
      %2506 = vmatprep.subr.bf16.mxu0 0
      %2507 = vmatpush1.bf16.msra.mxu0 0
      %2508 = vmatprep.subr.bf16.mxu0 0
      %2509 = vmatpush1.bf16.msra.mxu0 0
      %2510 = vmatprep.subr.bf16.mxu0 0
      %2511 = vmatpush1.bf16.msra.mxu0 0
      %2512 = vmatprep.subr.bf16.mxu0 0
      %2513 = vmatpush1.bf16.msra.mxu0 0
      %2514 = vmatprep.subr.bf16.mxu0 0
      %2515 = vmatpush1.bf16.msra.mxu0 0
      %2516 = vmatprep.subr.bf16.mxu0 0
      %2517 = vmatpush1.bf16.msra.mxu0 0
      %2518 = vmatprep.subr.bf16.mxu0 0
      %2519 = vmatpush1.bf16.msra.mxu0 0
      %2520 = vmatprep.subr.bf16.mxu0 0
      %2521 = vmatpush1.bf16.msra.mxu0 0
      %2522 = vmatprep.subr.bf16.mxu0 0
      %2523 = vmatpush1.bf16.msra.mxu0 0
      %2524 = vmatprep.subr.bf16.mxu0 0
      %2525 = vmatpush1.bf16.msra.mxu0 0
      %2526 = vmatprep.subr.bf16.mxu0 0
      %2527 = vmatpush1.bf16.msra.mxu0 0
      %2528 = vmatprep.subr.bf16.mxu0 0
      %2529 = vmatpush1.bf16.msra.mxu0 0
      %2530 = vmatprep.subr.bf16.mxu0 0
      %2531 = vmatpush1.bf16.msra.mxu0 0
      %2532 = vmatprep.subr.bf16.mxu0 0
      %2533 = vmatpush1.bf16.msra.mxu0 0
      %2534 = vmatprep.subr.bf16.mxu0 0
      %2535 = vmatpush1.bf16.msra.mxu0 0
      %2536 = vmatprep.mubr.bf16.mxu0 0
      %2537 = vmatmul.mubr.bf16.gmra.mrb[0].mxu0 %v706
      %v2538 = vpop.f32.mrb[0].mxu0
      %v2539 = vadd.f32 0.0, %v2538
      %v2540 = vpop.f32.mrb[0].mxu0
      %v2541 = vpop.f32.mrb[0].mxu0
      %v2542 = vadd.f32 0.0, %v2541
      %v2543 = vpop.f32.mrb[0].mxu0
      %2544 = vmatprep.mubr.bf16.mxu0 0
      %2545 = vmatmul.mubr.bf16.gmra.mrb[0].mxu0 %v709
      %v2546 = vpop.f32.mrb[0].mxu0
      %v2547 = vadd.f32 0.0, %v2546
      %v2548 = vpop.f32.mrb[0].mxu0
      %v2549 = vpop.f32.mrb[0].mxu0
      %v2550 = vadd.f32 0.0, %v2549
      %v2551 = vpop.f32.mrb[0].mxu0
      %2552 = vmatprep.mubr.bf16.mxu0 0
      %2553 = vmatmul.mubr.bf16.gmra.mrb[0].mxu0 %v712
      %v2554 = vpop.f32.mrb[0].mxu0
      %v2555 = vadd.f32 0.0, %v2554
      %v2556 = vpop.f32.mrb[0].mxu0
      %v2557 = vpop.f32.mrb[0].mxu0
      %v2558 = vadd.f32 0.0, %v2557
      %v2559 = vpop.f32.mrb[0].mxu0
      %2560 = vmatprep.mubr.bf16.mxu0 0
      %2561 = vmatmul.mubr.bf16.gmra.mrb[0].mxu0 %v715
      %v2562 = vpop.f32.mrb[0].mxu0
      %v2563 = vadd.f32 0.0, %v2562
      %v2564 = vpop.f32.mrb[0].mxu0
      %v2565 = vpop.f32.mrb[0].mxu0
      %v2566 = vadd.f32 0.0, %v2565
      %v2567 = vpop.f32.mrb[0].mxu0
      %2568 = vmatprep.mubr.bf16.mxu0 0
      %2569 = vmatmul.mubr.bf16.gmra.mrb[0].mxu0 %v718
      %v2570 = vpop.f32.mrb[0].mxu0
      %v2571 = vadd.f32 0.0, %v2570
      %v2572 = vpop.f32.mrb[0].mxu0
      %v2573 = vpop.f32.mrb[0].mxu0
      %v2574 = vadd.f32 0.0, %v2573
      %v2575 = vpop.f32.mrb[0].mxu0
      %2576 = vmatprep.mubr.bf16.mxu0 0
      %2577 = vmatmul.mubr.bf16.gmra.mrb[0].mxu0 %v721
      %v2578 = vpop.f32.mrb[0].mxu0
      %v2579 = vadd.f32 0.0, %v2578
      %v2580 = vpop.f32.mrb[0].mxu0
      %v2581 = vpop.f32.mrb[0].mxu0
      %v2582 = vadd.f32 0.0, %v2581
      %v2583 = vpop.f32.mrb[0].mxu0
      %2584 = vmatprep.mubr.bf16.mxu0 0
      %2585 = vmatmul.mubr.bf16.gmra.mrb[0].mxu0 %v724
      %v2586 = vpop.f32.mrb[0].mxu0
      %v2587 = vadd.f32 0.0, %v2586
      %v2588 = vpop.f32.mrb[0].mxu0
      %v2589 = vpop.f32.mrb[0].mxu0
      %v2590 = vadd.f32 0.0, %v2589
      %v2591 = vpop.f32.mrb[0].mxu0
      %2592 = vmatprep.mubr.bf16.mxu0 0
      %2593 = vmatmul.mubr.bf16.gmra.mrb[0].mxu0 %v727
      %v2594 = vpop.f32.mrb[0].mxu0
      %v2595 = vadd.f32 0.0, %v2594
      %v2596 = vpop.f32.mrb[0].mxu0
      %v2597 = vpop.f32.mrb[0].mxu0
      %v2598 = vadd.f32 0.0, %v2597
      %v2599 = vpop.f32.mrb[0].mxu0
      %2600 = vmatprep.mubr.bf16.mxu0 0
      %2601 = vmatmul.mubr.bf16.gmra.mrb[0].mxu0 %v730
      %v2602 = vpop.f32.mrb[0].mxu0
      %v2603 = vadd.f32 0.0, %v2602
      %v2604 = vpop.f32.mrb[0].mxu0
      %v2605 = vpop.f32.mrb[0].mxu0
      %v2606 = vadd.f32 0.0, %v2605
      %v2607 = vpop.f32.mrb[0].mxu0
      %2608 = vmatprep.mubr.bf16.mxu0 0
      %2609 = vmatmul.mubr.bf16.gmra.mrb[0].mxu0 %v733
      %v2610 = vpop.f32.mrb[0].mxu0
      %v2611 = vadd.f32 0.0, %v2610
      %v2612 = vpop.f32.mrb[0].mxu0
      %v2613 = vpop.f32.mrb[0].mxu0
      %v2614 = vadd.f32 0.0, %v2613
      %v2615 = vpop.f32.mrb[0].mxu0
      %2616 = vmatprep.mubr.bf16.mxu0 0
      %2617 = vmatmul.mubr.bf16.gmra.mrb[0].mxu0 %v736
      %v2618 = vpop.f32.mrb[0].mxu0
      %v2619 = vadd.f32 0.0, %v2618
      %v2620 = vpop.f32.mrb[0].mxu0
      %v2621 = vpop.f32.mrb[0].mxu0
      %v2622 = vadd.f32 0.0, %v2621
      %v2623 = vpop.f32.mrb[0].mxu0
      %2624 = vmatprep.mubr.bf16.mxu0 0
      %2625 = vmatmul.mubr.bf16.gmra.mrb[0].mxu0 %v739
      %v2626 = vpop.f32.mrb[0].mxu0
      %v2627 = vadd.f32 0.0, %v2626
      %v2628 = vpop.f32.mrb[0].mxu0
      %v2629 = vpop.f32.mrb[0].mxu0
      %v2630 = vadd.f32 0.0, %v2629
      %v2631 = vpop.f32.mrb[0].mxu0
      %2632 = vmatprep.mubr.bf16.mxu0 0
      %2633 = vmatmul.mubr.bf16.gmra.mrb[0].mxu0 %v742
      %v2634 = vpop.f32.mrb[0].mxu0
      %v2635 = vadd.f32 0.0, %v2634
      %v2636 = vpop.f32.mrb[0].mxu0
      %v2637 = vpop.f32.mrb[0].mxu0
      %v2638 = vadd.f32 0.0, %v2637
      %v2639 = vpop.f32.mrb[0].mxu0
      %2640 = vmatprep.mubr.bf16.mxu0 0
      %2641 = vmatmul.mubr.bf16.gmra.mrb[0].mxu0 %v745
      %v2642 = vpop.f32.mrb[0].mxu0
      %v2643 = vadd.f32 0.0, %v2642
      %v2644 = vpop.f32.mrb[0].mxu0
      %v2645 = vpop.f32.mrb[0].mxu0
      %v2646 = vadd.f32 0.0, %v2645
      %v2647 = vpop.f32.mrb[0].mxu0
      %2648 = vmatprep.mubr.bf16.mxu0 0
      %2649 = vmatmul.mubr.bf16.gmra.mrb[0].mxu0 %v1859
      %v2650 = vpop.f32.mrb[0].mxu0
      %v2651 = vadd.f32 0.0, %v2650
      %v2652 = vpop.f32.mrb[0].mxu0
      %v2653 = vpop.f32.mrb[0].mxu0
      %v2654 = vadd.f32 0.0, %v2653
      %v2655 = vpop.f32.mrb[0].mxu0
      %2656 = vmatprep.mubr.bf16.mxu0 0
      %2657 = vmatmul.mubr.bf16.gmra.mrb[0].mxu0 %v2499
      %v2658 = vpop.f32.mrb[0].mxu0
      %v2659 = vadd.f32 0.0, %v2658
      %v2660 = vpop.f32.mrb[0].mxu0
      %v2661 = vpop.f32.mrb[0].mxu0
      %v2662 = vadd.f32 0.0, %v2661
      %v2663 = vpop.f32.mrb[0].mxu0
      %2664 = vdwg.mxu0
      %v2665 = vadd.f32 %v2439, %v2539
      %v2666 = vadd.f32 %v2440, %v2542
      %v2667 = vadd.f32 %v2441, %v2547
      %v2668 = vadd.f32 %v2442, %v2550
      %v2669 = vadd.f32 %v2443, %v2555
      %v2670 = vadd.f32 %v2444, %v2558
      %v2671 = vadd.f32 %v2445, %v2563
      %v2672 = vadd.f32 %v2446, %v2566
      %v2673 = vadd.f32 %v2447, %v2571
      %v2674 = vadd.f32 %v2448, %v2574
      %v2675 = vadd.f32 %v2449, %v2579
      %v2676 = vadd.f32 %v2450, %v2582
      %v2677 = vadd.f32 %v2451, %v2587
      %v2678 = vadd.f32 %v2452, %v2590
      %v2679 = vadd.f32 %v2453, %v2595
      %v2680 = vadd.f32 %v2454, %v2598
      %v2681 = vadd.f32 %v2455, %v2603
      %v2682 = vadd.f32 %v2456, %v2606
      %v2683 = vadd.f32 %v2457, %v2611
      %v2684 = vadd.f32 %v2458, %v2614
      %v2685 = vadd.f32 %v2459, %v2619
      %v2686 = vadd.f32 %v2460, %v2622
      %v2687 = vadd.f32 %v2461, %v2627
      %v2688 = vadd.f32 %v2462, %v2630
      %v2689 = vadd.f32 %v2463, %v2635
      %v2690 = vadd.f32 %v2464, %v2638
      %v2691 = vadd.f32 %v2465, %v2643
      %v2692 = vadd.f32 %v2466, %v2646
      %v2693 = vadd.f32 %v2467, %v2651
      %v2694 = vadd.f32 %v2468, %v2654
      %v2695 = vadd.f32 %v2469, %v2659
      %v2696 = vadd.f32 %v2470, %v2662
      %v2698 = vrot.slane %v251, 5
      %v2699 = vrot.slane %v2698, 4
      %v2700 = vrot.slane %v252, 5
      %v2701 = vsel %vm1222, %v2699, %v2700
      %v2702 = vrot.slane %v2700, 4
      %v2703 = vrot.slane %v253, 5
      %v2704 = vsel %vm1222, %v2702, %v2703
      %v2705 = vunpack.c.l.b16 %v2701
      %v2706 = vunpack.c.l.b16 %v2704
      %v2707 = vpack.c.b16 %v2706, %v2705
      %v2709 = vsel %vm698, %v2707, 0
      %v2712 = vsel %vm747, %v262, 0
      %2714 = vmatprep.subr.bf16.mxu0 0
      %2715 = vmatpush1.bf16.msra.mxu0 %v2712
      %2716 = vmatprep.subr.bf16.mxu0 0
      %2717 = vmatpush1.bf16.msra.mxu0 0
      %2718 = vmatprep.subr.bf16.mxu0 0
      %2719 = vmatpush1.bf16.msra.mxu0 0
      %2720 = vmatprep.subr.bf16.mxu0 0
      %2721 = vmatpush1.bf16.msra.mxu0 0
      %2722 = vmatprep.subr.bf16.mxu0 0
      %2723 = vmatpush1.bf16.msra.mxu0 0
      %2724 = vmatprep.subr.bf16.mxu0 0
      %2725 = vmatpush1.bf16.msra.mxu0 0
      %2726 = vmatprep.subr.bf16.mxu0 0
      %2727 = vmatpush1.bf16.msra.mxu0 0
      %2728 = vmatprep.subr.bf16.mxu0 0
      %2729 = vmatpush1.bf16.msra.mxu0 0
      %2730 = vmatprep.subr.bf16.mxu0 0
      %2731 = vmatpush1.bf16.msra.mxu0 0
      %2732 = vmatprep.subr.bf16.mxu0 0
      %2733 = vmatpush1.bf16.msra.mxu0 0
      %2734 = vmatprep.subr.bf16.mxu0 0
      %2735 = vmatpush1.bf16.msra.mxu0 0
      %2736 = vmatprep.subr.bf16.mxu0 0
      %2737 = vmatpush1.bf16.msra.mxu0 0
      %2738 = vmatprep.subr.bf16.mxu0 0
      %2739 = vmatpush1.bf16.msra.mxu0 0
      %2740 = vmatprep.subr.bf16.mxu0 0
      %2741 = vmatpush1.bf16.msra.mxu0 0
      %2742 = vmatprep.subr.bf16.mxu0 0
      %2743 = vmatpush1.bf16.msra.mxu0 0
      %2744 = vmatprep.subr.bf16.mxu0 0
      %2745 = vmatpush1.bf16.msra.mxu0 0
      %2746 = vmatprep.mubr.bf16.mxu0 0
      %2747 = vmatmul.mubr.bf16.gmra.mrb[0].mxu0 %v1390
      %v2748 = vpop.f32.mrb[0].mxu0
      %v2749 = vadd.f32 0.0, %v2748
      %v2750 = vpop.f32.mrb[0].mxu0
      %v2751 = vpop.f32.mrb[0].mxu0
      %v2752 = vadd.f32 0.0, %v2751
      %v2753 = vpop.f32.mrb[0].mxu0
      %2754 = vmatprep.mubr.bf16.mxu0 0
      %2755 = vmatmul.mubr.bf16.gmra.mrb[0].mxu0 %v1393
      %v2756 = vpop.f32.mrb[0].mxu0
      %v2757 = vadd.f32 0.0, %v2756
      %v2758 = vpop.f32.mrb[0].mxu0
      %v2759 = vpop.f32.mrb[0].mxu0
      %v2760 = vadd.f32 0.0, %v2759
      %v2761 = vpop.f32.mrb[0].mxu0
      %2762 = vmatprep.mubr.bf16.mxu0 0
      %2763 = vmatmul.mubr.bf16.gmra.mrb[0].mxu0 %v1396
      %v2764 = vpop.f32.mrb[0].mxu0
      %v2765 = vadd.f32 0.0, %v2764
      %v2766 = vpop.f32.mrb[0].mxu0
      %v2767 = vpop.f32.mrb[0].mxu0
      %v2768 = vadd.f32 0.0, %v2767
      %v2769 = vpop.f32.mrb[0].mxu0
      %2770 = vmatprep.mubr.bf16.mxu0 0
      %2771 = vmatmul.mubr.bf16.gmra.mrb[0].mxu0 %v1399
      %v2772 = vpop.f32.mrb[0].mxu0
      %v2773 = vadd.f32 0.0, %v2772
      %v2774 = vpop.f32.mrb[0].mxu0
      %v2775 = vpop.f32.mrb[0].mxu0
      %v2776 = vadd.f32 0.0, %v2775
      %v2777 = vpop.f32.mrb[0].mxu0
      %2778 = vmatprep.mubr.bf16.mxu0 0
      %2779 = vmatmul.mubr.bf16.gmra.mrb[0].mxu0 %v1402
      %v2780 = vpop.f32.mrb[0].mxu0
      %v2781 = vadd.f32 0.0, %v2780
      %v2782 = vpop.f32.mrb[0].mxu0
      %v2783 = vpop.f32.mrb[0].mxu0
      %v2784 = vadd.f32 0.0, %v2783
      %v2785 = vpop.f32.mrb[0].mxu0
      %2786 = vmatprep.mubr.bf16.mxu0 0
      %2787 = vmatmul.mubr.bf16.gmra.mrb[0].mxu0 %v1405
      %v2788 = vpop.f32.mrb[0].mxu0
      %v2789 = vadd.f32 0.0, %v2788
      %v2790 = vpop.f32.mrb[0].mxu0
      %v2791 = vpop.f32.mrb[0].mxu0
      %v2792 = vadd.f32 0.0, %v2791
      %v2793 = vpop.f32.mrb[0].mxu0
      %2794 = vmatprep.mubr.bf16.mxu0 0
      %2795 = vmatmul.mubr.bf16.gmra.mrb[0].mxu0 %v1408
      %v2796 = vpop.f32.mrb[0].mxu0
      %v2797 = vadd.f32 0.0, %v2796
      %v2798 = vpop.f32.mrb[0].mxu0
      %v2799 = vpop.f32.mrb[0].mxu0
      %v2800 = vadd.f32 0.0, %v2799
      %v2801 = vpop.f32.mrb[0].mxu0
      %2802 = vmatprep.mubr.bf16.mxu0 0
      %2803 = vmatmul.mubr.bf16.gmra.mrb[0].mxu0 %v1411
      %v2804 = vpop.f32.mrb[0].mxu0
      %v2805 = vadd.f32 0.0, %v2804
      %v2806 = vpop.f32.mrb[0].mxu0
      %v2807 = vpop.f32.mrb[0].mxu0
      %v2808 = vadd.f32 0.0, %v2807
      %v2809 = vpop.f32.mrb[0].mxu0
      %2810 = vmatprep.mubr.bf16.mxu0 0
      %2811 = vmatmul.mubr.bf16.gmra.mrb[0].mxu0 %v1414
      %v2812 = vpop.f32.mrb[0].mxu0
      %v2813 = vadd.f32 0.0, %v2812
      %v2814 = vpop.f32.mrb[0].mxu0
      %v2815 = vpop.f32.mrb[0].mxu0
      %v2816 = vadd.f32 0.0, %v2815
      %v2817 = vpop.f32.mrb[0].mxu0
      %2818 = vmatprep.mubr.bf16.mxu0 0
      %2819 = vmatmul.mubr.bf16.gmra.mrb[0].mxu0 %v1417
      %v2820 = vpop.f32.mrb[0].mxu0
      %v2821 = vadd.f32 0.0, %v2820
      %v2822 = vpop.f32.mrb[0].mxu0
      %v2823 = vpop.f32.mrb[0].mxu0
      %v2824 = vadd.f32 0.0, %v2823
      %v2825 = vpop.f32.mrb[0].mxu0
      %2826 = vmatprep.mubr.bf16.mxu0 0
      %2827 = vmatmul.mubr.bf16.gmra.mrb[0].mxu0 %v1420
      %v2828 = vpop.f32.mrb[0].mxu0
      %v2829 = vadd.f32 0.0, %v2828
      %v2830 = vpop.f32.mrb[0].mxu0
      %v2831 = vpop.f32.mrb[0].mxu0
      %v2832 = vadd.f32 0.0, %v2831
      %v2833 = vpop.f32.mrb[0].mxu0
      %2834 = vmatprep.mubr.bf16.mxu0 0
      %2835 = vmatmul.mubr.bf16.gmra.mrb[0].mxu0 %v1423
      %v2836 = vpop.f32.mrb[0].mxu0
      %v2837 = vadd.f32 0.0, %v2836
      %v2838 = vpop.f32.mrb[0].mxu0
      %v2839 = vpop.f32.mrb[0].mxu0
      %v2840 = vadd.f32 0.0, %v2839
      %v2841 = vpop.f32.mrb[0].mxu0
      %2842 = vmatprep.mubr.bf16.mxu0 0
      %2843 = vmatmul.mubr.bf16.gmra.mrb[0].mxu0 %v1426
      %v2844 = vpop.f32.mrb[0].mxu0
      %v2845 = vadd.f32 0.0, %v2844
      %v2846 = vpop.f32.mrb[0].mxu0
      %v2847 = vpop.f32.mrb[0].mxu0
      %v2848 = vadd.f32 0.0, %v2847
      %v2849 = vpop.f32.mrb[0].mxu0
      %2850 = vmatprep.mubr.bf16.mxu0 0
      %2851 = vmatmul.mubr.bf16.gmra.mrb[0].mxu0 %v1429
      %v2852 = vpop.f32.mrb[0].mxu0
      %v2853 = vadd.f32 0.0, %v2852
      %v2854 = vpop.f32.mrb[0].mxu0
      %v2855 = vpop.f32.mrb[0].mxu0
      %v2856 = vadd.f32 0.0, %v2855
      %v2857 = vpop.f32.mrb[0].mxu0
      %2858 = vmatprep.mubr.bf16.mxu0 0
      %2859 = vmatmul.mubr.bf16.gmra.mrb[0].mxu0 %v2069
      %v2860 = vpop.f32.mrb[0].mxu0
      %v2861 = vadd.f32 0.0, %v2860
      %v2862 = vpop.f32.mrb[0].mxu0
      %v2863 = vpop.f32.mrb[0].mxu0
      %v2864 = vadd.f32 0.0, %v2863
      %v2865 = vpop.f32.mrb[0].mxu0
      %2866 = vmatprep.mubr.bf16.mxu0 0
      %2867 = vmatmul.mubr.bf16.gmra.mrb[0].mxu0 %v2709
      %v2868 = vpop.f32.mrb[0].mxu0
      %v2869 = vadd.f32 0.0, %v2868
      %v2870 = vpop.f32.mrb[0].mxu0
      %v2871 = vpop.f32.mrb[0].mxu0
      %v2872 = vadd.f32 0.0, %v2871
      %v2873 = vpop.f32.mrb[0].mxu0
      %2874 = vdwg.mxu0
      %v2875 = vadd.f32 %v2665, %v2749
      %v2876 = vadd.f32 %v2666, %v2752
      %v2877 = vadd.f32 %v2667, %v2757
      %v2878 = vadd.f32 %v2668, %v2760
      %v2879 = vadd.f32 %v2669, %v2765
      %v2880 = vadd.f32 %v2670, %v2768
      %v2881 = vadd.f32 %v2671, %v2773
      %v2882 = vadd.f32 %v2672, %v2776
      %v2883 = vadd.f32 %v2673, %v2781
      %v2884 = vadd.f32 %v2674, %v2784
      %v2885 = vadd.f32 %v2675, %v2789
      %v2886 = vadd.f32 %v2676, %v2792
      %v2887 = vadd.f32 %v2677, %v2797
      %v2888 = vadd.f32 %v2678, %v2800
      %v2889 = vadd.f32 %v2679, %v2805
      %v2890 = vadd.f32 %v2680, %v2808
      %v2891 = vadd.f32 %v2681, %v2813
      %v2892 = vadd.f32 %v2682, %v2816
      %v2893 = vadd.f32 %v2683, %v2821
      %v2894 = vadd.f32 %v2684, %v2824
      %v2895 = vadd.f32 %v2685, %v2829
      %v2896 = vadd.f32 %v2686, %v2832
      %v2897 = vadd.f32 %v2687, %v2837
      %v2898 = vadd.f32 %v2688, %v2840
      %v2899 = vadd.f32 %v2689, %v2845
      %v2900 = vadd.f32 %v2690, %v2848
      %v2901 = vadd.f32 %v2691, %v2853
      %v2902 = vadd.f32 %v2692, %v2856
      %v2903 = vadd.f32 %v2693, %v2861
      %v2904 = vadd.f32 %v2694, %v2864
      %v2905 = vadd.f32 %v2695, %v2869
      %v2906 = vadd.f32 %v2696, %v2872
      %v2907 = vld [vmem:[%s2] sm:$0x1]
      %v2909 = vlaneseq
      %v2910 = vshrl.u32 %v2909, 7
      %v2911 = vsub.s32 0, %v2910
      %v2912 = vrot.slane %v2907, %v2911
      %v2914 = vmul.f32 %v2875, %v2912
      %v2915 = vmul.f32 %v2876, %v2912
      %v2916 = vmul.f32 %v2877, %v2912
      %v2917 = vmul.f32 %v2878, %v2912
      %v2918 = vmul.f32 %v2879, %v2912
      %v2919 = vmul.f32 %v2880, %v2912
      %v2920 = vmul.f32 %v2881, %v2912
      %v2921 = vmul.f32 %v2882, %v2912
      %v2922 = vmul.f32 %v2883, %v2912
      %v2923 = vmul.f32 %v2884, %v2912
      %v2924 = vmul.f32 %v2885, %v2912
      %v2925 = vmul.f32 %v2886, %v2912
      %v2926 = vmul.f32 %v2887, %v2912
      %v2927 = vmul.f32 %v2888, %v2912
      %v2928 = vmul.f32 %v2889, %v2912
      %v2929 = vmul.f32 %v2890, %v2912
      %v2930 = vmul.f32 %v2891, %v2912
      %v2931 = vmul.f32 %v2892, %v2912
      %v2932 = vmul.f32 %v2893, %v2912
      %v2933 = vmul.f32 %v2894, %v2912
      %v2934 = vmul.f32 %v2895, %v2912
      %v2935 = vmul.f32 %v2896, %v2912
      %v2936 = vmul.f32 %v2897, %v2912
      %v2937 = vmul.f32 %v2898, %v2912
      %v2938 = vmul.f32 %v2899, %v2912
      %v2939 = vmul.f32 %v2900, %v2912
      %v2940 = vmul.f32 %v2901, %v2912
      %v2941 = vmul.f32 %v2902, %v2912
      %v2942 = vmul.f32 %v2903, %v2912
      %v2943 = vmul.f32 %v2904, %v2912
      %v2944 = vmul.f32 %v2905, %v2912
      %v2945 = vmul.f32 %v2906, %v2912
      %v2946 = vld [vmem:[%s3] sm:$0x1]
      %v2948 = vlaneseq
      %v2949 = vshrl.u32 %v2948, 7
      %v2950 = vsub.s32 0, %v2949
      %v2951 = vrot.slane %v2946, %v2950
      %v2953 = vadd.f32 %v2914, %v2951
      %v2954 = vadd.f32 %v2915, %v2951
      %v2955 = vadd.f32 %v2916, %v2951
      %v2956 = vadd.f32 %v2917, %v2951
      %v2957 = vadd.f32 %v2918, %v2951
      %v2958 = vadd.f32 %v2919, %v2951
      %v2959 = vadd.f32 %v2920, %v2951
      %v2960 = vadd.f32 %v2921, %v2951
      %v2961 = vadd.f32 %v2922, %v2951
      %v2962 = vadd.f32 %v2923, %v2951
      %v2963 = vadd.f32 %v2924, %v2951
      %v2964 = vadd.f32 %v2925, %v2951
      %v2965 = vadd.f32 %v2926, %v2951
      %v2966 = vadd.f32 %v2927, %v2951
      %v2967 = vadd.f32 %v2928, %v2951
      %v2968 = vadd.f32 %v2929, %v2951
      %v2969 = vadd.f32 %v2930, %v2951
      %v2970 = vadd.f32 %v2931, %v2951
      %v2971 = vadd.f32 %v2932, %v2951
      %v2972 = vadd.f32 %v2933, %v2951
      %v2973 = vadd.f32 %v2934, %v2951
      %v2974 = vadd.f32 %v2935, %v2951
      %v2975 = vadd.f32 %v2936, %v2951
      %v2976 = vadd.f32 %v2937, %v2951
      %v2977 = vadd.f32 %v2938, %v2951
      %v2978 = vadd.f32 %v2939, %v2951
      %v2979 = vadd.f32 %v2940, %v2951
      %v2980 = vadd.f32 %v2941, %v2951
      %v2981 = vadd.f32 %v2942, %v2951
      %v2982 = vadd.f32 %v2943, %v2951
      %v2983 = vadd.f32 %v2944, %v2951
      %v2984 = vadd.f32 %v2945, %v2951
      %v2985 = vmax.f32 %v2953, 0.0
      %v2986 = vmax.f32 %v2954, 0.0
      %v2987 = vmax.f32 %v2955, 0.0
      %v2988 = vmax.f32 %v2956, 0.0
      %v2989 = vmax.f32 %v2957, 0.0
      %v2990 = vmax.f32 %v2958, 0.0
      %v2991 = vmax.f32 %v2959, 0.0
      %v2992 = vmax.f32 %v2960, 0.0
      %v2993 = vmax.f32 %v2961, 0.0
      %v2994 = vmax.f32 %v2962, 0.0
      %v2995 = vmax.f32 %v2963, 0.0
      %v2996 = vmax.f32 %v2964, 0.0
      %v2997 = vmax.f32 %v2965, 0.0
      %v2998 = vmax.f32 %v2966, 0.0
      %v2999 = vmax.f32 %v2967, 0.0
      %v3000 = vmax.f32 %v2968, 0.0
      %v3001 = vmax.f32 %v2969, 0.0
      %v3002 = vmax.f32 %v2970, 0.0
      %v3003 = vmax.f32 %v2971, 0.0
      %v3004 = vmax.f32 %v2972, 0.0
      %v3005 = vmax.f32 %v2973, 0.0
      %v3006 = vmax.f32 %v2974, 0.0
      %v3007 = vmax.f32 %v2975, 0.0
      %v3008 = vmax.f32 %v2976, 0.0
      %v3009 = vmax.f32 %v2977, 0.0
      %v3010 = vmax.f32 %v2978, 0.0
      %v3011 = vmax.f32 %v2979, 0.0
      %v3012 = vmax.f32 %v2980, 0.0
      %v3013 = vmax.f32 %v2981, 0.0
      %v3014 = vmax.f32 %v2982, 0.0
      %v3015 = vmax.f32 %v2983, 0.0
      %v3016 = vmax.f32 %v2984, 0.0
      %3017 = vst [vmem:[%s197] sm:$0xff] %v2985
      %3018 = vst [vmem:[%s197 + $0x8] sm:$0xff] %v2986
      %3019 = vst [vmem:[%s197 + $0x10] sm:$0xff] %v2987
      %3020 = vst [vmem:[%s197 + $0x18] sm:$0xff] %v2988
      %3021 = vst [vmem:[%s197 + $0x20] sm:$0xff] %v2989
      %3022 = vst [vmem:[%s197 + $0x28] sm:$0xff] %v2990
      %3023 = vst [vmem:[%s197 + $0x30] sm:$0xff] %v2991
      %3024 = vst [vmem:[%s197 + $0x38] sm:$0xff] %v2992
      %3025 = vst [vmem:[%s197 + $0x40] sm:$0xff] %v2993
      %3026 = vst [vmem:[%s197 + $0x48] sm:$0xff] %v2994
      %3027 = vst [vmem:[%s197 + $0x50] sm:$0xff] %v2995
      %3028 = vst [vmem:[%s197 + $0x58] sm:$0xff] %v2996
      %3029 = vst [vmem:[%s197 + $0x60] sm:$0xff] %v2997
      %3030 = vst [vmem:[%s197 + $0x68] sm:$0xff] %v2998
      %3031 = vst [vmem:[%s197 + $0x70] sm:$0xff] %v2999
      %3032 = vst [vmem:[%s197 + $0x78] sm:$0xff] %v3000
      %3033 = vst [vmem:[%s197 + $0x80] sm:$0xff] %v3001
      %3034 = vst [vmem:[%s197 + $0x88] sm:$0xff] %v3002
      %3035 = vst [vmem:[%s197 + $0x90] sm:$0xff] %v3003
      %3036 = vst [vmem:[%s197 + $0x98] sm:$0xff] %v3004
      %3037 = vst [vmem:[%s197 + $0xa0] sm:$0xff] %v3005
      %3038 = vst [vmem:[%s197 + $0xa8] sm:$0xff] %v3006
      %3039 = vst [vmem:[%s197 + $0xb0] sm:$0xff] %v3007
      %3040 = vst [vmem:[%s197 + $0xb8] sm:$0xff] %v3008
      %3041 = vst [vmem:[%s197 + $0xc0] sm:$0xff] %v3009
      %3042 = vst [vmem:[%s197 + $0xc8] sm:$0xff] %v3010
      %3043 = vst [vmem:[%s197 + $0xd0] sm:$0xff] %v3011
      %3044 = vst [vmem:[%s197 + $0xd8] sm:$0xff] %v3012
      %3045 = vst [vmem:[%s197 + $0xe0] sm:$0xff] %v3013
      %3046 = vst [vmem:[%s197 + $0xe8] sm:$0xff] %v3014
      %3047 = vst [vmem:[%s197 + $0xf0] sm:$0xff] %v3015
      %3048 = vst [vmem:[%s197 + $0xf8] sm:$0xff] %v3016
      %s3049 = smul.u32 32, %s15
      %p3050 = scmp.lt.s32.totalorder %s3049, 63
      %s3051 = scalar_select %p3050, %s3049, 63
      %s3052 = smul.addr %s3051, 8
      %s3053 = scalar_lea.vmem %s4, %s3052
      // Predicated region
      $region37: #{_lambda_.5} parent=35 // pred_check
        %p3054 = pneg %p122
      $region38: #{_lambda_.5} parent=35 // pred_check_branch
        %3056 = sbr.rel (%p3054) target = $region40
      $region39: #{_lambda_.5} parent=35 // pred_region
        %s3057 = smul.u32 32, %s15
      $region40: #{_lambda_.5} parent=35 // pred_fallthru
        _
    $region36: #{_lambda_.5} parent=5 // pred_fallthru
      _
    %p3058 = scmp.le.s32.totalorder 2, %s10
    // Predicated region
    $region41: #{_lambda_.5} parent=5 // pred_check
      %p3059 = pneg %p3058
    $region42: #{_lambda_.5} parent=5 // pred_check_branch
      %3061 = sbr.rel (%p3059) target = $region44
    $region43: #{_lambda_.5} parent=5 // pred_region
      %s3062 = ssub.s32 %s10, 2
      // Predicated region
      $region45: #{_lambda_.5} parent=43 // pred_check
        %p3063 = pneg %p128
      $region46: #{_lambda_.5} parent=43 // pred_check_branch
        %3065 = sbr.rel (%p3063) target = $region48
      $region47: #{_lambda_.5} parent=43 // pred_region
        %s3066 = smul.u32 32, %s16
        %p3067 = scmp.lt.s32.totalorder %s3066, 63
        %s3068 = scalar_select %p3067, %s3066, 63
        %s3069 = smul.addr %s3068, 8
        %s3070 = scalar_lea.vmem %s4, %s3069
      $region48: #{_lambda_.5} parent=43 // pred_fallthru
        _
    $region44: #{_lambda_.5} parent=5 // pred_fallthru
      _
  $region6: #{_lambda_.5} parent=0 // loop_footer
    %s14 = sadd.s32 1, %s10
  $region7: #{_lambda_.5} parent=0 // loop_footer_branch
    %9 = sbr.rel target = $region3
  $region8: #{_lambda_.5} parent=0 // loop_exit
    _

// kernel: _lambda_.6
$region0: #{_lambda_.6}
  #allocation0 [shape = 'u32[]', space=smem, size = 0x4, offset = 0x4, fixed_abs, tag = 'smem constant byte address 0x4 - core index']
  #allocation1 [shape = 'u32[144,128]{1,0:T(1,128)}', space=vmem, size = 0x12000, scoped, tag = 'internal scratch']
  %s0 = inlined_call_operand.vmem [shape: bf16[2,18,18,8], index: 0, kind: input, shape index: {}]
  %s1 = inlined_call_operand.vmem [shape: bf16[9,8,128], index: 1, kind: input, shape index: {}]
  %s2 = inlined_call_operand.vmem [shape: f32[1,128], index: 2, kind: output, shape index: {0}]
  %s3 = inlined_call_operand.vmem [shape: f32[1,128], index: 3, kind: output, shape index: {1}]
  %4 = xla_tuple %s2, %s3
  %s5 = sld [smem:[#allocation0]]
  $region53: #{_lambda_.6} parent=0
    _
  %s7 = ssub.s32 1, %s5
  %s8 = scalar_select 0, %s7, %s5
  loop: start=0, step=1, limit=4
  $region2: #{_lambda_.6} parent=0 // loop_pre_header
    _
  $region3: #{_lambda_.6} parent=0 // loop_header
    %s10 = sphi 0, %s14
    %p11 = scmp.ge.s32.totalorder %s10, 4
    %s20 = sphi 0, %s22
    %s23 = sphi 0, %s20
    %s24 = sphi 0, %s23
    %s40 = sphi 0, %s24
    %s44 = sphi 0, %s44
    %s46 = sphi 0, %s44
    %s47 = sphi 0, %s46
    %s61 = sphi 0, %s47
    %s65 = sphi 0, %s65
    %s67 = sphi 0, %s65
    %s68 = sphi 0, %s67
    %s82 = sphi 0, %s68
    %s86 = sphi 0, %s86
    %s88 = sphi 0, %s86
    %s89 = sphi 0, %s88
    %s103 = sphi 0, %s89
  $region4: #{_lambda_.6} parent=0 // loop_header_branch
    %13 = sbr.rel (%p11) target = $region8
  $region5: #{_lambda_.6} parent=0 // loop_body
    %s15 = ssub.s32 %s10, 1
    %s16 = ssub.s32 %s10, 2
    %s17 = sadd.s32 %s10, 1
    %s18 = ssub.s32 %s10, %s17
    %p19 = scmp.eq.s32.totalorder %s18, 0
    %s21 = sadd.s32 %s20, 1
    %s22 = scalar_select %p19, %s20, %s21
    %p25 = pneg %p19
    %p26 = scmp.eq.s32.totalorder %s10, 1
    %p27 = por %p25, %p26
    %p28 = scmp.ne.s32.totalorder %s20, %s23
    %p29 = scmp.eq.s32.totalorder %s10, 0
    %p30 = por %p28, %p29
    %p31 = scmp.ne.s32.totalorder %s20, %s23
    %p32 = scmp.eq.s32.totalorder %s15, 1
    %p33 = por %p31, %p32
    %p34 = scmp.ne.s32.totalorder %s23, %s24
    %p35 = scmp.eq.s32.totalorder %s15, 0
    %p36 = por %p34, %p35
    %p37 = scmp.ne.s32.totalorder %s23, %s24
    %p38 = scmp.eq.s32.totalorder %s16, 1
    %p39 = por %p37, %p38
    %p41 = scmp.ne.s32.totalorder %s24, %s40
    %p42 = scmp.eq.s32.totalorder %s16, 0
    %p43 = por %p41, %p42
    %s45 = sadd.s32 %s44, 1
    %p48 = scmp.eq.s32.totalorder %s10, 1
    %p49 = scmp.ne.s32.totalorder %s44, %s46
    %p50 = scmp.eq.s32.totalorder %s10, 0
    %p51 = por %p49, %p50
    %p52 = scmp.ne.s32.totalorder %s44, %s46
    %p53 = scmp.eq.s32.totalorder %s15, 1
    %p54 = por %p52, %p53
    %p55 = scmp.ne.s32.totalorder %s46, %s47
    %p56 = scmp.eq.s32.totalorder %s15, 0
    %p57 = por %p55, %p56
    %p58 = scmp.ne.s32.totalorder %s46, %s47
    %p59 = scmp.eq.s32.totalorder %s16, 1
    %p60 = por %p58, %p59
    %p62 = scmp.ne.s32.totalorder %s47, %s61
    %p63 = scmp.eq.s32.totalorder %s16, 0
    %p64 = por %p62, %p63
    %s66 = sadd.s32 %s65, 1
    %p69 = scmp.eq.s32.totalorder %s10, 1
    %p70 = scmp.ne.s32.totalorder %s65, %s67
    %p71 = scmp.eq.s32.totalorder %s10, 0
    %p72 = por %p70, %p71
    %p73 = scmp.ne.s32.totalorder %s65, %s67
    %p74 = scmp.eq.s32.totalorder %s15, 1
    %p75 = por %p73, %p74
    %p76 = scmp.ne.s32.totalorder %s67, %s68
    %p77 = scmp.eq.s32.totalorder %s15, 0
    %p78 = por %p76, %p77
    %p79 = scmp.ne.s32.totalorder %s67, %s68
    %p80 = scmp.eq.s32.totalorder %s16, 1
    %p81 = por %p79, %p80
    %p83 = scmp.ne.s32.totalorder %s68, %s82
    %p84 = scmp.eq.s32.totalorder %s16, 0
    %p85 = por %p83, %p84
    %s87 = sadd.s32 %s86, 1
    %p90 = scmp.eq.s32.totalorder %s10, 1
    %p91 = scmp.ne.s32.totalorder %s86, %s88
    %p92 = scmp.eq.s32.totalorder %s10, 0
    %p93 = por %p91, %p92
    %p94 = scmp.ne.s32.totalorder %s86, %s88
    %p95 = scmp.eq.s32.totalorder %s15, 1
    %p96 = por %p94, %p95
    %p97 = scmp.ne.s32.totalorder %s88, %s89
    %p98 = scmp.eq.s32.totalorder %s15, 0
    %p99 = por %p97, %p98
    %p100 = scmp.ne.s32.totalorder %s88, %s89
    %p101 = scmp.eq.s32.totalorder %s16, 1
    %p102 = por %p100, %p101
    %p104 = scmp.ne.s32.totalorder %s89, %s103
    %p105 = scmp.eq.s32.totalorder %s16, 0
    %p106 = por %p104, %p105
    %p107 = scmp.le.s32.totalorder 1, %s10
    %p108 = scmp.lt.s32.totalorder %s10, 3
    %p109 = pnand %p107, %p108
    %p110 = pneg %p109
    // Predicated region
    $region9: #{_lambda_.6} parent=5 // pred_check
      _
    $region10: #{_lambda_.6} parent=5 // pred_check_branch
      %112 = sbr.rel (%p109) target = $region12
    $region11: #{_lambda_.6} parent=5 // pred_region
      %s113 = ssub.s32 %s10, 1
      // Predicated region
      $region13: #{_lambda_.6} parent=11 // pred_check
        %p114 = pneg %p57
      $region14: #{_lambda_.6} parent=11 // pred_check_branch
        %116 = sbr.rel (%p114) target = $region16
      $region15: #{_lambda_.6} parent=11 // pred_region
        _
      $region16: #{_lambda_.6} parent=11 // pred_fallthru
        _
    $region12: #{_lambda_.6} parent=5 // pred_fallthru
      _
    %p117 = scmp.lt.s32.totalorder %s10, 2
    // Predicated region
    $region17: #{_lambda_.6} parent=5 // pred_check
      %p118 = pneg %p117
    $region18: #{_lambda_.6} parent=5 // pred_check_branch
      %120 = sbr.rel (%p118) target = $region20
    $region19: #{_lambda_.6} parent=5 // pred_region
      // Predicated region
      $region21: #{_lambda_.6} parent=19 // pred_check
        %p121 = pneg %p30
      $region22: #{_lambda_.6} parent=19 // pred_check_branch
        %123 = sbr.rel (%p121) target = $region24
      $region23: #{_lambda_.6} parent=19 // pred_region
        %p124 = scmp.lt.s32.totalorder %s10, 1
        %s125 = scalar_select %p124, %s10, 1
        %s126 = smul.addr %s125, 54
        %s127 = smul.addr %s126, 4
        %s128 = scalar_lea.vmem %s0, %s127
      $region24: #{_lambda_.6} parent=19 // pred_fallthru
        _
    $region20: #{_lambda_.6} parent=5 // pred_fallthru
      _
    %p129 = scmp.le.s32.totalorder 1, %s10
    %p130 = scmp.lt.s32.totalorder %s10, 3
    %p131 = pnand %p129, %p130
    %p132 = pneg %p131
    // Predicated region
    $region25: #{_lambda_.6} parent=5 // pred_check
      _
    $region26: #{_lambda_.6} parent=5 // pred_check_branch
      %134 = sbr.rel (%p131) target = $region28
    $region27: #{_lambda_.6} parent=5 // pred_region
      %s135 = ssub.s32 %s10, 1
      %p136 = scmp.lt.s32.totalorder %s15, 1
      %s137 = scalar_select %p136, %s15, 1
      %s138 = smul.addr %s137, 54
      %s139 = smul.addr %s138, 4
      %s140 = scalar_lea.vmem %s0, %s139
      %p141 = pneg %p36
      %p142 = pneg %p33
      %p143 = pneg %p57
      %p144 = pneg %p54
      %p145 = pneg %p78
      %p146 = pneg %p75
      %p147 = pneg %p99
      %p148 = pneg %p96
      %p149 = scmp.lt.s32.totalorder %s15, 1
      %s150 = scalar_select %p149, %s15, 1
      %s151 = smul.addr %s150, 54
      %s152 = smul.addr %s151, 4
      %s153 = scalar_lea.vmem %s0, %s152
      %p155 = scmp.eq.s32.totalorder %s15, 0
      // Predicated region
      $region29: #{_lambda_.6} parent=27 // pred_check
        %p156 = pneg %p155
      $region30: #{_lambda_.6} parent=27 // pred_check_branch
        %158 = sbr.rel (%p156) target = $region32
      $region31: #{_lambda_.6} parent=27 // pred_region
        %159 = vst [vmem:[%s2] sm:$0x1] 0.0
        %160 = vst [vmem:[%s3] sm:$0x1] 0.0
      $region32: #{_lambda_.6} parent=27 // pred_fallthru
        _
      %v161 = vld [vmem:[%s153] sm:$0xf]
      %v162 = vld [vmem:[%s153 + $0x4] sm:$0xf]
      %v163 = vld [vmem:[%s153 + $0x8] sm:$0x1]
      %v164 = vld [vmem:[%s153 + $0xc] sm:$0xf]
      %v165 = vld [vmem:[%s153 + $0x10] sm:$0xf]
      %v166 = vld [vmem:[%s153 + $0x14] sm:$0x1]
      %v167 = vld [vmem:[%s153 + $0x18] sm:$0xf]
      %v168 = vld [vmem:[%s153 + $0x1c] sm:$0xf]
      %v169 = vld [vmem:[%s153 + $0x20] sm:$0x1]
      %v170 = vld [vmem:[%s153 + $0x24] sm:$0xf]
      %v171 = vld [vmem:[%s153 + $0x28] sm:$0xf]
      %v172 = vld [vmem:[%s153 + $0x2c] sm:$0x1]
      %v173 = vld [vmem:[%s153 + $0x30] sm:$0xf]
      %v174 = vld [vmem:[%s153 + $0x34] sm:$0xf]
      %v175 = vld [vmem:[%s153 + $0x38] sm:$0x1]
      %v176 = vld [vmem:[%s153 + $0x3c] sm:$0xf]
      %v177 = vld [vmem:[%s153 + $0x40] sm:$0xf]
      %v178 = vld [vmem:[%s153 + $0x44] sm:$0x1]
      %v179 = vld [vmem:[%s153 + $0x48] sm:$0xf]
      %v180 = vld [vmem:[%s153 + $0x4c] sm:$0xf]
      %v181 = vld [vmem:[%s153 + $0x50] sm:$0x1]
      %v182 = vld [vmem:[%s153 + $0x54] sm:$0xf]
      %v183 = vld [vmem:[%s153 + $0x58] sm:$0xf]
      %v184 = vld [vmem:[%s153 + $0x5c] sm:$0x1]
      %v185 = vld [vmem:[%s153 + $0x60] sm:$0xf]
      %v186 = vld [vmem:[%s153 + $0x64] sm:$0xf]
      %v187 = vld [vmem:[%s153 + $0x68] sm:$0x1]
      %v188 = vld [vmem:[%s153 + $0x6c] sm:$0xf]
      %v189 = vld [vmem:[%s153 + $0x70] sm:$0xf]
      %v190 = vld [vmem:[%s153 + $0x74] sm:$0x1]
      %v191 = vld [vmem:[%s153 + $0x78] sm:$0xf]
      %v192 = vld [vmem:[%s153 + $0x7c] sm:$0xf]
      %v193 = vld [vmem:[%s153 + $0x80] sm:$0x1]
      %v194 = vld [vmem:[%s153 + $0x84] sm:$0xf]
      %v195 = vld [vmem:[%s153 + $0x88] sm:$0xf]
      %v196 = vld [vmem:[%s153 + $0x8c] sm:$0x1]
      %v197 = vld [vmem:[%s153 + $0x90] sm:$0xf]
      %v198 = vld [vmem:[%s153 + $0x94] sm:$0xf]
      %v199 = vld [vmem:[%s153 + $0x98] sm:$0x1]
      %v200 = vld [vmem:[%s153 + $0x9c] sm:$0xf]
      %v201 = vld [vmem:[%s153 + $0xa0] sm:$0xf]
      %v202 = vld [vmem:[%s153 + $0xa4] sm:$0x1]
      %v203 = vld [vmem:[%s153 + $0xa8] sm:$0xf]
      %v204 = vld [vmem:[%s153 + $0xac] sm:$0xf]
      %v205 = vld [vmem:[%s153 + $0xb0] sm:$0x1]
      %v206 = vld [vmem:[%s153 + $0xb4] sm:$0xf]
      %v207 = vld [vmem:[%s153 + $0xb8] sm:$0xf]
      %v208 = vld [vmem:[%s153 + $0xbc] sm:$0x1]
      %v209 = vld [vmem:[%s153 + $0xc0] sm:$0xf]
      %v210 = vld [vmem:[%s153 + $0xc4] sm:$0xf]
      %v211 = vld [vmem:[%s153 + $0xc8] sm:$0x1]
      %v212 = vld [vmem:[%s153 + $0xcc] sm:$0xf]
      %v213 = vld [vmem:[%s153 + $0xd0] sm:$0xf]
      %v214 = vld [vmem:[%s153 + $0xd4] sm:$0x1]
      %v215 = vld [vmem:[%s1] sm:$0xf]
      %v216 = vld [vmem:[%s1 + $0x4] sm:$0xf]
      %v217 = vld [vmem:[%s1 + $0x8] sm:$0xf]
      %v218 = vld [vmem:[%s1 + $0xc] sm:$0xf]
      %v219 = vld [vmem:[%s1 + $0x10] sm:$0xf]
      %v220 = vld [vmem:[%s1 + $0x14] sm:$0xf]
      %v221 = vld [vmem:[%s1 + $0x18] sm:$0xf]
      %v222 = vld [vmem:[%s1 + $0x1c] sm:$0xf]
      %v223 = vld [vmem:[%s1 + $0x20] sm:$0xf]
      %vm224 = vsmask.f32 3328
      %vm225 = vsmask.f32 7440
      %vm226 = vmor %vm224, %vm225
      %v228 = vshrl.u32 %v161, 16
      %v230 = vrot.slane %v228, 4
      %v231 = vshll.u32 %v161, 16
      %v233 = vrot.slane %v231, 5
      %v234 = vor.u32 %v230, %v233
      %v235 = vrot.slane %v234, 4
      %v237 = vshll.u32 %v162, 16
      %v239 = vrot.slane %v237, 5
      %v240 = vsel %vm226, %v235, %v239
      %v241 = vshrl.u32 %v162, 16
      %v243 = vrot.slane %v241, 4
      %v244 = vor.u32 %v243, %v239
      %v245 = vrot.slane %v244, 4
      %v247 = vshll.u32 %v163, 16
      %v249 = vrot.slane %v247, 5
      %v250 = vsel %vm226, %v245, %v249
      %v252 = vshrl.u32 %v164, 16
      %v254 = vrot.slane %v252, 4
      %v255 = vshll.u32 %v164, 16
      %v257 = vrot.slane %v255, 5
      %v258 = vor.u32 %v254, %v257
      %v259 = vrot.slane %v258, 4
      %v261 = vshll.u32 %v165, 16
      %v263 = vrot.slane %v261, 5
      %v264 = vsel %vm226, %v259, %v263
      %v265 = vshrl.u32 %v165, 16
      %v267 = vrot.slane %v265, 4
      %v268 = vor.u32 %v267, %v263
      %v269 = vrot.slane %v268, 4
      %v271 = vshll.u32 %v166, 16
      %v273 = vrot.slane %v271, 5
      %v274 = vsel %vm226, %v269, %v273
      %v276 = vshrl.u32 %v167, 16
      %v278 = vrot.slane %v276, 4
      %v279 = vshll.u32 %v167, 16
      %v281 = vrot.slane %v279, 5
      %v282 = vor.u32 %v278, %v281
      %v283 = vrot.slane %v282, 4
      %v285 = vshll.u32 %v168, 16
      %v287 = vrot.slane %v285, 5
      %v288 = vsel %vm226, %v283, %v287
      %v289 = vshrl.u32 %v168, 16
      %v291 = vrot.slane %v289, 4
      %v292 = vor.u32 %v291, %v287
      %v293 = vrot.slane %v292, 4
      %v295 = vshll.u32 %v169, 16
      %v297 = vrot.slane %v295, 5
      %v298 = vsel %vm226, %v293, %v297
      %v300 = vshrl.u32 %v170, 16
      %v302 = vrot.slane %v300, 4
      %v303 = vshll.u32 %v170, 16
      %v305 = vrot.slane %v303, 5
      %v306 = vor.u32 %v302, %v305
      %v307 = vrot.slane %v306, 4
      %v309 = vshll.u32 %v171, 16
      %v311 = vrot.slane %v309, 5
      %v312 = vsel %vm226, %v307, %v311
      %v313 = vshrl.u32 %v171, 16
      %v315 = vrot.slane %v313, 4
      %v316 = vor.u32 %v315, %v311
      %v317 = vrot.slane %v316, 4
      %v319 = vshll.u32 %v172, 16
      %v321 = vrot.slane %v319, 5
      %v322 = vsel %vm226, %v317, %v321
      %v324 = vshrl.u32 %v173, 16
      %v326 = vrot.slane %v324, 4
      %v327 = vshll.u32 %v173, 16
      %v329 = vrot.slane %v327, 5
      %v330 = vor.u32 %v326, %v329
      %v331 = vrot.slane %v330, 4
      %v333 = vshll.u32 %v174, 16
      %v335 = vrot.slane %v333, 5
      %v336 = vsel %vm226, %v331, %v335
      %v337 = vshrl.u32 %v174, 16
      %v339 = vrot.slane %v337, 4
      %v340 = vor.u32 %v339, %v335
      %v341 = vrot.slane %v340, 4
      %v343 = vshll.u32 %v175, 16
      %v345 = vrot.slane %v343, 5
      %v346 = vsel %vm226, %v341, %v345
      %v348 = vshrl.u32 %v176, 16
      %v350 = vrot.slane %v348, 4
      %v351 = vshll.u32 %v176, 16
      %v353 = vrot.slane %v351, 5
      %v354 = vor.u32 %v350, %v353
      %v355 = vrot.slane %v354, 4
      %v357 = vshll.u32 %v177, 16
      %v359 = vrot.slane %v357, 5
      %v360 = vsel %vm226, %v355, %v359
      %v361 = vshrl.u32 %v177, 16
      %v363 = vrot.slane %v361, 4
      %v364 = vor.u32 %v363, %v359
      %v365 = vrot.slane %v364, 4
      %v367 = vshll.u32 %v178, 16
      %v369 = vrot.slane %v367, 5
      %v370 = vsel %vm226, %v365, %v369
      %v372 = vshrl.u32 %v179, 16
      %v374 = vrot.slane %v372, 4
      %v375 = vshll.u32 %v179, 16
      %v377 = vrot.slane %v375, 5
      %v378 = vor.u32 %v374, %v377
      %v379 = vrot.slane %v378, 4
      %v381 = vshll.u32 %v180, 16
      %v383 = vrot.slane %v381, 5
      %v384 = vsel %vm226, %v379, %v383
      %v385 = vshrl.u32 %v180, 16
      %v387 = vrot.slane %v385, 4
      %v388 = vor.u32 %v387, %v383
      %v389 = vrot.slane %v388, 4
      %v391 = vshll.u32 %v181, 16
      %v393 = vrot.slane %v391, 5
      %v394 = vsel %vm226, %v389, %v393
      %v396 = vshrl.u32 %v182, 16
      %v398 = vrot.slane %v396, 4
      %v399 = vshll.u32 %v182, 16
      %v401 = vrot.slane %v399, 5
      %v402 = vor.u32 %v398, %v401
      %v403 = vrot.slane %v402, 4
      %v405 = vshll.u32 %v183, 16
      %v407 = vrot.slane %v405, 5
      %v408 = vsel %vm226, %v403, %v407
      %v409 = vshrl.u32 %v183, 16
      %v411 = vrot.slane %v409, 4
      %v412 = vor.u32 %v411, %v407
      %v413 = vrot.slane %v412, 4
      %v415 = vshll.u32 %v184, 16
      %v417 = vrot.slane %v415, 5
      %v418 = vsel %vm226, %v413, %v417
      %v420 = vshrl.u32 %v185, 16
      %v422 = vrot.slane %v420, 4
      %v423 = vshll.u32 %v185, 16
      %v425 = vrot.slane %v423, 5
      %v426 = vor.u32 %v422, %v425
      %v427 = vrot.slane %v426, 4
      %v429 = vshll.u32 %v186, 16
      %v431 = vrot.slane %v429, 5
      %v432 = vsel %vm226, %v427, %v431
      %v433 = vshrl.u32 %v186, 16
      %v435 = vrot.slane %v433, 4
      %v436 = vor.u32 %v435, %v431
      %v437 = vrot.slane %v436, 4
      %v439 = vshll.u32 %v187, 16
      %v441 = vrot.slane %v439, 5
      %v442 = vsel %vm226, %v437, %v441
      %v444 = vshrl.u32 %v188, 16
      %v446 = vrot.slane %v444, 4
      %v447 = vshll.u32 %v188, 16
      %v449 = vrot.slane %v447, 5
      %v450 = vor.u32 %v446, %v449
      %v451 = vrot.slane %v450, 4
      %v453 = vshll.u32 %v189, 16
      %v455 = vrot.slane %v453, 5
      %v456 = vsel %vm226, %v451, %v455
      %v457 = vshrl.u32 %v189, 16
      %v459 = vrot.slane %v457, 4
      %v460 = vor.u32 %v459, %v455
      %v461 = vrot.slane %v460, 4
      %v463 = vshll.u32 %v190, 16
      %v465 = vrot.slane %v463, 5
      %v466 = vsel %vm226, %v461, %v465
      %v468 = vshrl.u32 %v191, 16
      %v470 = vrot.slane %v468, 4
      %v471 = vshll.u32 %v191, 16
      %v473 = vrot.slane %v471, 5
      %v474 = vor.u32 %v470, %v473
      %v475 = vrot.slane %v474, 4
      %v477 = vshll.u32 %v192, 16
      %v479 = vrot.slane %v477, 5
      %v480 = vsel %vm226, %v475, %v479
      %v481 = vshrl.u32 %v192, 16
      %v483 = vrot.slane %v481, 4
      %v484 = vor.u32 %v483, %v479
      %v485 = vrot.slane %v484, 4
      %v487 = vshll.u32 %v193, 16
      %v489 = vrot.slane %v487, 5
      %v490 = vsel %vm226, %v485, %v489
      %v492 = vshrl.u32 %v194, 16
      %v494 = vrot.slane %v492, 4
      %v495 = vshll.u32 %v194, 16
      %v497 = vrot.slane %v495, 5
      %v498 = vor.u32 %v494, %v497
      %v499 = vrot.slane %v498, 4
      %v501 = vshll.u32 %v195, 16
      %v503 = vrot.slane %v501, 5
      %v504 = vsel %vm226, %v499, %v503
      %v505 = vshrl.u32 %v195, 16
      %v507 = vrot.slane %v505, 4
      %v508 = vor.u32 %v507, %v503
      %v509 = vrot.slane %v508, 4
      %v511 = vshll.u32 %v196, 16
      %v513 = vrot.slane %v511, 5
      %v514 = vsel %vm226, %v509, %v513
      %v516 = vshrl.u32 %v197, 16
      %v518 = vrot.slane %v516, 4
      %v519 = vshll.u32 %v197, 16
      %v521 = vrot.slane %v519, 5
      %v522 = vor.u32 %v518, %v521
      %v523 = vrot.slane %v522, 4
      %v525 = vshll.u32 %v198, 16
      %v527 = vrot.slane %v525, 5
      %v528 = vsel %vm226, %v523, %v527
      %v529 = vshrl.u32 %v198, 16
      %v531 = vrot.slane %v529, 4
      %v532 = vor.u32 %v531, %v527
      %v533 = vrot.slane %v532, 4
      %v535 = vshll.u32 %v199, 16
      %v537 = vrot.slane %v535, 5
      %v538 = vsel %vm226, %v533, %v537
      %v540 = vshrl.u32 %v200, 16
      %v542 = vrot.slane %v540, 4
      %v543 = vshll.u32 %v200, 16
      %v545 = vrot.slane %v543, 5
      %v546 = vor.u32 %v542, %v545
      %v547 = vrot.slane %v546, 4
      %v549 = vshll.u32 %v201, 16
      %v551 = vrot.slane %v549, 5
      %v552 = vsel %vm226, %v547, %v551
      %v553 = vshrl.u32 %v201, 16
      %v555 = vrot.slane %v553, 4
      %v556 = vor.u32 %v555, %v551
      %v557 = vrot.slane %v556, 4
      %v559 = vshll.u32 %v202, 16
      %v561 = vrot.slane %v559, 5
      %v562 = vsel %vm226, %v557, %v561
      %v564 = vshrl.u32 %v203, 16
      %v566 = vrot.slane %v564, 4
      %v567 = vshll.u32 %v203, 16
      %v569 = vrot.slane %v567, 5
      %v570 = vor.u32 %v566, %v569
      %v571 = vrot.slane %v570, 4
      %v573 = vshll.u32 %v204, 16
      %v575 = vrot.slane %v573, 5
      %v576 = vsel %vm226, %v571, %v575
      %v577 = vshrl.u32 %v204, 16
      %v579 = vrot.slane %v577, 4
      %v580 = vor.u32 %v579, %v575
      %v581 = vrot.slane %v580, 4
      %v583 = vshll.u32 %v205, 16
      %v585 = vrot.slane %v583, 5
      %v586 = vsel %vm226, %v581, %v585
      %v588 = vshrl.u32 %v206, 16
      %v590 = vrot.slane %v588, 4
      %v591 = vshll.u32 %v206, 16
      %v593 = vrot.slane %v591, 5
      %v594 = vor.u32 %v590, %v593
      %v595 = vrot.slane %v594, 4
      %v597 = vshll.u32 %v207, 16
      %v599 = vrot.slane %v597, 5
      %v600 = vsel %vm226, %v595, %v599
      %v601 = vshrl.u32 %v207, 16
      %v603 = vrot.slane %v601, 4
      %v604 = vor.u32 %v603, %v599
      %v605 = vrot.slane %v604, 4
      %v607 = vshll.u32 %v208, 16
      %v609 = vrot.slane %v607, 5
      %v610 = vsel %vm226, %v605, %v609
      %v611 = vunpack.c.l.b16 %v240
      %v612 = vunpack.c.l.b16 %v250
      %v613 = vunpack.c.l.b16 %v264
      %v614 = vunpack.c.l.b16 %v274
      %v615 = vunpack.c.l.b16 %v288
      %v616 = vunpack.c.l.b16 %v298
      %v617 = vunpack.c.l.b16 %v312
      %v618 = vunpack.c.l.b16 %v322
      %v619 = vunpack.c.l.b16 %v336
      %v620 = vunpack.c.l.b16 %v346
      %v621 = vunpack.c.l.b16 %v360
      %v622 = vunpack.c.l.b16 %v370
      %v623 = vunpack.c.l.b16 %v384
      %v624 = vunpack.c.l.b16 %v394
      %v625 = vunpack.c.l.b16 %v408
      %v626 = vunpack.c.l.b16 %v418
      %v627 = vunpack.c.l.b16 %v432
      %v628 = vunpack.c.l.b16 %v442
      %v629 = vunpack.c.l.b16 %v456
      %v630 = vunpack.c.l.b16 %v466
      %v631 = vunpack.c.l.b16 %v480
      %v632 = vunpack.c.l.b16 %v490
      %v633 = vunpack.c.l.b16 %v504
      %v634 = vunpack.c.l.b16 %v514
      %v635 = vunpack.c.l.b16 %v528
      %v636 = vunpack.c.l.b16 %v538
      %v637 = vunpack.c.l.b16 %v552
      %v638 = vunpack.c.l.b16 %v562
      %v639 = vunpack.c.l.b16 %v576
      %v640 = vunpack.c.l.b16 %v586
      %v641 = vunpack.c.l.b16 %v600
      %v642 = vunpack.c.l.b16 %v610
      %v643 = vpack.c.b16 %v612, %v611
      %v644 = vpack.c.b16 %v614, %v613
      %v645 = vpack.c.b16 %v616, %v615
      %v646 = vpack.c.b16 %v618, %v617
      %v647 = vpack.c.b16 %v620, %v619
      %v648 = vpack.c.b16 %v622, %v621
      %v649 = vpack.c.b16 %v624, %v623
      %v650 = vpack.c.b16 %v626, %v625
      %v651 = vpack.c.b16 %v628, %v627
      %v652 = vpack.c.b16 %v630, %v629
      %v653 = vpack.c.b16 %v632, %v631
      %v654 = vpack.c.b16 %v634, %v633
      %v655 = vpack.c.b16 %v636, %v635
      %v656 = vpack.c.b16 %v638, %v637
      %v657 = vpack.c.b16 %v640, %v639
      %v658 = vpack.c.b16 %v642, %v641
      %vm659 = vcmask 64512
      %v661 = vsel %vm659, %v643, 0
      %v664 = vsel %vm659, %v644, 0
      %v667 = vsel %vm659, %v645, 0
      %v670 = vsel %vm659, %v646, 0
      %v673 = vsel %vm659, %v647, 0
      %v676 = vsel %vm659, %v648, 0
      %v679 = vsel %vm659, %v649, 0
      %v682 = vsel %vm659, %v650, 0
      %v685 = vsel %vm659, %v651, 0
      %v688 = vsel %vm659, %v652, 0
      %v691 = vsel %vm659, %v653, 0
      %v694 = vsel %vm659, %v654, 0
      %v697 = vsel %vm659, %v655, 0
      %v700 = vsel %vm659, %v656, 0
      %v703 = vsel %vm659, %v657, 0
      %v706 = vsel %vm659, %v658, 0
      %vm708 = vcmask 1043456
      %v710 = vsel %vm708, %v216, 0
      %712 = vmatprep.subr.bf16.mxu0 0
      %713 = vmatpush1.bf16.msra.mxu0 %v710
      %714 = vmatprep.subr.bf16.mxu0 0
      %715 = vmatpush1.bf16.msra.mxu0 0
      %716 = vmatprep.subr.bf16.mxu0 0
      %717 = vmatpush1.bf16.msra.mxu0 0
      %718 = vmatprep.subr.bf16.mxu0 0
      %719 = vmatpush1.bf16.msra.mxu0 0
      %720 = vmatprep.subr.bf16.mxu0 0
      %721 = vmatpush1.bf16.msra.mxu0 0
      %722 = vmatprep.subr.bf16.mxu0 0
      %723 = vmatpush1.bf16.msra.mxu0 0
      %724 = vmatprep.subr.bf16.mxu0 0
      %725 = vmatpush1.bf16.msra.mxu0 0
      %726 = vmatprep.subr.bf16.mxu0 0
      %727 = vmatpush1.bf16.msra.mxu0 0
      %728 = vmatprep.subr.bf16.mxu0 0
      %729 = vmatpush1.bf16.msra.mxu0 0
      %730 = vmatprep.subr.bf16.mxu0 0
      %731 = vmatpush1.bf16.msra.mxu0 0
      %732 = vmatprep.subr.bf16.mxu0 0
      %733 = vmatpush1.bf16.msra.mxu0 0
      %734 = vmatprep.subr.bf16.mxu0 0
      %735 = vmatpush1.bf16.msra.mxu0 0
      %736 = vmatprep.subr.bf16.mxu0 0
      %737 = vmatpush1.bf16.msra.mxu0 0
      %738 = vmatprep.subr.bf16.mxu0 0
      %739 = vmatpush1.bf16.msra.mxu0 0
      %740 = vmatprep.subr.bf16.mxu0 0
      %741 = vmatpush1.bf16.msra.mxu0 0
      %742 = vmatprep.subr.bf16.mxu0 0
      %743 = vmatpush1.bf16.msra.mxu0 0
      %744 = vmatprep.mubr.bf16.mxu0 0
      %745 = vmatmul.mubr.bf16.gmra.mrb[0].mxu0 %v661
      %v746 = vpop.f32.mrb[0].mxu0
      %v747 = vadd.f32 0.0, %v746
      %v748 = vpop.f32.mrb[0].mxu0
      %v749 = vpop.f32.mrb[0].mxu0
      %v750 = vadd.f32 0.0, %v749
      %v751 = vpop.f32.mrb[0].mxu0
      %752 = vmatprep.mubr.bf16.mxu0 0
      %753 = vmatmul.mubr.bf16.gmra.mrb[0].mxu0 %v664
      %v754 = vpop.f32.mrb[0].mxu0
      %v755 = vadd.f32 0.0, %v754
      %v756 = vpop.f32.mrb[0].mxu0
      %v757 = vpop.f32.mrb[0].mxu0
      %v758 = vadd.f32 0.0, %v757
      %v759 = vpop.f32.mrb[0].mxu0
      %760 = vmatprep.mubr.bf16.mxu0 0
      %761 = vmatmul.mubr.bf16.gmra.mrb[0].mxu0 %v667
      %v762 = vpop.f32.mrb[0].mxu0
      %v763 = vadd.f32 0.0, %v762
      %v764 = vpop.f32.mrb[0].mxu0
      %v765 = vpop.f32.mrb[0].mxu0
      %v766 = vadd.f32 0.0, %v765
      %v767 = vpop.f32.mrb[0].mxu0
      %768 = vmatprep.mubr.bf16.mxu0 0
      %769 = vmatmul.mubr.bf16.gmra.mrb[0].mxu0 %v670
      %v770 = vpop.f32.mrb[0].mxu0
      %v771 = vadd.f32 0.0, %v770
      %v772 = vpop.f32.mrb[0].mxu0
      %v773 = vpop.f32.mrb[0].mxu0
      %v774 = vadd.f32 0.0, %v773
      %v775 = vpop.f32.mrb[0].mxu0
      %776 = vmatprep.mubr.bf16.mxu0 0
      %777 = vmatmul.mubr.bf16.gmra.mrb[0].mxu0 %v673
      %v778 = vpop.f32.mrb[0].mxu0
      %v779 = vadd.f32 0.0, %v778
      %v780 = vpop.f32.mrb[0].mxu0
      %v781 = vpop.f32.mrb[0].mxu0
      %v782 = vadd.f32 0.0, %v781
      %v783 = vpop.f32.mrb[0].mxu0
      %784 = vmatprep.mubr.bf16.mxu0 0
      %785 = vmatmul.mubr.bf16.gmra.mrb[0].mxu0 %v676
      %v786 = vpop.f32.mrb[0].mxu0
      %v787 = vadd.f32 0.0, %v786
      %v788 = vpop.f32.mrb[0].mxu0
      %v789 = vpop.f32.mrb[0].mxu0
      %v790 = vadd.f32 0.0, %v789
      %v791 = vpop.f32.mrb[0].mxu0
      %792 = vmatprep.mubr.bf16.mxu0 0
      %793 = vmatmul.mubr.bf16.gmra.mrb[0].mxu0 %v679
      %v794 = vpop.f32.mrb[0].mxu0
      %v795 = vadd.f32 0.0, %v794
      %v796 = vpop.f32.mrb[0].mxu0
      %v797 = vpop.f32.mrb[0].mxu0
      %v798 = vadd.f32 0.0, %v797
      %v799 = vpop.f32.mrb[0].mxu0
      %800 = vmatprep.mubr.bf16.mxu0 0
      %801 = vmatmul.mubr.bf16.gmra.mrb[0].mxu0 %v682
      %v802 = vpop.f32.mrb[0].mxu0
      %v803 = vadd.f32 0.0, %v802
      %v804 = vpop.f32.mrb[0].mxu0
      %v805 = vpop.f32.mrb[0].mxu0
      %v806 = vadd.f32 0.0, %v805
      %v807 = vpop.f32.mrb[0].mxu0
      %808 = vmatprep.mubr.bf16.mxu0 0
      %809 = vmatmul.mubr.bf16.gmra.mrb[0].mxu0 %v685
      %v810 = vpop.f32.mrb[0].mxu0
      %v811 = vadd.f32 0.0, %v810
      %v812 = vpop.f32.mrb[0].mxu0
      %v813 = vpop.f32.mrb[0].mxu0
      %v814 = vadd.f32 0.0, %v813
      %v815 = vpop.f32.mrb[0].mxu0
      %816 = vmatprep.mubr.bf16.mxu0 0
      %817 = vmatmul.mubr.bf16.gmra.mrb[0].mxu0 %v688
      %v818 = vpop.f32.mrb[0].mxu0
      %v819 = vadd.f32 0.0, %v818
      %v820 = vpop.f32.mrb[0].mxu0
      %v821 = vpop.f32.mrb[0].mxu0
      %v822 = vadd.f32 0.0, %v821
      %v823 = vpop.f32.mrb[0].mxu0
      %824 = vmatprep.mubr.bf16.mxu0 0
      %825 = vmatmul.mubr.bf16.gmra.mrb[0].mxu0 %v691
      %v826 = vpop.f32.mrb[0].mxu0
      %v827 = vadd.f32 0.0, %v826
      %v828 = vpop.f32.mrb[0].mxu0
      %v829 = vpop.f32.mrb[0].mxu0
      %v830 = vadd.f32 0.0, %v829
      %v831 = vpop.f32.mrb[0].mxu0
      %832 = vmatprep.mubr.bf16.mxu0 0
      %833 = vmatmul.mubr.bf16.gmra.mrb[0].mxu0 %v694
      %v834 = vpop.f32.mrb[0].mxu0
      %v835 = vadd.f32 0.0, %v834
      %v836 = vpop.f32.mrb[0].mxu0
      %v837 = vpop.f32.mrb[0].mxu0
      %v838 = vadd.f32 0.0, %v837
      %v839 = vpop.f32.mrb[0].mxu0
      %840 = vmatprep.mubr.bf16.mxu0 0
      %841 = vmatmul.mubr.bf16.gmra.mrb[0].mxu0 %v697
      %v842 = vpop.f32.mrb[0].mxu0
      %v843 = vadd.f32 0.0, %v842
      %v844 = vpop.f32.mrb[0].mxu0
      %v845 = vpop.f32.mrb[0].mxu0
      %v846 = vadd.f32 0.0, %v845
      %v847 = vpop.f32.mrb[0].mxu0
      %848 = vmatprep.mubr.bf16.mxu0 0
      %849 = vmatmul.mubr.bf16.gmra.mrb[0].mxu0 %v700
      %v850 = vpop.f32.mrb[0].mxu0
      %v851 = vadd.f32 0.0, %v850
      %v852 = vpop.f32.mrb[0].mxu0
      %v853 = vpop.f32.mrb[0].mxu0
      %v854 = vadd.f32 0.0, %v853
      %v855 = vpop.f32.mrb[0].mxu0
      %856 = vmatprep.mubr.bf16.mxu0 0
      %857 = vmatmul.mubr.bf16.gmra.mrb[0].mxu0 %v703
      %v858 = vpop.f32.mrb[0].mxu0
      %v859 = vadd.f32 0.0, %v858
      %v860 = vpop.f32.mrb[0].mxu0
      %v861 = vpop.f32.mrb[0].mxu0
      %v862 = vadd.f32 0.0, %v861
      %v863 = vpop.f32.mrb[0].mxu0
      %864 = vmatprep.mubr.bf16.mxu0 0
      %865 = vmatmul.mubr.bf16.gmra.mrb[0].mxu0 %v706
      %v866 = vpop.f32.mrb[0].mxu0
      %v867 = vadd.f32 0.0, %v866
      %v868 = vpop.f32.mrb[0].mxu0
      %v869 = vpop.f32.mrb[0].mxu0
      %v870 = vadd.f32 0.0, %v869
      %v871 = vpop.f32.mrb[0].mxu0
      %872 = vdwg.mxu0
      %v905 = vunpack.c.l.b16 %v161
      %v906 = vunpack.c.l.b16 %v162
      %v907 = vunpack.c.l.b16 %v164
      %v908 = vunpack.c.l.b16 %v165
      %v909 = vunpack.c.l.b16 %v167
      %v910 = vunpack.c.l.b16 %v168
      %v911 = vunpack.c.l.b16 %v170
      %v912 = vunpack.c.l.b16 %v171
      %v913 = vunpack.c.l.b16 %v173
      %v914 = vunpack.c.l.b16 %v174
      %v915 = vunpack.c.l.b16 %v176
      %v916 = vunpack.c.l.b16 %v177
      %v917 = vunpack.c.l.b16 %v179
      %v918 = vunpack.c.l.b16 %v180
      %v919 = vunpack.c.l.b16 %v182
      %v920 = vunpack.c.l.b16 %v183
      %v921 = vunpack.c.l.b16 %v185
      %v922 = vunpack.c.l.b16 %v186
      %v923 = vunpack.c.l.b16 %v188
      %v924 = vunpack.c.l.b16 %v189
      %v925 = vunpack.c.l.b16 %v191
      %v926 = vunpack.c.l.b16 %v192
      %v927 = vunpack.c.l.b16 %v194
      %v928 = vunpack.c.l.b16 %v195
      %v929 = vunpack.c.l.b16 %v197
      %v930 = vunpack.c.l.b16 %v198
      %v931 = vunpack.c.l.b16 %v200
      %v932 = vunpack.c.l.b16 %v201
      %v933 = vunpack.c.l.b16 %v203
      %v934 = vunpack.c.l.b16 %v204
      %v935 = vunpack.c.l.b16 %v206
      %v936 = vunpack.c.l.b16 %v207
      %v937 = vpack.c.b16 %v906, %v905
      %v938 = vpack.c.b16 %v908, %v907
      %v939 = vpack.c.b16 %v910, %v909
      %v940 = vpack.c.b16 %v912, %v911
      %v941 = vpack.c.b16 %v914, %v913
      %v942 = vpack.c.b16 %v916, %v915
      %v943 = vpack.c.b16 %v918, %v917
      %v944 = vpack.c.b16 %v920, %v919
      %v945 = vpack.c.b16 %v922, %v921
      %v946 = vpack.c.b16 %v924, %v923
      %v947 = vpack.c.b16 %v926, %v925
      %v948 = vpack.c.b16 %v928, %v927
      %v949 = vpack.c.b16 %v930, %v929
      %v950 = vpack.c.b16 %v932, %v931
      %v951 = vpack.c.b16 %v934, %v933
      %v952 = vpack.c.b16 %v936, %v935
      %v954 = vsel %vm659, %v937, 0
      %v957 = vsel %vm659, %v938, 0
      %v960 = vsel %vm659, %v939, 0
      %v963 = vsel %vm659, %v940, 0
      %v966 = vsel %vm659, %v941, 0
      %v969 = vsel %vm659, %v942, 0
      %v972 = vsel %vm659, %v943, 0
      %v975 = vsel %vm659, %v944, 0
      %v978 = vsel %vm659, %v945, 0
      %v981 = vsel %vm659, %v946, 0
      %v984 = vsel %vm659, %v947, 0
      %v987 = vsel %vm659, %v948, 0
      %v990 = vsel %vm659, %v949, 0
      %v993 = vsel %vm659, %v950, 0
      %v996 = vsel %vm659, %v951, 0
      %v999 = vsel %vm659, %v952, 0
      %v1002 = vsel %vm708, %v215, 0
      %1004 = vmatprep.subr.bf16.mxu0 0
      %1005 = vmatpush1.bf16.msra.mxu0 %v1002
      %1006 = vmatprep.subr.bf16.mxu0 0
      %1007 = vmatpush1.bf16.msra.mxu0 0
      %1008 = vmatprep.subr.bf16.mxu0 0
      %1009 = vmatpush1.bf16.msra.mxu0 0
      %1010 = vmatprep.subr.bf16.mxu0 0
      %1011 = vmatpush1.bf16.msra.mxu0 0
      %1012 = vmatprep.subr.bf16.mxu0 0
      %1013 = vmatpush1.bf16.msra.mxu0 0
      %1014 = vmatprep.subr.bf16.mxu0 0
      %1015 = vmatpush1.bf16.msra.mxu0 0
      %1016 = vmatprep.subr.bf16.mxu0 0
      %1017 = vmatpush1.bf16.msra.mxu0 0
      %1018 = vmatprep.subr.bf16.mxu0 0
      %1019 = vmatpush1.bf16.msra.mxu0 0
      %1020 = vmatprep.subr.bf16.mxu0 0
      %1021 = vmatpush1.bf16.msra.mxu0 0
      %1022 = vmatprep.subr.bf16.mxu0 0
      %1023 = vmatpush1.bf16.msra.mxu0 0
      %1024 = vmatprep.subr.bf16.mxu0 0
      %1025 = vmatpush1.bf16.msra.mxu0 0
      %1026 = vmatprep.subr.bf16.mxu0 0
      %1027 = vmatpush1.bf16.msra.mxu0 0
      %1028 = vmatprep.subr.bf16.mxu0 0
      %1029 = vmatpush1.bf16.msra.mxu0 0
      %1030 = vmatprep.subr.bf16.mxu0 0
      %1031 = vmatpush1.bf16.msra.mxu0 0
      %1032 = vmatprep.subr.bf16.mxu0 0
      %1033 = vmatpush1.bf16.msra.mxu0 0
      %1034 = vmatprep.subr.bf16.mxu0 0
      %1035 = vmatpush1.bf16.msra.mxu0 0
      %1036 = vmatprep.mubr.bf16.mxu0 0
      %1037 = vmatmul.mubr.bf16.gmra.mrb[0].mxu0 %v954
      %v1038 = vpop.f32.mrb[0].mxu0
      %v1039 = vadd.f32 %v747, %v1038
      %v1040 = vpop.f32.mrb[0].mxu0
      %v1041 = vpop.f32.mrb[0].mxu0
      %v1042 = vadd.f32 %v750, %v1041
      %v1043 = vpop.f32.mrb[0].mxu0
      %1044 = vmatprep.mubr.bf16.mxu0 0
      %1045 = vmatmul.mubr.bf16.gmra.mrb[0].mxu0 %v957
      %v1046 = vpop.f32.mrb[0].mxu0
      %v1047 = vadd.f32 %v755, %v1046
      %v1048 = vpop.f32.mrb[0].mxu0
      %v1049 = vpop.f32.mrb[0].mxu0
      %v1050 = vadd.f32 %v758, %v1049
      %v1051 = vpop.f32.mrb[0].mxu0
      %1052 = vmatprep.mubr.bf16.mxu0 0
      %1053 = vmatmul.mubr.bf16.gmra.mrb[0].mxu0 %v960
      %v1054 = vpop.f32.mrb[0].mxu0
      %v1055 = vadd.f32 %v763, %v1054
      %v1056 = vpop.f32.mrb[0].mxu0
      %v1057 = vpop.f32.mrb[0].mxu0
      %v1058 = vadd.f32 %v766, %v1057
      %v1059 = vpop.f32.mrb[0].mxu0
      %1060 = vmatprep.mubr.bf16.mxu0 0
      %1061 = vmatmul.mubr.bf16.gmra.mrb[0].mxu0 %v963
      %v1062 = vpop.f32.mrb[0].mxu0
      %v1063 = vadd.f32 %v771, %v1062
      %v1064 = vpop.f32.mrb[0].mxu0
      %v1065 = vpop.f32.mrb[0].mxu0
      %v1066 = vadd.f32 %v774, %v1065
      %v1067 = vpop.f32.mrb[0].mxu0
      %1068 = vmatprep.mubr.bf16.mxu0 0
      %1069 = vmatmul.mubr.bf16.gmra.mrb[0].mxu0 %v966
      %v1070 = vpop.f32.mrb[0].mxu0
      %v1071 = vadd.f32 %v779, %v1070
      %v1072 = vpop.f32.mrb[0].mxu0
      %v1073 = vpop.f32.mrb[0].mxu0
      %v1074 = vadd.f32 %v782, %v1073
      %v1075 = vpop.f32.mrb[0].mxu0
      %1076 = vmatprep.mubr.bf16.mxu0 0
      %1077 = vmatmul.mubr.bf16.gmra.mrb[0].mxu0 %v969
      %v1078 = vpop.f32.mrb[0].mxu0
      %v1079 = vadd.f32 %v787, %v1078
      %v1080 = vpop.f32.mrb[0].mxu0
      %v1081 = vpop.f32.mrb[0].mxu0
      %v1082 = vadd.f32 %v790, %v1081
      %v1083 = vpop.f32.mrb[0].mxu0
      %1084 = vmatprep.mubr.bf16.mxu0 0
      %1085 = vmatmul.mubr.bf16.gmra.mrb[0].mxu0 %v972
      %v1086 = vpop.f32.mrb[0].mxu0
      %v1087 = vadd.f32 %v795, %v1086
      %v1088 = vpop.f32.mrb[0].mxu0
      %v1089 = vpop.f32.mrb[0].mxu0
      %v1090 = vadd.f32 %v798, %v1089
      %v1091 = vpop.f32.mrb[0].mxu0
      %1092 = vmatprep.mubr.bf16.mxu0 0
      %1093 = vmatmul.mubr.bf16.gmra.mrb[0].mxu0 %v975
      %v1094 = vpop.f32.mrb[0].mxu0
      %v1095 = vadd.f32 %v803, %v1094
      %v1096 = vpop.f32.mrb[0].mxu0
      %v1097 = vpop.f32.mrb[0].mxu0
      %v1098 = vadd.f32 %v806, %v1097
      %v1099 = vpop.f32.mrb[0].mxu0
      %1100 = vmatprep.mubr.bf16.mxu0 0
      %1101 = vmatmul.mubr.bf16.gmra.mrb[0].mxu0 %v978
      %v1102 = vpop.f32.mrb[0].mxu0
      %v1103 = vadd.f32 %v811, %v1102
      %v1104 = vpop.f32.mrb[0].mxu0
      %v1105 = vpop.f32.mrb[0].mxu0
      %v1106 = vadd.f32 %v814, %v1105
      %v1107 = vpop.f32.mrb[0].mxu0
      %1108 = vmatprep.mubr.bf16.mxu0 0
      %1109 = vmatmul.mubr.bf16.gmra.mrb[0].mxu0 %v981
      %v1110 = vpop.f32.mrb[0].mxu0
      %v1111 = vadd.f32 %v819, %v1110
      %v1112 = vpop.f32.mrb[0].mxu0
      %v1113 = vpop.f32.mrb[0].mxu0
      %v1114 = vadd.f32 %v822, %v1113
      %v1115 = vpop.f32.mrb[0].mxu0
      %1116 = vmatprep.mubr.bf16.mxu0 0
      %1117 = vmatmul.mubr.bf16.gmra.mrb[0].mxu0 %v984
      %v1118 = vpop.f32.mrb[0].mxu0
      %v1119 = vadd.f32 %v827, %v1118
      %v1120 = vpop.f32.mrb[0].mxu0
      %v1121 = vpop.f32.mrb[0].mxu0
      %v1122 = vadd.f32 %v830, %v1121
      %v1123 = vpop.f32.mrb[0].mxu0
      %1124 = vmatprep.mubr.bf16.mxu0 0
      %1125 = vmatmul.mubr.bf16.gmra.mrb[0].mxu0 %v987
      %v1126 = vpop.f32.mrb[0].mxu0
      %v1127 = vadd.f32 %v835, %v1126
      %v1128 = vpop.f32.mrb[0].mxu0
      %v1129 = vpop.f32.mrb[0].mxu0
      %v1130 = vadd.f32 %v838, %v1129
      %v1131 = vpop.f32.mrb[0].mxu0
      %1132 = vmatprep.mubr.bf16.mxu0 0
      %1133 = vmatmul.mubr.bf16.gmra.mrb[0].mxu0 %v990
      %v1134 = vpop.f32.mrb[0].mxu0
      %v1135 = vadd.f32 %v843, %v1134
      %v1136 = vpop.f32.mrb[0].mxu0
      %v1137 = vpop.f32.mrb[0].mxu0
      %v1138 = vadd.f32 %v846, %v1137
      %v1139 = vpop.f32.mrb[0].mxu0
      %1140 = vmatprep.mubr.bf16.mxu0 0
      %1141 = vmatmul.mubr.bf16.gmra.mrb[0].mxu0 %v993
      %v1142 = vpop.f32.mrb[0].mxu0
      %v1143 = vadd.f32 %v851, %v1142
      %v1144 = vpop.f32.mrb[0].mxu0
      %v1145 = vpop.f32.mrb[0].mxu0
      %v1146 = vadd.f32 %v854, %v1145
      %v1147 = vpop.f32.mrb[0].mxu0
      %1148 = vmatprep.mubr.bf16.mxu0 0
      %1149 = vmatmul.mubr.bf16.gmra.mrb[0].mxu0 %v996
      %v1150 = vpop.f32.mrb[0].mxu0
      %v1151 = vadd.f32 %v859, %v1150
      %v1152 = vpop.f32.mrb[0].mxu0
      %v1153 = vpop.f32.mrb[0].mxu0
      %v1154 = vadd.f32 %v862, %v1153
      %v1155 = vpop.f32.mrb[0].mxu0
      %1156 = vmatprep.mubr.bf16.mxu0 0
      %1157 = vmatmul.mubr.bf16.gmra.mrb[0].mxu0 %v999
      %v1158 = vpop.f32.mrb[0].mxu0
      %v1159 = vadd.f32 %v867, %v1158
      %v1160 = vpop.f32.mrb[0].mxu0
      %v1161 = vpop.f32.mrb[0].mxu0
      %v1162 = vadd.f32 %v870, %v1161
      %v1163 = vpop.f32.mrb[0].mxu0
      %1164 = vdwg.mxu0
      %vm1181 = vcmask 1042432
      %vm1182 = vcmask 1046532
      %vm1183 = vmor %vm1181, %vm1182
      %v1184 = vrot.slane %v161, 5
      %v1185 = vrot.slane %v1184, 4
      %v1186 = vrot.slane %v162, 5
      %v1187 = vsel %vm1183, %v1185, %v1186
      %v1188 = vrot.slane %v1186, 4
      %v1189 = vrot.slane %v163, 5
      %v1190 = vsel %vm1183, %v1188, %v1189
      %v1191 = vrot.slane %v164, 5
      %v1192 = vrot.slane %v1191, 4
      %v1193 = vrot.slane %v165, 5
      %v1194 = vsel %vm1183, %v1192, %v1193
      %v1195 = vrot.slane %v1193, 4
      %v1196 = vrot.slane %v166, 5
      %v1197 = vsel %vm1183, %v1195, %v1196
      %v1198 = vrot.slane %v167, 5
      %v1199 = vrot.slane %v1198, 4
      %v1200 = vrot.slane %v168, 5
      %v1201 = vsel %vm1183, %v1199, %v1200
      %v1202 = vrot.slane %v1200, 4
      %v1203 = vrot.slane %v169, 5
      %v1204 = vsel %vm1183, %v1202, %v1203
      %v1205 = vrot.slane %v170, 5
      %v1206 = vrot.slane %v1205, 4
      %v1207 = vrot.slane %v171, 5
      %v1208 = vsel %vm1183, %v1206, %v1207
      %v1209 = vrot.slane %v1207, 4
      %v1210 = vrot.slane %v172, 5
      %v1211 = vsel %vm1183, %v1209, %v1210
      %v1212 = vrot.slane %v173, 5
      %v1213 = vrot.slane %v1212, 4
      %v1214 = vrot.slane %v174, 5
      %v1215 = vsel %vm1183, %v1213, %v1214
      %v1216 = vrot.slane %v1214, 4
      %v1217 = vrot.slane %v175, 5
      %v1218 = vsel %vm1183, %v1216, %v1217
      %v1219 = vrot.slane %v176, 5
      %v1220 = vrot.slane %v1219, 4
      %v1221 = vrot.slane %v177, 5
      %v1222 = vsel %vm1183, %v1220, %v1221
      %v1223 = vrot.slane %v1221, 4
      %v1224 = vrot.slane %v178, 5
      %v1225 = vsel %vm1183, %v1223, %v1224
      %v1226 = vrot.slane %v179, 5
      %v1227 = vrot.slane %v1226, 4
      %v1228 = vrot.slane %v180, 5
      %v1229 = vsel %vm1183, %v1227, %v1228
      %v1230 = vrot.slane %v1228, 4
      %v1231 = vrot.slane %v181, 5
      %v1232 = vsel %vm1183, %v1230, %v1231
      %v1233 = vrot.slane %v182, 5
      %v1234 = vrot.slane %v1233, 4
      %v1235 = vrot.slane %v183, 5
      %v1236 = vsel %vm1183, %v1234, %v1235
      %v1237 = vrot.slane %v1235, 4
      %v1238 = vrot.slane %v184, 5
      %v1239 = vsel %vm1183, %v1237, %v1238
      %v1240 = vrot.slane %v185, 5
      %v1241 = vrot.slane %v1240, 4
      %v1242 = vrot.slane %v186, 5
      %v1243 = vsel %vm1183, %v1241, %v1242
      %v1244 = vrot.slane %v1242, 4
      %v1245 = vrot.slane %v187, 5
      %v1246 = vsel %vm1183, %v1244, %v1245
      %v1247 = vrot.slane %v188, 5
      %v1248 = vrot.slane %v1247, 4
      %v1249 = vrot.slane %v189, 5
      %v1250 = vsel %vm1183, %v1248, %v1249
      %v1251 = vrot.slane %v1249, 4
      %v1252 = vrot.slane %v190, 5
      %v1253 = vsel %vm1183, %v1251, %v1252
      %v1254 = vrot.slane %v191, 5
      %v1255 = vrot.slane %v1254, 4
      %v1256 = vrot.slane %v192, 5
      %v1257 = vsel %vm1183, %v1255, %v1256
      %v1258 = vrot.slane %v1256, 4
      %v1259 = vrot.slane %v193, 5
      %v1260 = vsel %vm1183, %v1258, %v1259
      %v1261 = vrot.slane %v194, 5
      %v1262 = vrot.slane %v1261, 4
      %v1263 = vrot.slane %v195, 5
      %v1264 = vsel %vm1183, %v1262, %v1263
      %v1265 = vrot.slane %v1263, 4
      %v1266 = vrot.slane %v196, 5
      %v1267 = vsel %vm1183, %v1265, %v1266
      %v1268 = vrot.slane %v197, 5
      %v1269 = vrot.slane %v1268, 4
      %v1270 = vrot.slane %v198, 5
      %v1271 = vsel %vm1183, %v1269, %v1270
      %v1272 = vrot.slane %v1270, 4
      %v1273 = vrot.slane %v199, 5
      %v1274 = vsel %vm1183, %v1272, %v1273
      %v1275 = vrot.slane %v200, 5
      %v1276 = vrot.slane %v1275, 4
      %v1277 = vrot.slane %v201, 5
      %v1278 = vsel %vm1183, %v1276, %v1277
      %v1279 = vrot.slane %v1277, 4
      %v1280 = vrot.slane %v202, 5
      %v1281 = vsel %vm1183, %v1279, %v1280
      %v1282 = vrot.slane %v203, 5
      %v1283 = vrot.slane %v1282, 4
      %v1284 = vrot.slane %v204, 5
      %v1285 = vsel %vm1183, %v1283, %v1284
      %v1286 = vrot.slane %v1284, 4
      %v1287 = vrot.slane %v205, 5
      %v1288 = vsel %vm1183, %v1286, %v1287
      %v1289 = vrot.slane %v206, 5
      %v1290 = vrot.slane %v1289, 4
      %v1291 = vrot.slane %v207, 5
      %v1292 = vsel %vm1183, %v1290, %v1291
      %v1293 = vrot.slane %v1291, 4
      %v1294 = vrot.slane %v208, 5
      %v1295 = vsel %vm1183, %v1293, %v1294
      %v1296 = vunpack.c.l.b16 %v1187
      %v1297 = vunpack.c.l.b16 %v1190
      %v1298 = vunpack.c.l.b16 %v1194
      %v1299 = vunpack.c.l.b16 %v1197
      %v1300 = vunpack.c.l.b16 %v1201
      %v1301 = vunpack.c.l.b16 %v1204
      %v1302 = vunpack.c.l.b16 %v1208
      %v1303 = vunpack.c.l.b16 %v1211
      %v1304 = vunpack.c.l.b16 %v1215
      %v1305 = vunpack.c.l.b16 %v1218
      %v1306 = vunpack.c.l.b16 %v1222
      %v1307 = vunpack.c.l.b16 %v1225
      %v1308 = vunpack.c.l.b16 %v1229
      %v1309 = vunpack.c.l.b16 %v1232
      %v1310 = vunpack.c.l.b16 %v1236
      %v1311 = vunpack.c.l.b16 %v1239
      %v1312 = vunpack.c.l.b16 %v1243
      %v1313 = vunpack.c.l.b16 %v1246
      %v1314 = vunpack.c.l.b16 %v1250
      %v1315 = vunpack.c.l.b16 %v1253
      %v1316 = vunpack.c.l.b16 %v1257
      %v1317 = vunpack.c.l.b16 %v1260
      %v1318 = vunpack.c.l.b16 %v1264
      %v1319 = vunpack.c.l.b16 %v1267
      %v1320 = vunpack.c.l.b16 %v1271
      %v1321 = vunpack.c.l.b16 %v1274
      %v1322 = vunpack.c.l.b16 %v1278
      %v1323 = vunpack.c.l.b16 %v1281
      %v1324 = vunpack.c.l.b16 %v1285
      %v1325 = vunpack.c.l.b16 %v1288
      %v1326 = vunpack.c.l.b16 %v1292
      %v1327 = vunpack.c.l.b16 %v1295
      %v1328 = vpack.c.b16 %v1297, %v1296
      %v1329 = vpack.c.b16 %v1299, %v1298
      %v1330 = vpack.c.b16 %v1301, %v1300
      %v1331 = vpack.c.b16 %v1303, %v1302
      %v1332 = vpack.c.b16 %v1305, %v1304
      %v1333 = vpack.c.b16 %v1307, %v1306
      %v1334 = vpack.c.b16 %v1309, %v1308
      %v1335 = vpack.c.b16 %v1311, %v1310
      %v1336 = vpack.c.b16 %v1313, %v1312
      %v1337 = vpack.c.b16 %v1315, %v1314
      %v1338 = vpack.c.b16 %v1317, %v1316
      %v1339 = vpack.c.b16 %v1319, %v1318
      %v1340 = vpack.c.b16 %v1321, %v1320
      %v1341 = vpack.c.b16 %v1323, %v1322
      %v1342 = vpack.c.b16 %v1325, %v1324
      %v1343 = vpack.c.b16 %v1327, %v1326
      %v1345 = vsel %vm659, %v1328, 0
      %v1348 = vsel %vm659, %v1329, 0
      %v1351 = vsel %vm659, %v1330, 0
      %v1354 = vsel %vm659, %v1331, 0
      %v1357 = vsel %vm659, %v1332, 0
      %v1360 = vsel %vm659, %v1333, 0
      %v1363 = vsel %vm659, %v1334, 0
      %v1366 = vsel %vm659, %v1335, 0
      %v1369 = vsel %vm659, %v1336, 0
      %v1372 = vsel %vm659, %v1337, 0
      %v1375 = vsel %vm659, %v1338, 0
      %v1378 = vsel %vm659, %v1339, 0
      %v1381 = vsel %vm659, %v1340, 0
      %v1384 = vsel %vm659, %v1341, 0
      %v1387 = vsel %vm659, %v1342, 0
      %v1390 = vsel %vm659, %v1343, 0
      %v1393 = vsel %vm708, %v217, 0
      %1395 = vmatprep.subr.bf16.mxu0 0
      %1396 = vmatpush1.bf16.msra.mxu0 %v1393
      %1397 = vmatprep.subr.bf16.mxu0 0
      %1398 = vmatpush1.bf16.msra.mxu0 0
      %1399 = vmatprep.subr.bf16.mxu0 0
      %1400 = vmatpush1.bf16.msra.mxu0 0
      %1401 = vmatprep.subr.bf16.mxu0 0
      %1402 = vmatpush1.bf16.msra.mxu0 0
      %1403 = vmatprep.subr.bf16.mxu0 0
      %1404 = vmatpush1.bf16.msra.mxu0 0
      %1405 = vmatprep.subr.bf16.mxu0 0
      %1406 = vmatpush1.bf16.msra.mxu0 0
      %1407 = vmatprep.subr.bf16.mxu0 0
      %1408 = vmatpush1.bf16.msra.mxu0 0
      %1409 = vmatprep.subr.bf16.mxu0 0
      %1410 = vmatpush1.bf16.msra.mxu0 0
      %1411 = vmatprep.subr.bf16.mxu0 0
      %1412 = vmatpush1.bf16.msra.mxu0 0
      %1413 = vmatprep.subr.bf16.mxu0 0
      %1414 = vmatpush1.bf16.msra.mxu0 0
      %1415 = vmatprep.subr.bf16.mxu0 0
      %1416 = vmatpush1.bf16.msra.mxu0 0
      %1417 = vmatprep.subr.bf16.mxu0 0
      %1418 = vmatpush1.bf16.msra.mxu0 0
      %1419 = vmatprep.subr.bf16.mxu0 0
      %1420 = vmatpush1.bf16.msra.mxu0 0
      %1421 = vmatprep.subr.bf16.mxu0 0
      %1422 = vmatpush1.bf16.msra.mxu0 0
      %1423 = vmatprep.subr.bf16.mxu0 0
      %1424 = vmatpush1.bf16.msra.mxu0 0
      %1425 = vmatprep.subr.bf16.mxu0 0
      %1426 = vmatpush1.bf16.msra.mxu0 0
      %1427 = vmatprep.mubr.bf16.mxu0 0
      %1428 = vmatmul.mubr.bf16.gmra.mrb[0].mxu0 %v1345
      %v1429 = vpop.f32.mrb[0].mxu0
      %v1430 = vadd.f32 0.0, %v1429
      %v1431 = vpop.f32.mrb[0].mxu0
      %v1432 = vpop.f32.mrb[0].mxu0
      %v1433 = vadd.f32 0.0, %v1432
      %v1434 = vpop.f32.mrb[0].mxu0
      %1435 = vmatprep.mubr.bf16.mxu0 0
      %1436 = vmatmul.mubr.bf16.gmra.mrb[0].mxu0 %v1348
      %v1437 = vpop.f32.mrb[0].mxu0
      %v1438 = vadd.f32 0.0, %v1437
      %v1439 = vpop.f32.mrb[0].mxu0
      %v1440 = vpop.f32.mrb[0].mxu0
      %v1441 = vadd.f32 0.0, %v1440
      %v1442 = vpop.f32.mrb[0].mxu0
      %1443 = vmatprep.mubr.bf16.mxu0 0
      %1444 = vmatmul.mubr.bf16.gmra.mrb[0].mxu0 %v1351
      %v1445 = vpop.f32.mrb[0].mxu0
      %v1446 = vadd.f32 0.0, %v1445
      %v1447 = vpop.f32.mrb[0].mxu0
      %v1448 = vpop.f32.mrb[0].mxu0
      %v1449 = vadd.f32 0.0, %v1448
      %v1450 = vpop.f32.mrb[0].mxu0
      %1451 = vmatprep.mubr.bf16.mxu0 0
      %1452 = vmatmul.mubr.bf16.gmra.mrb[0].mxu0 %v1354
      %v1453 = vpop.f32.mrb[0].mxu0
      %v1454 = vadd.f32 0.0, %v1453
      %v1455 = vpop.f32.mrb[0].mxu0
      %v1456 = vpop.f32.mrb[0].mxu0
      %v1457 = vadd.f32 0.0, %v1456
      %v1458 = vpop.f32.mrb[0].mxu0
      %1459 = vmatprep.mubr.bf16.mxu0 0
      %1460 = vmatmul.mubr.bf16.gmra.mrb[0].mxu0 %v1357
      %v1461 = vpop.f32.mrb[0].mxu0
      %v1462 = vadd.f32 0.0, %v1461
      %v1463 = vpop.f32.mrb[0].mxu0
      %v1464 = vpop.f32.mrb[0].mxu0
      %v1465 = vadd.f32 0.0, %v1464
      %v1466 = vpop.f32.mrb[0].mxu0
      %1467 = vmatprep.mubr.bf16.mxu0 0
      %1468 = vmatmul.mubr.bf16.gmra.mrb[0].mxu0 %v1360
      %v1469 = vpop.f32.mrb[0].mxu0
      %v1470 = vadd.f32 0.0, %v1469
      %v1471 = vpop.f32.mrb[0].mxu0
      %v1472 = vpop.f32.mrb[0].mxu0
      %v1473 = vadd.f32 0.0, %v1472
      %v1474 = vpop.f32.mrb[0].mxu0
      %1475 = vmatprep.mubr.bf16.mxu0 0
      %1476 = vmatmul.mubr.bf16.gmra.mrb[0].mxu0 %v1363
      %v1477 = vpop.f32.mrb[0].mxu0
      %v1478 = vadd.f32 0.0, %v1477
      %v1479 = vpop.f32.mrb[0].mxu0
      %v1480 = vpop.f32.mrb[0].mxu0
      %v1481 = vadd.f32 0.0, %v1480
      %v1482 = vpop.f32.mrb[0].mxu0
      %1483 = vmatprep.mubr.bf16.mxu0 0
      %1484 = vmatmul.mubr.bf16.gmra.mrb[0].mxu0 %v1366
      %v1485 = vpop.f32.mrb[0].mxu0
      %v1486 = vadd.f32 0.0, %v1485
      %v1487 = vpop.f32.mrb[0].mxu0
      %v1488 = vpop.f32.mrb[0].mxu0
      %v1489 = vadd.f32 0.0, %v1488
      %v1490 = vpop.f32.mrb[0].mxu0
      %1491 = vmatprep.mubr.bf16.mxu0 0
      %1492 = vmatmul.mubr.bf16.gmra.mrb[0].mxu0 %v1369
      %v1493 = vpop.f32.mrb[0].mxu0
      %v1494 = vadd.f32 0.0, %v1493
      %v1495 = vpop.f32.mrb[0].mxu0
      %v1496 = vpop.f32.mrb[0].mxu0
      %v1497 = vadd.f32 0.0, %v1496
      %v1498 = vpop.f32.mrb[0].mxu0
      %1499 = vmatprep.mubr.bf16.mxu0 0
      %1500 = vmatmul.mubr.bf16.gmra.mrb[0].mxu0 %v1372
      %v1501 = vpop.f32.mrb[0].mxu0
      %v1502 = vadd.f32 0.0, %v1501
      %v1503 = vpop.f32.mrb[0].mxu0
      %v1504 = vpop.f32.mrb[0].mxu0
      %v1505 = vadd.f32 0.0, %v1504
      %v1506 = vpop.f32.mrb[0].mxu0
      %1507 = vmatprep.mubr.bf16.mxu0 0
      %1508 = vmatmul.mubr.bf16.gmra.mrb[0].mxu0 %v1375
      %v1509 = vpop.f32.mrb[0].mxu0
      %v1510 = vadd.f32 0.0, %v1509
      %v1511 = vpop.f32.mrb[0].mxu0
      %v1512 = vpop.f32.mrb[0].mxu0
      %v1513 = vadd.f32 0.0, %v1512
      %v1514 = vpop.f32.mrb[0].mxu0
      %1515 = vmatprep.mubr.bf16.mxu0 0
      %1516 = vmatmul.mubr.bf16.gmra.mrb[0].mxu0 %v1378
      %v1517 = vpop.f32.mrb[0].mxu0
      %v1518 = vadd.f32 0.0, %v1517
      %v1519 = vpop.f32.mrb[0].mxu0
      %v1520 = vpop.f32.mrb[0].mxu0
      %v1521 = vadd.f32 0.0, %v1520
      %v1522 = vpop.f32.mrb[0].mxu0
      %1523 = vmatprep.mubr.bf16.mxu0 0
      %1524 = vmatmul.mubr.bf16.gmra.mrb[0].mxu0 %v1381
      %v1525 = vpop.f32.mrb[0].mxu0
      %v1526 = vadd.f32 0.0, %v1525
      %v1527 = vpop.f32.mrb[0].mxu0
      %v1528 = vpop.f32.mrb[0].mxu0
      %v1529 = vadd.f32 0.0, %v1528
      %v1530 = vpop.f32.mrb[0].mxu0
      %1531 = vmatprep.mubr.bf16.mxu0 0
      %1532 = vmatmul.mubr.bf16.gmra.mrb[0].mxu0 %v1384
      %v1533 = vpop.f32.mrb[0].mxu0
      %v1534 = vadd.f32 0.0, %v1533
      %v1535 = vpop.f32.mrb[0].mxu0
      %v1536 = vpop.f32.mrb[0].mxu0
      %v1537 = vadd.f32 0.0, %v1536
      %v1538 = vpop.f32.mrb[0].mxu0
      %1539 = vmatprep.mubr.bf16.mxu0 0
      %1540 = vmatmul.mubr.bf16.gmra.mrb[0].mxu0 %v1387
      %v1541 = vpop.f32.mrb[0].mxu0
      %v1542 = vadd.f32 0.0, %v1541
      %v1543 = vpop.f32.mrb[0].mxu0
      %v1544 = vpop.f32.mrb[0].mxu0
      %v1545 = vadd.f32 0.0, %v1544
      %v1546 = vpop.f32.mrb[0].mxu0
      %1547 = vmatprep.mubr.bf16.mxu0 0
      %1548 = vmatmul.mubr.bf16.gmra.mrb[0].mxu0 %v1390
      %v1549 = vpop.f32.mrb[0].mxu0
      %v1550 = vadd.f32 0.0, %v1549
      %v1551 = vpop.f32.mrb[0].mxu0
      %v1552 = vpop.f32.mrb[0].mxu0
      %v1553 = vadd.f32 0.0, %v1552
      %v1554 = vpop.f32.mrb[0].mxu0
      %1555 = vdwg.mxu0
      %v1556 = vadd.f32 %v1039, %v1430
      %v1557 = vadd.f32 %v1042, %v1433
      %v1558 = vadd.f32 %v1047, %v1438
      %v1559 = vadd.f32 %v1050, %v1441
      %v1560 = vadd.f32 %v1055, %v1446
      %v1561 = vadd.f32 %v1058, %v1449
      %v1562 = vadd.f32 %v1063, %v1454
      %v1563 = vadd.f32 %v1066, %v1457
      %v1564 = vadd.f32 %v1071, %v1462
      %v1565 = vadd.f32 %v1074, %v1465
      %v1566 = vadd.f32 %v1079, %v1470
      %v1567 = vadd.f32 %v1082, %v1473
      %v1568 = vadd.f32 %v1087, %v1478
      %v1569 = vadd.f32 %v1090, %v1481
      %v1570 = vadd.f32 %v1095, %v1486
      %v1571 = vadd.f32 %v1098, %v1489
      %v1572 = vadd.f32 %v1103, %v1494
      %v1573 = vadd.f32 %v1106, %v1497
      %v1574 = vadd.f32 %v1111, %v1502
      %v1575 = vadd.f32 %v1114, %v1505
      %v1576 = vadd.f32 %v1119, %v1510
      %v1577 = vadd.f32 %v1122, %v1513
      %v1578 = vadd.f32 %v1127, %v1518
      %v1579 = vadd.f32 %v1130, %v1521
      %v1580 = vadd.f32 %v1135, %v1526
      %v1581 = vadd.f32 %v1138, %v1529
      %v1582 = vadd.f32 %v1143, %v1534
      %v1583 = vadd.f32 %v1146, %v1537
      %v1584 = vadd.f32 %v1151, %v1542
      %v1585 = vadd.f32 %v1154, %v1545
      %v1586 = vadd.f32 %v1159, %v1550
      %v1587 = vadd.f32 %v1162, %v1553
      %v1590 = vunpack.c.l.b16 %v209
      %v1591 = vunpack.c.l.b16 %v210
      %v1592 = vpack.c.b16 %v1591, %v1590
      %v1594 = vsel %vm659, %v1592, 0
      %v1597 = vsel %vm708, %v218, 0
      %1599 = vmatprep.subr.bf16.mxu0 0
      %1600 = vmatpush1.bf16.msra.mxu0 %v1597
      %1601 = vmatprep.subr.bf16.mxu0 0
      %1602 = vmatpush1.bf16.msra.mxu0 0
      %1603 = vmatprep.subr.bf16.mxu0 0
      %1604 = vmatpush1.bf16.msra.mxu0 0
      %1605 = vmatprep.subr.bf16.mxu0 0
      %1606 = vmatpush1.bf16.msra.mxu0 0
      %1607 = vmatprep.subr.bf16.mxu0 0
      %1608 = vmatpush1.bf16.msra.mxu0 0
      %1609 = vmatprep.subr.bf16.mxu0 0
      %1610 = vmatpush1.bf16.msra.mxu0 0
      %1611 = vmatprep.subr.bf16.mxu0 0
      %1612 = vmatpush1.bf16.msra.mxu0 0
      %1613 = vmatprep.subr.bf16.mxu0 0
      %1614 = vmatpush1.bf16.msra.mxu0 0
      %1615 = vmatprep.subr.bf16.mxu0 0
      %1616 = vmatpush1.bf16.msra.mxu0 0
      %1617 = vmatprep.subr.bf16.mxu0 0
      %1618 = vmatpush1.bf16.msra.mxu0 0
      %1619 = vmatprep.subr.bf16.mxu0 0
      %1620 = vmatpush1.bf16.msra.mxu0 0
      %1621 = vmatprep.subr.bf16.mxu0 0
      %1622 = vmatpush1.bf16.msra.mxu0 0
      %1623 = vmatprep.subr.bf16.mxu0 0
      %1624 = vmatpush1.bf16.msra.mxu0 0
      %1625 = vmatprep.subr.bf16.mxu0 0
      %1626 = vmatpush1.bf16.msra.mxu0 0
      %1627 = vmatprep.subr.bf16.mxu0 0
      %1628 = vmatpush1.bf16.msra.mxu0 0
      %1629 = vmatprep.subr.bf16.mxu0 0
      %1630 = vmatpush1.bf16.msra.mxu0 0
      %1631 = vmatprep.mubr.bf16.mxu0 0
      %1632 = vmatmul.mubr.bf16.gmra.mrb[0].mxu0 %v957
      %v1633 = vpop.f32.mrb[0].mxu0
      %v1634 = vadd.f32 0.0, %v1633
      %v1635 = vpop.f32.mrb[0].mxu0
      %v1636 = vpop.f32.mrb[0].mxu0
      %v1637 = vadd.f32 0.0, %v1636
      %v1638 = vpop.f32.mrb[0].mxu0
      %1639 = vmatprep.mubr.bf16.mxu0 0
      %1640 = vmatmul.mubr.bf16.gmra.mrb[0].mxu0 %v960
      %v1641 = vpop.f32.mrb[0].mxu0
      %v1642 = vadd.f32 0.0, %v1641
      %v1643 = vpop.f32.mrb[0].mxu0
      %v1644 = vpop.f32.mrb[0].mxu0
      %v1645 = vadd.f32 0.0, %v1644
      %v1646 = vpop.f32.mrb[0].mxu0
      %1647 = vmatprep.mubr.bf16.mxu0 0
      %1648 = vmatmul.mubr.bf16.gmra.mrb[0].mxu0 %v963
      %v1649 = vpop.f32.mrb[0].mxu0
      %v1650 = vadd.f32 0.0, %v1649
      %v1651 = vpop.f32.mrb[0].mxu0
      %v1652 = vpop.f32.mrb[0].mxu0
      %v1653 = vadd.f32 0.0, %v1652
      %v1654 = vpop.f32.mrb[0].mxu0
      %1655 = vmatprep.mubr.bf16.mxu0 0
      %1656 = vmatmul.mubr.bf16.gmra.mrb[0].mxu0 %v966
      %v1657 = vpop.f32.mrb[0].mxu0
      %v1658 = vadd.f32 0.0, %v1657
      %v1659 = vpop.f32.mrb[0].mxu0
      %v1660 = vpop.f32.mrb[0].mxu0
      %v1661 = vadd.f32 0.0, %v1660
      %v1662 = vpop.f32.mrb[0].mxu0
      %1663 = vmatprep.mubr.bf16.mxu0 0
      %1664 = vmatmul.mubr.bf16.gmra.mrb[0].mxu0 %v969
      %v1665 = vpop.f32.mrb[0].mxu0
      %v1666 = vadd.f32 0.0, %v1665
      %v1667 = vpop.f32.mrb[0].mxu0
      %v1668 = vpop.f32.mrb[0].mxu0
      %v1669 = vadd.f32 0.0, %v1668
      %v1670 = vpop.f32.mrb[0].mxu0
      %1671 = vmatprep.mubr.bf16.mxu0 0
      %1672 = vmatmul.mubr.bf16.gmra.mrb[0].mxu0 %v972
      %v1673 = vpop.f32.mrb[0].mxu0
      %v1674 = vadd.f32 0.0, %v1673
      %v1675 = vpop.f32.mrb[0].mxu0
      %v1676 = vpop.f32.mrb[0].mxu0
      %v1677 = vadd.f32 0.0, %v1676
      %v1678 = vpop.f32.mrb[0].mxu0
      %1679 = vmatprep.mubr.bf16.mxu0 0
      %1680 = vmatmul.mubr.bf16.gmra.mrb[0].mxu0 %v975
      %v1681 = vpop.f32.mrb[0].mxu0
      %v1682 = vadd.f32 0.0, %v1681
      %v1683 = vpop.f32.mrb[0].mxu0
      %v1684 = vpop.f32.mrb[0].mxu0
      %v1685 = vadd.f32 0.0, %v1684
      %v1686 = vpop.f32.mrb[0].mxu0
      %1687 = vmatprep.mubr.bf16.mxu0 0
      %1688 = vmatmul.mubr.bf16.gmra.mrb[0].mxu0 %v978
      %v1689 = vpop.f32.mrb[0].mxu0
      %v1690 = vadd.f32 0.0, %v1689
      %v1691 = vpop.f32.mrb[0].mxu0
      %v1692 = vpop.f32.mrb[0].mxu0
      %v1693 = vadd.f32 0.0, %v1692
      %v1694 = vpop.f32.mrb[0].mxu0
      %1695 = vmatprep.mubr.bf16.mxu0 0
      %1696 = vmatmul.mubr.bf16.gmra.mrb[0].mxu0 %v981
      %v1697 = vpop.f32.mrb[0].mxu0
      %v1698 = vadd.f32 0.0, %v1697
      %v1699 = vpop.f32.mrb[0].mxu0
      %v1700 = vpop.f32.mrb[0].mxu0
      %v1701 = vadd.f32 0.0, %v1700
      %v1702 = vpop.f32.mrb[0].mxu0
      %1703 = vmatprep.mubr.bf16.mxu0 0
      %1704 = vmatmul.mubr.bf16.gmra.mrb[0].mxu0 %v984
      %v1705 = vpop.f32.mrb[0].mxu0
      %v1706 = vadd.f32 0.0, %v1705
      %v1707 = vpop.f32.mrb[0].mxu0
      %v1708 = vpop.f32.mrb[0].mxu0
      %v1709 = vadd.f32 0.0, %v1708
      %v1710 = vpop.f32.mrb[0].mxu0
      %1711 = vmatprep.mubr.bf16.mxu0 0
      %1712 = vmatmul.mubr.bf16.gmra.mrb[0].mxu0 %v987
      %v1713 = vpop.f32.mrb[0].mxu0
      %v1714 = vadd.f32 0.0, %v1713
      %v1715 = vpop.f32.mrb[0].mxu0
      %v1716 = vpop.f32.mrb[0].mxu0
      %v1717 = vadd.f32 0.0, %v1716
      %v1718 = vpop.f32.mrb[0].mxu0
      %1719 = vmatprep.mubr.bf16.mxu0 0
      %1720 = vmatmul.mubr.bf16.gmra.mrb[0].mxu0 %v990
      %v1721 = vpop.f32.mrb[0].mxu0
      %v1722 = vadd.f32 0.0, %v1721
      %v1723 = vpop.f32.mrb[0].mxu0
      %v1724 = vpop.f32.mrb[0].mxu0
      %v1725 = vadd.f32 0.0, %v1724
      %v1726 = vpop.f32.mrb[0].mxu0
      %1727 = vmatprep.mubr.bf16.mxu0 0
      %1728 = vmatmul.mubr.bf16.gmra.mrb[0].mxu0 %v993
      %v1729 = vpop.f32.mrb[0].mxu0
      %v1730 = vadd.f32 0.0, %v1729
      %v1731 = vpop.f32.mrb[0].mxu0
      %v1732 = vpop.f32.mrb[0].mxu0
      %v1733 = vadd.f32 0.0, %v1732
      %v1734 = vpop.f32.mrb[0].mxu0
      %1735 = vmatprep.mubr.bf16.mxu0 0
      %1736 = vmatmul.mubr.bf16.gmra.mrb[0].mxu0 %v996
      %v1737 = vpop.f32.mrb[0].mxu0
      %v1738 = vadd.f32 0.0, %v1737
      %v1739 = vpop.f32.mrb[0].mxu0
      %v1740 = vpop.f32.mrb[0].mxu0
      %v1741 = vadd.f32 0.0, %v1740
      %v1742 = vpop.f32.mrb[0].mxu0
      %1743 = vmatprep.mubr.bf16.mxu0 0
      %1744 = vmatmul.mubr.bf16.gmra.mrb[0].mxu0 %v999
      %v1745 = vpop.f32.mrb[0].mxu0
      %v1746 = vadd.f32 0.0, %v1745
      %v1747 = vpop.f32.mrb[0].mxu0
      %v1748 = vpop.f32.mrb[0].mxu0
      %v1749 = vadd.f32 0.0, %v1748
      %v1750 = vpop.f32.mrb[0].mxu0
      %1751 = vmatprep.mubr.bf16.mxu0 0
      %1752 = vmatmul.mubr.bf16.gmra.mrb[0].mxu0 %v1594
      %v1753 = vpop.f32.mrb[0].mxu0
      %v1754 = vadd.f32 0.0, %v1753
      %v1755 = vpop.f32.mrb[0].mxu0
      %v1756 = vpop.f32.mrb[0].mxu0
      %v1757 = vadd.f32 0.0, %v1756
      %v1758 = vpop.f32.mrb[0].mxu0
      %1759 = vdwg.mxu0
      %v1760 = vadd.f32 %v1556, %v1634
      %v1761 = vadd.f32 %v1557, %v1637
      %v1762 = vadd.f32 %v1558, %v1642
      %v1763 = vadd.f32 %v1559, %v1645
      %v1764 = vadd.f32 %v1560, %v1650
      %v1765 = vadd.f32 %v1561, %v1653
      %v1766 = vadd.f32 %v1562, %v1658
      %v1767 = vadd.f32 %v1563, %v1661
      %v1768 = vadd.f32 %v1564, %v1666
      %v1769 = vadd.f32 %v1565, %v1669
      %v1770 = vadd.f32 %v1566, %v1674
      %v1771 = vadd.f32 %v1567, %v1677
      %v1772 = vadd.f32 %v1568, %v1682
      %v1773 = vadd.f32 %v1569, %v1685
      %v1774 = vadd.f32 %v1570, %v1690
      %v1775 = vadd.f32 %v1571, %v1693
      %v1776 = vadd.f32 %v1572, %v1698
      %v1777 = vadd.f32 %v1573, %v1701
      %v1778 = vadd.f32 %v1574, %v1706
      %v1779 = vadd.f32 %v1575, %v1709
      %v1780 = vadd.f32 %v1576, %v1714
      %v1781 = vadd.f32 %v1577, %v1717
      %v1782 = vadd.f32 %v1578, %v1722
      %v1783 = vadd.f32 %v1579, %v1725
      %v1784 = vadd.f32 %v1580, %v1730
      %v1785 = vadd.f32 %v1581, %v1733
      %v1786 = vadd.f32 %v1582, %v1738
      %v1787 = vadd.f32 %v1583, %v1741
      %v1788 = vadd.f32 %v1584, %v1746
      %v1789 = vadd.f32 %v1585, %v1749
      %v1790 = vadd.f32 %v1586, %v1754
      %v1791 = vadd.f32 %v1587, %v1757
      %v1793 = vshrl.u32 %v209, 16
      %v1795 = vrot.slane %v1793, 4
      %v1796 = vshll.u32 %v209, 16
      %v1798 = vrot.slane %v1796, 5
      %v1799 = vor.u32 %v1795, %v1798
      %v1800 = vrot.slane %v1799, 4
      %v1802 = vshll.u32 %v210, 16
      %v1804 = vrot.slane %v1802, 5
      %v1805 = vsel %vm226, %v1800, %v1804
      %v1806 = vshrl.u32 %v210, 16
      %v1808 = vrot.slane %v1806, 4
      %v1809 = vor.u32 %v1808, %v1804
      %v1810 = vrot.slane %v1809, 4
      %v1812 = vshll.u32 %v211, 16
      %v1814 = vrot.slane %v1812, 5
      %v1815 = vsel %vm226, %v1810, %v1814
      %v1816 = vunpack.c.l.b16 %v1805
      %v1817 = vunpack.c.l.b16 %v1815
      %v1818 = vpack.c.b16 %v1817, %v1816
      %v1820 = vsel %vm659, %v1818, 0
      %v1823 = vsel %vm708, %v219, 0
      %1825 = vmatprep.subr.bf16.mxu0 0
      %1826 = vmatpush1.bf16.msra.mxu0 %v1823
      %1827 = vmatprep.subr.bf16.mxu0 0
      %1828 = vmatpush1.bf16.msra.mxu0 0
      %1829 = vmatprep.subr.bf16.mxu0 0
      %1830 = vmatpush1.bf16.msra.mxu0 0
      %1831 = vmatprep.subr.bf16.mxu0 0
      %1832 = vmatpush1.bf16.msra.mxu0 0
      %1833 = vmatprep.subr.bf16.mxu0 0
      %1834 = vmatpush1.bf16.msra.mxu0 0
      %1835 = vmatprep.subr.bf16.mxu0 0
      %1836 = vmatpush1.bf16.msra.mxu0 0
      %1837 = vmatprep.subr.bf16.mxu0 0
      %1838 = vmatpush1.bf16.msra.mxu0 0
      %1839 = vmatprep.subr.bf16.mxu0 0
      %1840 = vmatpush1.bf16.msra.mxu0 0
      %1841 = vmatprep.subr.bf16.mxu0 0
      %1842 = vmatpush1.bf16.msra.mxu0 0
      %1843 = vmatprep.subr.bf16.mxu0 0
      %1844 = vmatpush1.bf16.msra.mxu0 0
      %1845 = vmatprep.subr.bf16.mxu0 0
      %1846 = vmatpush1.bf16.msra.mxu0 0
      %1847 = vmatprep.subr.bf16.mxu0 0
      %1848 = vmatpush1.bf16.msra.mxu0 0
      %1849 = vmatprep.subr.bf16.mxu0 0
      %1850 = vmatpush1.bf16.msra.mxu0 0
      %1851 = vmatprep.subr.bf16.mxu0 0
      %1852 = vmatpush1.bf16.msra.mxu0 0
      %1853 = vmatprep.subr.bf16.mxu0 0
      %1854 = vmatpush1.bf16.msra.mxu0 0
      %1855 = vmatprep.subr.bf16.mxu0 0
      %1856 = vmatpush1.bf16.msra.mxu0 0
      %1857 = vmatprep.mubr.bf16.mxu0 0
      %1858 = vmatmul.mubr.bf16.gmra.mrb[0].mxu0 %v664
      %v1859 = vpop.f32.mrb[0].mxu0
      %v1860 = vadd.f32 0.0, %v1859
      %v1861 = vpop.f32.mrb[0].mxu0
      %v1862 = vpop.f32.mrb[0].mxu0
      %v1863 = vadd.f32 0.0, %v1862
      %v1864 = vpop.f32.mrb[0].mxu0
      %1865 = vmatprep.mubr.bf16.mxu0 0
      %1866 = vmatmul.mubr.bf16.gmra.mrb[0].mxu0 %v667
      %v1867 = vpop.f32.mrb[0].mxu0
      %v1868 = vadd.f32 0.0, %v1867
      %v1869 = vpop.f32.mrb[0].mxu0
      %v1870 = vpop.f32.mrb[0].mxu0
      %v1871 = vadd.f32 0.0, %v1870
      %v1872 = vpop.f32.mrb[0].mxu0
      %1873 = vmatprep.mubr.bf16.mxu0 0
      %1874 = vmatmul.mubr.bf16.gmra.mrb[0].mxu0 %v670
      %v1875 = vpop.f32.mrb[0].mxu0
      %v1876 = vadd.f32 0.0, %v1875
      %v1877 = vpop.f32.mrb[0].mxu0
      %v1878 = vpop.f32.mrb[0].mxu0
      %v1879 = vadd.f32 0.0, %v1878
      %v1880 = vpop.f32.mrb[0].mxu0
      %1881 = vmatprep.mubr.bf16.mxu0 0
      %1882 = vmatmul.mubr.bf16.gmra.mrb[0].mxu0 %v673
      %v1883 = vpop.f32.mrb[0].mxu0
      %v1884 = vadd.f32 0.0, %v1883
      %v1885 = vpop.f32.mrb[0].mxu0
      %v1886 = vpop.f32.mrb[0].mxu0
      %v1887 = vadd.f32 0.0, %v1886
      %v1888 = vpop.f32.mrb[0].mxu0
      %1889 = vmatprep.mubr.bf16.mxu0 0
      %1890 = vmatmul.mubr.bf16.gmra.mrb[0].mxu0 %v676
      %v1891 = vpop.f32.mrb[0].mxu0
      %v1892 = vadd.f32 0.0, %v1891
      %v1893 = vpop.f32.mrb[0].mxu0
      %v1894 = vpop.f32.mrb[0].mxu0
      %v1895 = vadd.f32 0.0, %v1894
      %v1896 = vpop.f32.mrb[0].mxu0
      %1897 = vmatprep.mubr.bf16.mxu0 0
      %1898 = vmatmul.mubr.bf16.gmra.mrb[0].mxu0 %v679
      %v1899 = vpop.f32.mrb[0].mxu0
      %v1900 = vadd.f32 0.0, %v1899
      %v1901 = vpop.f32.mrb[0].mxu0
      %v1902 = vpop.f32.mrb[0].mxu0
      %v1903 = vadd.f32 0.0, %v1902
      %v1904 = vpop.f32.mrb[0].mxu0
      %1905 = vmatprep.mubr.bf16.mxu0 0
      %1906 = vmatmul.mubr.bf16.gmra.mrb[0].mxu0 %v682
      %v1907 = vpop.f32.mrb[0].mxu0
      %v1908 = vadd.f32 0.0, %v1907
      %v1909 = vpop.f32.mrb[0].mxu0
      %v1910 = vpop.f32.mrb[0].mxu0
      %v1911 = vadd.f32 0.0, %v1910
      %v1912 = vpop.f32.mrb[0].mxu0
      %1913 = vmatprep.mubr.bf16.mxu0 0
      %1914 = vmatmul.mubr.bf16.gmra.mrb[0].mxu0 %v685
      %v1915 = vpop.f32.mrb[0].mxu0
      %v1916 = vadd.f32 0.0, %v1915
      %v1917 = vpop.f32.mrb[0].mxu0
      %v1918 = vpop.f32.mrb[0].mxu0
      %v1919 = vadd.f32 0.0, %v1918
      %v1920 = vpop.f32.mrb[0].mxu0
      %1921 = vmatprep.mubr.bf16.mxu0 0
      %1922 = vmatmul.mubr.bf16.gmra.mrb[0].mxu0 %v688
      %v1923 = vpop.f32.mrb[0].mxu0
      %v1924 = vadd.f32 0.0, %v1923
      %v1925 = vpop.f32.mrb[0].mxu0
      %v1926 = vpop.f32.mrb[0].mxu0
      %v1927 = vadd.f32 0.0, %v1926
      %v1928 = vpop.f32.mrb[0].mxu0
      %1929 = vmatprep.mubr.bf16.mxu0 0
      %1930 = vmatmul.mubr.bf16.gmra.mrb[0].mxu0 %v691
      %v1931 = vpop.f32.mrb[0].mxu0
      %v1932 = vadd.f32 0.0, %v1931
      %v1933 = vpop.f32.mrb[0].mxu0
      %v1934 = vpop.f32.mrb[0].mxu0
      %v1935 = vadd.f32 0.0, %v1934
      %v1936 = vpop.f32.mrb[0].mxu0
      %1937 = vmatprep.mubr.bf16.mxu0 0
      %1938 = vmatmul.mubr.bf16.gmra.mrb[0].mxu0 %v694
      %v1939 = vpop.f32.mrb[0].mxu0
      %v1940 = vadd.f32 0.0, %v1939
      %v1941 = vpop.f32.mrb[0].mxu0
      %v1942 = vpop.f32.mrb[0].mxu0
      %v1943 = vadd.f32 0.0, %v1942
      %v1944 = vpop.f32.mrb[0].mxu0
      %1945 = vmatprep.mubr.bf16.mxu0 0
      %1946 = vmatmul.mubr.bf16.gmra.mrb[0].mxu0 %v697
      %v1947 = vpop.f32.mrb[0].mxu0
      %v1948 = vadd.f32 0.0, %v1947
      %v1949 = vpop.f32.mrb[0].mxu0
      %v1950 = vpop.f32.mrb[0].mxu0
      %v1951 = vadd.f32 0.0, %v1950
      %v1952 = vpop.f32.mrb[0].mxu0
      %1953 = vmatprep.mubr.bf16.mxu0 0
      %1954 = vmatmul.mubr.bf16.gmra.mrb[0].mxu0 %v700
      %v1955 = vpop.f32.mrb[0].mxu0
      %v1956 = vadd.f32 0.0, %v1955
      %v1957 = vpop.f32.mrb[0].mxu0
      %v1958 = vpop.f32.mrb[0].mxu0
      %v1959 = vadd.f32 0.0, %v1958
      %v1960 = vpop.f32.mrb[0].mxu0
      %1961 = vmatprep.mubr.bf16.mxu0 0
      %1962 = vmatmul.mubr.bf16.gmra.mrb[0].mxu0 %v703
      %v1963 = vpop.f32.mrb[0].mxu0
      %v1964 = vadd.f32 0.0, %v1963
      %v1965 = vpop.f32.mrb[0].mxu0
      %v1966 = vpop.f32.mrb[0].mxu0
      %v1967 = vadd.f32 0.0, %v1966
      %v1968 = vpop.f32.mrb[0].mxu0
      %1969 = vmatprep.mubr.bf16.mxu0 0
      %1970 = vmatmul.mubr.bf16.gmra.mrb[0].mxu0 %v706
      %v1971 = vpop.f32.mrb[0].mxu0
      %v1972 = vadd.f32 0.0, %v1971
      %v1973 = vpop.f32.mrb[0].mxu0
      %v1974 = vpop.f32.mrb[0].mxu0
      %v1975 = vadd.f32 0.0, %v1974
      %v1976 = vpop.f32.mrb[0].mxu0
      %1977 = vmatprep.mubr.bf16.mxu0 0
      %1978 = vmatmul.mubr.bf16.gmra.mrb[0].mxu0 %v1820
      %v1979 = vpop.f32.mrb[0].mxu0
      %v1980 = vadd.f32 0.0, %v1979
      %v1981 = vpop.f32.mrb[0].mxu0
      %v1982 = vpop.f32.mrb[0].mxu0
      %v1983 = vadd.f32 0.0, %v1982
      %v1984 = vpop.f32.mrb[0].mxu0
      %1985 = vdwg.mxu0
      %v1986 = vadd.f32 %v1760, %v1860
      %v1987 = vadd.f32 %v1761, %v1863
      %v1988 = vadd.f32 %v1762, %v1868
      %v1989 = vadd.f32 %v1763, %v1871
      %v1990 = vadd.f32 %v1764, %v1876
      %v1991 = vadd.f32 %v1765, %v1879
      %v1992 = vadd.f32 %v1766, %v1884
      %v1993 = vadd.f32 %v1767, %v1887
      %v1994 = vadd.f32 %v1768, %v1892
      %v1995 = vadd.f32 %v1769, %v1895
      %v1996 = vadd.f32 %v1770, %v1900
      %v1997 = vadd.f32 %v1771, %v1903
      %v1998 = vadd.f32 %v1772, %v1908
      %v1999 = vadd.f32 %v1773, %v1911
      %v2000 = vadd.f32 %v1774, %v1916
      %v2001 = vadd.f32 %v1775, %v1919
      %v2002 = vadd.f32 %v1776, %v1924
      %v2003 = vadd.f32 %v1777, %v1927
      %v2004 = vadd.f32 %v1778, %v1932
      %v2005 = vadd.f32 %v1779, %v1935
      %v2006 = vadd.f32 %v1780, %v1940
      %v2007 = vadd.f32 %v1781, %v1943
      %v2008 = vadd.f32 %v1782, %v1948
      %v2009 = vadd.f32 %v1783, %v1951
      %v2010 = vadd.f32 %v1784, %v1956
      %v2011 = vadd.f32 %v1785, %v1959
      %v2012 = vadd.f32 %v1786, %v1964
      %v2013 = vadd.f32 %v1787, %v1967
      %v2014 = vadd.f32 %v1788, %v1972
      %v2015 = vadd.f32 %v1789, %v1975
      %v2016 = vadd.f32 %v1790, %v1980
      %v2017 = vadd.f32 %v1791, %v1983
      %v2019 = vrot.slane %v209, 5
      %v2020 = vrot.slane %v2019, 4
      %v2021 = vrot.slane %v210, 5
      %v2022 = vsel %vm1183, %v2020, %v2021
      %v2023 = vrot.slane %v2021, 4
      %v2024 = vrot.slane %v211, 5
      %v2025 = vsel %vm1183, %v2023, %v2024
      %v2026 = vunpack.c.l.b16 %v2022
      %v2027 = vunpack.c.l.b16 %v2025
      %v2028 = vpack.c.b16 %v2027, %v2026
      %v2030 = vsel %vm659, %v2028, 0
      %v2033 = vsel %vm708, %v220, 0
      %2035 = vmatprep.subr.bf16.mxu0 0
      %2036 = vmatpush1.bf16.msra.mxu0 %v2033
      %2037 = vmatprep.subr.bf16.mxu0 0
      %2038 = vmatpush1.bf16.msra.mxu0 0
      %2039 = vmatprep.subr.bf16.mxu0 0
      %2040 = vmatpush1.bf16.msra.mxu0 0
      %2041 = vmatprep.subr.bf16.mxu0 0
      %2042 = vmatpush1.bf16.msra.mxu0 0
      %2043 = vmatprep.subr.bf16.mxu0 0
      %2044 = vmatpush1.bf16.msra.mxu0 0
      %2045 = vmatprep.subr.bf16.mxu0 0
      %2046 = vmatpush1.bf16.msra.mxu0 0
      %2047 = vmatprep.subr.bf16.mxu0 0
      %2048 = vmatpush1.bf16.msra.mxu0 0
      %2049 = vmatprep.subr.bf16.mxu0 0
      %2050 = vmatpush1.bf16.msra.mxu0 0
      %2051 = vmatprep.subr.bf16.mxu0 0
      %2052 = vmatpush1.bf16.msra.mxu0 0
      %2053 = vmatprep.subr.bf16.mxu0 0
      %2054 = vmatpush1.bf16.msra.mxu0 0
      %2055 = vmatprep.subr.bf16.mxu0 0
      %2056 = vmatpush1.bf16.msra.mxu0 0
      %2057 = vmatprep.subr.bf16.mxu0 0
      %2058 = vmatpush1.bf16.msra.mxu0 0
      %2059 = vmatprep.subr.bf16.mxu0 0
      %2060 = vmatpush1.bf16.msra.mxu0 0
      %2061 = vmatprep.subr.bf16.mxu0 0
      %2062 = vmatpush1.bf16.msra.mxu0 0
      %2063 = vmatprep.subr.bf16.mxu0 0
      %2064 = vmatpush1.bf16.msra.mxu0 0
      %2065 = vmatprep.subr.bf16.mxu0 0
      %2066 = vmatpush1.bf16.msra.mxu0 0
      %2067 = vmatprep.mubr.bf16.mxu0 0
      %2068 = vmatmul.mubr.bf16.gmra.mrb[0].mxu0 %v1348
      %v2069 = vpop.f32.mrb[0].mxu0
      %v2070 = vadd.f32 0.0, %v2069
      %v2071 = vpop.f32.mrb[0].mxu0
      %v2072 = vpop.f32.mrb[0].mxu0
      %v2073 = vadd.f32 0.0, %v2072
      %v2074 = vpop.f32.mrb[0].mxu0
      %2075 = vmatprep.mubr.bf16.mxu0 0
      %2076 = vmatmul.mubr.bf16.gmra.mrb[0].mxu0 %v1351
      %v2077 = vpop.f32.mrb[0].mxu0
      %v2078 = vadd.f32 0.0, %v2077
      %v2079 = vpop.f32.mrb[0].mxu0
      %v2080 = vpop.f32.mrb[0].mxu0
      %v2081 = vadd.f32 0.0, %v2080
      %v2082 = vpop.f32.mrb[0].mxu0
      %2083 = vmatprep.mubr.bf16.mxu0 0
      %2084 = vmatmul.mubr.bf16.gmra.mrb[0].mxu0 %v1354
      %v2085 = vpop.f32.mrb[0].mxu0
      %v2086 = vadd.f32 0.0, %v2085
      %v2087 = vpop.f32.mrb[0].mxu0
      %v2088 = vpop.f32.mrb[0].mxu0
      %v2089 = vadd.f32 0.0, %v2088
      %v2090 = vpop.f32.mrb[0].mxu0
      %2091 = vmatprep.mubr.bf16.mxu0 0
      %2092 = vmatmul.mubr.bf16.gmra.mrb[0].mxu0 %v1357
      %v2093 = vpop.f32.mrb[0].mxu0
      %v2094 = vadd.f32 0.0, %v2093
      %v2095 = vpop.f32.mrb[0].mxu0
      %v2096 = vpop.f32.mrb[0].mxu0
      %v2097 = vadd.f32 0.0, %v2096
      %v2098 = vpop.f32.mrb[0].mxu0
      %2099 = vmatprep.mubr.bf16.mxu0 0
      %2100 = vmatmul.mubr.bf16.gmra.mrb[0].mxu0 %v1360
      %v2101 = vpop.f32.mrb[0].mxu0
      %v2102 = vadd.f32 0.0, %v2101
      %v2103 = vpop.f32.mrb[0].mxu0
      %v2104 = vpop.f32.mrb[0].mxu0
      %v2105 = vadd.f32 0.0, %v2104
      %v2106 = vpop.f32.mrb[0].mxu0
      %2107 = vmatprep.mubr.bf16.mxu0 0
      %2108 = vmatmul.mubr.bf16.gmra.mrb[0].mxu0 %v1363
      %v2109 = vpop.f32.mrb[0].mxu0
      %v2110 = vadd.f32 0.0, %v2109
      %v2111 = vpop.f32.mrb[0].mxu0
      %v2112 = vpop.f32.mrb[0].mxu0
      %v2113 = vadd.f32 0.0, %v2112
      %v2114 = vpop.f32.mrb[0].mxu0
      %2115 = vmatprep.mubr.bf16.mxu0 0
      %2116 = vmatmul.mubr.bf16.gmra.mrb[0].mxu0 %v1366
      %v2117 = vpop.f32.mrb[0].mxu0
      %v2118 = vadd.f32 0.0, %v2117
      %v2119 = vpop.f32.mrb[0].mxu0
      %v2120 = vpop.f32.mrb[0].mxu0
      %v2121 = vadd.f32 0.0, %v2120
      %v2122 = vpop.f32.mrb[0].mxu0
      %2123 = vmatprep.mubr.bf16.mxu0 0
      %2124 = vmatmul.mubr.bf16.gmra.mrb[0].mxu0 %v1369
      %v2125 = vpop.f32.mrb[0].mxu0
      %v2126 = vadd.f32 0.0, %v2125
      %v2127 = vpop.f32.mrb[0].mxu0
      %v2128 = vpop.f32.mrb[0].mxu0
      %v2129 = vadd.f32 0.0, %v2128
      %v2130 = vpop.f32.mrb[0].mxu0
      %2131 = vmatprep.mubr.bf16.mxu0 0
      %2132 = vmatmul.mubr.bf16.gmra.mrb[0].mxu0 %v1372
      %v2133 = vpop.f32.mrb[0].mxu0
      %v2134 = vadd.f32 0.0, %v2133
      %v2135 = vpop.f32.mrb[0].mxu0
      %v2136 = vpop.f32.mrb[0].mxu0
      %v2137 = vadd.f32 0.0, %v2136
      %v2138 = vpop.f32.mrb[0].mxu0
      %2139 = vmatprep.mubr.bf16.mxu0 0
      %2140 = vmatmul.mubr.bf16.gmra.mrb[0].mxu0 %v1375
      %v2141 = vpop.f32.mrb[0].mxu0
      %v2142 = vadd.f32 0.0, %v2141
      %v2143 = vpop.f32.mrb[0].mxu0
      %v2144 = vpop.f32.mrb[0].mxu0
      %v2145 = vadd.f32 0.0, %v2144
      %v2146 = vpop.f32.mrb[0].mxu0
      %2147 = vmatprep.mubr.bf16.mxu0 0
      %2148 = vmatmul.mubr.bf16.gmra.mrb[0].mxu0 %v1378
      %v2149 = vpop.f32.mrb[0].mxu0
      %v2150 = vadd.f32 0.0, %v2149
      %v2151 = vpop.f32.mrb[0].mxu0
      %v2152 = vpop.f32.mrb[0].mxu0
      %v2153 = vadd.f32 0.0, %v2152
      %v2154 = vpop.f32.mrb[0].mxu0
      %2155 = vmatprep.mubr.bf16.mxu0 0
      %2156 = vmatmul.mubr.bf16.gmra.mrb[0].mxu0 %v1381
      %v2157 = vpop.f32.mrb[0].mxu0
      %v2158 = vadd.f32 0.0, %v2157
      %v2159 = vpop.f32.mrb[0].mxu0
      %v2160 = vpop.f32.mrb[0].mxu0
      %v2161 = vadd.f32 0.0, %v2160
      %v2162 = vpop.f32.mrb[0].mxu0
      %2163 = vmatprep.mubr.bf16.mxu0 0
      %2164 = vmatmul.mubr.bf16.gmra.mrb[0].mxu0 %v1384
      %v2165 = vpop.f32.mrb[0].mxu0
      %v2166 = vadd.f32 0.0, %v2165
      %v2167 = vpop.f32.mrb[0].mxu0
      %v2168 = vpop.f32.mrb[0].mxu0
      %v2169 = vadd.f32 0.0, %v2168
      %v2170 = vpop.f32.mrb[0].mxu0
      %2171 = vmatprep.mubr.bf16.mxu0 0
      %2172 = vmatmul.mubr.bf16.gmra.mrb[0].mxu0 %v1387
      %v2173 = vpop.f32.mrb[0].mxu0
      %v2174 = vadd.f32 0.0, %v2173
      %v2175 = vpop.f32.mrb[0].mxu0
      %v2176 = vpop.f32.mrb[0].mxu0
      %v2177 = vadd.f32 0.0, %v2176
      %v2178 = vpop.f32.mrb[0].mxu0
      %2179 = vmatprep.mubr.bf16.mxu0 0
      %2180 = vmatmul.mubr.bf16.gmra.mrb[0].mxu0 %v1390
      %v2181 = vpop.f32.mrb[0].mxu0
      %v2182 = vadd.f32 0.0, %v2181
      %v2183 = vpop.f32.mrb[0].mxu0
      %v2184 = vpop.f32.mrb[0].mxu0
      %v2185 = vadd.f32 0.0, %v2184
      %v2186 = vpop.f32.mrb[0].mxu0
      %2187 = vmatprep.mubr.bf16.mxu0 0
      %2188 = vmatmul.mubr.bf16.gmra.mrb[0].mxu0 %v2030
      %v2189 = vpop.f32.mrb[0].mxu0
      %v2190 = vadd.f32 0.0, %v2189
      %v2191 = vpop.f32.mrb[0].mxu0
      %v2192 = vpop.f32.mrb[0].mxu0
      %v2193 = vadd.f32 0.0, %v2192
      %v2194 = vpop.f32.mrb[0].mxu0
      %2195 = vdwg.mxu0
      %v2196 = vadd.f32 %v1986, %v2070
      %v2197 = vadd.f32 %v1987, %v2073
      %v2198 = vadd.f32 %v1988, %v2078
      %v2199 = vadd.f32 %v1989, %v2081
      %v2200 = vadd.f32 %v1990, %v2086
      %v2201 = vadd.f32 %v1991, %v2089
      %v2202 = vadd.f32 %v1992, %v2094
      %v2203 = vadd.f32 %v1993, %v2097
      %v2204 = vadd.f32 %v1994, %v2102
      %v2205 = vadd.f32 %v1995, %v2105
      %v2206 = vadd.f32 %v1996, %v2110
      %v2207 = vadd.f32 %v1997, %v2113
      %v2208 = vadd.f32 %v1998, %v2118
      %v2209 = vadd.f32 %v1999, %v2121
      %v2210 = vadd.f32 %v2000, %v2126
      %v2211 = vadd.f32 %v2001, %v2129
      %v2212 = vadd.f32 %v2002, %v2134
      %v2213 = vadd.f32 %v2003, %v2137
      %v2214 = vadd.f32 %v2004, %v2142
      %v2215 = vadd.f32 %v2005, %v2145
      %v2216 = vadd.f32 %v2006, %v2150
      %v2217 = vadd.f32 %v2007, %v2153
      %v2218 = vadd.f32 %v2008, %v2158
      %v2219 = vadd.f32 %v2009, %v2161
      %v2220 = vadd.f32 %v2010, %v2166
      %v2221 = vadd.f32 %v2011, %v2169
      %v2222 = vadd.f32 %v2012, %v2174
      %v2223 = vadd.f32 %v2013, %v2177
      %v2224 = vadd.f32 %v2014, %v2182
      %v2225 = vadd.f32 %v2015, %v2185
      %v2226 = vadd.f32 %v2016, %v2190
      %v2227 = vadd.f32 %v2017, %v2193
      %v2230 = vunpack.c.l.b16 %v212
      %v2231 = vunpack.c.l.b16 %v213
      %v2232 = vpack.c.b16 %v2231, %v2230
      %v2234 = vsel %vm659, %v2232, 0
      %v2237 = vsel %vm708, %v221, 0
      %2239 = vmatprep.subr.bf16.mxu0 0
      %2240 = vmatpush1.bf16.msra.mxu0 %v2237
      %2241 = vmatprep.subr.bf16.mxu0 0
      %2242 = vmatpush1.bf16.msra.mxu0 0
      %2243 = vmatprep.subr.bf16.mxu0 0
      %2244 = vmatpush1.bf16.msra.mxu0 0
      %2245 = vmatprep.subr.bf16.mxu0 0
      %2246 = vmatpush1.bf16.msra.mxu0 0
      %2247 = vmatprep.subr.bf16.mxu0 0
      %2248 = vmatpush1.bf16.msra.mxu0 0
      %2249 = vmatprep.subr.bf16.mxu0 0
      %2250 = vmatpush1.bf16.msra.mxu0 0
      %2251 = vmatprep.subr.bf16.mxu0 0
      %2252 = vmatpush1.bf16.msra.mxu0 0
      %2253 = vmatprep.subr.bf16.mxu0 0
      %2254 = vmatpush1.bf16.msra.mxu0 0
      %2255 = vmatprep.subr.bf16.mxu0 0
      %2256 = vmatpush1.bf16.msra.mxu0 0
      %2257 = vmatprep.subr.bf16.mxu0 0
      %2258 = vmatpush1.bf16.msra.mxu0 0
      %2259 = vmatprep.subr.bf16.mxu0 0
      %2260 = vmatpush1.bf16.msra.mxu0 0
      %2261 = vmatprep.subr.bf16.mxu0 0
      %2262 = vmatpush1.bf16.msra.mxu0 0
      %2263 = vmatprep.subr.bf16.mxu0 0
      %2264 = vmatpush1.bf16.msra.mxu0 0
      %2265 = vmatprep.subr.bf16.mxu0 0
      %2266 = vmatpush1.bf16.msra.mxu0 0
      %2267 = vmatprep.subr.bf16.mxu0 0
      %2268 = vmatpush1.bf16.msra.mxu0 0
      %2269 = vmatprep.subr.bf16.mxu0 0
      %2270 = vmatpush1.bf16.msra.mxu0 0
      %2271 = vmatprep.mubr.bf16.mxu0 0
      %2272 = vmatmul.mubr.bf16.gmra.mrb[0].mxu0 %v960
      %v2273 = vpop.f32.mrb[0].mxu0
      %v2274 = vadd.f32 0.0, %v2273
      %v2275 = vpop.f32.mrb[0].mxu0
      %v2276 = vpop.f32.mrb[0].mxu0
      %v2277 = vadd.f32 0.0, %v2276
      %v2278 = vpop.f32.mrb[0].mxu0
      %2279 = vmatprep.mubr.bf16.mxu0 0
      %2280 = vmatmul.mubr.bf16.gmra.mrb[0].mxu0 %v963
      %v2281 = vpop.f32.mrb[0].mxu0
      %v2282 = vadd.f32 0.0, %v2281
      %v2283 = vpop.f32.mrb[0].mxu0
      %v2284 = vpop.f32.mrb[0].mxu0
      %v2285 = vadd.f32 0.0, %v2284
      %v2286 = vpop.f32.mrb[0].mxu0
      %2287 = vmatprep.mubr.bf16.mxu0 0
      %2288 = vmatmul.mubr.bf16.gmra.mrb[0].mxu0 %v966
      %v2289 = vpop.f32.mrb[0].mxu0
      %v2290 = vadd.f32 0.0, %v2289
      %v2291 = vpop.f32.mrb[0].mxu0
      %v2292 = vpop.f32.mrb[0].mxu0
      %v2293 = vadd.f32 0.0, %v2292
      %v2294 = vpop.f32.mrb[0].mxu0
      %2295 = vmatprep.mubr.bf16.mxu0 0
      %2296 = vmatmul.mubr.bf16.gmra.mrb[0].mxu0 %v969
      %v2297 = vpop.f32.mrb[0].mxu0
      %v2298 = vadd.f32 0.0, %v2297
      %v2299 = vpop.f32.mrb[0].mxu0
      %v2300 = vpop.f32.mrb[0].mxu0
      %v2301 = vadd.f32 0.0, %v2300
      %v2302 = vpop.f32.mrb[0].mxu0
      %2303 = vmatprep.mubr.bf16.mxu0 0
      %2304 = vmatmul.mubr.bf16.gmra.mrb[0].mxu0 %v972
      %v2305 = vpop.f32.mrb[0].mxu0
      %v2306 = vadd.f32 0.0, %v2305
      %v2307 = vpop.f32.mrb[0].mxu0
      %v2308 = vpop.f32.mrb[0].mxu0
      %v2309 = vadd.f32 0.0, %v2308
      %v2310 = vpop.f32.mrb[0].mxu0
      %2311 = vmatprep.mubr.bf16.mxu0 0
      %2312 = vmatmul.mubr.bf16.gmra.mrb[0].mxu0 %v975
      %v2313 = vpop.f32.mrb[0].mxu0
      %v2314 = vadd.f32 0.0, %v2313
      %v2315 = vpop.f32.mrb[0].mxu0
      %v2316 = vpop.f32.mrb[0].mxu0
      %v2317 = vadd.f32 0.0, %v2316
      %v2318 = vpop.f32.mrb[0].mxu0
      %2319 = vmatprep.mubr.bf16.mxu0 0
      %2320 = vmatmul.mubr.bf16.gmra.mrb[0].mxu0 %v978
      %v2321 = vpop.f32.mrb[0].mxu0
      %v2322 = vadd.f32 0.0, %v2321
      %v2323 = vpop.f32.mrb[0].mxu0
      %v2324 = vpop.f32.mrb[0].mxu0
      %v2325 = vadd.f32 0.0, %v2324
      %v2326 = vpop.f32.mrb[0].mxu0
      %2327 = vmatprep.mubr.bf16.mxu0 0
      %2328 = vmatmul.mubr.bf16.gmra.mrb[0].mxu0 %v981
      %v2329 = vpop.f32.mrb[0].mxu0
      %v2330 = vadd.f32 0.0, %v2329
      %v2331 = vpop.f32.mrb[0].mxu0
      %v2332 = vpop.f32.mrb[0].mxu0
      %v2333 = vadd.f32 0.0, %v2332
      %v2334 = vpop.f32.mrb[0].mxu0
      %2335 = vmatprep.mubr.bf16.mxu0 0
      %2336 = vmatmul.mubr.bf16.gmra.mrb[0].mxu0 %v984
      %v2337 = vpop.f32.mrb[0].mxu0
      %v2338 = vadd.f32 0.0, %v2337
      %v2339 = vpop.f32.mrb[0].mxu0
      %v2340 = vpop.f32.mrb[0].mxu0
      %v2341 = vadd.f32 0.0, %v2340
      %v2342 = vpop.f32.mrb[0].mxu0
      %2343 = vmatprep.mubr.bf16.mxu0 0
      %2344 = vmatmul.mubr.bf16.gmra.mrb[0].mxu0 %v987
      %v2345 = vpop.f32.mrb[0].mxu0
      %v2346 = vadd.f32 0.0, %v2345
      %v2347 = vpop.f32.mrb[0].mxu0
      %v2348 = vpop.f32.mrb[0].mxu0
      %v2349 = vadd.f32 0.0, %v2348
      %v2350 = vpop.f32.mrb[0].mxu0
      %2351 = vmatprep.mubr.bf16.mxu0 0
      %2352 = vmatmul.mubr.bf16.gmra.mrb[0].mxu0 %v990
      %v2353 = vpop.f32.mrb[0].mxu0
      %v2354 = vadd.f32 0.0, %v2353
      %v2355 = vpop.f32.mrb[0].mxu0
      %v2356 = vpop.f32.mrb[0].mxu0
      %v2357 = vadd.f32 0.0, %v2356
      %v2358 = vpop.f32.mrb[0].mxu0
      %2359 = vmatprep.mubr.bf16.mxu0 0
      %2360 = vmatmul.mubr.bf16.gmra.mrb[0].mxu0 %v993
      %v2361 = vpop.f32.mrb[0].mxu0
      %v2362 = vadd.f32 0.0, %v2361
      %v2363 = vpop.f32.mrb[0].mxu0
      %v2364 = vpop.f32.mrb[0].mxu0
      %v2365 = vadd.f32 0.0, %v2364
      %v2366 = vpop.f32.mrb[0].mxu0
      %2367 = vmatprep.mubr.bf16.mxu0 0
      %2368 = vmatmul.mubr.bf16.gmra.mrb[0].mxu0 %v996
      %v2369 = vpop.f32.mrb[0].mxu0
      %v2370 = vadd.f32 0.0, %v2369
      %v2371 = vpop.f32.mrb[0].mxu0
      %v2372 = vpop.f32.mrb[0].mxu0
      %v2373 = vadd.f32 0.0, %v2372
      %v2374 = vpop.f32.mrb[0].mxu0
      %2375 = vmatprep.mubr.bf16.mxu0 0
      %2376 = vmatmul.mubr.bf16.gmra.mrb[0].mxu0 %v999
      %v2377 = vpop.f32.mrb[0].mxu0
      %v2378 = vadd.f32 0.0, %v2377
      %v2379 = vpop.f32.mrb[0].mxu0
      %v2380 = vpop.f32.mrb[0].mxu0
      %v2381 = vadd.f32 0.0, %v2380
      %v2382 = vpop.f32.mrb[0].mxu0
      %2383 = vmatprep.mubr.bf16.mxu0 0
      %2384 = vmatmul.mubr.bf16.gmra.mrb[0].mxu0 %v1594
      %v2385 = vpop.f32.mrb[0].mxu0
      %v2386 = vadd.f32 0.0, %v2385
      %v2387 = vpop.f32.mrb[0].mxu0
      %v2388 = vpop.f32.mrb[0].mxu0
      %v2389 = vadd.f32 0.0, %v2388
      %v2390 = vpop.f32.mrb[0].mxu0
      %2391 = vmatprep.mubr.bf16.mxu0 0
      %2392 = vmatmul.mubr.bf16.gmra.mrb[0].mxu0 %v2234
      %v2393 = vpop.f32.mrb[0].mxu0
      %v2394 = vadd.f32 0.0, %v2393
      %v2395 = vpop.f32.mrb[0].mxu0
      %v2396 = vpop.f32.mrb[0].mxu0
      %v2397 = vadd.f32 0.0, %v2396
      %v2398 = vpop.f32.mrb[0].mxu0
      %2399 = vdwg.mxu0
      %v2400 = vadd.f32 %v2196, %v2274
      %v2401 = vadd.f32 %v2197, %v2277
      %v2402 = vadd.f32 %v2198, %v2282
      %v2403 = vadd.f32 %v2199, %v2285
      %v2404 = vadd.f32 %v2200, %v2290
      %v2405 = vadd.f32 %v2201, %v2293
      %v2406 = vadd.f32 %v2202, %v2298
      %v2407 = vadd.f32 %v2203, %v2301
      %v2408 = vadd.f32 %v2204, %v2306
      %v2409 = vadd.f32 %v2205, %v2309
      %v2410 = vadd.f32 %v2206, %v2314
      %v2411 = vadd.f32 %v2207, %v2317
      %v2412 = vadd.f32 %v2208, %v2322
      %v2413 = vadd.f32 %v2209, %v2325
      %v2414 = vadd.f32 %v2210, %v2330
      %v2415 = vadd.f32 %v2211, %v2333
      %v2416 = vadd.f32 %v2212, %v2338
      %v2417 = vadd.f32 %v2213, %v2341
      %v2418 = vadd.f32 %v2214, %v2346
      %v2419 = vadd.f32 %v2215, %v2349
      %v2420 = vadd.f32 %v2216, %v2354
      %v2421 = vadd.f32 %v2217, %v2357
      %v2422 = vadd.f32 %v2218, %v2362
      %v2423 = vadd.f32 %v2219, %v2365
      %v2424 = vadd.f32 %v2220, %v2370
      %v2425 = vadd.f32 %v2221, %v2373
      %v2426 = vadd.f32 %v2222, %v2378
      %v2427 = vadd.f32 %v2223, %v2381
      %v2428 = vadd.f32 %v2224, %v2386
      %v2429 = vadd.f32 %v2225, %v2389
      %v2430 = vadd.f32 %v2226, %v2394
      %v2431 = vadd.f32 %v2227, %v2397
      %v2433 = vshrl.u32 %v212, 16
      %v2435 = vrot.slane %v2433, 4
      %v2436 = vshll.u32 %v212, 16
      %v2438 = vrot.slane %v2436, 5
      %v2439 = vor.u32 %v2435, %v2438
      %v2440 = vrot.slane %v2439, 4
      %v2442 = vshll.u32 %v213, 16
      %v2444 = vrot.slane %v2442, 5
      %v2445 = vsel %vm226, %v2440, %v2444
      %v2446 = vshrl.u32 %v213, 16
      %v2448 = vrot.slane %v2446, 4
      %v2449 = vor.u32 %v2448, %v2444
      %v2450 = vrot.slane %v2449, 4
      %v2452 = vshll.u32 %v214, 16
      %v2454 = vrot.slane %v2452, 5
      %v2455 = vsel %vm226, %v2450, %v2454
      %v2456 = vunpack.c.l.b16 %v2445
      %v2457 = vunpack.c.l.b16 %v2455
      %v2458 = vpack.c.b16 %v2457, %v2456
      %v2460 = vsel %vm659, %v2458, 0
      %v2463 = vsel %vm708, %v222, 0
      %2465 = vmatprep.subr.bf16.mxu0 0
      %2466 = vmatpush1.bf16.msra.mxu0 %v2463
      %2467 = vmatprep.subr.bf16.mxu0 0
      %2468 = vmatpush1.bf16.msra.mxu0 0
      %2469 = vmatprep.subr.bf16.mxu0 0
      %2470 = vmatpush1.bf16.msra.mxu0 0
      %2471 = vmatprep.subr.bf16.mxu0 0
      %2472 = vmatpush1.bf16.msra.mxu0 0
      %2473 = vmatprep.subr.bf16.mxu0 0
      %2474 = vmatpush1.bf16.msra.mxu0 0
      %2475 = vmatprep.subr.bf16.mxu0 0
      %2476 = vmatpush1.bf16.msra.mxu0 0
      %2477 = vmatprep.subr.bf16.mxu0 0
      %2478 = vmatpush1.bf16.msra.mxu0 0
      %2479 = vmatprep.subr.bf16.mxu0 0
      %2480 = vmatpush1.bf16.msra.mxu0 0
      %2481 = vmatprep.subr.bf16.mxu0 0
      %2482 = vmatpush1.bf16.msra.mxu0 0
      %2483 = vmatprep.subr.bf16.mxu0 0
      %2484 = vmatpush1.bf16.msra.mxu0 0
      %2485 = vmatprep.subr.bf16.mxu0 0
      %2486 = vmatpush1.bf16.msra.mxu0 0
      %2487 = vmatprep.subr.bf16.mxu0 0
      %2488 = vmatpush1.bf16.msra.mxu0 0
      %2489 = vmatprep.subr.bf16.mxu0 0
      %2490 = vmatpush1.bf16.msra.mxu0 0
      %2491 = vmatprep.subr.bf16.mxu0 0
      %2492 = vmatpush1.bf16.msra.mxu0 0
      %2493 = vmatprep.subr.bf16.mxu0 0
      %2494 = vmatpush1.bf16.msra.mxu0 0
      %2495 = vmatprep.subr.bf16.mxu0 0
      %2496 = vmatpush1.bf16.msra.mxu0 0
      %2497 = vmatprep.mubr.bf16.mxu0 0
      %2498 = vmatmul.mubr.bf16.gmra.mrb[0].mxu0 %v667
      %v2499 = vpop.f32.mrb[0].mxu0
      %v2500 = vadd.f32 0.0, %v2499
      %v2501 = vpop.f32.mrb[0].mxu0
      %v2502 = vpop.f32.mrb[0].mxu0
      %v2503 = vadd.f32 0.0, %v2502
      %v2504 = vpop.f32.mrb[0].mxu0
      %2505 = vmatprep.mubr.bf16.mxu0 0
      %2506 = vmatmul.mubr.bf16.gmra.mrb[0].mxu0 %v670
      %v2507 = vpop.f32.mrb[0].mxu0
      %v2508 = vadd.f32 0.0, %v2507
      %v2509 = vpop.f32.mrb[0].mxu0
      %v2510 = vpop.f32.mrb[0].mxu0
      %v2511 = vadd.f32 0.0, %v2510
      %v2512 = vpop.f32.mrb[0].mxu0
      %2513 = vmatprep.mubr.bf16.mxu0 0
      %2514 = vmatmul.mubr.bf16.gmra.mrb[0].mxu0 %v673
      %v2515 = vpop.f32.mrb[0].mxu0
      %v2516 = vadd.f32 0.0, %v2515
      %v2517 = vpop.f32.mrb[0].mxu0
      %v2518 = vpop.f32.mrb[0].mxu0
      %v2519 = vadd.f32 0.0, %v2518
      %v2520 = vpop.f32.mrb[0].mxu0
      %2521 = vmatprep.mubr.bf16.mxu0 0
      %2522 = vmatmul.mubr.bf16.gmra.mrb[0].mxu0 %v676
      %v2523 = vpop.f32.mrb[0].mxu0
      %v2524 = vadd.f32 0.0, %v2523
      %v2525 = vpop.f32.mrb[0].mxu0
      %v2526 = vpop.f32.mrb[0].mxu0
      %v2527 = vadd.f32 0.0, %v2526
      %v2528 = vpop.f32.mrb[0].mxu0
      %2529 = vmatprep.mubr.bf16.mxu0 0
      %2530 = vmatmul.mubr.bf16.gmra.mrb[0].mxu0 %v679
      %v2531 = vpop.f32.mrb[0].mxu0
      %v2532 = vadd.f32 0.0, %v2531
      %v2533 = vpop.f32.mrb[0].mxu0
      %v2534 = vpop.f32.mrb[0].mxu0
      %v2535 = vadd.f32 0.0, %v2534
      %v2536 = vpop.f32.mrb[0].mxu0
      %2537 = vmatprep.mubr.bf16.mxu0 0
      %2538 = vmatmul.mubr.bf16.gmra.mrb[0].mxu0 %v682
      %v2539 = vpop.f32.mrb[0].mxu0
      %v2540 = vadd.f32 0.0, %v2539
      %v2541 = vpop.f32.mrb[0].mxu0
      %v2542 = vpop.f32.mrb[0].mxu0
      %v2543 = vadd.f32 0.0, %v2542
      %v2544 = vpop.f32.mrb[0].mxu0
      %2545 = vmatprep.mubr.bf16.mxu0 0
      %2546 = vmatmul.mubr.bf16.gmra.mrb[0].mxu0 %v685
      %v2547 = vpop.f32.mrb[0].mxu0
      %v2548 = vadd.f32 0.0, %v2547
      %v2549 = vpop.f32.mrb[0].mxu0
      %v2550 = vpop.f32.mrb[0].mxu0
      %v2551 = vadd.f32 0.0, %v2550
      %v2552 = vpop.f32.mrb[0].mxu0
      %2553 = vmatprep.mubr.bf16.mxu0 0
      %2554 = vmatmul.mubr.bf16.gmra.mrb[0].mxu0 %v688
      %v2555 = vpop.f32.mrb[0].mxu0
      %v2556 = vadd.f32 0.0, %v2555
      %v2557 = vpop.f32.mrb[0].mxu0
      %v2558 = vpop.f32.mrb[0].mxu0
      %v2559 = vadd.f32 0.0, %v2558
      %v2560 = vpop.f32.mrb[0].mxu0
      %2561 = vmatprep.mubr.bf16.mxu0 0
      %2562 = vmatmul.mubr.bf16.gmra.mrb[0].mxu0 %v691
      %v2563 = vpop.f32.mrb[0].mxu0
      %v2564 = vadd.f32 0.0, %v2563
      %v2565 = vpop.f32.mrb[0].mxu0
      %v2566 = vpop.f32.mrb[0].mxu0
      %v2567 = vadd.f32 0.0, %v2566
      %v2568 = vpop.f32.mrb[0].mxu0
      %2569 = vmatprep.mubr.bf16.mxu0 0
      %2570 = vmatmul.mubr.bf16.gmra.mrb[0].mxu0 %v694
      %v2571 = vpop.f32.mrb[0].mxu0
      %v2572 = vadd.f32 0.0, %v2571
      %v2573 = vpop.f32.mrb[0].mxu0
      %v2574 = vpop.f32.mrb[0].mxu0
      %v2575 = vadd.f32 0.0, %v2574
      %v2576 = vpop.f32.mrb[0].mxu0
      %2577 = vmatprep.mubr.bf16.mxu0 0
      %2578 = vmatmul.mubr.bf16.gmra.mrb[0].mxu0 %v697
      %v2579 = vpop.f32.mrb[0].mxu0
      %v2580 = vadd.f32 0.0, %v2579
      %v2581 = vpop.f32.mrb[0].mxu0
      %v2582 = vpop.f32.mrb[0].mxu0
      %v2583 = vadd.f32 0.0, %v2582
      %v2584 = vpop.f32.mrb[0].mxu0
      %2585 = vmatprep.mubr.bf16.mxu0 0
      %2586 = vmatmul.mubr.bf16.gmra.mrb[0].mxu0 %v700
      %v2587 = vpop.f32.mrb[0].mxu0
      %v2588 = vadd.f32 0.0, %v2587
      %v2589 = vpop.f32.mrb[0].mxu0
      %v2590 = vpop.f32.mrb[0].mxu0
      %v2591 = vadd.f32 0.0, %v2590
      %v2592 = vpop.f32.mrb[0].mxu0
      %2593 = vmatprep.mubr.bf16.mxu0 0
      %2594 = vmatmul.mubr.bf16.gmra.mrb[0].mxu0 %v703
      %v2595 = vpop.f32.mrb[0].mxu0
      %v2596 = vadd.f32 0.0, %v2595
      %v2597 = vpop.f32.mrb[0].mxu0
      %v2598 = vpop.f32.mrb[0].mxu0
      %v2599 = vadd.f32 0.0, %v2598
      %v2600 = vpop.f32.mrb[0].mxu0
      %2601 = vmatprep.mubr.bf16.mxu0 0
      %2602 = vmatmul.mubr.bf16.gmra.mrb[0].mxu0 %v706
      %v2603 = vpop.f32.mrb[0].mxu0
      %v2604 = vadd.f32 0.0, %v2603
      %v2605 = vpop.f32.mrb[0].mxu0
      %v2606 = vpop.f32.mrb[0].mxu0
      %v2607 = vadd.f32 0.0, %v2606
      %v2608 = vpop.f32.mrb[0].mxu0
      %2609 = vmatprep.mubr.bf16.mxu0 0
      %2610 = vmatmul.mubr.bf16.gmra.mrb[0].mxu0 %v1820
      %v2611 = vpop.f32.mrb[0].mxu0
      %v2612 = vadd.f32 0.0, %v2611
      %v2613 = vpop.f32.mrb[0].mxu0
      %v2614 = vpop.f32.mrb[0].mxu0
      %v2615 = vadd.f32 0.0, %v2614
      %v2616 = vpop.f32.mrb[0].mxu0
      %2617 = vmatprep.mubr.bf16.mxu0 0
      %2618 = vmatmul.mubr.bf16.gmra.mrb[0].mxu0 %v2460
      %v2619 = vpop.f32.mrb[0].mxu0
      %v2620 = vadd.f32 0.0, %v2619
      %v2621 = vpop.f32.mrb[0].mxu0
      %v2622 = vpop.f32.mrb[0].mxu0
      %v2623 = vadd.f32 0.0, %v2622
      %v2624 = vpop.f32.mrb[0].mxu0
      %2625 = vdwg.mxu0
      %v2626 = vadd.f32 %v2400, %v2500
      %v2627 = vadd.f32 %v2401, %v2503
      %v2628 = vadd.f32 %v2402, %v2508
      %v2629 = vadd.f32 %v2403, %v2511
      %v2630 = vadd.f32 %v2404, %v2516
      %v2631 = vadd.f32 %v2405, %v2519
      %v2632 = vadd.f32 %v2406, %v2524
      %v2633 = vadd.f32 %v2407, %v2527
      %v2634 = vadd.f32 %v2408, %v2532
      %v2635 = vadd.f32 %v2409, %v2535
      %v2636 = vadd.f32 %v2410, %v2540
      %v2637 = vadd.f32 %v2411, %v2543
      %v2638 = vadd.f32 %v2412, %v2548
      %v2639 = vadd.f32 %v2413, %v2551
      %v2640 = vadd.f32 %v2414, %v2556
      %v2641 = vadd.f32 %v2415, %v2559
      %v2642 = vadd.f32 %v2416, %v2564
      %v2643 = vadd.f32 %v2417, %v2567
      %v2644 = vadd.f32 %v2418, %v2572
      %v2645 = vadd.f32 %v2419, %v2575
      %v2646 = vadd.f32 %v2420, %v2580
      %v2647 = vadd.f32 %v2421, %v2583
      %v2648 = vadd.f32 %v2422, %v2588
      %v2649 = vadd.f32 %v2423, %v2591
      %v2650 = vadd.f32 %v2424, %v2596
      %v2651 = vadd.f32 %v2425, %v2599
      %v2652 = vadd.f32 %v2426, %v2604
      %v2653 = vadd.f32 %v2427, %v2607
      %v2654 = vadd.f32 %v2428, %v2612
      %v2655 = vadd.f32 %v2429, %v2615
      %v2656 = vadd.f32 %v2430, %v2620
      %v2657 = vadd.f32 %v2431, %v2623
      %v2659 = vrot.slane %v212, 5
      %v2660 = vrot.slane %v2659, 4
      %v2661 = vrot.slane %v213, 5
      %v2662 = vsel %vm1183, %v2660, %v2661
      %v2663 = vrot.slane %v2661, 4
      %v2664 = vrot.slane %v214, 5
      %v2665 = vsel %vm1183, %v2663, %v2664
      %v2666 = vunpack.c.l.b16 %v2662
      %v2667 = vunpack.c.l.b16 %v2665
      %v2668 = vpack.c.b16 %v2667, %v2666
      %v2670 = vsel %vm659, %v2668, 0
      %v2673 = vsel %vm708, %v223, 0
      %2675 = vmatprep.subr.bf16.mxu0 0
      %2676 = vmatpush1.bf16.msra.mxu0 %v2673
      %2677 = vmatprep.subr.bf16.mxu0 0
      %2678 = vmatpush1.bf16.msra.mxu0 0
      %2679 = vmatprep.subr.bf16.mxu0 0
      %2680 = vmatpush1.bf16.msra.mxu0 0
      %2681 = vmatprep.subr.bf16.mxu0 0
      %2682 = vmatpush1.bf16.msra.mxu0 0
      %2683 = vmatprep.subr.bf16.mxu0 0
      %2684 = vmatpush1.bf16.msra.mxu0 0
      %2685 = vmatprep.subr.bf16.mxu0 0
      %2686 = vmatpush1.bf16.msra.mxu0 0
      %2687 = vmatprep.subr.bf16.mxu0 0
      %2688 = vmatpush1.bf16.msra.mxu0 0
      %2689 = vmatprep.subr.bf16.mxu0 0
      %2690 = vmatpush1.bf16.msra.mxu0 0
      %2691 = vmatprep.subr.bf16.mxu0 0
      %2692 = vmatpush1.bf16.msra.mxu0 0
      %2693 = vmatprep.subr.bf16.mxu0 0
      %2694 = vmatpush1.bf16.msra.mxu0 0
      %2695 = vmatprep.subr.bf16.mxu0 0
      %2696 = vmatpush1.bf16.msra.mxu0 0
      %2697 = vmatprep.subr.bf16.mxu0 0
      %2698 = vmatpush1.bf16.msra.mxu0 0
      %2699 = vmatprep.subr.bf16.mxu0 0
      %2700 = vmatpush1.bf16.msra.mxu0 0
      %2701 = vmatprep.subr.bf16.mxu0 0
      %2702 = vmatpush1.bf16.msra.mxu0 0
      %2703 = vmatprep.subr.bf16.mxu0 0
      %2704 = vmatpush1.bf16.msra.mxu0 0
      %2705 = vmatprep.subr.bf16.mxu0 0
      %2706 = vmatpush1.bf16.msra.mxu0 0
      %2707 = vmatprep.mubr.bf16.mxu0 0
      %2708 = vmatmul.mubr.bf16.gmra.mrb[0].mxu0 %v1351
      %v2709 = vpop.f32.mrb[0].mxu0
      %v2710 = vadd.f32 0.0, %v2709
      %v2711 = vpop.f32.mrb[0].mxu0
      %v2712 = vpop.f32.mrb[0].mxu0
      %v2713 = vadd.f32 0.0, %v2712
      %v2714 = vpop.f32.mrb[0].mxu0
      %2715 = vmatprep.mubr.bf16.mxu0 0
      %2716 = vmatmul.mubr.bf16.gmra.mrb[0].mxu0 %v1354
      %v2717 = vpop.f32.mrb[0].mxu0
      %v2718 = vadd.f32 0.0, %v2717
      %v2719 = vpop.f32.mrb[0].mxu0
      %v2720 = vpop.f32.mrb[0].mxu0
      %v2721 = vadd.f32 0.0, %v2720
      %v2722 = vpop.f32.mrb[0].mxu0
      %2723 = vmatprep.mubr.bf16.mxu0 0
      %2724 = vmatmul.mubr.bf16.gmra.mrb[0].mxu0 %v1357
      %v2725 = vpop.f32.mrb[0].mxu0
      %v2726 = vadd.f32 0.0, %v2725
      %v2727 = vpop.f32.mrb[0].mxu0
      %v2728 = vpop.f32.mrb[0].mxu0
      %v2729 = vadd.f32 0.0, %v2728
      %v2730 = vpop.f32.mrb[0].mxu0
      %2731 = vmatprep.mubr.bf16.mxu0 0
      %2732 = vmatmul.mubr.bf16.gmra.mrb[0].mxu0 %v1360
      %v2733 = vpop.f32.mrb[0].mxu0
      %v2734 = vadd.f32 0.0, %v2733
      %v2735 = vpop.f32.mrb[0].mxu0
      %v2736 = vpop.f32.mrb[0].mxu0
      %v2737 = vadd.f32 0.0, %v2736
      %v2738 = vpop.f32.mrb[0].mxu0
      %2739 = vmatprep.mubr.bf16.mxu0 0
      %2740 = vmatmul.mubr.bf16.gmra.mrb[0].mxu0 %v1363
      %v2741 = vpop.f32.mrb[0].mxu0
      %v2742 = vadd.f32 0.0, %v2741
      %v2743 = vpop.f32.mrb[0].mxu0
      %v2744 = vpop.f32.mrb[0].mxu0
      %v2745 = vadd.f32 0.0, %v2744
      %v2746 = vpop.f32.mrb[0].mxu0
      %2747 = vmatprep.mubr.bf16.mxu0 0
      %2748 = vmatmul.mubr.bf16.gmra.mrb[0].mxu0 %v1366
      %v2749 = vpop.f32.mrb[0].mxu0
      %v2750 = vadd.f32 0.0, %v2749
      %v2751 = vpop.f32.mrb[0].mxu0
      %v2752 = vpop.f32.mrb[0].mxu0
      %v2753 = vadd.f32 0.0, %v2752
      %v2754 = vpop.f32.mrb[0].mxu0
      %2755 = vmatprep.mubr.bf16.mxu0 0
      %2756 = vmatmul.mubr.bf16.gmra.mrb[0].mxu0 %v1369
      %v2757 = vpop.f32.mrb[0].mxu0
      %v2758 = vadd.f32 0.0, %v2757
      %v2759 = vpop.f32.mrb[0].mxu0
      %v2760 = vpop.f32.mrb[0].mxu0
      %v2761 = vadd.f32 0.0, %v2760
      %v2762 = vpop.f32.mrb[0].mxu0
      %2763 = vmatprep.mubr.bf16.mxu0 0
      %2764 = vmatmul.mubr.bf16.gmra.mrb[0].mxu0 %v1372
      %v2765 = vpop.f32.mrb[0].mxu0
      %v2766 = vadd.f32 0.0, %v2765
      %v2767 = vpop.f32.mrb[0].mxu0
      %v2768 = vpop.f32.mrb[0].mxu0
      %v2769 = vadd.f32 0.0, %v2768
      %v2770 = vpop.f32.mrb[0].mxu0
      %2771 = vmatprep.mubr.bf16.mxu0 0
      %2772 = vmatmul.mubr.bf16.gmra.mrb[0].mxu0 %v1375
      %v2773 = vpop.f32.mrb[0].mxu0
      %v2774 = vadd.f32 0.0, %v2773
      %v2775 = vpop.f32.mrb[0].mxu0
      %v2776 = vpop.f32.mrb[0].mxu0
      %v2777 = vadd.f32 0.0, %v2776
      %v2778 = vpop.f32.mrb[0].mxu0
      %2779 = vmatprep.mubr.bf16.mxu0 0
      %2780 = vmatmul.mubr.bf16.gmra.mrb[0].mxu0 %v1378
      %v2781 = vpop.f32.mrb[0].mxu0
      %v2782 = vadd.f32 0.0, %v2781
      %v2783 = vpop.f32.mrb[0].mxu0
      %v2784 = vpop.f32.mrb[0].mxu0
      %v2785 = vadd.f32 0.0, %v2784
      %v2786 = vpop.f32.mrb[0].mxu0
      %2787 = vmatprep.mubr.bf16.mxu0 0
      %2788 = vmatmul.mubr.bf16.gmra.mrb[0].mxu0 %v1381
      %v2789 = vpop.f32.mrb[0].mxu0
      %v2790 = vadd.f32 0.0, %v2789
      %v2791 = vpop.f32.mrb[0].mxu0
      %v2792 = vpop.f32.mrb[0].mxu0
      %v2793 = vadd.f32 0.0, %v2792
      %v2794 = vpop.f32.mrb[0].mxu0
      %2795 = vmatprep.mubr.bf16.mxu0 0
      %2796 = vmatmul.mubr.bf16.gmra.mrb[0].mxu0 %v1384
      %v2797 = vpop.f32.mrb[0].mxu0
      %v2798 = vadd.f32 0.0, %v2797
      %v2799 = vpop.f32.mrb[0].mxu0
      %v2800 = vpop.f32.mrb[0].mxu0
      %v2801 = vadd.f32 0.0, %v2800
      %v2802 = vpop.f32.mrb[0].mxu0
      %2803 = vmatprep.mubr.bf16.mxu0 0
      %2804 = vmatmul.mubr.bf16.gmra.mrb[0].mxu0 %v1387
      %v2805 = vpop.f32.mrb[0].mxu0
      %v2806 = vadd.f32 0.0, %v2805
      %v2807 = vpop.f32.mrb[0].mxu0
      %v2808 = vpop.f32.mrb[0].mxu0
      %v2809 = vadd.f32 0.0, %v2808
      %v2810 = vpop.f32.mrb[0].mxu0
      %2811 = vmatprep.mubr.bf16.mxu0 0
      %2812 = vmatmul.mubr.bf16.gmra.mrb[0].mxu0 %v1390
      %v2813 = vpop.f32.mrb[0].mxu0
      %v2814 = vadd.f32 0.0, %v2813
      %v2815 = vpop.f32.mrb[0].mxu0
      %v2816 = vpop.f32.mrb[0].mxu0
      %v2817 = vadd.f32 0.0, %v2816
      %v2818 = vpop.f32.mrb[0].mxu0
      %2819 = vmatprep.mubr.bf16.mxu0 0
      %2820 = vmatmul.mubr.bf16.gmra.mrb[0].mxu0 %v2030
      %v2821 = vpop.f32.mrb[0].mxu0
      %v2822 = vadd.f32 0.0, %v2821
      %v2823 = vpop.f32.mrb[0].mxu0
      %v2824 = vpop.f32.mrb[0].mxu0
      %v2825 = vadd.f32 0.0, %v2824
      %v2826 = vpop.f32.mrb[0].mxu0
      %2827 = vmatprep.mubr.bf16.mxu0 0
      %2828 = vmatmul.mubr.bf16.gmra.mrb[0].mxu0 %v2670
      %v2829 = vpop.f32.mrb[0].mxu0
      %v2830 = vadd.f32 0.0, %v2829
      %v2831 = vpop.f32.mrb[0].mxu0
      %v2832 = vpop.f32.mrb[0].mxu0
      %v2833 = vadd.f32 0.0, %v2832
      %v2834 = vpop.f32.mrb[0].mxu0
      %2835 = vdwg.mxu0
      %v2836 = vadd.f32 %v2626, %v2710
      %v2837 = vadd.f32 %v2627, %v2713
      %v2838 = vadd.f32 %v2628, %v2718
      %v2839 = vadd.f32 %v2629, %v2721
      %v2840 = vadd.f32 %v2630, %v2726
      %v2841 = vadd.f32 %v2631, %v2729
      %v2842 = vadd.f32 %v2632, %v2734
      %v2843 = vadd.f32 %v2633, %v2737
      %v2844 = vadd.f32 %v2634, %v2742
      %v2845 = vadd.f32 %v2635, %v2745
      %v2846 = vadd.f32 %v2636, %v2750
      %v2847 = vadd.f32 %v2637, %v2753
      %v2848 = vadd.f32 %v2638, %v2758
      %v2849 = vadd.f32 %v2639, %v2761
      %v2850 = vadd.f32 %v2640, %v2766
      %v2851 = vadd.f32 %v2641, %v2769
      %v2852 = vadd.f32 %v2642, %v2774
      %v2853 = vadd.f32 %v2643, %v2777
      %v2854 = vadd.f32 %v2644, %v2782
      %v2855 = vadd.f32 %v2645, %v2785
      %v2856 = vadd.f32 %v2646, %v2790
      %v2857 = vadd.f32 %v2647, %v2793
      %v2858 = vadd.f32 %v2648, %v2798
      %v2859 = vadd.f32 %v2649, %v2801
      %v2860 = vadd.f32 %v2650, %v2806
      %v2861 = vadd.f32 %v2651, %v2809
      %v2862 = vadd.f32 %v2652, %v2814
      %v2863 = vadd.f32 %v2653, %v2817
      %v2864 = vadd.f32 %v2654, %v2822
      %v2865 = vadd.f32 %v2655, %v2825
      %v2866 = vadd.f32 %v2656, %v2830
      %v2867 = vadd.f32 %v2657, %v2833
      %v2868 = vld [vmem:[%s2] sm:$0x1]
      %v2869 = vadd.f32 %v2836, %v2837
      %v2870 = vadd.f32 %v2869, %v2838
      %v2871 = vadd.f32 %v2870, %v2839
      %v2872 = vadd.f32 %v2871, %v2840
      %v2873 = vadd.f32 %v2872, %v2841
      %v2874 = vadd.f32 %v2873, %v2842
      %v2875 = vadd.f32 %v2874, %v2843
      %v2876 = vadd.f32 %v2875, %v2844
      %v2877 = vadd.f32 %v2876, %v2845
      %v2878 = vadd.f32 %v2877, %v2846
      %v2879 = vadd.f32 %v2878, %v2847
      %v2880 = vadd.f32 %v2879, %v2848
      %v2881 = vadd.f32 %v2880, %v2849
      %v2882 = vadd.f32 %v2881, %v2850
      %v2883 = vadd.f32 %v2882, %v2851
      %v2884 = vadd.f32 %v2883, %v2852
      %v2885 = vadd.f32 %v2884, %v2853
      %v2886 = vadd.f32 %v2885, %v2854
      %v2887 = vadd.f32 %v2886, %v2855
      %v2888 = vadd.f32 %v2887, %v2856
      %v2889 = vadd.f32 %v2888, %v2857
      %v2890 = vadd.f32 %v2889, %v2858
      %v2891 = vadd.f32 %v2890, %v2859
      %v2892 = vadd.f32 %v2891, %v2860
      %v2893 = vadd.f32 %v2892, %v2861
      %v2894 = vadd.f32 %v2893, %v2862
      %v2895 = vadd.f32 %v2894, %v2863
      %v2896 = vadd.f32 %v2895, %v2864
      %v2897 = vadd.f32 %v2896, %v2865
      %v2898 = vadd.f32 %v2897, %v2866
      %v2899 = vadd.f32 %v2898, %v2867
      %v2900 = vrot.slane %v2899, 4
      %v2901 = vadd.f32 %v2899, %v2900
      %v2902 = vrot.slane %v2901, 2
      %v2903 = vadd.f32 %v2901, %v2902
      %v2904 = vrot.slane %v2903, 1
      %v2905 = vadd.f32 %v2903, %v2904
      %v2906 = vadd.f32 %v2868, %v2905
      %2907 = vst [vmem:[%s2] sm:$0x1] %v2906
      %v2908 = vld [vmem:[%s3] sm:$0x1]
      %v2909 = vmul.f32 %v2836, %v2836
      %v2910 = vmul.f32 %v2837, %v2837
      %v2911 = vmul.f32 %v2838, %v2838
      %v2912 = vmul.f32 %v2839, %v2839
      %v2913 = vmul.f32 %v2840, %v2840
      %v2914 = vmul.f32 %v2841, %v2841
      %v2915 = vmul.f32 %v2842, %v2842
      %v2916 = vmul.f32 %v2843, %v2843
      %v2917 = vmul.f32 %v2844, %v2844
      %v2918 = vmul.f32 %v2845, %v2845
      %v2919 = vmul.f32 %v2846, %v2846
      %v2920 = vmul.f32 %v2847, %v2847
      %v2921 = vmul.f32 %v2848, %v2848
      %v2922 = vmul.f32 %v2849, %v2849
      %v2923 = vmul.f32 %v2850, %v2850
      %v2924 = vmul.f32 %v2851, %v2851
      %v2925 = vmul.f32 %v2852, %v2852
      %v2926 = vmul.f32 %v2853, %v2853
      %v2927 = vmul.f32 %v2854, %v2854
      %v2928 = vmul.f32 %v2855, %v2855
      %v2929 = vmul.f32 %v2856, %v2856
      %v2930 = vmul.f32 %v2857, %v2857
      %v2931 = vmul.f32 %v2858, %v2858
      %v2932 = vmul.f32 %v2859, %v2859
      %v2933 = vmul.f32 %v2860, %v2860
      %v2934 = vmul.f32 %v2861, %v2861
      %v2935 = vmul.f32 %v2862, %v2862
      %v2936 = vmul.f32 %v2863, %v2863
      %v2937 = vmul.f32 %v2864, %v2864
      %v2938 = vmul.f32 %v2865, %v2865
      %v2939 = vmul.f32 %v2866, %v2866
      %v2940 = vmul.f32 %v2867, %v2867
      %v2941 = vadd.f32 %v2909, %v2910
      %v2942 = vadd.f32 %v2941, %v2911
      %v2943 = vadd.f32 %v2942, %v2912
      %v2944 = vadd.f32 %v2943, %v2913
      %v2945 = vadd.f32 %v2944, %v2914
      %v2946 = vadd.f32 %v2945, %v2915
      %v2947 = vadd.f32 %v2946, %v2916
      %v2948 = vadd.f32 %v2947, %v2917
      %v2949 = vadd.f32 %v2948, %v2918
      %v2950 = vadd.f32 %v2949, %v2919
      %v2951 = vadd.f32 %v2950, %v2920
      %v2952 = vadd.f32 %v2951, %v2921
      %v2953 = vadd.f32 %v2952, %v2922
      %v2954 = vadd.f32 %v2953, %v2923
      %v2955 = vadd.f32 %v2954, %v2924
      %v2956 = vadd.f32 %v2955, %v2925
      %v2957 = vadd.f32 %v2956, %v2926
      %v2958 = vadd.f32 %v2957, %v2927
      %v2959 = vadd.f32 %v2958, %v2928
      %v2960 = vadd.f32 %v2959, %v2929
      %v2961 = vadd.f32 %v2960, %v2930
      %v2962 = vadd.f32 %v2961, %v2931
      %v2963 = vadd.f32 %v2962, %v2932
      %v2964 = vadd.f32 %v2963, %v2933
      %v2965 = vadd.f32 %v2964, %v2934
      %v2966 = vadd.f32 %v2965, %v2935
      %v2967 = vadd.f32 %v2966, %v2936
      %v2968 = vadd.f32 %v2967, %v2937
      %v2969 = vadd.f32 %v2968, %v2938
      %v2970 = vadd.f32 %v2969, %v2939
      %v2971 = vadd.f32 %v2970, %v2940
      %v2972 = vrot.slane %v2971, 4
      %v2973 = vadd.f32 %v2971, %v2972
      %v2974 = vrot.slane %v2973, 2
      %v2975 = vadd.f32 %v2973, %v2974
      %v2976 = vrot.slane %v2975, 1
      %v2977 = vadd.f32 %v2975, %v2976
      %v2978 = vadd.f32 %v2908, %v2977
      %2979 = vst [vmem:[%s3] sm:$0x1] %v2978
      // Predicated region
      $region33: #{_lambda_.6} parent=27 // pred_check
        %p2980 = pneg %p75
      $region34: #{_lambda_.6} parent=27 // pred_check_branch
        %2982 = sbr.rel (%p2980) target = $region36
      $region35: #{_lambda_.6} parent=27 // pred_region
        _
      $region36: #{_lambda_.6} parent=27 // pred_fallthru
        _
      // Predicated region
      $region37: #{_lambda_.6} parent=27 // pred_check
        %p2983 = pneg %p96
      $region38: #{_lambda_.6} parent=27 // pred_check_branch
        %2985 = sbr.rel (%p2983) target = $region40
      $region39: #{_lambda_.6} parent=27 // pred_region
        _
      $region40: #{_lambda_.6} parent=27 // pred_fallthru
        _
      // Predicated region
      $region41: #{_lambda_.6} parent=27 // pred_check
        %p2986 = pneg %p75
      $region42: #{_lambda_.6} parent=27 // pred_check_branch
        %2988 = sbr.rel (%p2986) target = $region44
      $region43: #{_lambda_.6} parent=27 // pred_region
        _
      $region44: #{_lambda_.6} parent=27 // pred_fallthru
        _
      // Predicated region
      $region45: #{_lambda_.6} parent=27 // pred_check
        %p2989 = pneg %p96
      $region46: #{_lambda_.6} parent=27 // pred_check_branch
        %2991 = sbr.rel (%p2989) target = $region48
      $region47: #{_lambda_.6} parent=27 // pred_region
        _
      $region48: #{_lambda_.6} parent=27 // pred_fallthru
        _
    $region28: #{_lambda_.6} parent=5 // pred_fallthru
      _
    %p2992 = scmp.le.s32.totalorder 2, %s10
    // Predicated region
    $region49: #{_lambda_.6} parent=5 // pred_check
      %p2993 = pneg %p2992
    $region50: #{_lambda_.6} parent=5 // pred_check_branch
      %2995 = sbr.rel (%p2993) target = $region52
    $region51: #{_lambda_.6} parent=5 // pred_region
      %s2996 = ssub.s32 %s10, 2
    $region52: #{_lambda_.6} parent=5 // pred_fallthru
      _
  $region6: #{_lambda_.6} parent=0 // loop_footer
    %s14 = sadd.s32 1, %s10
  $region7: #{_lambda_.6} parent=0 // loop_footer_branch
    %9 = sbr.rel target = $region3
  $region8: #{_lambda_.6} parent=0 // loop_exit
    _

// kernel: _lambda_.7
$region0: #{_lambda_.7}
  #allocation0 [shape = 'u32[]', space=smem, size = 0x4, offset = 0x4, fixed_abs, tag = 'smem constant byte address 0x4 - core index']
  #allocation1 [shape = 'u32[144,128]{1,0:T(1,128)}', space=vmem, size = 0x12000, scoped, tag = 'internal scratch']
  %s0 = inlined_call_operand.vmem [shape: bf16[2,18,18,8], index: 0, kind: input, shape index: {}]
  %s1 = inlined_call_operand.vmem [shape: bf16[9,8,128], index: 1, kind: input, shape index: {}]
  %s2 = inlined_call_operand.vmem [shape: f32[1,128], index: 2, kind: input, shape index: {}]
  %s3 = inlined_call_operand.vmem [shape: f32[1,128], index: 3, kind: input, shape index: {}]
  %s4 = inlined_call_operand.vmem [shape: f32[512,128], index: 4, kind: output, shape index: {}]
  %s5 = sld [smem:[#allocation0]]
  $region49: #{_lambda_.7} parent=0
    _
  %s7 = ssub.s32 1, %s5
  %s8 = scalar_select 0, %s7, %s5
  loop: start=0, step=1, limit=4
  $region2: #{_lambda_.7} parent=0 // loop_pre_header
    _
  $region3: #{_lambda_.7} parent=0 // loop_header
    %s10 = sphi 0, %s14
    %p11 = scmp.ge.s32.totalorder %s10, 4
    %s20 = sphi 0, %s22
    %s23 = sphi 0, %s20
    %s24 = sphi 0, %s23
    %s40 = sphi 0, %s24
    %s44 = sphi 0, %s44
    %s46 = sphi 0, %s44
    %s47 = sphi 0, %s46
    %s61 = sphi 0, %s47
    %s65 = sphi 0, %s65
    %s67 = sphi 0, %s65
    %s68 = sphi 0, %s67
    %s82 = sphi 0, %s68
    %s86 = sphi 0, %s86
    %s88 = sphi 0, %s86
    %s89 = sphi 0, %s88
    %s103 = sphi 0, %s89
    %s109 = sphi 0, %s111
    %s112 = sphi 0, %s109
    %s113 = sphi 0, %s112
    %s129 = sphi 0, %s113
  $region4: #{_lambda_.7} parent=0 // loop_header_branch
    %13 = sbr.rel (%p11) target = $region8
  $region5: #{_lambda_.7} parent=0 // loop_body
    %s15 = ssub.s32 %s10, 1
    %s16 = ssub.s32 %s10, 2
    %s17 = sadd.s32 %s10, 1
    %s18 = ssub.s32 %s10, %s17
    %p19 = scmp.eq.s32.totalorder %s18, 0
    %s21 = sadd.s32 %s20, 1
    %s22 = scalar_select %p19, %s20, %s21
    %p25 = pneg %p19
    %p26 = scmp.eq.s32.totalorder %s10, 1
    %p27 = por %p25, %p26
    %p28 = scmp.ne.s32.totalorder %s20, %s23
    %p29 = scmp.eq.s32.totalorder %s10, 0
    %p30 = por %p28, %p29
    %p31 = scmp.ne.s32.totalorder %s20, %s23
    %p32 = scmp.eq.s32.totalorder %s15, 1
    %p33 = por %p31, %p32
    %p34 = scmp.ne.s32.totalorder %s23, %s24
    %p35 = scmp.eq.s32.totalorder %s15, 0
    %p36 = por %p34, %p35
    %p37 = scmp.ne.s32.totalorder %s23, %s24
    %p38 = scmp.eq.s32.totalorder %s16, 1
    %p39 = por %p37, %p38
    %p41 = scmp.ne.s32.totalorder %s24, %s40
    %p42 = scmp.eq.s32.totalorder %s16, 0
    %p43 = por %p41, %p42
    %s45 = sadd.s32 %s44, 1
    %p48 = scmp.eq.s32.totalorder %s10, 1
    %p49 = scmp.ne.s32.totalorder %s44, %s46
    %p50 = scmp.eq.s32.totalorder %s10, 0
    %p51 = por %p49, %p50
    %p52 = scmp.ne.s32.totalorder %s44, %s46
    %p53 = scmp.eq.s32.totalorder %s15, 1
    %p54 = por %p52, %p53
    %p55 = scmp.ne.s32.totalorder %s46, %s47
    %p56 = scmp.eq.s32.totalorder %s15, 0
    %p57 = por %p55, %p56
    %p58 = scmp.ne.s32.totalorder %s46, %s47
    %p59 = scmp.eq.s32.totalorder %s16, 1
    %p60 = por %p58, %p59
    %p62 = scmp.ne.s32.totalorder %s47, %s61
    %p63 = scmp.eq.s32.totalorder %s16, 0
    %p64 = por %p62, %p63
    %s66 = sadd.s32 %s65, 1
    %p69 = scmp.eq.s32.totalorder %s10, 1
    %p70 = scmp.ne.s32.totalorder %s65, %s67
    %p71 = scmp.eq.s32.totalorder %s10, 0
    %p72 = por %p70, %p71
    %p73 = scmp.ne.s32.totalorder %s65, %s67
    %p74 = scmp.eq.s32.totalorder %s15, 1
    %p75 = por %p73, %p74
    %p76 = scmp.ne.s32.totalorder %s67, %s68
    %p77 = scmp.eq.s32.totalorder %s15, 0
    %p78 = por %p76, %p77
    %p79 = scmp.ne.s32.totalorder %s67, %s68
    %p80 = scmp.eq.s32.totalorder %s16, 1
    %p81 = por %p79, %p80
    %p83 = scmp.ne.s32.totalorder %s68, %s82
    %p84 = scmp.eq.s32.totalorder %s16, 0
    %p85 = por %p83, %p84
    %s87 = sadd.s32 %s86, 1
    %p90 = scmp.eq.s32.totalorder %s10, 1
    %p91 = scmp.ne.s32.totalorder %s86, %s88
    %p92 = scmp.eq.s32.totalorder %s10, 0
    %p93 = por %p91, %p92
    %p94 = scmp.ne.s32.totalorder %s86, %s88
    %p95 = scmp.eq.s32.totalorder %s15, 1
    %p96 = por %p94, %p95
    %p97 = scmp.ne.s32.totalorder %s88, %s89
    %p98 = scmp.eq.s32.totalorder %s15, 0
    %p99 = por %p97, %p98
    %p100 = scmp.ne.s32.totalorder %s88, %s89
    %p101 = scmp.eq.s32.totalorder %s16, 1
    %p102 = por %p100, %p101
    %p104 = scmp.ne.s32.totalorder %s89, %s103
    %p105 = scmp.eq.s32.totalorder %s16, 0
    %p106 = por %p104, %p105
    %s107 = ssub.s32 %s10, %s17
    %p108 = scmp.eq.s32.totalorder %s107, 0
    %s110 = sadd.s32 %s109, 1
    %s111 = scalar_select %p108, %s109, %s110
    %p114 = pneg %p108
    %p115 = scmp.eq.s32.totalorder %s10, 1
    %p116 = por %p114, %p115
    %p117 = scmp.ne.s32.totalorder %s109, %s112
    %p118 = scmp.eq.s32.totalorder %s10, 0
    %p119 = por %p117, %p118
    %p120 = scmp.ne.s32.totalorder %s109, %s112
    %p121 = scmp.eq.s32.totalorder %s15, 1
    %p122 = por %p120, %p121
    %p123 = scmp.ne.s32.totalorder %s112, %s113
    %p124 = scmp.eq.s32.totalorder %s15, 0
    %p125 = por %p123, %p124
    %p126 = scmp.ne.s32.totalorder %s112, %s113
    %p127 = scmp.eq.s32.totalorder %s16, 1
    %p128 = por %p126, %p127
    %p130 = scmp.ne.s32.totalorder %s113, %s129
    %p131 = scmp.eq.s32.totalorder %s16, 0
    %p132 = por %p130, %p131
    %p133 = scmp.le.s32.totalorder 1, %s10
    %p134 = scmp.lt.s32.totalorder %s10, 3
    %p135 = pnand %p133, %p134
    %p136 = pneg %p135
    // Predicated region
    $region9: #{_lambda_.7} parent=5 // pred_check
      _
    $region10: #{_lambda_.7} parent=5 // pred_check_branch
      %138 = sbr.rel (%p135) target = $region12
    $region11: #{_lambda_.7} parent=5 // pred_region
      %s139 = ssub.s32 %s10, 1
      // Predicated region
      $region13: #{_lambda_.7} parent=11 // pred_check
        %p140 = pneg %p57
      $region14: #{_lambda_.7} parent=11 // pred_check_branch
        %142 = sbr.rel (%p140) target = $region16
      $region15: #{_lambda_.7} parent=11 // pred_region
        _
      $region16: #{_lambda_.7} parent=11 // pred_fallthru
        _
      // Predicated region
      $region17: #{_lambda_.7} parent=11 // pred_check
        %p143 = pneg %p78
      $region18: #{_lambda_.7} parent=11 // pred_check_branch
        %145 = sbr.rel (%p143) target = $region20
      $region19: #{_lambda_.7} parent=11 // pred_region
        _
      $region20: #{_lambda_.7} parent=11 // pred_fallthru
        _
      // Predicated region
      $region21: #{_lambda_.7} parent=11 // pred_check
        %p146 = pneg %p99
      $region22: #{_lambda_.7} parent=11 // pred_check_branch
        %148 = sbr.rel (%p146) target = $region24
      $region23: #{_lambda_.7} parent=11 // pred_region
        _
      $region24: #{_lambda_.7} parent=11 // pred_fallthru
        _
    $region12: #{_lambda_.7} parent=5 // pred_fallthru
      _
    %p149 = scmp.lt.s32.totalorder %s10, 2
    // Predicated region
    $region25: #{_lambda_.7} parent=5 // pred_check
      %p150 = pneg %p149
    $region26: #{_lambda_.7} parent=5 // pred_check_branch
      %152 = sbr.rel (%p150) target = $region28
    $region27: #{_lambda_.7} parent=5 // pred_region
      // Predicated region
      $region29: #{_lambda_.7} parent=27 // pred_check
        %p153 = pneg %p30
      $region30: #{_lambda_.7} parent=27 // pred_check_branch
        %155 = sbr.rel (%p153) target = $region32
      $region31: #{_lambda_.7} parent=27 // pred_region
        %p156 = scmp.lt.s32.totalorder %s10, 1
        %s157 = scalar_select %p156, %s10, 1
        %s158 = smul.addr %s157, 54
        %s159 = smul.addr %s158, 4
        %s160 = scalar_lea.vmem %s0, %s159
      $region32: #{_lambda_.7} parent=27 // pred_fallthru
        _
    $region28: #{_lambda_.7} parent=5 // pred_fallthru
      _
    %p161 = scmp.le.s32.totalorder 1, %s10
    %p162 = scmp.lt.s32.totalorder %s10, 3
    %p163 = pnand %p161, %p162
    %p164 = pneg %p163
    // Predicated region
    $region33: #{_lambda_.7} parent=5 // pred_check
      _
    $region34: #{_lambda_.7} parent=5 // pred_check_branch
      %166 = sbr.rel (%p163) target = $region36
    $region35: #{_lambda_.7} parent=5 // pred_region
      %s167 = ssub.s32 %s10, 1
      %p168 = scmp.lt.s32.totalorder %s15, 1
      %s169 = scalar_select %p168, %s15, 1
      %s170 = smul.addr %s169, 54
      %s171 = smul.addr %s170, 4
      %s172 = scalar_lea.vmem %s0, %s171
      %p173 = pneg %p36
      %p174 = pneg %p33
      %p175 = pneg %p57
      %p176 = pneg %p54
      %p177 = pneg %p78
      %p178 = pneg %p75
      %p179 = pneg %p99
      %p180 = pneg %p96
      %p181 = pneg %p125
      %p182 = pneg %p122
      %s183 = smul.u32 32, %s15
      %p184 = scmp.lt.s32.totalorder %s183, 63
      %s185 = scalar_select %p184, %s183, 63
      %s186 = smul.addr %s185, 8
      %s187 = scalar_lea.vmem %s4, %s186
      %p188 = scmp.lt.s32.totalorder %s15, 1
      %s189 = scalar_select %p188, %s15, 1
      %s190 = smul.addr %s189, 54
      %s191 = smul.addr %s190, 4
      %s192 = scalar_lea.vmem %s0, %s191
      %s193 = smul.u32 32, %s15
      %p194 = scmp.lt.s32.totalorder %s193, 63
      %s195 = scalar_select %p194, %s193, 63
      %s196 = smul.addr %s195, 8
      %s197 = scalar_lea.vmem %s4, %s196
      %s198 = smul.u32 32, %s15
      %v200 = vld [vmem:[%s192] sm:$0xf]
      %v201 = vld [vmem:[%s192 + $0x4] sm:$0xf]
      %v202 = vld [vmem:[%s192 + $0x8] sm:$0x1]
      %v203 = vld [vmem:[%s192 + $0xc] sm:$0xf]
      %v204 = vld [vmem:[%s192 + $0x10] sm:$0xf]
      %v205 = vld [vmem:[%s192 + $0x14] sm:$0x1]
      %v206 = vld [vmem:[%s192 + $0x18] sm:$0xf]
      %v207 = vld [vmem:[%s192 + $0x1c] sm:$0xf]
      %v208 = vld [vmem:[%s192 + $0x20] sm:$0x1]
      %v209 = vld [vmem:[%s192 + $0x24] sm:$0xf]
      %v210 = vld [vmem:[%s192 + $0x28] sm:$0xf]
      %v211 = vld [vmem:[%s192 + $0x2c] sm:$0x1]
      %v212 = vld [vmem:[%s192 + $0x30] sm:$0xf]
      %v213 = vld [vmem:[%s192 + $0x34] sm:$0xf]
      %v214 = vld [vmem:[%s192 + $0x38] sm:$0x1]
      %v215 = vld [vmem:[%s192 + $0x3c] sm:$0xf]
      %v216 = vld [vmem:[%s192 + $0x40] sm:$0xf]
      %v217 = vld [vmem:[%s192 + $0x44] sm:$0x1]
      %v218 = vld [vmem:[%s192 + $0x48] sm:$0xf]
      %v219 = vld [vmem:[%s192 + $0x4c] sm:$0xf]
      %v220 = vld [vmem:[%s192 + $0x50] sm:$0x1]
      %v221 = vld [vmem:[%s192 + $0x54] sm:$0xf]
      %v222 = vld [vmem:[%s192 + $0x58] sm:$0xf]
      %v223 = vld [vmem:[%s192 + $0x5c] sm:$0x1]
      %v224 = vld [vmem:[%s192 + $0x60] sm:$0xf]
      %v225 = vld [vmem:[%s192 + $0x64] sm:$0xf]
      %v226 = vld [vmem:[%s192 + $0x68] sm:$0x1]
      %v227 = vld [vmem:[%s192 + $0x6c] sm:$0xf]
      %v228 = vld [vmem:[%s192 + $0x70] sm:$0xf]
      %v229 = vld [vmem:[%s192 + $0x74] sm:$0x1]
      %v230 = vld [vmem:[%s192 + $0x78] sm:$0xf]
      %v231 = vld [vmem:[%s192 + $0x7c] sm:$0xf]
      %v232 = vld [vmem:[%s192 + $0x80] sm:$0x1]
      %v233 = vld [vmem:[%s192 + $0x84] sm:$0xf]
      %v234 = vld [vmem:[%s192 + $0x88] sm:$0xf]
      %v235 = vld [vmem:[%s192 + $0x8c] sm:$0x1]
      %v236 = vld [vmem:[%s192 + $0x90] sm:$0xf]
      %v237 = vld [vmem:[%s192 + $0x94] sm:$0xf]
      %v238 = vld [vmem:[%s192 + $0x98] sm:$0x1]
      %v239 = vld [vmem:[%s192 + $0x9c] sm:$0xf]
      %v240 = vld [vmem:[%s192 + $0xa0] sm:$0xf]
      %v241 = vld [vmem:[%s192 + $0xa4] sm:$0x1]
      %v242 = vld [vmem:[%s192 + $0xa8] sm:$0xf]
      %v243 = vld [vmem:[%s192 + $0xac] sm:$0xf]
      %v244 = vld [vmem:[%s192 + $0xb0] sm:$0x1]
      %v245 = vld [vmem:[%s192 + $0xb4] sm:$0xf]
      %v246 = vld [vmem:[%s192 + $0xb8] sm:$0xf]
      %v247 = vld [vmem:[%s192 + $0xbc] sm:$0x1]
      %v248 = vld [vmem:[%s192 + $0xc0] sm:$0xf]
      %v249 = vld [vmem:[%s192 + $0xc4] sm:$0xf]
      %v250 = vld [vmem:[%s192 + $0xc8] sm:$0x1]
      %v251 = vld [vmem:[%s192 + $0xcc] sm:$0xf]
      %v252 = vld [vmem:[%s192 + $0xd0] sm:$0xf]
      %v253 = vld [vmem:[%s192 + $0xd4] sm:$0x1]
      %v254 = vld [vmem:[%s1] sm:$0xf]
      %v255 = vld [vmem:[%s1 + $0x4] sm:$0xf]
      %v256 = vld [vmem:[%s1 + $0x8] sm:$0xf]
      %v257 = vld [vmem:[%s1 + $0xc] sm:$0xf]
      %v258 = vld [vmem:[%s1 + $0x10] sm:$0xf]
      %v259 = vld [vmem:[%s1 + $0x14] sm:$0xf]
      %v260 = vld [vmem:[%s1 + $0x18] sm:$0xf]
      %v261 = vld [vmem:[%s1 + $0x1c] sm:$0xf]
      %v262 = vld [vmem:[%s1 + $0x20] sm:$0xf]
      %vm263 = vsmask.f32 3328
      %vm264 = vsmask.f32 7440
      %vm265 = vmor %vm263, %vm264
      %v267 = vshrl.u32 %v200, 16
      %v269 = vrot.slane %v267, 4
      %v270 = vshll.u32 %v200, 16
      %v272 = vrot.slane %v270, 5
      %v273 = vor.u32 %v269, %v272
      %v274 = vrot.slane %v273, 4
      %v276 = vshll.u32 %v201, 16
      %v278 = vrot.slane %v276, 5
      %v279 = vsel %vm265, %v274, %v278
      %v280 = vshrl.u32 %v201, 16
      %v282 = vrot.slane %v280, 4
      %v283 = vor.u32 %v282, %v278
      %v284 = vrot.slane %v283, 4
      %v286 = vshll.u32 %v202, 16
      %v288 = vrot.slane %v286, 5
      %v289 = vsel %vm265, %v284, %v288
      %v291 = vshrl.u32 %v203, 16
      %v293 = vrot.slane %v291, 4
      %v294 = vshll.u32 %v203, 16
      %v296 = vrot.slane %v294, 5
      %v297 = vor.u32 %v293, %v296
      %v298 = vrot.slane %v297, 4
      %v300 = vshll.u32 %v204, 16
      %v302 = vrot.slane %v300, 5
      %v303 = vsel %vm265, %v298, %v302
      %v304 = vshrl.u32 %v204, 16
      %v306 = vrot.slane %v304, 4
      %v307 = vor.u32 %v306, %v302
      %v308 = vrot.slane %v307, 4
      %v310 = vshll.u32 %v205, 16
      %v312 = vrot.slane %v310, 5
      %v313 = vsel %vm265, %v308, %v312
      %v315 = vshrl.u32 %v206, 16
      %v317 = vrot.slane %v315, 4
      %v318 = vshll.u32 %v206, 16
      %v320 = vrot.slane %v318, 5
      %v321 = vor.u32 %v317, %v320
      %v322 = vrot.slane %v321, 4
      %v324 = vshll.u32 %v207, 16
      %v326 = vrot.slane %v324, 5
      %v327 = vsel %vm265, %v322, %v326
      %v328 = vshrl.u32 %v207, 16
      %v330 = vrot.slane %v328, 4
      %v331 = vor.u32 %v330, %v326
      %v332 = vrot.slane %v331, 4
      %v334 = vshll.u32 %v208, 16
      %v336 = vrot.slane %v334, 5
      %v337 = vsel %vm265, %v332, %v336
      %v339 = vshrl.u32 %v209, 16
      %v341 = vrot.slane %v339, 4
      %v342 = vshll.u32 %v209, 16
      %v344 = vrot.slane %v342, 5
      %v345 = vor.u32 %v341, %v344
      %v346 = vrot.slane %v345, 4
      %v348 = vshll.u32 %v210, 16
      %v350 = vrot.slane %v348, 5
      %v351 = vsel %vm265, %v346, %v350
      %v352 = vshrl.u32 %v210, 16
      %v354 = vrot.slane %v352, 4
      %v355 = vor.u32 %v354, %v350
      %v356 = vrot.slane %v355, 4
      %v358 = vshll.u32 %v211, 16
      %v360 = vrot.slane %v358, 5
      %v361 = vsel %vm265, %v356, %v360
      %v363 = vshrl.u32 %v212, 16
      %v365 = vrot.slane %v363, 4
      %v366 = vshll.u32 %v212, 16
      %v368 = vrot.slane %v366, 5
      %v369 = vor.u32 %v365, %v368
      %v370 = vrot.slane %v369, 4
      %v372 = vshll.u32 %v213, 16
      %v374 = vrot.slane %v372, 5
      %v375 = vsel %vm265, %v370, %v374
      %v376 = vshrl.u32 %v213, 16
      %v378 = vrot.slane %v376, 4
      %v379 = vor.u32 %v378, %v374
      %v380 = vrot.slane %v379, 4
      %v382 = vshll.u32 %v214, 16
      %v384 = vrot.slane %v382, 5
      %v385 = vsel %vm265, %v380, %v384
      %v387 = vshrl.u32 %v215, 16
      %v389 = vrot.slane %v387, 4
      %v390 = vshll.u32 %v215, 16
      %v392 = vrot.slane %v390, 5
      %v393 = vor.u32 %v389, %v392
      %v394 = vrot.slane %v393, 4
      %v396 = vshll.u32 %v216, 16
      %v398 = vrot.slane %v396, 5
      %v399 = vsel %vm265, %v394, %v398
      %v400 = vshrl.u32 %v216, 16
      %v402 = vrot.slane %v400, 4
      %v403 = vor.u32 %v402, %v398
      %v404 = vrot.slane %v403, 4
      %v406 = vshll.u32 %v217, 16
      %v408 = vrot.slane %v406, 5
      %v409 = vsel %vm265, %v404, %v408
      %v411 = vshrl.u32 %v218, 16
      %v413 = vrot.slane %v411, 4
      %v414 = vshll.u32 %v218, 16
      %v416 = vrot.slane %v414, 5
      %v417 = vor.u32 %v413, %v416
      %v418 = vrot.slane %v417, 4
      %v420 = vshll.u32 %v219, 16
      %v422 = vrot.slane %v420, 5
      %v423 = vsel %vm265, %v418, %v422
      %v424 = vshrl.u32 %v219, 16
      %v426 = vrot.slane %v424, 4
      %v427 = vor.u32 %v426, %v422
      %v428 = vrot.slane %v427, 4
      %v430 = vshll.u32 %v220, 16
      %v432 = vrot.slane %v430, 5
      %v433 = vsel %vm265, %v428, %v432
      %v435 = vshrl.u32 %v221, 16
      %v437 = vrot.slane %v435, 4
      %v438 = vshll.u32 %v221, 16
      %v440 = vrot.slane %v438, 5
      %v441 = vor.u32 %v437, %v440
      %v442 = vrot.slane %v441, 4
      %v444 = vshll.u32 %v222, 16
      %v446 = vrot.slane %v444, 5
      %v447 = vsel %vm265, %v442, %v446
      %v448 = vshrl.u32 %v222, 16
      %v450 = vrot.slane %v448, 4
      %v451 = vor.u32 %v450, %v446
      %v452 = vrot.slane %v451, 4
      %v454 = vshll.u32 %v223, 16
      %v456 = vrot.slane %v454, 5
      %v457 = vsel %vm265, %v452, %v456
      %v459 = vshrl.u32 %v224, 16
      %v461 = vrot.slane %v459, 4
      %v462 = vshll.u32 %v224, 16
      %v464 = vrot.slane %v462, 5
      %v465 = vor.u32 %v461, %v464
      %v466 = vrot.slane %v465, 4
      %v468 = vshll.u32 %v225, 16
      %v470 = vrot.slane %v468, 5
      %v471 = vsel %vm265, %v466, %v470
      %v472 = vshrl.u32 %v225, 16
      %v474 = vrot.slane %v472, 4
      %v475 = vor.u32 %v474, %v470
      %v476 = vrot.slane %v475, 4
      %v478 = vshll.u32 %v226, 16
      %v480 = vrot.slane %v478, 5
      %v481 = vsel %vm265, %v476, %v480
      %v483 = vshrl.u32 %v227, 16
      %v485 = vrot.slane %v483, 4
      %v486 = vshll.u32 %v227, 16
      %v488 = vrot.slane %v486, 5
      %v489 = vor.u32 %v485, %v488
      %v490 = vrot.slane %v489, 4
      %v492 = vshll.u32 %v228, 16
      %v494 = vrot.slane %v492, 5
      %v495 = vsel %vm265, %v490, %v494
      %v496 = vshrl.u32 %v228, 16
      %v498 = vrot.slane %v496, 4
      %v499 = vor.u32 %v498, %v494
      %v500 = vrot.slane %v499, 4
      %v502 = vshll.u32 %v229, 16
      %v504 = vrot.slane %v502, 5
      %v505 = vsel %vm265, %v500, %v504
      %v507 = vshrl.u32 %v230, 16
      %v509 = vrot.slane %v507, 4
      %v510 = vshll.u32 %v230, 16
      %v512 = vrot.slane %v510, 5
      %v513 = vor.u32 %v509, %v512
      %v514 = vrot.slane %v513, 4
      %v516 = vshll.u32 %v231, 16
      %v518 = vrot.slane %v516, 5
      %v519 = vsel %vm265, %v514, %v518
      %v520 = vshrl.u32 %v231, 16
      %v522 = vrot.slane %v520, 4
      %v523 = vor.u32 %v522, %v518
      %v524 = vrot.slane %v523, 4
      %v526 = vshll.u32 %v232, 16
      %v528 = vrot.slane %v526, 5
      %v529 = vsel %vm265, %v524, %v528
      %v531 = vshrl.u32 %v233, 16
      %v533 = vrot.slane %v531, 4
      %v534 = vshll.u32 %v233, 16
      %v536 = vrot.slane %v534, 5
      %v537 = vor.u32 %v533, %v536
      %v538 = vrot.slane %v537, 4
      %v540 = vshll.u32 %v234, 16
      %v542 = vrot.slane %v540, 5
      %v543 = vsel %vm265, %v538, %v542
      %v544 = vshrl.u32 %v234, 16
      %v546 = vrot.slane %v544, 4
      %v547 = vor.u32 %v546, %v542
      %v548 = vrot.slane %v547, 4
      %v550 = vshll.u32 %v235, 16
      %v552 = vrot.slane %v550, 5
      %v553 = vsel %vm265, %v548, %v552
      %v555 = vshrl.u32 %v236, 16
      %v557 = vrot.slane %v555, 4
      %v558 = vshll.u32 %v236, 16
      %v560 = vrot.slane %v558, 5
      %v561 = vor.u32 %v557, %v560
      %v562 = vrot.slane %v561, 4
      %v564 = vshll.u32 %v237, 16
      %v566 = vrot.slane %v564, 5
      %v567 = vsel %vm265, %v562, %v566
      %v568 = vshrl.u32 %v237, 16
      %v570 = vrot.slane %v568, 4
      %v571 = vor.u32 %v570, %v566
      %v572 = vrot.slane %v571, 4
      %v574 = vshll.u32 %v238, 16
      %v576 = vrot.slane %v574, 5
      %v577 = vsel %vm265, %v572, %v576
      %v579 = vshrl.u32 %v239, 16
      %v581 = vrot.slane %v579, 4
      %v582 = vshll.u32 %v239, 16
      %v584 = vrot.slane %v582, 5
      %v585 = vor.u32 %v581, %v584
      %v586 = vrot.slane %v585, 4
      %v588 = vshll.u32 %v240, 16
      %v590 = vrot.slane %v588, 5
      %v591 = vsel %vm265, %v586, %v590
      %v592 = vshrl.u32 %v240, 16
      %v594 = vrot.slane %v592, 4
      %v595 = vor.u32 %v594, %v590
      %v596 = vrot.slane %v595, 4
      %v598 = vshll.u32 %v241, 16
      %v600 = vrot.slane %v598, 5
      %v601 = vsel %vm265, %v596, %v600
      %v603 = vshrl.u32 %v242, 16
      %v605 = vrot.slane %v603, 4
      %v606 = vshll.u32 %v242, 16
      %v608 = vrot.slane %v606, 5
      %v609 = vor.u32 %v605, %v608
      %v610 = vrot.slane %v609, 4
      %v612 = vshll.u32 %v243, 16
      %v614 = vrot.slane %v612, 5
      %v615 = vsel %vm265, %v610, %v614
      %v616 = vshrl.u32 %v243, 16
      %v618 = vrot.slane %v616, 4
      %v619 = vor.u32 %v618, %v614
      %v620 = vrot.slane %v619, 4
      %v622 = vshll.u32 %v244, 16
      %v624 = vrot.slane %v622, 5
      %v625 = vsel %vm265, %v620, %v624
      %v627 = vshrl.u32 %v245, 16
      %v629 = vrot.slane %v627, 4
      %v630 = vshll.u32 %v245, 16
      %v632 = vrot.slane %v630, 5
      %v633 = vor.u32 %v629, %v632
      %v634 = vrot.slane %v633, 4
      %v636 = vshll.u32 %v246, 16
      %v638 = vrot.slane %v636, 5
      %v639 = vsel %vm265, %v634, %v638
      %v640 = vshrl.u32 %v246, 16
      %v642 = vrot.slane %v640, 4
      %v643 = vor.u32 %v642, %v638
      %v644 = vrot.slane %v643, 4
      %v646 = vshll.u32 %v247, 16
      %v648 = vrot.slane %v646, 5
      %v649 = vsel %vm265, %v644, %v648
      %v650 = vunpack.c.l.b16 %v279
      %v651 = vunpack.c.l.b16 %v289
      %v652 = vunpack.c.l.b16 %v303
      %v653 = vunpack.c.l.b16 %v313
      %v654 = vunpack.c.l.b16 %v327
      %v655 = vunpack.c.l.b16 %v337
      %v656 = vunpack.c.l.b16 %v351
      %v657 = vunpack.c.l.b16 %v361
      %v658 = vunpack.c.l.b16 %v375
      %v659 = vunpack.c.l.b16 %v385
      %v660 = vunpack.c.l.b16 %v399
      %v661 = vunpack.c.l.b16 %v409
      %v662 = vunpack.c.l.b16 %v423
      %v663 = vunpack.c.l.b16 %v433
      %v664 = vunpack.c.l.b16 %v447
      %v665 = vunpack.c.l.b16 %v457
      %v666 = vunpack.c.l.b16 %v471
      %v667 = vunpack.c.l.b16 %v481
      %v668 = vunpack.c.l.b16 %v495
      %v669 = vunpack.c.l.b16 %v505
      %v670 = vunpack.c.l.b16 %v519
      %v671 = vunpack.c.l.b16 %v529
      %v672 = vunpack.c.l.b16 %v543
      %v673 = vunpack.c.l.b16 %v553
      %v674 = vunpack.c.l.b16 %v567
      %v675 = vunpack.c.l.b16 %v577
      %v676 = vunpack.c.l.b16 %v591
      %v677 = vunpack.c.l.b16 %v601
      %v678 = vunpack.c.l.b16 %v615
      %v679 = vunpack.c.l.b16 %v625
      %v680 = vunpack.c.l.b16 %v639
      %v681 = vunpack.c.l.b16 %v649
      %v682 = vpack.c.b16 %v651, %v650
      %v683 = vpack.c.b16 %v653, %v652
      %v684 = vpack.c.b16 %v655, %v654
      %v685 = vpack.c.b16 %v657, %v656
      %v686 = vpack.c.b16 %v659, %v658
      %v687 = vpack.c.b16 %v661, %v660
      %v688 = vpack.c.b16 %v663, %v662
      %v689 = vpack.c.b16 %v665, %v664
      %v690 = vpack.c.b16 %v667, %v666
      %v691 = vpack.c.b16 %v669, %v668
      %v692 = vpack.c.b16 %v671, %v670
      %v693 = vpack.c.b16 %v673, %v672
      %v694 = vpack.c.b16 %v675, %v674
      %v695 = vpack.c.b16 %v677, %v676
      %v696 = vpack.c.b16 %v679, %v678
      %v697 = vpack.c.b16 %v681, %v680
      %vm698 = vcmask 64512
      %v700 = vsel %vm698, %v682, 0
      %v703 = vsel %vm698, %v683, 0
      %v706 = vsel %vm698, %v684, 0
      %v709 = vsel %vm698, %v685, 0
      %v712 = vsel %vm698, %v686, 0
      %v715 = vsel %vm698, %v687, 0
      %v718 = vsel %vm698, %v688, 0
      %v721 = vsel %vm698, %v689, 0
      %v724 = vsel %vm698, %v690, 0
      %v727 = vsel %vm698, %v691, 0
      %v730 = vsel %vm698, %v692, 0
      %v733 = vsel %vm698, %v693, 0
      %v736 = vsel %vm698, %v694, 0
      %v739 = vsel %vm698, %v695, 0
      %v742 = vsel %vm698, %v696, 0
      %v745 = vsel %vm698, %v697, 0
      %vm747 = vcmask 1043456
      %v749 = vsel %vm747, %v255, 0
      %751 = vmatprep.subr.bf16.mxu0 0
      %752 = vmatpush1.bf16.msra.mxu0 %v749
      %753 = vmatprep.subr.bf16.mxu0 0
      %754 = vmatpush1.bf16.msra.mxu0 0
      %755 = vmatprep.subr.bf16.mxu0 0
      %756 = vmatpush1.bf16.msra.mxu0 0
      %757 = vmatprep.subr.bf16.mxu0 0
      %758 = vmatpush1.bf16.msra.mxu0 0
      %759 = vmatprep.subr.bf16.mxu0 0
      %760 = vmatpush1.bf16.msra.mxu0 0
      %761 = vmatprep.subr.bf16.mxu0 0
      %762 = vmatpush1.bf16.msra.mxu0 0
      %763 = vmatprep.subr.bf16.mxu0 0
      %764 = vmatpush1.bf16.msra.mxu0 0
      %765 = vmatprep.subr.bf16.mxu0 0
      %766 = vmatpush1.bf16.msra.mxu0 0
      %767 = vmatprep.subr.bf16.mxu0 0
      %768 = vmatpush1.bf16.msra.mxu0 0
      %769 = vmatprep.subr.bf16.mxu0 0
      %770 = vmatpush1.bf16.msra.mxu0 0
      %771 = vmatprep.subr.bf16.mxu0 0
      %772 = vmatpush1.bf16.msra.mxu0 0
      %773 = vmatprep.subr.bf16.mxu0 0
      %774 = vmatpush1.bf16.msra.mxu0 0
      %775 = vmatprep.subr.bf16.mxu0 0
      %776 = vmatpush1.bf16.msra.mxu0 0
      %777 = vmatprep.subr.bf16.mxu0 0
      %778 = vmatpush1.bf16.msra.mxu0 0
      %779 = vmatprep.subr.bf16.mxu0 0
      %780 = vmatpush1.bf16.msra.mxu0 0
      %781 = vmatprep.subr.bf16.mxu0 0
      %782 = vmatpush1.bf16.msra.mxu0 0
      %783 = vmatprep.mubr.bf16.mxu0 0
      %784 = vmatmul.mubr.bf16.gmra.mrb[0].mxu0 %v700
      %v785 = vpop.f32.mrb[0].mxu0
      %v786 = vadd.f32 0.0, %v785
      %v787 = vpop.f32.mrb[0].mxu0
      %v788 = vpop.f32.mrb[0].mxu0
      %v789 = vadd.f32 0.0, %v788
      %v790 = vpop.f32.mrb[0].mxu0
      %791 = vmatprep.mubr.bf16.mxu0 0
      %792 = vmatmul.mubr.bf16.gmra.mrb[0].mxu0 %v703
      %v793 = vpop.f32.mrb[0].mxu0
      %v794 = vadd.f32 0.0, %v793
      %v795 = vpop.f32.mrb[0].mxu0
      %v796 = vpop.f32.mrb[0].mxu0
      %v797 = vadd.f32 0.0, %v796
      %v798 = vpop.f32.mrb[0].mxu0
      %799 = vmatprep.mubr.bf16.mxu0 0
      %800 = vmatmul.mubr.bf16.gmra.mrb[0].mxu0 %v706
      %v801 = vpop.f32.mrb[0].mxu0
      %v802 = vadd.f32 0.0, %v801
      %v803 = vpop.f32.mrb[0].mxu0
      %v804 = vpop.f32.mrb[0].mxu0
      %v805 = vadd.f32 0.0, %v804
      %v806 = vpop.f32.mrb[0].mxu0
      %807 = vmatprep.mubr.bf16.mxu0 0
      %808 = vmatmul.mubr.bf16.gmra.mrb[0].mxu0 %v709
      %v809 = vpop.f32.mrb[0].mxu0
      %v810 = vadd.f32 0.0, %v809
      %v811 = vpop.f32.mrb[0].mxu0
      %v812 = vpop.f32.mrb[0].mxu0
      %v813 = vadd.f32 0.0, %v812
      %v814 = vpop.f32.mrb[0].mxu0
      %815 = vmatprep.mubr.bf16.mxu0 0
      %816 = vmatmul.mubr.bf16.gmra.mrb[0].mxu0 %v712
      %v817 = vpop.f32.mrb[0].mxu0
      %v818 = vadd.f32 0.0, %v817
      %v819 = vpop.f32.mrb[0].mxu0
      %v820 = vpop.f32.mrb[0].mxu0
      %v821 = vadd.f32 0.0, %v820
      %v822 = vpop.f32.mrb[0].mxu0
      %823 = vmatprep.mubr.bf16.mxu0 0
      %824 = vmatmul.mubr.bf16.gmra.mrb[0].mxu0 %v715
      %v825 = vpop.f32.mrb[0].mxu0
      %v826 = vadd.f32 0.0, %v825
      %v827 = vpop.f32.mrb[0].mxu0
      %v828 = vpop.f32.mrb[0].mxu0
      %v829 = vadd.f32 0.0, %v828
      %v830 = vpop.f32.mrb[0].mxu0
      %831 = vmatprep.mubr.bf16.mxu0 0
      %832 = vmatmul.mubr.bf16.gmra.mrb[0].mxu0 %v718
      %v833 = vpop.f32.mrb[0].mxu0
      %v834 = vadd.f32 0.0, %v833
      %v835 = vpop.f32.mrb[0].mxu0
      %v836 = vpop.f32.mrb[0].mxu0
      %v837 = vadd.f32 0.0, %v836
      %v838 = vpop.f32.mrb[0].mxu0
      %839 = vmatprep.mubr.bf16.mxu0 0
      %840 = vmatmul.mubr.bf16.gmra.mrb[0].mxu0 %v721
      %v841 = vpop.f32.mrb[0].mxu0
      %v842 = vadd.f32 0.0, %v841
      %v843 = vpop.f32.mrb[0].mxu0
      %v844 = vpop.f32.mrb[0].mxu0
      %v845 = vadd.f32 0.0, %v844
      %v846 = vpop.f32.mrb[0].mxu0
      %847 = vmatprep.mubr.bf16.mxu0 0
      %848 = vmatmul.mubr.bf16.gmra.mrb[0].mxu0 %v724
      %v849 = vpop.f32.mrb[0].mxu0
      %v850 = vadd.f32 0.0, %v849
      %v851 = vpop.f32.mrb[0].mxu0
      %v852 = vpop.f32.mrb[0].mxu0
      %v853 = vadd.f32 0.0, %v852
      %v854 = vpop.f32.mrb[0].mxu0
      %855 = vmatprep.mubr.bf16.mxu0 0
      %856 = vmatmul.mubr.bf16.gmra.mrb[0].mxu0 %v727
      %v857 = vpop.f32.mrb[0].mxu0
      %v858 = vadd.f32 0.0, %v857
      %v859 = vpop.f32.mrb[0].mxu0
      %v860 = vpop.f32.mrb[0].mxu0
      %v861 = vadd.f32 0.0, %v860
      %v862 = vpop.f32.mrb[0].mxu0
      %863 = vmatprep.mubr.bf16.mxu0 0
      %864 = vmatmul.mubr.bf16.gmra.mrb[0].mxu0 %v730
      %v865 = vpop.f32.mrb[0].mxu0
      %v866 = vadd.f32 0.0, %v865
      %v867 = vpop.f32.mrb[0].mxu0
      %v868 = vpop.f32.mrb[0].mxu0
      %v869 = vadd.f32 0.0, %v868
      %v870 = vpop.f32.mrb[0].mxu0
      %871 = vmatprep.mubr.bf16.mxu0 0
      %872 = vmatmul.mubr.bf16.gmra.mrb[0].mxu0 %v733
      %v873 = vpop.f32.mrb[0].mxu0
      %v874 = vadd.f32 0.0, %v873
      %v875 = vpop.f32.mrb[0].mxu0
      %v876 = vpop.f32.mrb[0].mxu0
      %v877 = vadd.f32 0.0, %v876
      %v878 = vpop.f32.mrb[0].mxu0
      %879 = vmatprep.mubr.bf16.mxu0 0
      %880 = vmatmul.mubr.bf16.gmra.mrb[0].mxu0 %v736
      %v881 = vpop.f32.mrb[0].mxu0
      %v882 = vadd.f32 0.0, %v881
      %v883 = vpop.f32.mrb[0].mxu0
      %v884 = vpop.f32.mrb[0].mxu0
      %v885 = vadd.f32 0.0, %v884
      %v886 = vpop.f32.mrb[0].mxu0
      %887 = vmatprep.mubr.bf16.mxu0 0
      %888 = vmatmul.mubr.bf16.gmra.mrb[0].mxu0 %v739
      %v889 = vpop.f32.mrb[0].mxu0
      %v890 = vadd.f32 0.0, %v889
      %v891 = vpop.f32.mrb[0].mxu0
      %v892 = vpop.f32.mrb[0].mxu0
      %v893 = vadd.f32 0.0, %v892
      %v894 = vpop.f32.mrb[0].mxu0
      %895 = vmatprep.mubr.bf16.mxu0 0
      %896 = vmatmul.mubr.bf16.gmra.mrb[0].mxu0 %v742
      %v897 = vpop.f32.mrb[0].mxu0
      %v898 = vadd.f32 0.0, %v897
      %v899 = vpop.f32.mrb[0].mxu0
      %v900 = vpop.f32.mrb[0].mxu0
      %v901 = vadd.f32 0.0, %v900
      %v902 = vpop.f32.mrb[0].mxu0
      %903 = vmatprep.mubr.bf16.mxu0 0
      %904 = vmatmul.mubr.bf16.gmra.mrb[0].mxu0 %v745
      %v905 = vpop.f32.mrb[0].mxu0
      %v906 = vadd.f32 0.0, %v905
      %v907 = vpop.f32.mrb[0].mxu0
      %v908 = vpop.f32.mrb[0].mxu0
      %v909 = vadd.f32 0.0, %v908
      %v910 = vpop.f32.mrb[0].mxu0
      %911 = vdwg.mxu0
      %v944 = vunpack.c.l.b16 %v200
      %v945 = vunpack.c.l.b16 %v201
      %v946 = vunpack.c.l.b16 %v203
      %v947 = vunpack.c.l.b16 %v204
      %v948 = vunpack.c.l.b16 %v206
      %v949 = vunpack.c.l.b16 %v207
      %v950 = vunpack.c.l.b16 %v209
      %v951 = vunpack.c.l.b16 %v210
      %v952 = vunpack.c.l.b16 %v212
      %v953 = vunpack.c.l.b16 %v213
      %v954 = vunpack.c.l.b16 %v215
      %v955 = vunpack.c.l.b16 %v216
      %v956 = vunpack.c.l.b16 %v218
      %v957 = vunpack.c.l.b16 %v219
      %v958 = vunpack.c.l.b16 %v221
      %v959 = vunpack.c.l.b16 %v222
      %v960 = vunpack.c.l.b16 %v224
      %v961 = vunpack.c.l.b16 %v225
      %v962 = vunpack.c.l.b16 %v227
      %v963 = vunpack.c.l.b16 %v228
      %v964 = vunpack.c.l.b16 %v230
      %v965 = vunpack.c.l.b16 %v231
      %v966 = vunpack.c.l.b16 %v233
      %v967 = vunpack.c.l.b16 %v234
      %v968 = vunpack.c.l.b16 %v236
      %v969 = vunpack.c.l.b16 %v237
      %v970 = vunpack.c.l.b16 %v239
      %v971 = vunpack.c.l.b16 %v240
      %v972 = vunpack.c.l.b16 %v242
      %v973 = vunpack.c.l.b16 %v243
      %v974 = vunpack.c.l.b16 %v245
      %v975 = vunpack.c.l.b16 %v246
      %v976 = vpack.c.b16 %v945, %v944
      %v977 = vpack.c.b16 %v947, %v946
      %v978 = vpack.c.b16 %v949, %v948
      %v979 = vpack.c.b16 %v951, %v950
      %v980 = vpack.c.b16 %v953, %v952
      %v981 = vpack.c.b16 %v955, %v954
      %v982 = vpack.c.b16 %v957, %v956
      %v983 = vpack.c.b16 %v959, %v958
      %v984 = vpack.c.b16 %v961, %v960
      %v985 = vpack.c.b16 %v963, %v962
      %v986 = vpack.c.b16 %v965, %v964
      %v987 = vpack.c.b16 %v967, %v966
      %v988 = vpack.c.b16 %v969, %v968
      %v989 = vpack.c.b16 %v971, %v970
      %v990 = vpack.c.b16 %v973, %v972
      %v991 = vpack.c.b16 %v975, %v974
      %v993 = vsel %vm698, %v976, 0
      %v996 = vsel %vm698, %v977, 0
      %v999 = vsel %vm698, %v978, 0
      %v1002 = vsel %vm698, %v979, 0
      %v1005 = vsel %vm698, %v980, 0
      %v1008 = vsel %vm698, %v981, 0
      %v1011 = vsel %vm698, %v982, 0
      %v1014 = vsel %vm698, %v983, 0
      %v1017 = vsel %vm698, %v984, 0
      %v1020 = vsel %vm698, %v985, 0
      %v1023 = vsel %vm698, %v986, 0
      %v1026 = vsel %vm698, %v987, 0
      %v1029 = vsel %vm698, %v988, 0
      %v1032 = vsel %vm698, %v989, 0
      %v1035 = vsel %vm698, %v990, 0
      %v1038 = vsel %vm698, %v991, 0
      %v1041 = vsel %vm747, %v254, 0
      %1043 = vmatprep.subr.bf16.mxu0 0
      %1044 = vmatpush1.bf16.msra.mxu0 %v1041
      %1045 = vmatprep.subr.bf16.mxu0 0
      %1046 = vmatpush1.bf16.msra.mxu0 0
      %1047 = vmatprep.subr.bf16.mxu0 0
      %1048 = vmatpush1.bf16.msra.mxu0 0
      %1049 = vmatprep.subr.bf16.mxu0 0
      %1050 = vmatpush1.bf16.msra.mxu0 0
      %1051 = vmatprep.subr.bf16.mxu0 0
      %1052 = vmatpush1.bf16.msra.mxu0 0
      %1053 = vmatprep.subr.bf16.mxu0 0
      %1054 = vmatpush1.bf16.msra.mxu0 0
      %1055 = vmatprep.subr.bf16.mxu0 0
      %1056 = vmatpush1.bf16.msra.mxu0 0
      %1057 = vmatprep.subr.bf16.mxu0 0
      %1058 = vmatpush1.bf16.msra.mxu0 0
      %1059 = vmatprep.subr.bf16.mxu0 0
      %1060 = vmatpush1.bf16.msra.mxu0 0
      %1061 = vmatprep.subr.bf16.mxu0 0
      %1062 = vmatpush1.bf16.msra.mxu0 0
      %1063 = vmatprep.subr.bf16.mxu0 0
      %1064 = vmatpush1.bf16.msra.mxu0 0
      %1065 = vmatprep.subr.bf16.mxu0 0
      %1066 = vmatpush1.bf16.msra.mxu0 0
      %1067 = vmatprep.subr.bf16.mxu0 0
      %1068 = vmatpush1.bf16.msra.mxu0 0
      %1069 = vmatprep.subr.bf16.mxu0 0
      %1070 = vmatpush1.bf16.msra.mxu0 0
      %1071 = vmatprep.subr.bf16.mxu0 0
      %1072 = vmatpush1.bf16.msra.mxu0 0
      %1073 = vmatprep.subr.bf16.mxu0 0
      %1074 = vmatpush1.bf16.msra.mxu0 0
      %1075 = vmatprep.mubr.bf16.mxu0 0
      %1076 = vmatmul.mubr.bf16.gmra.mrb[0].mxu0 %v993
      %v1077 = vpop.f32.mrb[0].mxu0
      %v1078 = vadd.f32 %v786, %v1077
      %v1079 = vpop.f32.mrb[0].mxu0
      %v1080 = vpop.f32.mrb[0].mxu0
      %v1081 = vadd.f32 %v789, %v1080
      %v1082 = vpop.f32.mrb[0].mxu0
      %1083 = vmatprep.mubr.bf16.mxu0 0
      %1084 = vmatmul.mubr.bf16.gmra.mrb[0].mxu0 %v996
      %v1085 = vpop.f32.mrb[0].mxu0
      %v1086 = vadd.f32 %v794, %v1085
      %v1087 = vpop.f32.mrb[0].mxu0
      %v1088 = vpop.f32.mrb[0].mxu0
      %v1089 = vadd.f32 %v797, %v1088
      %v1090 = vpop.f32.mrb[0].mxu0
      %1091 = vmatprep.mubr.bf16.mxu0 0
      %1092 = vmatmul.mubr.bf16.gmra.mrb[0].mxu0 %v999
      %v1093 = vpop.f32.mrb[0].mxu0
      %v1094 = vadd.f32 %v802, %v1093
      %v1095 = vpop.f32.mrb[0].mxu0
      %v1096 = vpop.f32.mrb[0].mxu0
      %v1097 = vadd.f32 %v805, %v1096
      %v1098 = vpop.f32.mrb[0].mxu0
      %1099 = vmatprep.mubr.bf16.mxu0 0
      %1100 = vmatmul.mubr.bf16.gmra.mrb[0].mxu0 %v1002
      %v1101 = vpop.f32.mrb[0].mxu0
      %v1102 = vadd.f32 %v810, %v1101
      %v1103 = vpop.f32.mrb[0].mxu0
      %v1104 = vpop.f32.mrb[0].mxu0
      %v1105 = vadd.f32 %v813, %v1104
      %v1106 = vpop.f32.mrb[0].mxu0
      %1107 = vmatprep.mubr.bf16.mxu0 0
      %1108 = vmatmul.mubr.bf16.gmra.mrb[0].mxu0 %v1005
      %v1109 = vpop.f32.mrb[0].mxu0
      %v1110 = vadd.f32 %v818, %v1109
      %v1111 = vpop.f32.mrb[0].mxu0
      %v1112 = vpop.f32.mrb[0].mxu0
      %v1113 = vadd.f32 %v821, %v1112
      %v1114 = vpop.f32.mrb[0].mxu0
      %1115 = vmatprep.mubr.bf16.mxu0 0
      %1116 = vmatmul.mubr.bf16.gmra.mrb[0].mxu0 %v1008
      %v1117 = vpop.f32.mrb[0].mxu0
      %v1118 = vadd.f32 %v826, %v1117
      %v1119 = vpop.f32.mrb[0].mxu0
      %v1120 = vpop.f32.mrb[0].mxu0
      %v1121 = vadd.f32 %v829, %v1120
      %v1122 = vpop.f32.mrb[0].mxu0
      %1123 = vmatprep.mubr.bf16.mxu0 0
      %1124 = vmatmul.mubr.bf16.gmra.mrb[0].mxu0 %v1011
      %v1125 = vpop.f32.mrb[0].mxu0
      %v1126 = vadd.f32 %v834, %v1125
      %v1127 = vpop.f32.mrb[0].mxu0
      %v1128 = vpop.f32.mrb[0].mxu0
      %v1129 = vadd.f32 %v837, %v1128
      %v1130 = vpop.f32.mrb[0].mxu0
      %1131 = vmatprep.mubr.bf16.mxu0 0
      %1132 = vmatmul.mubr.bf16.gmra.mrb[0].mxu0 %v1014
      %v1133 = vpop.f32.mrb[0].mxu0
      %v1134 = vadd.f32 %v842, %v1133
      %v1135 = vpop.f32.mrb[0].mxu0
      %v1136 = vpop.f32.mrb[0].mxu0
      %v1137 = vadd.f32 %v845, %v1136
      %v1138 = vpop.f32.mrb[0].mxu0
      %1139 = vmatprep.mubr.bf16.mxu0 0
      %1140 = vmatmul.mubr.bf16.gmra.mrb[0].mxu0 %v1017
      %v1141 = vpop.f32.mrb[0].mxu0
      %v1142 = vadd.f32 %v850, %v1141
      %v1143 = vpop.f32.mrb[0].mxu0
      %v1144 = vpop.f32.mrb[0].mxu0
      %v1145 = vadd.f32 %v853, %v1144
      %v1146 = vpop.f32.mrb[0].mxu0
      %1147 = vmatprep.mubr.bf16.mxu0 0
      %1148 = vmatmul.mubr.bf16.gmra.mrb[0].mxu0 %v1020
      %v1149 = vpop.f32.mrb[0].mxu0
      %v1150 = vadd.f32 %v858, %v1149
      %v1151 = vpop.f32.mrb[0].mxu0
      %v1152 = vpop.f32.mrb[0].mxu0
      %v1153 = vadd.f32 %v861, %v1152
      %v1154 = vpop.f32.mrb[0].mxu0
      %1155 = vmatprep.mubr.bf16.mxu0 0
      %1156 = vmatmul.mubr.bf16.gmra.mrb[0].mxu0 %v1023
      %v1157 = vpop.f32.mrb[0].mxu0
      %v1158 = vadd.f32 %v866, %v1157
      %v1159 = vpop.f32.mrb[0].mxu0
      %v1160 = vpop.f32.mrb[0].mxu0
      %v1161 = vadd.f32 %v869, %v1160
      %v1162 = vpop.f32.mrb[0].mxu0
      %1163 = vmatprep.mubr.bf16.mxu0 0
      %1164 = vmatmul.mubr.bf16.gmra.mrb[0].mxu0 %v1026
      %v1165 = vpop.f32.mrb[0].mxu0
      %v1166 = vadd.f32 %v874, %v1165
      %v1167 = vpop.f32.mrb[0].mxu0
      %v1168 = vpop.f32.mrb[0].mxu0
      %v1169 = vadd.f32 %v877, %v1168
      %v1170 = vpop.f32.mrb[0].mxu0
      %1171 = vmatprep.mubr.bf16.mxu0 0
      %1172 = vmatmul.mubr.bf16.gmra.mrb[0].mxu0 %v1029
      %v1173 = vpop.f32.mrb[0].mxu0
      %v1174 = vadd.f32 %v882, %v1173
      %v1175 = vpop.f32.mrb[0].mxu0
      %v1176 = vpop.f32.mrb[0].mxu0
      %v1177 = vadd.f32 %v885, %v1176
      %v1178 = vpop.f32.mrb[0].mxu0
      %1179 = vmatprep.mubr.bf16.mxu0 0
      %1180 = vmatmul.mubr.bf16.gmra.mrb[0].mxu0 %v1032
      %v1181 = vpop.f32.mrb[0].mxu0
      %v1182 = vadd.f32 %v890, %v1181
      %v1183 = vpop.f32.mrb[0].mxu0
      %v1184 = vpop.f32.mrb[0].mxu0
      %v1185 = vadd.f32 %v893, %v1184
      %v1186 = vpop.f32.mrb[0].mxu0
      %1187 = vmatprep.mubr.bf16.mxu0 0
      %1188 = vmatmul.mubr.bf16.gmra.mrb[0].mxu0 %v1035
      %v1189 = vpop.f32.mrb[0].mxu0
      %v1190 = vadd.f32 %v898, %v1189
      %v1191 = vpop.f32.mrb[0].mxu0
      %v1192 = vpop.f32.mrb[0].mxu0
      %v1193 = vadd.f32 %v901, %v1192
      %v1194 = vpop.f32.mrb[0].mxu0
      %1195 = vmatprep.mubr.bf16.mxu0 0
      %1196 = vmatmul.mubr.bf16.gmra.mrb[0].mxu0 %v1038
      %v1197 = vpop.f32.mrb[0].mxu0
      %v1198 = vadd.f32 %v906, %v1197
      %v1199 = vpop.f32.mrb[0].mxu0
      %v1200 = vpop.f32.mrb[0].mxu0
      %v1201 = vadd.f32 %v909, %v1200
      %v1202 = vpop.f32.mrb[0].mxu0
      %1203 = vdwg.mxu0
      %vm1220 = vcmask 1042432
      %vm1221 = vcmask 1046532
      %vm1222 = vmor %vm1220, %vm1221
      %v1223 = vrot.slane %v200, 5
      %v1224 = vrot.slane %v1223, 4
      %v1225 = vrot.slane %v201, 5
      %v1226 = vsel %vm1222, %v1224, %v1225
      %v1227 = vrot.slane %v1225, 4
      %v1228 = vrot.slane %v202, 5
      %v1229 = vsel %vm1222, %v1227, %v1228
      %v1230 = vrot.slane %v203, 5
      %v1231 = vrot.slane %v1230, 4
      %v1232 = vrot.slane %v204, 5
      %v1233 = vsel %vm1222, %v1231, %v1232
      %v1234 = vrot.slane %v1232, 4
      %v1235 = vrot.slane %v205, 5
      %v1236 = vsel %vm1222, %v1234, %v1235
      %v1237 = vrot.slane %v206, 5
      %v1238 = vrot.slane %v1237, 4
      %v1239 = vrot.slane %v207, 5
      %v1240 = vsel %vm1222, %v1238, %v1239
      %v1241 = vrot.slane %v1239, 4
      %v1242 = vrot.slane %v208, 5
      %v1243 = vsel %vm1222, %v1241, %v1242
      %v1244 = vrot.slane %v209, 5
      %v1245 = vrot.slane %v1244, 4
      %v1246 = vrot.slane %v210, 5
      %v1247 = vsel %vm1222, %v1245, %v1246
      %v1248 = vrot.slane %v1246, 4
      %v1249 = vrot.slane %v211, 5
      %v1250 = vsel %vm1222, %v1248, %v1249
      %v1251 = vrot.slane %v212, 5
      %v1252 = vrot.slane %v1251, 4
      %v1253 = vrot.slane %v213, 5
      %v1254 = vsel %vm1222, %v1252, %v1253
      %v1255 = vrot.slane %v1253, 4
      %v1256 = vrot.slane %v214, 5
      %v1257 = vsel %vm1222, %v1255, %v1256
      %v1258 = vrot.slane %v215, 5
      %v1259 = vrot.slane %v1258, 4
      %v1260 = vrot.slane %v216, 5
      %v1261 = vsel %vm1222, %v1259, %v1260
      %v1262 = vrot.slane %v1260, 4
      %v1263 = vrot.slane %v217, 5
      %v1264 = vsel %vm1222, %v1262, %v1263
      %v1265 = vrot.slane %v218, 5
      %v1266 = vrot.slane %v1265, 4
      %v1267 = vrot.slane %v219, 5
      %v1268 = vsel %vm1222, %v1266, %v1267
      %v1269 = vrot.slane %v1267, 4
      %v1270 = vrot.slane %v220, 5
      %v1271 = vsel %vm1222, %v1269, %v1270
      %v1272 = vrot.slane %v221, 5
      %v1273 = vrot.slane %v1272, 4
      %v1274 = vrot.slane %v222, 5
      %v1275 = vsel %vm1222, %v1273, %v1274
      %v1276 = vrot.slane %v1274, 4
      %v1277 = vrot.slane %v223, 5
      %v1278 = vsel %vm1222, %v1276, %v1277
      %v1279 = vrot.slane %v224, 5
      %v1280 = vrot.slane %v1279, 4
      %v1281 = vrot.slane %v225, 5
      %v1282 = vsel %vm1222, %v1280, %v1281
      %v1283 = vrot.slane %v1281, 4
      %v1284 = vrot.slane %v226, 5
      %v1285 = vsel %vm1222, %v1283, %v1284
      %v1286 = vrot.slane %v227, 5
      %v1287 = vrot.slane %v1286, 4
      %v1288 = vrot.slane %v228, 5
      %v1289 = vsel %vm1222, %v1287, %v1288
      %v1290 = vrot.slane %v1288, 4
      %v1291 = vrot.slane %v229, 5
      %v1292 = vsel %vm1222, %v1290, %v1291
      %v1293 = vrot.slane %v230, 5
      %v1294 = vrot.slane %v1293, 4
      %v1295 = vrot.slane %v231, 5
      %v1296 = vsel %vm1222, %v1294, %v1295
      %v1297 = vrot.slane %v1295, 4
      %v1298 = vrot.slane %v232, 5
      %v1299 = vsel %vm1222, %v1297, %v1298
      %v1300 = vrot.slane %v233, 5
      %v1301 = vrot.slane %v1300, 4
      %v1302 = vrot.slane %v234, 5
      %v1303 = vsel %vm1222, %v1301, %v1302
      %v1304 = vrot.slane %v1302, 4
      %v1305 = vrot.slane %v235, 5
      %v1306 = vsel %vm1222, %v1304, %v1305
      %v1307 = vrot.slane %v236, 5
      %v1308 = vrot.slane %v1307, 4
      %v1309 = vrot.slane %v237, 5
      %v1310 = vsel %vm1222, %v1308, %v1309
      %v1311 = vrot.slane %v1309, 4
      %v1312 = vrot.slane %v238, 5
      %v1313 = vsel %vm1222, %v1311, %v1312
      %v1314 = vrot.slane %v239, 5
      %v1315 = vrot.slane %v1314, 4
      %v1316 = vrot.slane %v240, 5
      %v1317 = vsel %vm1222, %v1315, %v1316
      %v1318 = vrot.slane %v1316, 4
      %v1319 = vrot.slane %v241, 5
      %v1320 = vsel %vm1222, %v1318, %v1319
      %v1321 = vrot.slane %v242, 5
      %v1322 = vrot.slane %v1321, 4
      %v1323 = vrot.slane %v243, 5
      %v1324 = vsel %vm1222, %v1322, %v1323
      %v1325 = vrot.slane %v1323, 4
      %v1326 = vrot.slane %v244, 5
      %v1327 = vsel %vm1222, %v1325, %v1326
      %v1328 = vrot.slane %v245, 5
      %v1329 = vrot.slane %v1328, 4
      %v1330 = vrot.slane %v246, 5
      %v1331 = vsel %vm1222, %v1329, %v1330
      %v1332 = vrot.slane %v1330, 4
      %v1333 = vrot.slane %v247, 5
      %v1334 = vsel %vm1222, %v1332, %v1333
      %v1335 = vunpack.c.l.b16 %v1226
      %v1336 = vunpack.c.l.b16 %v1229
      %v1337 = vunpack.c.l.b16 %v1233
      %v1338 = vunpack.c.l.b16 %v1236
      %v1339 = vunpack.c.l.b16 %v1240
      %v1340 = vunpack.c.l.b16 %v1243
      %v1341 = vunpack.c.l.b16 %v1247
      %v1342 = vunpack.c.l.b16 %v1250
      %v1343 = vunpack.c.l.b16 %v1254
      %v1344 = vunpack.c.l.b16 %v1257
      %v1345 = vunpack.c.l.b16 %v1261
      %v1346 = vunpack.c.l.b16 %v1264
      %v1347 = vunpack.c.l.b16 %v1268
      %v1348 = vunpack.c.l.b16 %v1271
      %v1349 = vunpack.c.l.b16 %v1275
      %v1350 = vunpack.c.l.b16 %v1278
      %v1351 = vunpack.c.l.b16 %v1282
      %v1352 = vunpack.c.l.b16 %v1285
      %v1353 = vunpack.c.l.b16 %v1289
      %v1354 = vunpack.c.l.b16 %v1292
      %v1355 = vunpack.c.l.b16 %v1296
      %v1356 = vunpack.c.l.b16 %v1299
      %v1357 = vunpack.c.l.b16 %v1303
      %v1358 = vunpack.c.l.b16 %v1306
      %v1359 = vunpack.c.l.b16 %v1310
      %v1360 = vunpack.c.l.b16 %v1313
      %v1361 = vunpack.c.l.b16 %v1317
      %v1362 = vunpack.c.l.b16 %v1320
      %v1363 = vunpack.c.l.b16 %v1324
      %v1364 = vunpack.c.l.b16 %v1327
      %v1365 = vunpack.c.l.b16 %v1331
      %v1366 = vunpack.c.l.b16 %v1334
      %v1367 = vpack.c.b16 %v1336, %v1335
      %v1368 = vpack.c.b16 %v1338, %v1337
      %v1369 = vpack.c.b16 %v1340, %v1339
      %v1370 = vpack.c.b16 %v1342, %v1341
      %v1371 = vpack.c.b16 %v1344, %v1343
      %v1372 = vpack.c.b16 %v1346, %v1345
      %v1373 = vpack.c.b16 %v1348, %v1347
      %v1374 = vpack.c.b16 %v1350, %v1349
      %v1375 = vpack.c.b16 %v1352, %v1351
      %v1376 = vpack.c.b16 %v1354, %v1353
      %v1377 = vpack.c.b16 %v1356, %v1355
      %v1378 = vpack.c.b16 %v1358, %v1357
      %v1379 = vpack.c.b16 %v1360, %v1359
      %v1380 = vpack.c.b16 %v1362, %v1361
      %v1381 = vpack.c.b16 %v1364, %v1363
      %v1382 = vpack.c.b16 %v1366, %v1365
      %v1384 = vsel %vm698, %v1367, 0
      %v1387 = vsel %vm698, %v1368, 0
      %v1390 = vsel %vm698, %v1369, 0
      %v1393 = vsel %vm698, %v1370, 0
      %v1396 = vsel %vm698, %v1371, 0
      %v1399 = vsel %vm698, %v1372, 0
      %v1402 = vsel %vm698, %v1373, 0
      %v1405 = vsel %vm698, %v1374, 0
      %v1408 = vsel %vm698, %v1375, 0
      %v1411 = vsel %vm698, %v1376, 0
      %v1414 = vsel %vm698, %v1377, 0
      %v1417 = vsel %vm698, %v1378, 0
      %v1420 = vsel %vm698, %v1379, 0
      %v1423 = vsel %vm698, %v1380, 0
      %v1426 = vsel %vm698, %v1381, 0
      %v1429 = vsel %vm698, %v1382, 0
      %v1432 = vsel %vm747, %v256, 0
      %1434 = vmatprep.subr.bf16.mxu0 0
      %1435 = vmatpush1.bf16.msra.mxu0 %v1432
      %1436 = vmatprep.subr.bf16.mxu0 0
      %1437 = vmatpush1.bf16.msra.mxu0 0
      %1438 = vmatprep.subr.bf16.mxu0 0
      %1439 = vmatpush1.bf16.msra.mxu0 0
      %1440 = vmatprep.subr.bf16.mxu0 0
      %1441 = vmatpush1.bf16.msra.mxu0 0
      %1442 = vmatprep.subr.bf16.mxu0 0
      %1443 = vmatpush1.bf16.msra.mxu0 0
      %1444 = vmatprep.subr.bf16.mxu0 0
      %1445 = vmatpush1.bf16.msra.mxu0 0
      %1446 = vmatprep.subr.bf16.mxu0 0
      %1447 = vmatpush1.bf16.msra.mxu0 0
      %1448 = vmatprep.subr.bf16.mxu0 0
      %1449 = vmatpush1.bf16.msra.mxu0 0
      %1450 = vmatprep.subr.bf16.mxu0 0
      %1451 = vmatpush1.bf16.msra.mxu0 0
      %1452 = vmatprep.subr.bf16.mxu0 0
      %1453 = vmatpush1.bf16.msra.mxu0 0
      %1454 = vmatprep.subr.bf16.mxu0 0
      %1455 = vmatpush1.bf16.msra.mxu0 0
      %1456 = vmatprep.subr.bf16.mxu0 0
      %1457 = vmatpush1.bf16.msra.mxu0 0
      %1458 = vmatprep.subr.bf16.mxu0 0
      %1459 = vmatpush1.bf16.msra.mxu0 0
      %1460 = vmatprep.subr.bf16.mxu0 0
      %1461 = vmatpush1.bf16.msra.mxu0 0
      %1462 = vmatprep.subr.bf16.mxu0 0
      %1463 = vmatpush1.bf16.msra.mxu0 0
      %1464 = vmatprep.subr.bf16.mxu0 0
      %1465 = vmatpush1.bf16.msra.mxu0 0
      %1466 = vmatprep.mubr.bf16.mxu0 0
      %1467 = vmatmul.mubr.bf16.gmra.mrb[0].mxu0 %v1384
      %v1468 = vpop.f32.mrb[0].mxu0
      %v1469 = vadd.f32 0.0, %v1468
      %v1470 = vpop.f32.mrb[0].mxu0
      %v1471 = vpop.f32.mrb[0].mxu0
      %v1472 = vadd.f32 0.0, %v1471
      %v1473 = vpop.f32.mrb[0].mxu0
      %1474 = vmatprep.mubr.bf16.mxu0 0
      %1475 = vmatmul.mubr.bf16.gmra.mrb[0].mxu0 %v1387
      %v1476 = vpop.f32.mrb[0].mxu0
      %v1477 = vadd.f32 0.0, %v1476
      %v1478 = vpop.f32.mrb[0].mxu0
      %v1479 = vpop.f32.mrb[0].mxu0
      %v1480 = vadd.f32 0.0, %v1479
      %v1481 = vpop.f32.mrb[0].mxu0
      %1482 = vmatprep.mubr.bf16.mxu0 0
      %1483 = vmatmul.mubr.bf16.gmra.mrb[0].mxu0 %v1390
      %v1484 = vpop.f32.mrb[0].mxu0
      %v1485 = vadd.f32 0.0, %v1484
      %v1486 = vpop.f32.mrb[0].mxu0
      %v1487 = vpop.f32.mrb[0].mxu0
      %v1488 = vadd.f32 0.0, %v1487
      %v1489 = vpop.f32.mrb[0].mxu0
      %1490 = vmatprep.mubr.bf16.mxu0 0
      %1491 = vmatmul.mubr.bf16.gmra.mrb[0].mxu0 %v1393
      %v1492 = vpop.f32.mrb[0].mxu0
      %v1493 = vadd.f32 0.0, %v1492
      %v1494 = vpop.f32.mrb[0].mxu0
      %v1495 = vpop.f32.mrb[0].mxu0
      %v1496 = vadd.f32 0.0, %v1495
      %v1497 = vpop.f32.mrb[0].mxu0
      %1498 = vmatprep.mubr.bf16.mxu0 0
      %1499 = vmatmul.mubr.bf16.gmra.mrb[0].mxu0 %v1396
      %v1500 = vpop.f32.mrb[0].mxu0
      %v1501 = vadd.f32 0.0, %v1500
      %v1502 = vpop.f32.mrb[0].mxu0
      %v1503 = vpop.f32.mrb[0].mxu0
      %v1504 = vadd.f32 0.0, %v1503
      %v1505 = vpop.f32.mrb[0].mxu0
      %1506 = vmatprep.mubr.bf16.mxu0 0
      %1507 = vmatmul.mubr.bf16.gmra.mrb[0].mxu0 %v1399
      %v1508 = vpop.f32.mrb[0].mxu0
      %v1509 = vadd.f32 0.0, %v1508
      %v1510 = vpop.f32.mrb[0].mxu0
      %v1511 = vpop.f32.mrb[0].mxu0
      %v1512 = vadd.f32 0.0, %v1511
      %v1513 = vpop.f32.mrb[0].mxu0
      %1514 = vmatprep.mubr.bf16.mxu0 0
      %1515 = vmatmul.mubr.bf16.gmra.mrb[0].mxu0 %v1402
      %v1516 = vpop.f32.mrb[0].mxu0
      %v1517 = vadd.f32 0.0, %v1516
      %v1518 = vpop.f32.mrb[0].mxu0
      %v1519 = vpop.f32.mrb[0].mxu0
      %v1520 = vadd.f32 0.0, %v1519
      %v1521 = vpop.f32.mrb[0].mxu0
      %1522 = vmatprep.mubr.bf16.mxu0 0
      %1523 = vmatmul.mubr.bf16.gmra.mrb[0].mxu0 %v1405
      %v1524 = vpop.f32.mrb[0].mxu0
      %v1525 = vadd.f32 0.0, %v1524
      %v1526 = vpop.f32.mrb[0].mxu0
      %v1527 = vpop.f32.mrb[0].mxu0
      %v1528 = vadd.f32 0.0, %v1527
      %v1529 = vpop.f32.mrb[0].mxu0
      %1530 = vmatprep.mubr.bf16.mxu0 0
      %1531 = vmatmul.mubr.bf16.gmra.mrb[0].mxu0 %v1408
      %v1532 = vpop.f32.mrb[0].mxu0
      %v1533 = vadd.f32 0.0, %v1532
      %v1534 = vpop.f32.mrb[0].mxu0
      %v1535 = vpop.f32.mrb[0].mxu0
      %v1536 = vadd.f32 0.0, %v1535
      %v1537 = vpop.f32.mrb[0].mxu0
      %1538 = vmatprep.mubr.bf16.mxu0 0
      %1539 = vmatmul.mubr.bf16.gmra.mrb[0].mxu0 %v1411
      %v1540 = vpop.f32.mrb[0].mxu0
      %v1541 = vadd.f32 0.0, %v1540
      %v1542 = vpop.f32.mrb[0].mxu0
      %v1543 = vpop.f32.mrb[0].mxu0
      %v1544 = vadd.f32 0.0, %v1543
      %v1545 = vpop.f32.mrb[0].mxu0
      %1546 = vmatprep.mubr.bf16.mxu0 0
      %1547 = vmatmul.mubr.bf16.gmra.mrb[0].mxu0 %v1414
      %v1548 = vpop.f32.mrb[0].mxu0
      %v1549 = vadd.f32 0.0, %v1548
      %v1550 = vpop.f32.mrb[0].mxu0
      %v1551 = vpop.f32.mrb[0].mxu0
      %v1552 = vadd.f32 0.0, %v1551
      %v1553 = vpop.f32.mrb[0].mxu0
      %1554 = vmatprep.mubr.bf16.mxu0 0
      %1555 = vmatmul.mubr.bf16.gmra.mrb[0].mxu0 %v1417
      %v1556 = vpop.f32.mrb[0].mxu0
      %v1557 = vadd.f32 0.0, %v1556
      %v1558 = vpop.f32.mrb[0].mxu0
      %v1559 = vpop.f32.mrb[0].mxu0
      %v1560 = vadd.f32 0.0, %v1559
      %v1561 = vpop.f32.mrb[0].mxu0
      %1562 = vmatprep.mubr.bf16.mxu0 0
      %1563 = vmatmul.mubr.bf16.gmra.mrb[0].mxu0 %v1420
      %v1564 = vpop.f32.mrb[0].mxu0
      %v1565 = vadd.f32 0.0, %v1564
      %v1566 = vpop.f32.mrb[0].mxu0
      %v1567 = vpop.f32.mrb[0].mxu0
      %v1568 = vadd.f32 0.0, %v1567
      %v1569 = vpop.f32.mrb[0].mxu0
      %1570 = vmatprep.mubr.bf16.mxu0 0
      %1571 = vmatmul.mubr.bf16.gmra.mrb[0].mxu0 %v1423
      %v1572 = vpop.f32.mrb[0].mxu0
      %v1573 = vadd.f32 0.0, %v1572
      %v1574 = vpop.f32.mrb[0].mxu0
      %v1575 = vpop.f32.mrb[0].mxu0
      %v1576 = vadd.f32 0.0, %v1575
      %v1577 = vpop.f32.mrb[0].mxu0
      %1578 = vmatprep.mubr.bf16.mxu0 0
      %1579 = vmatmul.mubr.bf16.gmra.mrb[0].mxu0 %v1426
      %v1580 = vpop.f32.mrb[0].mxu0
      %v1581 = vadd.f32 0.0, %v1580
      %v1582 = vpop.f32.mrb[0].mxu0
      %v1583 = vpop.f32.mrb[0].mxu0
      %v1584 = vadd.f32 0.0, %v1583
      %v1585 = vpop.f32.mrb[0].mxu0
      %1586 = vmatprep.mubr.bf16.mxu0 0
      %1587 = vmatmul.mubr.bf16.gmra.mrb[0].mxu0 %v1429
      %v1588 = vpop.f32.mrb[0].mxu0
      %v1589 = vadd.f32 0.0, %v1588
      %v1590 = vpop.f32.mrb[0].mxu0
      %v1591 = vpop.f32.mrb[0].mxu0
      %v1592 = vadd.f32 0.0, %v1591
      %v1593 = vpop.f32.mrb[0].mxu0
      %1594 = vdwg.mxu0
      %v1595 = vadd.f32 %v1078, %v1469
      %v1596 = vadd.f32 %v1081, %v1472
      %v1597 = vadd.f32 %v1086, %v1477
      %v1598 = vadd.f32 %v1089, %v1480
      %v1599 = vadd.f32 %v1094, %v1485
      %v1600 = vadd.f32 %v1097, %v1488
      %v1601 = vadd.f32 %v1102, %v1493
      %v1602 = vadd.f32 %v1105, %v1496
      %v1603 = vadd.f32 %v1110, %v1501
      %v1604 = vadd.f32 %v1113, %v1504
      %v1605 = vadd.f32 %v1118, %v1509
      %v1606 = vadd.f32 %v1121, %v1512
      %v1607 = vadd.f32 %v1126, %v1517
      %v1608 = vadd.f32 %v1129, %v1520
      %v1609 = vadd.f32 %v1134, %v1525
      %v1610 = vadd.f32 %v1137, %v1528
      %v1611 = vadd.f32 %v1142, %v1533
      %v1612 = vadd.f32 %v1145, %v1536
      %v1613 = vadd.f32 %v1150, %v1541
      %v1614 = vadd.f32 %v1153, %v1544
      %v1615 = vadd.f32 %v1158, %v1549
      %v1616 = vadd.f32 %v1161, %v1552
      %v1617 = vadd.f32 %v1166, %v1557
      %v1618 = vadd.f32 %v1169, %v1560
      %v1619 = vadd.f32 %v1174, %v1565
      %v1620 = vadd.f32 %v1177, %v1568
      %v1621 = vadd.f32 %v1182, %v1573
      %v1622 = vadd.f32 %v1185, %v1576
      %v1623 = vadd.f32 %v1190, %v1581
      %v1624 = vadd.f32 %v1193, %v1584
      %v1625 = vadd.f32 %v1198, %v1589
      %v1626 = vadd.f32 %v1201, %v1592
      %v1629 = vunpack.c.l.b16 %v248
      %v1630 = vunpack.c.l.b16 %v249
      %v1631 = vpack.c.b16 %v1630, %v1629
      %v1633 = vsel %vm698, %v1631, 0
      %v1636 = vsel %vm747, %v257, 0
      %1638 = vmatprep.subr.bf16.mxu0 0
      %1639 = vmatpush1.bf16.msra.mxu0 %v1636
      %1640 = vmatprep.subr.bf16.mxu0 0
      %1641 = vmatpush1.bf16.msra.mxu0 0
      %1642 = vmatprep.subr.bf16.mxu0 0
      %1643 = vmatpush1.bf16.msra.mxu0 0
      %1644 = vmatprep.subr.bf16.mxu0 0
      %1645 = vmatpush1.bf16.msra.mxu0 0
      %1646 = vmatprep.subr.bf16.mxu0 0
      %1647 = vmatpush1.bf16.msra.mxu0 0
      %1648 = vmatprep.subr.bf16.mxu0 0
      %1649 = vmatpush1.bf16.msra.mxu0 0
      %1650 = vmatprep.subr.bf16.mxu0 0
      %1651 = vmatpush1.bf16.msra.mxu0 0
      %1652 = vmatprep.subr.bf16.mxu0 0
      %1653 = vmatpush1.bf16.msra.mxu0 0
      %1654 = vmatprep.subr.bf16.mxu0 0
      %1655 = vmatpush1.bf16.msra.mxu0 0
      %1656 = vmatprep.subr.bf16.mxu0 0
      %1657 = vmatpush1.bf16.msra.mxu0 0
      %1658 = vmatprep.subr.bf16.mxu0 0
      %1659 = vmatpush1.bf16.msra.mxu0 0
      %1660 = vmatprep.subr.bf16.mxu0 0
      %1661 = vmatpush1.bf16.msra.mxu0 0
      %1662 = vmatprep.subr.bf16.mxu0 0
      %1663 = vmatpush1.bf16.msra.mxu0 0
      %1664 = vmatprep.subr.bf16.mxu0 0
      %1665 = vmatpush1.bf16.msra.mxu0 0
      %1666 = vmatprep.subr.bf16.mxu0 0
      %1667 = vmatpush1.bf16.msra.mxu0 0
      %1668 = vmatprep.subr.bf16.mxu0 0
      %1669 = vmatpush1.bf16.msra.mxu0 0
      %1670 = vmatprep.mubr.bf16.mxu0 0
      %1671 = vmatmul.mubr.bf16.gmra.mrb[0].mxu0 %v996
      %v1672 = vpop.f32.mrb[0].mxu0
      %v1673 = vadd.f32 0.0, %v1672
      %v1674 = vpop.f32.mrb[0].mxu0
      %v1675 = vpop.f32.mrb[0].mxu0
      %v1676 = vadd.f32 0.0, %v1675
      %v1677 = vpop.f32.mrb[0].mxu0
      %1678 = vmatprep.mubr.bf16.mxu0 0
      %1679 = vmatmul.mubr.bf16.gmra.mrb[0].mxu0 %v999
      %v1680 = vpop.f32.mrb[0].mxu0
      %v1681 = vadd.f32 0.0, %v1680
      %v1682 = vpop.f32.mrb[0].mxu0
      %v1683 = vpop.f32.mrb[0].mxu0
      %v1684 = vadd.f32 0.0, %v1683
      %v1685 = vpop.f32.mrb[0].mxu0
      %1686 = vmatprep.mubr.bf16.mxu0 0
      %1687 = vmatmul.mubr.bf16.gmra.mrb[0].mxu0 %v1002
      %v1688 = vpop.f32.mrb[0].mxu0
      %v1689 = vadd.f32 0.0, %v1688
      %v1690 = vpop.f32.mrb[0].mxu0
      %v1691 = vpop.f32.mrb[0].mxu0
      %v1692 = vadd.f32 0.0, %v1691
      %v1693 = vpop.f32.mrb[0].mxu0
      %1694 = vmatprep.mubr.bf16.mxu0 0
      %1695 = vmatmul.mubr.bf16.gmra.mrb[0].mxu0 %v1005
      %v1696 = vpop.f32.mrb[0].mxu0
      %v1697 = vadd.f32 0.0, %v1696
      %v1698 = vpop.f32.mrb[0].mxu0
      %v1699 = vpop.f32.mrb[0].mxu0
      %v1700 = vadd.f32 0.0, %v1699
      %v1701 = vpop.f32.mrb[0].mxu0
      %1702 = vmatprep.mubr.bf16.mxu0 0
      %1703 = vmatmul.mubr.bf16.gmra.mrb[0].mxu0 %v1008
      %v1704 = vpop.f32.mrb[0].mxu0
      %v1705 = vadd.f32 0.0, %v1704
      %v1706 = vpop.f32.mrb[0].mxu0
      %v1707 = vpop.f32.mrb[0].mxu0
      %v1708 = vadd.f32 0.0, %v1707
      %v1709 = vpop.f32.mrb[0].mxu0
      %1710 = vmatprep.mubr.bf16.mxu0 0
      %1711 = vmatmul.mubr.bf16.gmra.mrb[0].mxu0 %v1011
      %v1712 = vpop.f32.mrb[0].mxu0
      %v1713 = vadd.f32 0.0, %v1712
      %v1714 = vpop.f32.mrb[0].mxu0
      %v1715 = vpop.f32.mrb[0].mxu0
      %v1716 = vadd.f32 0.0, %v1715
      %v1717 = vpop.f32.mrb[0].mxu0
      %1718 = vmatprep.mubr.bf16.mxu0 0
      %1719 = vmatmul.mubr.bf16.gmra.mrb[0].mxu0 %v1014
      %v1720 = vpop.f32.mrb[0].mxu0
      %v1721 = vadd.f32 0.0, %v1720
      %v1722 = vpop.f32.mrb[0].mxu0
      %v1723 = vpop.f32.mrb[0].mxu0
      %v1724 = vadd.f32 0.0, %v1723
      %v1725 = vpop.f32.mrb[0].mxu0
      %1726 = vmatprep.mubr.bf16.mxu0 0
      %1727 = vmatmul.mubr.bf16.gmra.mrb[0].mxu0 %v1017
      %v1728 = vpop.f32.mrb[0].mxu0
      %v1729 = vadd.f32 0.0, %v1728
      %v1730 = vpop.f32.mrb[0].mxu0
      %v1731 = vpop.f32.mrb[0].mxu0
      %v1732 = vadd.f32 0.0, %v1731
      %v1733 = vpop.f32.mrb[0].mxu0
      %1734 = vmatprep.mubr.bf16.mxu0 0
      %1735 = vmatmul.mubr.bf16.gmra.mrb[0].mxu0 %v1020
      %v1736 = vpop.f32.mrb[0].mxu0
      %v1737 = vadd.f32 0.0, %v1736
      %v1738 = vpop.f32.mrb[0].mxu0
      %v1739 = vpop.f32.mrb[0].mxu0
      %v1740 = vadd.f32 0.0, %v1739
      %v1741 = vpop.f32.mrb[0].mxu0
      %1742 = vmatprep.mubr.bf16.mxu0 0
      %1743 = vmatmul.mubr.bf16.gmra.mrb[0].mxu0 %v1023
      %v1744 = vpop.f32.mrb[0].mxu0
      %v1745 = vadd.f32 0.0, %v1744
      %v1746 = vpop.f32.mrb[0].mxu0
      %v1747 = vpop.f32.mrb[0].mxu0
      %v1748 = vadd.f32 0.0, %v1747
      %v1749 = vpop.f32.mrb[0].mxu0
      %1750 = vmatprep.mubr.bf16.mxu0 0
      %1751 = vmatmul.mubr.bf16.gmra.mrb[0].mxu0 %v1026
      %v1752 = vpop.f32.mrb[0].mxu0
      %v1753 = vadd.f32 0.0, %v1752
      %v1754 = vpop.f32.mrb[0].mxu0
      %v1755 = vpop.f32.mrb[0].mxu0
      %v1756 = vadd.f32 0.0, %v1755
      %v1757 = vpop.f32.mrb[0].mxu0
      %1758 = vmatprep.mubr.bf16.mxu0 0
      %1759 = vmatmul.mubr.bf16.gmra.mrb[0].mxu0 %v1029
      %v1760 = vpop.f32.mrb[0].mxu0
      %v1761 = vadd.f32 0.0, %v1760
      %v1762 = vpop.f32.mrb[0].mxu0
      %v1763 = vpop.f32.mrb[0].mxu0
      %v1764 = vadd.f32 0.0, %v1763
      %v1765 = vpop.f32.mrb[0].mxu0
      %1766 = vmatprep.mubr.bf16.mxu0 0
      %1767 = vmatmul.mubr.bf16.gmra.mrb[0].mxu0 %v1032
      %v1768 = vpop.f32.mrb[0].mxu0
      %v1769 = vadd.f32 0.0, %v1768
      %v1770 = vpop.f32.mrb[0].mxu0
      %v1771 = vpop.f32.mrb[0].mxu0
      %v1772 = vadd.f32 0.0, %v1771
      %v1773 = vpop.f32.mrb[0].mxu0
      %1774 = vmatprep.mubr.bf16.mxu0 0
      %1775 = vmatmul.mubr.bf16.gmra.mrb[0].mxu0 %v1035
      %v1776 = vpop.f32.mrb[0].mxu0
      %v1777 = vadd.f32 0.0, %v1776
      %v1778 = vpop.f32.mrb[0].mxu0
      %v1779 = vpop.f32.mrb[0].mxu0
      %v1780 = vadd.f32 0.0, %v1779
      %v1781 = vpop.f32.mrb[0].mxu0
      %1782 = vmatprep.mubr.bf16.mxu0 0
      %1783 = vmatmul.mubr.bf16.gmra.mrb[0].mxu0 %v1038
      %v1784 = vpop.f32.mrb[0].mxu0
      %v1785 = vadd.f32 0.0, %v1784
      %v1786 = vpop.f32.mrb[0].mxu0
      %v1787 = vpop.f32.mrb[0].mxu0
      %v1788 = vadd.f32 0.0, %v1787
      %v1789 = vpop.f32.mrb[0].mxu0
      %1790 = vmatprep.mubr.bf16.mxu0 0
      %1791 = vmatmul.mubr.bf16.gmra.mrb[0].mxu0 %v1633
      %v1792 = vpop.f32.mrb[0].mxu0
      %v1793 = vadd.f32 0.0, %v1792
      %v1794 = vpop.f32.mrb[0].mxu0
      %v1795 = vpop.f32.mrb[0].mxu0
      %v1796 = vadd.f32 0.0, %v1795
      %v1797 = vpop.f32.mrb[0].mxu0
      %1798 = vdwg.mxu0
      %v1799 = vadd.f32 %v1595, %v1673
      %v1800 = vadd.f32 %v1596, %v1676
      %v1801 = vadd.f32 %v1597, %v1681
      %v1802 = vadd.f32 %v1598, %v1684
      %v1803 = vadd.f32 %v1599, %v1689
      %v1804 = vadd.f32 %v1600, %v1692
      %v1805 = vadd.f32 %v1601, %v1697
      %v1806 = vadd.f32 %v1602, %v1700
      %v1807 = vadd.f32 %v1603, %v1705
      %v1808 = vadd.f32 %v1604, %v1708
      %v1809 = vadd.f32 %v1605, %v1713
      %v1810 = vadd.f32 %v1606, %v1716
      %v1811 = vadd.f32 %v1607, %v1721
      %v1812 = vadd.f32 %v1608, %v1724
      %v1813 = vadd.f32 %v1609, %v1729
      %v1814 = vadd.f32 %v1610, %v1732
      %v1815 = vadd.f32 %v1611, %v1737
      %v1816 = vadd.f32 %v1612, %v1740
      %v1817 = vadd.f32 %v1613, %v1745
      %v1818 = vadd.f32 %v1614, %v1748
      %v1819 = vadd.f32 %v1615, %v1753
      %v1820 = vadd.f32 %v1616, %v1756
      %v1821 = vadd.f32 %v1617, %v1761
      %v1822 = vadd.f32 %v1618, %v1764
      %v1823 = vadd.f32 %v1619, %v1769
      %v1824 = vadd.f32 %v1620, %v1772
      %v1825 = vadd.f32 %v1621, %v1777
      %v1826 = vadd.f32 %v1622, %v1780
      %v1827 = vadd.f32 %v1623, %v1785
      %v1828 = vadd.f32 %v1624, %v1788
      %v1829 = vadd.f32 %v1625, %v1793
      %v1830 = vadd.f32 %v1626, %v1796
      %v1832 = vshrl.u32 %v248, 16
      %v1834 = vrot.slane %v1832, 4
      %v1835 = vshll.u32 %v248, 16
      %v1837 = vrot.slane %v1835, 5
      %v1838 = vor.u32 %v1834, %v1837
      %v1839 = vrot.slane %v1838, 4
      %v1841 = vshll.u32 %v249, 16
      %v1843 = vrot.slane %v1841, 5
      %v1844 = vsel %vm265, %v1839, %v1843
      %v1845 = vshrl.u32 %v249, 16
      %v1847 = vrot.slane %v1845, 4
      %v1848 = vor.u32 %v1847, %v1843
      %v1849 = vrot.slane %v1848, 4
      %v1851 = vshll.u32 %v250, 16
      %v1853 = vrot.slane %v1851, 5
      %v1854 = vsel %vm265, %v1849, %v1853
      %v1855 = vunpack.c.l.b16 %v1844
      %v1856 = vunpack.c.l.b16 %v1854
      %v1857 = vpack.c.b16 %v1856, %v1855
      %v1859 = vsel %vm698, %v1857, 0
      %v1862 = vsel %vm747, %v258, 0
      %1864 = vmatprep.subr.bf16.mxu0 0
      %1865 = vmatpush1.bf16.msra.mxu0 %v1862
      %1866 = vmatprep.subr.bf16.mxu0 0
      %1867 = vmatpush1.bf16.msra.mxu0 0
      %1868 = vmatprep.subr.bf16.mxu0 0
      %1869 = vmatpush1.bf16.msra.mxu0 0
      %1870 = vmatprep.subr.bf16.mxu0 0
      %1871 = vmatpush1.bf16.msra.mxu0 0
      %1872 = vmatprep.subr.bf16.mxu0 0
      %1873 = vmatpush1.bf16.msra.mxu0 0
      %1874 = vmatprep.subr.bf16.mxu0 0
      %1875 = vmatpush1.bf16.msra.mxu0 0
      %1876 = vmatprep.subr.bf16.mxu0 0
      %1877 = vmatpush1.bf16.msra.mxu0 0
      %1878 = vmatprep.subr.bf16.mxu0 0
      %1879 = vmatpush1.bf16.msra.mxu0 0
      %1880 = vmatprep.subr.bf16.mxu0 0
      %1881 = vmatpush1.bf16.msra.mxu0 0
      %1882 = vmatprep.subr.bf16.mxu0 0
      %1883 = vmatpush1.bf16.msra.mxu0 0
      %1884 = vmatprep.subr.bf16.mxu0 0
      %1885 = vmatpush1.bf16.msra.mxu0 0
      %1886 = vmatprep.subr.bf16.mxu0 0
      %1887 = vmatpush1.bf16.msra.mxu0 0
      %1888 = vmatprep.subr.bf16.mxu0 0
      %1889 = vmatpush1.bf16.msra.mxu0 0
      %1890 = vmatprep.subr.bf16.mxu0 0
      %1891 = vmatpush1.bf16.msra.mxu0 0
      %1892 = vmatprep.subr.bf16.mxu0 0
      %1893 = vmatpush1.bf16.msra.mxu0 0
      %1894 = vmatprep.subr.bf16.mxu0 0
      %1895 = vmatpush1.bf16.msra.mxu0 0
      %1896 = vmatprep.mubr.bf16.mxu0 0
      %1897 = vmatmul.mubr.bf16.gmra.mrb[0].mxu0 %v703
      %v1898 = vpop.f32.mrb[0].mxu0
      %v1899 = vadd.f32 0.0, %v1898
      %v1900 = vpop.f32.mrb[0].mxu0
      %v1901 = vpop.f32.mrb[0].mxu0
      %v1902 = vadd.f32 0.0, %v1901
      %v1903 = vpop.f32.mrb[0].mxu0
      %1904 = vmatprep.mubr.bf16.mxu0 0
      %1905 = vmatmul.mubr.bf16.gmra.mrb[0].mxu0 %v706
      %v1906 = vpop.f32.mrb[0].mxu0
      %v1907 = vadd.f32 0.0, %v1906
      %v1908 = vpop.f32.mrb[0].mxu0
      %v1909 = vpop.f32.mrb[0].mxu0
      %v1910 = vadd.f32 0.0, %v1909
      %v1911 = vpop.f32.mrb[0].mxu0
      %1912 = vmatprep.mubr.bf16.mxu0 0
      %1913 = vmatmul.mubr.bf16.gmra.mrb[0].mxu0 %v709
      %v1914 = vpop.f32.mrb[0].mxu0
      %v1915 = vadd.f32 0.0, %v1914
      %v1916 = vpop.f32.mrb[0].mxu0
      %v1917 = vpop.f32.mrb[0].mxu0
      %v1918 = vadd.f32 0.0, %v1917
      %v1919 = vpop.f32.mrb[0].mxu0
      %1920 = vmatprep.mubr.bf16.mxu0 0
      %1921 = vmatmul.mubr.bf16.gmra.mrb[0].mxu0 %v712
      %v1922 = vpop.f32.mrb[0].mxu0
      %v1923 = vadd.f32 0.0, %v1922
      %v1924 = vpop.f32.mrb[0].mxu0
      %v1925 = vpop.f32.mrb[0].mxu0
      %v1926 = vadd.f32 0.0, %v1925
      %v1927 = vpop.f32.mrb[0].mxu0
      %1928 = vmatprep.mubr.bf16.mxu0 0
      %1929 = vmatmul.mubr.bf16.gmra.mrb[0].mxu0 %v715
      %v1930 = vpop.f32.mrb[0].mxu0
      %v1931 = vadd.f32 0.0, %v1930
      %v1932 = vpop.f32.mrb[0].mxu0
      %v1933 = vpop.f32.mrb[0].mxu0
      %v1934 = vadd.f32 0.0, %v1933
      %v1935 = vpop.f32.mrb[0].mxu0
      %1936 = vmatprep.mubr.bf16.mxu0 0
      %1937 = vmatmul.mubr.bf16.gmra.mrb[0].mxu0 %v718
      %v1938 = vpop.f32.mrb[0].mxu0
      %v1939 = vadd.f32 0.0, %v1938
      %v1940 = vpop.f32.mrb[0].mxu0
      %v1941 = vpop.f32.mrb[0].mxu0
      %v1942 = vadd.f32 0.0, %v1941
      %v1943 = vpop.f32.mrb[0].mxu0
      %1944 = vmatprep.mubr.bf16.mxu0 0
      %1945 = vmatmul.mubr.bf16.gmra.mrb[0].mxu0 %v721
      %v1946 = vpop.f32.mrb[0].mxu0
      %v1947 = vadd.f32 0.0, %v1946
      %v1948 = vpop.f32.mrb[0].mxu0
      %v1949 = vpop.f32.mrb[0].mxu0
      %v1950 = vadd.f32 0.0, %v1949
      %v1951 = vpop.f32.mrb[0].mxu0
      %1952 = vmatprep.mubr.bf16.mxu0 0
      %1953 = vmatmul.mubr.bf16.gmra.mrb[0].mxu0 %v724
      %v1954 = vpop.f32.mrb[0].mxu0
      %v1955 = vadd.f32 0.0, %v1954
      %v1956 = vpop.f32.mrb[0].mxu0
      %v1957 = vpop.f32.mrb[0].mxu0
      %v1958 = vadd.f32 0.0, %v1957
      %v1959 = vpop.f32.mrb[0].mxu0
      %1960 = vmatprep.mubr.bf16.mxu0 0
      %1961 = vmatmul.mubr.bf16.gmra.mrb[0].mxu0 %v727
      %v1962 = vpop.f32.mrb[0].mxu0
      %v1963 = vadd.f32 0.0, %v1962
      %v1964 = vpop.f32.mrb[0].mxu0
      %v1965 = vpop.f32.mrb[0].mxu0
      %v1966 = vadd.f32 0.0, %v1965
      %v1967 = vpop.f32.mrb[0].mxu0
      %1968 = vmatprep.mubr.bf16.mxu0 0
      %1969 = vmatmul.mubr.bf16.gmra.mrb[0].mxu0 %v730
      %v1970 = vpop.f32.mrb[0].mxu0
      %v1971 = vadd.f32 0.0, %v1970
      %v1972 = vpop.f32.mrb[0].mxu0
      %v1973 = vpop.f32.mrb[0].mxu0
      %v1974 = vadd.f32 0.0, %v1973
      %v1975 = vpop.f32.mrb[0].mxu0
      %1976 = vmatprep.mubr.bf16.mxu0 0
      %1977 = vmatmul.mubr.bf16.gmra.mrb[0].mxu0 %v733
      %v1978 = vpop.f32.mrb[0].mxu0
      %v1979 = vadd.f32 0.0, %v1978
      %v1980 = vpop.f32.mrb[0].mxu0
      %v1981 = vpop.f32.mrb[0].mxu0
      %v1982 = vadd.f32 0.0, %v1981
      %v1983 = vpop.f32.mrb[0].mxu0
      %1984 = vmatprep.mubr.bf16.mxu0 0
      %1985 = vmatmul.mubr.bf16.gmra.mrb[0].mxu0 %v736
      %v1986 = vpop.f32.mrb[0].mxu0
      %v1987 = vadd.f32 0.0, %v1986
      %v1988 = vpop.f32.mrb[0].mxu0
      %v1989 = vpop.f32.mrb[0].mxu0
      %v1990 = vadd.f32 0.0, %v1989
      %v1991 = vpop.f32.mrb[0].mxu0
      %1992 = vmatprep.mubr.bf16.mxu0 0
      %1993 = vmatmul.mubr.bf16.gmra.mrb[0].mxu0 %v739
      %v1994 = vpop.f32.mrb[0].mxu0
      %v1995 = vadd.f32 0.0, %v1994
      %v1996 = vpop.f32.mrb[0].mxu0
      %v1997 = vpop.f32.mrb[0].mxu0
      %v1998 = vadd.f32 0.0, %v1997
      %v1999 = vpop.f32.mrb[0].mxu0
      %2000 = vmatprep.mubr.bf16.mxu0 0
      %2001 = vmatmul.mubr.bf16.gmra.mrb[0].mxu0 %v742
      %v2002 = vpop.f32.mrb[0].mxu0
      %v2003 = vadd.f32 0.0, %v2002
      %v2004 = vpop.f32.mrb[0].mxu0
      %v2005 = vpop.f32.mrb[0].mxu0
      %v2006 = vadd.f32 0.0, %v2005
      %v2007 = vpop.f32.mrb[0].mxu0
      %2008 = vmatprep.mubr.bf16.mxu0 0
      %2009 = vmatmul.mubr.bf16.gmra.mrb[0].mxu0 %v745
      %v2010 = vpop.f32.mrb[0].mxu0
      %v2011 = vadd.f32 0.0, %v2010
      %v2012 = vpop.f32.mrb[0].mxu0
      %v2013 = vpop.f32.mrb[0].mxu0
      %v2014 = vadd.f32 0.0, %v2013
      %v2015 = vpop.f32.mrb[0].mxu0
      %2016 = vmatprep.mubr.bf16.mxu0 0
      %2017 = vmatmul.mubr.bf16.gmra.mrb[0].mxu0 %v1859
      %v2018 = vpop.f32.mrb[0].mxu0
      %v2019 = vadd.f32 0.0, %v2018
      %v2020 = vpop.f32.mrb[0].mxu0
      %v2021 = vpop.f32.mrb[0].mxu0
      %v2022 = vadd.f32 0.0, %v2021
      %v2023 = vpop.f32.mrb[0].mxu0
      %2024 = vdwg.mxu0
      %v2025 = vadd.f32 %v1799, %v1899
      %v2026 = vadd.f32 %v1800, %v1902
      %v2027 = vadd.f32 %v1801, %v1907
      %v2028 = vadd.f32 %v1802, %v1910
      %v2029 = vadd.f32 %v1803, %v1915
      %v2030 = vadd.f32 %v1804, %v1918
      %v2031 = vadd.f32 %v1805, %v1923
      %v2032 = vadd.f32 %v1806, %v1926
      %v2033 = vadd.f32 %v1807, %v1931
      %v2034 = vadd.f32 %v1808, %v1934
      %v2035 = vadd.f32 %v1809, %v1939
      %v2036 = vadd.f32 %v1810, %v1942
      %v2037 = vadd.f32 %v1811, %v1947
      %v2038 = vadd.f32 %v1812, %v1950
      %v2039 = vadd.f32 %v1813, %v1955
      %v2040 = vadd.f32 %v1814, %v1958
      %v2041 = vadd.f32 %v1815, %v1963
      %v2042 = vadd.f32 %v1816, %v1966
      %v2043 = vadd.f32 %v1817, %v1971
      %v2044 = vadd.f32 %v1818, %v1974
      %v2045 = vadd.f32 %v1819, %v1979
      %v2046 = vadd.f32 %v1820, %v1982
      %v2047 = vadd.f32 %v1821, %v1987
      %v2048 = vadd.f32 %v1822, %v1990
      %v2049 = vadd.f32 %v1823, %v1995
      %v2050 = vadd.f32 %v1824, %v1998
      %v2051 = vadd.f32 %v1825, %v2003
      %v2052 = vadd.f32 %v1826, %v2006
      %v2053 = vadd.f32 %v1827, %v2011
      %v2054 = vadd.f32 %v1828, %v2014
      %v2055 = vadd.f32 %v1829, %v2019
      %v2056 = vadd.f32 %v1830, %v2022
      %v2058 = vrot.slane %v248, 5
      %v2059 = vrot.slane %v2058, 4
      %v2060 = vrot.slane %v249, 5
      %v2061 = vsel %vm1222, %v2059, %v2060
      %v2062 = vrot.slane %v2060, 4
      %v2063 = vrot.slane %v250, 5
      %v2064 = vsel %vm1222, %v2062, %v2063
      %v2065 = vunpack.c.l.b16 %v2061
      %v2066 = vunpack.c.l.b16 %v2064
      %v2067 = vpack.c.b16 %v2066, %v2065
      %v2069 = vsel %vm698, %v2067, 0
      %v2072 = vsel %vm747, %v259, 0
      %2074 = vmatprep.subr.bf16.mxu0 0
      %2075 = vmatpush1.bf16.msra.mxu0 %v2072
      %2076 = vmatprep.subr.bf16.mxu0 0
      %2077 = vmatpush1.bf16.msra.mxu0 0
      %2078 = vmatprep.subr.bf16.mxu0 0
      %2079 = vmatpush1.bf16.msra.mxu0 0
      %2080 = vmatprep.subr.bf16.mxu0 0
      %2081 = vmatpush1.bf16.msra.mxu0 0
      %2082 = vmatprep.subr.bf16.mxu0 0
      %2083 = vmatpush1.bf16.msra.mxu0 0
      %2084 = vmatprep.subr.bf16.mxu0 0
      %2085 = vmatpush1.bf16.msra.mxu0 0
      %2086 = vmatprep.subr.bf16.mxu0 0
      %2087 = vmatpush1.bf16.msra.mxu0 0
      %2088 = vmatprep.subr.bf16.mxu0 0
      %2089 = vmatpush1.bf16.msra.mxu0 0
      %2090 = vmatprep.subr.bf16.mxu0 0
      %2091 = vmatpush1.bf16.msra.mxu0 0
      %2092 = vmatprep.subr.bf16.mxu0 0
      %2093 = vmatpush1.bf16.msra.mxu0 0
      %2094 = vmatprep.subr.bf16.mxu0 0
      %2095 = vmatpush1.bf16.msra.mxu0 0
      %2096 = vmatprep.subr.bf16.mxu0 0
      %2097 = vmatpush1.bf16.msra.mxu0 0
      %2098 = vmatprep.subr.bf16.mxu0 0
      %2099 = vmatpush1.bf16.msra.mxu0 0
      %2100 = vmatprep.subr.bf16.mxu0 0
      %2101 = vmatpush1.bf16.msra.mxu0 0
      %2102 = vmatprep.subr.bf16.mxu0 0
      %2103 = vmatpush1.bf16.msra.mxu0 0
      %2104 = vmatprep.subr.bf16.mxu0 0
      %2105 = vmatpush1.bf16.msra.mxu0 0
      %2106 = vmatprep.mubr.bf16.mxu0 0
      %2107 = vmatmul.mubr.bf16.gmra.mrb[0].mxu0 %v1387
      %v2108 = vpop.f32.mrb[0].mxu0
      %v2109 = vadd.f32 0.0, %v2108
      %v2110 = vpop.f32.mrb[0].mxu0
      %v2111 = vpop.f32.mrb[0].mxu0
      %v2112 = vadd.f32 0.0, %v2111
      %v2113 = vpop.f32.mrb[0].mxu0
      %2114 = vmatprep.mubr.bf16.mxu0 0
      %2115 = vmatmul.mubr.bf16.gmra.mrb[0].mxu0 %v1390
      %v2116 = vpop.f32.mrb[0].mxu0
      %v2117 = vadd.f32 0.0, %v2116
      %v2118 = vpop.f32.mrb[0].mxu0
      %v2119 = vpop.f32.mrb[0].mxu0
      %v2120 = vadd.f32 0.0, %v2119
      %v2121 = vpop.f32.mrb[0].mxu0
      %2122 = vmatprep.mubr.bf16.mxu0 0
      %2123 = vmatmul.mubr.bf16.gmra.mrb[0].mxu0 %v1393
      %v2124 = vpop.f32.mrb[0].mxu0
      %v2125 = vadd.f32 0.0, %v2124
      %v2126 = vpop.f32.mrb[0].mxu0
      %v2127 = vpop.f32.mrb[0].mxu0
      %v2128 = vadd.f32 0.0, %v2127
      %v2129 = vpop.f32.mrb[0].mxu0
      %2130 = vmatprep.mubr.bf16.mxu0 0
      %2131 = vmatmul.mubr.bf16.gmra.mrb[0].mxu0 %v1396
      %v2132 = vpop.f32.mrb[0].mxu0
      %v2133 = vadd.f32 0.0, %v2132
      %v2134 = vpop.f32.mrb[0].mxu0
      %v2135 = vpop.f32.mrb[0].mxu0
      %v2136 = vadd.f32 0.0, %v2135
      %v2137 = vpop.f32.mrb[0].mxu0
      %2138 = vmatprep.mubr.bf16.mxu0 0
      %2139 = vmatmul.mubr.bf16.gmra.mrb[0].mxu0 %v1399
      %v2140 = vpop.f32.mrb[0].mxu0
      %v2141 = vadd.f32 0.0, %v2140
      %v2142 = vpop.f32.mrb[0].mxu0
      %v2143 = vpop.f32.mrb[0].mxu0
      %v2144 = vadd.f32 0.0, %v2143
      %v2145 = vpop.f32.mrb[0].mxu0
      %2146 = vmatprep.mubr.bf16.mxu0 0
      %2147 = vmatmul.mubr.bf16.gmra.mrb[0].mxu0 %v1402
      %v2148 = vpop.f32.mrb[0].mxu0
      %v2149 = vadd.f32 0.0, %v2148
      %v2150 = vpop.f32.mrb[0].mxu0
      %v2151 = vpop.f32.mrb[0].mxu0
      %v2152 = vadd.f32 0.0, %v2151
      %v2153 = vpop.f32.mrb[0].mxu0
      %2154 = vmatprep.mubr.bf16.mxu0 0
      %2155 = vmatmul.mubr.bf16.gmra.mrb[0].mxu0 %v1405
      %v2156 = vpop.f32.mrb[0].mxu0
      %v2157 = vadd.f32 0.0, %v2156
      %v2158 = vpop.f32.mrb[0].mxu0
      %v2159 = vpop.f32.mrb[0].mxu0
      %v2160 = vadd.f32 0.0, %v2159
      %v2161 = vpop.f32.mrb[0].mxu0
      %2162 = vmatprep.mubr.bf16.mxu0 0
      %2163 = vmatmul.mubr.bf16.gmra.mrb[0].mxu0 %v1408
      %v2164 = vpop.f32.mrb[0].mxu0
      %v2165 = vadd.f32 0.0, %v2164
      %v2166 = vpop.f32.mrb[0].mxu0
      %v2167 = vpop.f32.mrb[0].mxu0
      %v2168 = vadd.f32 0.0, %v2167
      %v2169 = vpop.f32.mrb[0].mxu0
      %2170 = vmatprep.mubr.bf16.mxu0 0
      %2171 = vmatmul.mubr.bf16.gmra.mrb[0].mxu0 %v1411
      %v2172 = vpop.f32.mrb[0].mxu0
      %v2173 = vadd.f32 0.0, %v2172
      %v2174 = vpop.f32.mrb[0].mxu0
      %v2175 = vpop.f32.mrb[0].mxu0
      %v2176 = vadd.f32 0.0, %v2175
      %v2177 = vpop.f32.mrb[0].mxu0
      %2178 = vmatprep.mubr.bf16.mxu0 0
      %2179 = vmatmul.mubr.bf16.gmra.mrb[0].mxu0 %v1414
      %v2180 = vpop.f32.mrb[0].mxu0
      %v2181 = vadd.f32 0.0, %v2180
      %v2182 = vpop.f32.mrb[0].mxu0
      %v2183 = vpop.f32.mrb[0].mxu0
      %v2184 = vadd.f32 0.0, %v2183
      %v2185 = vpop.f32.mrb[0].mxu0
      %2186 = vmatprep.mubr.bf16.mxu0 0
      %2187 = vmatmul.mubr.bf16.gmra.mrb[0].mxu0 %v1417
      %v2188 = vpop.f32.mrb[0].mxu0
      %v2189 = vadd.f32 0.0, %v2188
      %v2190 = vpop.f32.mrb[0].mxu0
      %v2191 = vpop.f32.mrb[0].mxu0
      %v2192 = vadd.f32 0.0, %v2191
      %v2193 = vpop.f32.mrb[0].mxu0
      %2194 = vmatprep.mubr.bf16.mxu0 0
      %2195 = vmatmul.mubr.bf16.gmra.mrb[0].mxu0 %v1420
      %v2196 = vpop.f32.mrb[0].mxu0
      %v2197 = vadd.f32 0.0, %v2196
      %v2198 = vpop.f32.mrb[0].mxu0
      %v2199 = vpop.f32.mrb[0].mxu0
      %v2200 = vadd.f32 0.0, %v2199
      %v2201 = vpop.f32.mrb[0].mxu0
      %2202 = vmatprep.mubr.bf16.mxu0 0
      %2203 = vmatmul.mubr.bf16.gmra.mrb[0].mxu0 %v1423
      %v2204 = vpop.f32.mrb[0].mxu0
      %v2205 = vadd.f32 0.0, %v2204
      %v2206 = vpop.f32.mrb[0].mxu0
      %v2207 = vpop.f32.mrb[0].mxu0
      %v2208 = vadd.f32 0.0, %v2207
      %v2209 = vpop.f32.mrb[0].mxu0
      %2210 = vmatprep.mubr.bf16.mxu0 0
      %2211 = vmatmul.mubr.bf16.gmra.mrb[0].mxu0 %v1426
      %v2212 = vpop.f32.mrb[0].mxu0
      %v2213 = vadd.f32 0.0, %v2212
      %v2214 = vpop.f32.mrb[0].mxu0
      %v2215 = vpop.f32.mrb[0].mxu0
      %v2216 = vadd.f32 0.0, %v2215
      %v2217 = vpop.f32.mrb[0].mxu0
      %2218 = vmatprep.mubr.bf16.mxu0 0
      %2219 = vmatmul.mubr.bf16.gmra.mrb[0].mxu0 %v1429
      %v2220 = vpop.f32.mrb[0].mxu0
      %v2221 = vadd.f32 0.0, %v2220
      %v2222 = vpop.f32.mrb[0].mxu0
      %v2223 = vpop.f32.mrb[0].mxu0
      %v2224 = vadd.f32 0.0, %v2223
      %v2225 = vpop.f32.mrb[0].mxu0
      %2226 = vmatprep.mubr.bf16.mxu0 0
      %2227 = vmatmul.mubr.bf16.gmra.mrb[0].mxu0 %v2069
      %v2228 = vpop.f32.mrb[0].mxu0
      %v2229 = vadd.f32 0.0, %v2228
      %v2230 = vpop.f32.mrb[0].mxu0
      %v2231 = vpop.f32.mrb[0].mxu0
      %v2232 = vadd.f32 0.0, %v2231
      %v2233 = vpop.f32.mrb[0].mxu0
      %2234 = vdwg.mxu0
      %v2235 = vadd.f32 %v2025, %v2109
      %v2236 = vadd.f32 %v2026, %v2112
      %v2237 = vadd.f32 %v2027, %v2117
      %v2238 = vadd.f32 %v2028, %v2120
      %v2239 = vadd.f32 %v2029, %v2125
      %v2240 = vadd.f32 %v2030, %v2128
      %v2241 = vadd.f32 %v2031, %v2133
      %v2242 = vadd.f32 %v2032, %v2136
      %v2243 = vadd.f32 %v2033, %v2141
      %v2244 = vadd.f32 %v2034, %v2144
      %v2245 = vadd.f32 %v2035, %v2149
      %v2246 = vadd.f32 %v2036, %v2152
      %v2247 = vadd.f32 %v2037, %v2157
      %v2248 = vadd.f32 %v2038, %v2160
      %v2249 = vadd.f32 %v2039, %v2165
      %v2250 = vadd.f32 %v2040, %v2168
      %v2251 = vadd.f32 %v2041, %v2173
      %v2252 = vadd.f32 %v2042, %v2176
      %v2253 = vadd.f32 %v2043, %v2181
      %v2254 = vadd.f32 %v2044, %v2184
      %v2255 = vadd.f32 %v2045, %v2189
      %v2256 = vadd.f32 %v2046, %v2192
      %v2257 = vadd.f32 %v2047, %v2197
      %v2258 = vadd.f32 %v2048, %v2200
      %v2259 = vadd.f32 %v2049, %v2205
      %v2260 = vadd.f32 %v2050, %v2208
      %v2261 = vadd.f32 %v2051, %v2213
      %v2262 = vadd.f32 %v2052, %v2216
      %v2263 = vadd.f32 %v2053, %v2221
      %v2264 = vadd.f32 %v2054, %v2224
      %v2265 = vadd.f32 %v2055, %v2229
      %v2266 = vadd.f32 %v2056, %v2232
      %v2269 = vunpack.c.l.b16 %v251
      %v2270 = vunpack.c.l.b16 %v252
      %v2271 = vpack.c.b16 %v2270, %v2269
      %v2273 = vsel %vm698, %v2271, 0
      %v2276 = vsel %vm747, %v260, 0
      %2278 = vmatprep.subr.bf16.mxu0 0
      %2279 = vmatpush1.bf16.msra.mxu0 %v2276
      %2280 = vmatprep.subr.bf16.mxu0 0
      %2281 = vmatpush1.bf16.msra.mxu0 0
      %2282 = vmatprep.subr.bf16.mxu0 0
      %2283 = vmatpush1.bf16.msra.mxu0 0
      %2284 = vmatprep.subr.bf16.mxu0 0
      %2285 = vmatpush1.bf16.msra.mxu0 0
      %2286 = vmatprep.subr.bf16.mxu0 0
      %2287 = vmatpush1.bf16.msra.mxu0 0
      %2288 = vmatprep.subr.bf16.mxu0 0
      %2289 = vmatpush1.bf16.msra.mxu0 0
      %2290 = vmatprep.subr.bf16.mxu0 0
      %2291 = vmatpush1.bf16.msra.mxu0 0
      %2292 = vmatprep.subr.bf16.mxu0 0
      %2293 = vmatpush1.bf16.msra.mxu0 0
      %2294 = vmatprep.subr.bf16.mxu0 0
      %2295 = vmatpush1.bf16.msra.mxu0 0
      %2296 = vmatprep.subr.bf16.mxu0 0
      %2297 = vmatpush1.bf16.msra.mxu0 0
      %2298 = vmatprep.subr.bf16.mxu0 0
      %2299 = vmatpush1.bf16.msra.mxu0 0
      %2300 = vmatprep.subr.bf16.mxu0 0
      %2301 = vmatpush1.bf16.msra.mxu0 0
      %2302 = vmatprep.subr.bf16.mxu0 0
      %2303 = vmatpush1.bf16.msra.mxu0 0
      %2304 = vmatprep.subr.bf16.mxu0 0
      %2305 = vmatpush1.bf16.msra.mxu0 0
      %2306 = vmatprep.subr.bf16.mxu0 0
      %2307 = vmatpush1.bf16.msra.mxu0 0
      %2308 = vmatprep.subr.bf16.mxu0 0
      %2309 = vmatpush1.bf16.msra.mxu0 0
      %2310 = vmatprep.mubr.bf16.mxu0 0
      %2311 = vmatmul.mubr.bf16.gmra.mrb[0].mxu0 %v999
      %v2312 = vpop.f32.mrb[0].mxu0
      %v2313 = vadd.f32 0.0, %v2312
      %v2314 = vpop.f32.mrb[0].mxu0
      %v2315 = vpop.f32.mrb[0].mxu0
      %v2316 = vadd.f32 0.0, %v2315
      %v2317 = vpop.f32.mrb[0].mxu0
      %2318 = vmatprep.mubr.bf16.mxu0 0
      %2319 = vmatmul.mubr.bf16.gmra.mrb[0].mxu0 %v1002
      %v2320 = vpop.f32.mrb[0].mxu0
      %v2321 = vadd.f32 0.0, %v2320
      %v2322 = vpop.f32.mrb[0].mxu0
      %v2323 = vpop.f32.mrb[0].mxu0
      %v2324 = vadd.f32 0.0, %v2323
      %v2325 = vpop.f32.mrb[0].mxu0
      %2326 = vmatprep.mubr.bf16.mxu0 0
      %2327 = vmatmul.mubr.bf16.gmra.mrb[0].mxu0 %v1005
      %v2328 = vpop.f32.mrb[0].mxu0
      %v2329 = vadd.f32 0.0, %v2328
      %v2330 = vpop.f32.mrb[0].mxu0
      %v2331 = vpop.f32.mrb[0].mxu0
      %v2332 = vadd.f32 0.0, %v2331
      %v2333 = vpop.f32.mrb[0].mxu0
      %2334 = vmatprep.mubr.bf16.mxu0 0
      %2335 = vmatmul.mubr.bf16.gmra.mrb[0].mxu0 %v1008
      %v2336 = vpop.f32.mrb[0].mxu0
      %v2337 = vadd.f32 0.0, %v2336
      %v2338 = vpop.f32.mrb[0].mxu0
      %v2339 = vpop.f32.mrb[0].mxu0
      %v2340 = vadd.f32 0.0, %v2339
      %v2341 = vpop.f32.mrb[0].mxu0
      %2342 = vmatprep.mubr.bf16.mxu0 0
      %2343 = vmatmul.mubr.bf16.gmra.mrb[0].mxu0 %v1011
      %v2344 = vpop.f32.mrb[0].mxu0
      %v2345 = vadd.f32 0.0, %v2344
      %v2346 = vpop.f32.mrb[0].mxu0
      %v2347 = vpop.f32.mrb[0].mxu0
      %v2348 = vadd.f32 0.0, %v2347
      %v2349 = vpop.f32.mrb[0].mxu0
      %2350 = vmatprep.mubr.bf16.mxu0 0
      %2351 = vmatmul.mubr.bf16.gmra.mrb[0].mxu0 %v1014
      %v2352 = vpop.f32.mrb[0].mxu0
      %v2353 = vadd.f32 0.0, %v2352
      %v2354 = vpop.f32.mrb[0].mxu0
      %v2355 = vpop.f32.mrb[0].mxu0
      %v2356 = vadd.f32 0.0, %v2355
      %v2357 = vpop.f32.mrb[0].mxu0
      %2358 = vmatprep.mubr.bf16.mxu0 0
      %2359 = vmatmul.mubr.bf16.gmra.mrb[0].mxu0 %v1017
      %v2360 = vpop.f32.mrb[0].mxu0
      %v2361 = vadd.f32 0.0, %v2360
      %v2362 = vpop.f32.mrb[0].mxu0
      %v2363 = vpop.f32.mrb[0].mxu0
      %v2364 = vadd.f32 0.0, %v2363
      %v2365 = vpop.f32.mrb[0].mxu0
      %2366 = vmatprep.mubr.bf16.mxu0 0
      %2367 = vmatmul.mubr.bf16.gmra.mrb[0].mxu0 %v1020
      %v2368 = vpop.f32.mrb[0].mxu0
      %v2369 = vadd.f32 0.0, %v2368
      %v2370 = vpop.f32.mrb[0].mxu0
      %v2371 = vpop.f32.mrb[0].mxu0
      %v2372 = vadd.f32 0.0, %v2371
      %v2373 = vpop.f32.mrb[0].mxu0
      %2374 = vmatprep.mubr.bf16.mxu0 0
      %2375 = vmatmul.mubr.bf16.gmra.mrb[0].mxu0 %v1023
      %v2376 = vpop.f32.mrb[0].mxu0
      %v2377 = vadd.f32 0.0, %v2376
      %v2378 = vpop.f32.mrb[0].mxu0
      %v2379 = vpop.f32.mrb[0].mxu0
      %v2380 = vadd.f32 0.0, %v2379
      %v2381 = vpop.f32.mrb[0].mxu0
      %2382 = vmatprep.mubr.bf16.mxu0 0
      %2383 = vmatmul.mubr.bf16.gmra.mrb[0].mxu0 %v1026
      %v2384 = vpop.f32.mrb[0].mxu0
      %v2385 = vadd.f32 0.0, %v2384
      %v2386 = vpop.f32.mrb[0].mxu0
      %v2387 = vpop.f32.mrb[0].mxu0
      %v2388 = vadd.f32 0.0, %v2387
      %v2389 = vpop.f32.mrb[0].mxu0
      %2390 = vmatprep.mubr.bf16.mxu0 0
      %2391 = vmatmul.mubr.bf16.gmra.mrb[0].mxu0 %v1029
      %v2392 = vpop.f32.mrb[0].mxu0
      %v2393 = vadd.f32 0.0, %v2392
      %v2394 = vpop.f32.mrb[0].mxu0
      %v2395 = vpop.f32.mrb[0].mxu0
      %v2396 = vadd.f32 0.0, %v2395
      %v2397 = vpop.f32.mrb[0].mxu0
      %2398 = vmatprep.mubr.bf16.mxu0 0
      %2399 = vmatmul.mubr.bf16.gmra.mrb[0].mxu0 %v1032
      %v2400 = vpop.f32.mrb[0].mxu0
      %v2401 = vadd.f32 0.0, %v2400
      %v2402 = vpop.f32.mrb[0].mxu0
      %v2403 = vpop.f32.mrb[0].mxu0
      %v2404 = vadd.f32 0.0, %v2403
      %v2405 = vpop.f32.mrb[0].mxu0
      %2406 = vmatprep.mubr.bf16.mxu0 0
      %2407 = vmatmul.mubr.bf16.gmra.mrb[0].mxu0 %v1035
      %v2408 = vpop.f32.mrb[0].mxu0
      %v2409 = vadd.f32 0.0, %v2408
      %v2410 = vpop.f32.mrb[0].mxu0
      %v2411 = vpop.f32.mrb[0].mxu0
      %v2412 = vadd.f32 0.0, %v2411
      %v2413 = vpop.f32.mrb[0].mxu0
      %2414 = vmatprep.mubr.bf16.mxu0 0
      %2415 = vmatmul.mubr.bf16.gmra.mrb[0].mxu0 %v1038
      %v2416 = vpop.f32.mrb[0].mxu0
      %v2417 = vadd.f32 0.0, %v2416
      %v2418 = vpop.f32.mrb[0].mxu0
      %v2419 = vpop.f32.mrb[0].mxu0
      %v2420 = vadd.f32 0.0, %v2419
      %v2421 = vpop.f32.mrb[0].mxu0
      %2422 = vmatprep.mubr.bf16.mxu0 0
      %2423 = vmatmul.mubr.bf16.gmra.mrb[0].mxu0 %v1633
      %v2424 = vpop.f32.mrb[0].mxu0
      %v2425 = vadd.f32 0.0, %v2424
      %v2426 = vpop.f32.mrb[0].mxu0
      %v2427 = vpop.f32.mrb[0].mxu0
      %v2428 = vadd.f32 0.0, %v2427
      %v2429 = vpop.f32.mrb[0].mxu0
      %2430 = vmatprep.mubr.bf16.mxu0 0
      %2431 = vmatmul.mubr.bf16.gmra.mrb[0].mxu0 %v2273
      %v2432 = vpop.f32.mrb[0].mxu0
      %v2433 = vadd.f32 0.0, %v2432
      %v2434 = vpop.f32.mrb[0].mxu0
      %v2435 = vpop.f32.mrb[0].mxu0
      %v2436 = vadd.f32 0.0, %v2435
      %v2437 = vpop.f32.mrb[0].mxu0
      %2438 = vdwg.mxu0
      %v2439 = vadd.f32 %v2235, %v2313
      %v2440 = vadd.f32 %v2236, %v2316
      %v2441 = vadd.f32 %v2237, %v2321
      %v2442 = vadd.f32 %v2238, %v2324
      %v2443 = vadd.f32 %v2239, %v2329
      %v2444 = vadd.f32 %v2240, %v2332
      %v2445 = vadd.f32 %v2241, %v2337
      %v2446 = vadd.f32 %v2242, %v2340
      %v2447 = vadd.f32 %v2243, %v2345
      %v2448 = vadd.f32 %v2244, %v2348
      %v2449 = vadd.f32 %v2245, %v2353
      %v2450 = vadd.f32 %v2246, %v2356
      %v2451 = vadd.f32 %v2247, %v2361
      %v2452 = vadd.f32 %v2248, %v2364
      %v2453 = vadd.f32 %v2249, %v2369
      %v2454 = vadd.f32 %v2250, %v2372
      %v2455 = vadd.f32 %v2251, %v2377
      %v2456 = vadd.f32 %v2252, %v2380
      %v2457 = vadd.f32 %v2253, %v2385
      %v2458 = vadd.f32 %v2254, %v2388
      %v2459 = vadd.f32 %v2255, %v2393
      %v2460 = vadd.f32 %v2256, %v2396
      %v2461 = vadd.f32 %v2257, %v2401
      %v2462 = vadd.f32 %v2258, %v2404
      %v2463 = vadd.f32 %v2259, %v2409
      %v2464 = vadd.f32 %v2260, %v2412
      %v2465 = vadd.f32 %v2261, %v2417
      %v2466 = vadd.f32 %v2262, %v2420
      %v2467 = vadd.f32 %v2263, %v2425
      %v2468 = vadd.f32 %v2264, %v2428
      %v2469 = vadd.f32 %v2265, %v2433
      %v2470 = vadd.f32 %v2266, %v2436
      %v2472 = vshrl.u32 %v251, 16
      %v2474 = vrot.slane %v2472, 4
      %v2475 = vshll.u32 %v251, 16
      %v2477 = vrot.slane %v2475, 5
      %v2478 = vor.u32 %v2474, %v2477
      %v2479 = vrot.slane %v2478, 4
      %v2481 = vshll.u32 %v252, 16
      %v2483 = vrot.slane %v2481, 5
      %v2484 = vsel %vm265, %v2479, %v2483
      %v2485 = vshrl.u32 %v252, 16
      %v2487 = vrot.slane %v2485, 4
      %v2488 = vor.u32 %v2487, %v2483
      %v2489 = vrot.slane %v2488, 4
      %v2491 = vshll.u32 %v253, 16
      %v2493 = vrot.slane %v2491, 5
      %v2494 = vsel %vm265, %v2489, %v2493
      %v2495 = vunpack.c.l.b16 %v2484
      %v2496 = vunpack.c.l.b16 %v2494
      %v2497 = vpack.c.b16 %v2496, %v2495
      %v2499 = vsel %vm698, %v2497, 0
      %v2502 = vsel %vm747, %v261, 0
      %2504 = vmatprep.subr.bf16.mxu0 0
      %2505 = vmatpush1.bf16.msra.mxu0 %v2502
      %2506 = vmatprep.subr.bf16.mxu0 0
      %2507 = vmatpush1.bf16.msra.mxu0 0
      %2508 = vmatprep.subr.bf16.mxu0 0
      %2509 = vmatpush1.bf16.msra.mxu0 0
      %2510 = vmatprep.subr.bf16.mxu0 0
      %2511 = vmatpush1.bf16.msra.mxu0 0
      %2512 = vmatprep.subr.bf16.mxu0 0
      %2513 = vmatpush1.bf16.msra.mxu0 0
      %2514 = vmatprep.subr.bf16.mxu0 0
      %2515 = vmatpush1.bf16.msra.mxu0 0
      %2516 = vmatprep.subr.bf16.mxu0 0
      %2517 = vmatpush1.bf16.msra.mxu0 0
      %2518 = vmatprep.subr.bf16.mxu0 0
      %2519 = vmatpush1.bf16.msra.mxu0 0
      %2520 = vmatprep.subr.bf16.mxu0 0
      %2521 = vmatpush1.bf16.msra.mxu0 0
      %2522 = vmatprep.subr.bf16.mxu0 0
      %2523 = vmatpush1.bf16.msra.mxu0 0
      %2524 = vmatprep.subr.bf16.mxu0 0
      %2525 = vmatpush1.bf16.msra.mxu0 0
      %2526 = vmatprep.subr.bf16.mxu0 0
      %2527 = vmatpush1.bf16.msra.mxu0 0
      %2528 = vmatprep.subr.bf16.mxu0 0
      %2529 = vmatpush1.bf16.msra.mxu0 0
      %2530 = vmatprep.subr.bf16.mxu0 0
      %2531 = vmatpush1.bf16.msra.mxu0 0
      %2532 = vmatprep.subr.bf16.mxu0 0
      %2533 = vmatpush1.bf16.msra.mxu0 0
      %2534 = vmatprep.subr.bf16.mxu0 0
      %2535 = vmatpush1.bf16.msra.mxu0 0
      %2536 = vmatprep.mubr.bf16.mxu0 0
      %2537 = vmatmul.mubr.bf16.gmra.mrb[0].mxu0 %v706
      %v2538 = vpop.f32.mrb[0].mxu0
      %v2539 = vadd.f32 0.0, %v2538
      %v2540 = vpop.f32.mrb[0].mxu0
      %v2541 = vpop.f32.mrb[0].mxu0
      %v2542 = vadd.f32 0.0, %v2541
      %v2543 = vpop.f32.mrb[0].mxu0
      %2544 = vmatprep.mubr.bf16.mxu0 0
      %2545 = vmatmul.mubr.bf16.gmra.mrb[0].mxu0 %v709
      %v2546 = vpop.f32.mrb[0].mxu0
      %v2547 = vadd.f32 0.0, %v2546
      %v2548 = vpop.f32.mrb[0].mxu0
      %v2549 = vpop.f32.mrb[0].mxu0
      %v2550 = vadd.f32 0.0, %v2549
      %v2551 = vpop.f32.mrb[0].mxu0
      %2552 = vmatprep.mubr.bf16.mxu0 0
      %2553 = vmatmul.mubr.bf16.gmra.mrb[0].mxu0 %v712
      %v2554 = vpop.f32.mrb[0].mxu0
      %v2555 = vadd.f32 0.0, %v2554
      %v2556 = vpop.f32.mrb[0].mxu0
      %v2557 = vpop.f32.mrb[0].mxu0
      %v2558 = vadd.f32 0.0, %v2557
      %v2559 = vpop.f32.mrb[0].mxu0
      %2560 = vmatprep.mubr.bf16.mxu0 0
      %2561 = vmatmul.mubr.bf16.gmra.mrb[0].mxu0 %v715
      %v2562 = vpop.f32.mrb[0].mxu0
      %v2563 = vadd.f32 0.0, %v2562
      %v2564 = vpop.f32.mrb[0].mxu0
      %v2565 = vpop.f32.mrb[0].mxu0
      %v2566 = vadd.f32 0.0, %v2565
      %v2567 = vpop.f32.mrb[0].mxu0
      %2568 = vmatprep.mubr.bf16.mxu0 0
      %2569 = vmatmul.mubr.bf16.gmra.mrb[0].mxu0 %v718
      %v2570 = vpop.f32.mrb[0].mxu0
      %v2571 = vadd.f32 0.0, %v2570
      %v2572 = vpop.f32.mrb[0].mxu0
      %v2573 = vpop.f32.mrb[0].mxu0
      %v2574 = vadd.f32 0.0, %v2573
      %v2575 = vpop.f32.mrb[0].mxu0
      %2576 = vmatprep.mubr.bf16.mxu0 0
      %2577 = vmatmul.mubr.bf16.gmra.mrb[0].mxu0 %v721
      %v2578 = vpop.f32.mrb[0].mxu0
      %v2579 = vadd.f32 0.0, %v2578
      %v2580 = vpop.f32.mrb[0].mxu0
      %v2581 = vpop.f32.mrb[0].mxu0
      %v2582 = vadd.f32 0.0, %v2581
      %v2583 = vpop.f32.mrb[0].mxu0
      %2584 = vmatprep.mubr.bf16.mxu0 0
      %2585 = vmatmul.mubr.bf16.gmra.mrb[0].mxu0 %v724
      %v2586 = vpop.f32.mrb[0].mxu0
      %v2587 = vadd.f32 0.0, %v2586
      %v2588 = vpop.f32.mrb[0].mxu0
      %v2589 = vpop.f32.mrb[0].mxu0
      %v2590 = vadd.f32 0.0, %v2589
      %v2591 = vpop.f32.mrb[0].mxu0
      %2592 = vmatprep.mubr.bf16.mxu0 0
      %2593 = vmatmul.mubr.bf16.gmra.mrb[0].mxu0 %v727
      %v2594 = vpop.f32.mrb[0].mxu0
      %v2595 = vadd.f32 0.0, %v2594
      %v2596 = vpop.f32.mrb[0].mxu0
      %v2597 = vpop.f32.mrb[0].mxu0
      %v2598 = vadd.f32 0.0, %v2597
      %v2599 = vpop.f32.mrb[0].mxu0
      %2600 = vmatprep.mubr.bf16.mxu0 0
      %2601 = vmatmul.mubr.bf16.gmra.mrb[0].mxu0 %v730
      %v2602 = vpop.f32.mrb[0].mxu0
      %v2603 = vadd.f32 0.0, %v2602
      %v2604 = vpop.f32.mrb[0].mxu0
      %v2605 = vpop.f32.mrb[0].mxu0
      %v2606 = vadd.f32 0.0, %v2605
      %v2607 = vpop.f32.mrb[0].mxu0
      %2608 = vmatprep.mubr.bf16.mxu0 0
      %2609 = vmatmul.mubr.bf16.gmra.mrb[0].mxu0 %v733
      %v2610 = vpop.f32.mrb[0].mxu0
      %v2611 = vadd.f32 0.0, %v2610
      %v2612 = vpop.f32.mrb[0].mxu0
      %v2613 = vpop.f32.mrb[0].mxu0
      %v2614 = vadd.f32 0.0, %v2613
      %v2615 = vpop.f32.mrb[0].mxu0
      %2616 = vmatprep.mubr.bf16.mxu0 0
      %2617 = vmatmul.mubr.bf16.gmra.mrb[0].mxu0 %v736
      %v2618 = vpop.f32.mrb[0].mxu0
      %v2619 = vadd.f32 0.0, %v2618
      %v2620 = vpop.f32.mrb[0].mxu0
      %v2621 = vpop.f32.mrb[0].mxu0
      %v2622 = vadd.f32 0.0, %v2621
      %v2623 = vpop.f32.mrb[0].mxu0
      %2624 = vmatprep.mubr.bf16.mxu0 0
      %2625 = vmatmul.mubr.bf16.gmra.mrb[0].mxu0 %v739
      %v2626 = vpop.f32.mrb[0].mxu0
      %v2627 = vadd.f32 0.0, %v2626
      %v2628 = vpop.f32.mrb[0].mxu0
      %v2629 = vpop.f32.mrb[0].mxu0
      %v2630 = vadd.f32 0.0, %v2629
      %v2631 = vpop.f32.mrb[0].mxu0
      %2632 = vmatprep.mubr.bf16.mxu0 0
      %2633 = vmatmul.mubr.bf16.gmra.mrb[0].mxu0 %v742
      %v2634 = vpop.f32.mrb[0].mxu0
      %v2635 = vadd.f32 0.0, %v2634
      %v2636 = vpop.f32.mrb[0].mxu0
      %v2637 = vpop.f32.mrb[0].mxu0
      %v2638 = vadd.f32 0.0, %v2637
      %v2639 = vpop.f32.mrb[0].mxu0
      %2640 = vmatprep.mubr.bf16.mxu0 0
      %2641 = vmatmul.mubr.bf16.gmra.mrb[0].mxu0 %v745
      %v2642 = vpop.f32.mrb[0].mxu0
      %v2643 = vadd.f32 0.0, %v2642
      %v2644 = vpop.f32.mrb[0].mxu0
      %v2645 = vpop.f32.mrb[0].mxu0
      %v2646 = vadd.f32 0.0, %v2645
      %v2647 = vpop.f32.mrb[0].mxu0
      %2648 = vmatprep.mubr.bf16.mxu0 0
      %2649 = vmatmul.mubr.bf16.gmra.mrb[0].mxu0 %v1859
      %v2650 = vpop.f32.mrb[0].mxu0
      %v2651 = vadd.f32 0.0, %v2650
      %v2652 = vpop.f32.mrb[0].mxu0
      %v2653 = vpop.f32.mrb[0].mxu0
      %v2654 = vadd.f32 0.0, %v2653
      %v2655 = vpop.f32.mrb[0].mxu0
      %2656 = vmatprep.mubr.bf16.mxu0 0
      %2657 = vmatmul.mubr.bf16.gmra.mrb[0].mxu0 %v2499
      %v2658 = vpop.f32.mrb[0].mxu0
      %v2659 = vadd.f32 0.0, %v2658
      %v2660 = vpop.f32.mrb[0].mxu0
      %v2661 = vpop.f32.mrb[0].mxu0
      %v2662 = vadd.f32 0.0, %v2661
      %v2663 = vpop.f32.mrb[0].mxu0
      %2664 = vdwg.mxu0
      %v2665 = vadd.f32 %v2439, %v2539
      %v2666 = vadd.f32 %v2440, %v2542
      %v2667 = vadd.f32 %v2441, %v2547
      %v2668 = vadd.f32 %v2442, %v2550
      %v2669 = vadd.f32 %v2443, %v2555
      %v2670 = vadd.f32 %v2444, %v2558
      %v2671 = vadd.f32 %v2445, %v2563
      %v2672 = vadd.f32 %v2446, %v2566
      %v2673 = vadd.f32 %v2447, %v2571
      %v2674 = vadd.f32 %v2448, %v2574
      %v2675 = vadd.f32 %v2449, %v2579
      %v2676 = vadd.f32 %v2450, %v2582
      %v2677 = vadd.f32 %v2451, %v2587
      %v2678 = vadd.f32 %v2452, %v2590
      %v2679 = vadd.f32 %v2453, %v2595
      %v2680 = vadd.f32 %v2454, %v2598
      %v2681 = vadd.f32 %v2455, %v2603
      %v2682 = vadd.f32 %v2456, %v2606
      %v2683 = vadd.f32 %v2457, %v2611
      %v2684 = vadd.f32 %v2458, %v2614
      %v2685 = vadd.f32 %v2459, %v2619
      %v2686 = vadd.f32 %v2460, %v2622
      %v2687 = vadd.f32 %v2461, %v2627
      %v2688 = vadd.f32 %v2462, %v2630
      %v2689 = vadd.f32 %v2463, %v2635
      %v2690 = vadd.f32 %v2464, %v2638
      %v2691 = vadd.f32 %v2465, %v2643
      %v2692 = vadd.f32 %v2466, %v2646
      %v2693 = vadd.f32 %v2467, %v2651
      %v2694 = vadd.f32 %v2468, %v2654
      %v2695 = vadd.f32 %v2469, %v2659
      %v2696 = vadd.f32 %v2470, %v2662
      %v2698 = vrot.slane %v251, 5
      %v2699 = vrot.slane %v2698, 4
      %v2700 = vrot.slane %v252, 5
      %v2701 = vsel %vm1222, %v2699, %v2700
      %v2702 = vrot.slane %v2700, 4
      %v2703 = vrot.slane %v253, 5
      %v2704 = vsel %vm1222, %v2702, %v2703
      %v2705 = vunpack.c.l.b16 %v2701
      %v2706 = vunpack.c.l.b16 %v2704
      %v2707 = vpack.c.b16 %v2706, %v2705
      %v2709 = vsel %vm698, %v2707, 0
      %v2712 = vsel %vm747, %v262, 0
      %2714 = vmatprep.subr.bf16.mxu0 0
      %2715 = vmatpush1.bf16.msra.mxu0 %v2712
      %2716 = vmatprep.subr.bf16.mxu0 0
      %2717 = vmatpush1.bf16.msra.mxu0 0
      %2718 = vmatprep.subr.bf16.mxu0 0
      %2719 = vmatpush1.bf16.msra.mxu0 0
      %2720 = vmatprep.subr.bf16.mxu0 0
      %2721 = vmatpush1.bf16.msra.mxu0 0
      %2722 = vmatprep.subr.bf16.mxu0 0
      %2723 = vmatpush1.bf16.msra.mxu0 0
      %2724 = vmatprep.subr.bf16.mxu0 0
      %2725 = vmatpush1.bf16.msra.mxu0 0
      %2726 = vmatprep.subr.bf16.mxu0 0
      %2727 = vmatpush1.bf16.msra.mxu0 0
      %2728 = vmatprep.subr.bf16.mxu0 0
      %2729 = vmatpush1.bf16.msra.mxu0 0
      %2730 = vmatprep.subr.bf16.mxu0 0
      %2731 = vmatpush1.bf16.msra.mxu0 0
      %2732 = vmatprep.subr.bf16.mxu0 0
      %2733 = vmatpush1.bf16.msra.mxu0 0
      %2734 = vmatprep.subr.bf16.mxu0 0
      %2735 = vmatpush1.bf16.msra.mxu0 0
      %2736 = vmatprep.subr.bf16.mxu0 0
      %2737 = vmatpush1.bf16.msra.mxu0 0
      %2738 = vmatprep.subr.bf16.mxu0 0
      %2739 = vmatpush1.bf16.msra.mxu0 0
      %2740 = vmatprep.subr.bf16.mxu0 0
      %2741 = vmatpush1.bf16.msra.mxu0 0
      %2742 = vmatprep.subr.bf16.mxu0 0
      %2743 = vmatpush1.bf16.msra.mxu0 0
      %2744 = vmatprep.subr.bf16.mxu0 0
      %2745 = vmatpush1.bf16.msra.mxu0 0
      %2746 = vmatprep.mubr.bf16.mxu0 0
      %2747 = vmatmul.mubr.bf16.gmra.mrb[0].mxu0 %v1390
      %v2748 = vpop.f32.mrb[0].mxu0
      %v2749 = vadd.f32 0.0, %v2748
      %v2750 = vpop.f32.mrb[0].mxu0
      %v2751 = vpop.f32.mrb[0].mxu0
      %v2752 = vadd.f32 0.0, %v2751
      %v2753 = vpop.f32.mrb[0].mxu0
      %2754 = vmatprep.mubr.bf16.mxu0 0
      %2755 = vmatmul.mubr.bf16.gmra.mrb[0].mxu0 %v1393
      %v2756 = vpop.f32.mrb[0].mxu0
      %v2757 = vadd.f32 0.0, %v2756
      %v2758 = vpop.f32.mrb[0].mxu0
      %v2759 = vpop.f32.mrb[0].mxu0
      %v2760 = vadd.f32 0.0, %v2759
      %v2761 = vpop.f32.mrb[0].mxu0
      %2762 = vmatprep.mubr.bf16.mxu0 0
      %2763 = vmatmul.mubr.bf16.gmra.mrb[0].mxu0 %v1396
      %v2764 = vpop.f32.mrb[0].mxu0
      %v2765 = vadd.f32 0.0, %v2764
      %v2766 = vpop.f32.mrb[0].mxu0
      %v2767 = vpop.f32.mrb[0].mxu0
      %v2768 = vadd.f32 0.0, %v2767
      %v2769 = vpop.f32.mrb[0].mxu0
      %2770 = vmatprep.mubr.bf16.mxu0 0
      %2771 = vmatmul.mubr.bf16.gmra.mrb[0].mxu0 %v1399
      %v2772 = vpop.f32.mrb[0].mxu0
      %v2773 = vadd.f32 0.0, %v2772
      %v2774 = vpop.f32.mrb[0].mxu0
      %v2775 = vpop.f32.mrb[0].mxu0
      %v2776 = vadd.f32 0.0, %v2775
      %v2777 = vpop.f32.mrb[0].mxu0
      %2778 = vmatprep.mubr.bf16.mxu0 0
      %2779 = vmatmul.mubr.bf16.gmra.mrb[0].mxu0 %v1402
      %v2780 = vpop.f32.mrb[0].mxu0
      %v2781 = vadd.f32 0.0, %v2780
      %v2782 = vpop.f32.mrb[0].mxu0
      %v2783 = vpop.f32.mrb[0].mxu0
      %v2784 = vadd.f32 0.0, %v2783
      %v2785 = vpop.f32.mrb[0].mxu0
      %2786 = vmatprep.mubr.bf16.mxu0 0
      %2787 = vmatmul.mubr.bf16.gmra.mrb[0].mxu0 %v1405
      %v2788 = vpop.f32.mrb[0].mxu0
      %v2789 = vadd.f32 0.0, %v2788
      %v2790 = vpop.f32.mrb[0].mxu0
      %v2791 = vpop.f32.mrb[0].mxu0
      %v2792 = vadd.f32 0.0, %v2791
      %v2793 = vpop.f32.mrb[0].mxu0
      %2794 = vmatprep.mubr.bf16.mxu0 0
      %2795 = vmatmul.mubr.bf16.gmra.mrb[0].mxu0 %v1408
      %v2796 = vpop.f32.mrb[0].mxu0
      %v2797 = vadd.f32 0.0, %v2796
      %v2798 = vpop.f32.mrb[0].mxu0
      %v2799 = vpop.f32.mrb[0].mxu0
      %v2800 = vadd.f32 0.0, %v2799
      %v2801 = vpop.f32.mrb[0].mxu0
      %2802 = vmatprep.mubr.bf16.mxu0 0
      %2803 = vmatmul.mubr.bf16.gmra.mrb[0].mxu0 %v1411
      %v2804 = vpop.f32.mrb[0].mxu0
      %v2805 = vadd.f32 0.0, %v2804
      %v2806 = vpop.f32.mrb[0].mxu0
      %v2807 = vpop.f32.mrb[0].mxu0
      %v2808 = vadd.f32 0.0, %v2807
      %v2809 = vpop.f32.mrb[0].mxu0
      %2810 = vmatprep.mubr.bf16.mxu0 0
      %2811 = vmatmul.mubr.bf16.gmra.mrb[0].mxu0 %v1414
      %v2812 = vpop.f32.mrb[0].mxu0
      %v2813 = vadd.f32 0.0, %v2812
      %v2814 = vpop.f32.mrb[0].mxu0
      %v2815 = vpop.f32.mrb[0].mxu0
      %v2816 = vadd.f32 0.0, %v2815
      %v2817 = vpop.f32.mrb[0].mxu0
      %2818 = vmatprep.mubr.bf16.mxu0 0
      %2819 = vmatmul.mubr.bf16.gmra.mrb[0].mxu0 %v1417
      %v2820 = vpop.f32.mrb[0].mxu0
      %v2821 = vadd.f32 0.0, %v2820
      %v2822 = vpop.f32.mrb[0].mxu0
      %v2823 = vpop.f32.mrb[0].mxu0
      %v2824 = vadd.f32 0.0, %v2823
      %v2825 = vpop.f32.mrb[0].mxu0
      %2826 = vmatprep.mubr.bf16.mxu0 0
      %2827 = vmatmul.mubr.bf16.gmra.mrb[0].mxu0 %v1420
      %v2828 = vpop.f32.mrb[0].mxu0
      %v2829 = vadd.f32 0.0, %v2828
      %v2830 = vpop.f32.mrb[0].mxu0
      %v2831 = vpop.f32.mrb[0].mxu0
      %v2832 = vadd.f32 0.0, %v2831
      %v2833 = vpop.f32.mrb[0].mxu0
      %2834 = vmatprep.mubr.bf16.mxu0 0
      %2835 = vmatmul.mubr.bf16.gmra.mrb[0].mxu0 %v1423
      %v2836 = vpop.f32.mrb[0].mxu0
      %v2837 = vadd.f32 0.0, %v2836
      %v2838 = vpop.f32.mrb[0].mxu0
      %v2839 = vpop.f32.mrb[0].mxu0
      %v2840 = vadd.f32 0.0, %v2839
      %v2841 = vpop.f32.mrb[0].mxu0
      %2842 = vmatprep.mubr.bf16.mxu0 0
      %2843 = vmatmul.mubr.bf16.gmra.mrb[0].mxu0 %v1426
      %v2844 = vpop.f32.mrb[0].mxu0
      %v2845 = vadd.f32 0.0, %v2844
      %v2846 = vpop.f32.mrb[0].mxu0
      %v2847 = vpop.f32.mrb[0].mxu0
      %v2848 = vadd.f32 0.0, %v2847
      %v2849 = vpop.f32.mrb[0].mxu0
      %2850 = vmatprep.mubr.bf16.mxu0 0
      %2851 = vmatmul.mubr.bf16.gmra.mrb[0].mxu0 %v1429
      %v2852 = vpop.f32.mrb[0].mxu0
      %v2853 = vadd.f32 0.0, %v2852
      %v2854 = vpop.f32.mrb[0].mxu0
      %v2855 = vpop.f32.mrb[0].mxu0
      %v2856 = vadd.f32 0.0, %v2855
      %v2857 = vpop.f32.mrb[0].mxu0
      %2858 = vmatprep.mubr.bf16.mxu0 0
      %2859 = vmatmul.mubr.bf16.gmra.mrb[0].mxu0 %v2069
      %v2860 = vpop.f32.mrb[0].mxu0
      %v2861 = vadd.f32 0.0, %v2860
      %v2862 = vpop.f32.mrb[0].mxu0
      %v2863 = vpop.f32.mrb[0].mxu0
      %v2864 = vadd.f32 0.0, %v2863
      %v2865 = vpop.f32.mrb[0].mxu0
      %2866 = vmatprep.mubr.bf16.mxu0 0
      %2867 = vmatmul.mubr.bf16.gmra.mrb[0].mxu0 %v2709
      %v2868 = vpop.f32.mrb[0].mxu0
      %v2869 = vadd.f32 0.0, %v2868
      %v2870 = vpop.f32.mrb[0].mxu0
      %v2871 = vpop.f32.mrb[0].mxu0
      %v2872 = vadd.f32 0.0, %v2871
      %v2873 = vpop.f32.mrb[0].mxu0
      %2874 = vdwg.mxu0
      %v2875 = vadd.f32 %v2665, %v2749
      %v2876 = vadd.f32 %v2666, %v2752
      %v2877 = vadd.f32 %v2667, %v2757
      %v2878 = vadd.f32 %v2668, %v2760
      %v2879 = vadd.f32 %v2669, %v2765
      %v2880 = vadd.f32 %v2670, %v2768
      %v2881 = vadd.f32 %v2671, %v2773
      %v2882 = vadd.f32 %v2672, %v2776
      %v2883 = vadd.f32 %v2673, %v2781
      %v2884 = vadd.f32 %v2674, %v2784
      %v2885 = vadd.f32 %v2675, %v2789
      %v2886 = vadd.f32 %v2676, %v2792
      %v2887 = vadd.f32 %v2677, %v2797
      %v2888 = vadd.f32 %v2678, %v2800
      %v2889 = vadd.f32 %v2679, %v2805
      %v2890 = vadd.f32 %v2680, %v2808
      %v2891 = vadd.f32 %v2681, %v2813
      %v2892 = vadd.f32 %v2682, %v2816
      %v2893 = vadd.f32 %v2683, %v2821
      %v2894 = vadd.f32 %v2684, %v2824
      %v2895 = vadd.f32 %v2685, %v2829
      %v2896 = vadd.f32 %v2686, %v2832
      %v2897 = vadd.f32 %v2687, %v2837
      %v2898 = vadd.f32 %v2688, %v2840
      %v2899 = vadd.f32 %v2689, %v2845
      %v2900 = vadd.f32 %v2690, %v2848
      %v2901 = vadd.f32 %v2691, %v2853
      %v2902 = vadd.f32 %v2692, %v2856
      %v2903 = vadd.f32 %v2693, %v2861
      %v2904 = vadd.f32 %v2694, %v2864
      %v2905 = vadd.f32 %v2695, %v2869
      %v2906 = vadd.f32 %v2696, %v2872
      %v2907 = vld [vmem:[%s2] sm:$0x1]
      %v2909 = vlaneseq
      %v2910 = vshrl.u32 %v2909, 7
      %v2911 = vsub.s32 0, %v2910
      %v2912 = vrot.slane %v2907, %v2911
      %v2914 = vmul.f32 %v2875, %v2912
      %v2915 = vmul.f32 %v2876, %v2912
      %v2916 = vmul.f32 %v2877, %v2912
      %v2917 = vmul.f32 %v2878, %v2912
      %v2918 = vmul.f32 %v2879, %v2912
      %v2919 = vmul.f32 %v2880, %v2912
      %v2920 = vmul.f32 %v2881, %v2912
      %v2921 = vmul.f32 %v2882, %v2912
      %v2922 = vmul.f32 %v2883, %v2912
      %v2923 = vmul.f32 %v2884, %v2912
      %v2924 = vmul.f32 %v2885, %v2912
      %v2925 = vmul.f32 %v2886, %v2912
      %v2926 = vmul.f32 %v2887, %v2912
      %v2927 = vmul.f32 %v2888, %v2912
      %v2928 = vmul.f32 %v2889, %v2912
      %v2929 = vmul.f32 %v2890, %v2912
      %v2930 = vmul.f32 %v2891, %v2912
      %v2931 = vmul.f32 %v2892, %v2912
      %v2932 = vmul.f32 %v2893, %v2912
      %v2933 = vmul.f32 %v2894, %v2912
      %v2934 = vmul.f32 %v2895, %v2912
      %v2935 = vmul.f32 %v2896, %v2912
      %v2936 = vmul.f32 %v2897, %v2912
      %v2937 = vmul.f32 %v2898, %v2912
      %v2938 = vmul.f32 %v2899, %v2912
      %v2939 = vmul.f32 %v2900, %v2912
      %v2940 = vmul.f32 %v2901, %v2912
      %v2941 = vmul.f32 %v2902, %v2912
      %v2942 = vmul.f32 %v2903, %v2912
      %v2943 = vmul.f32 %v2904, %v2912
      %v2944 = vmul.f32 %v2905, %v2912
      %v2945 = vmul.f32 %v2906, %v2912
      %v2946 = vld [vmem:[%s3] sm:$0x1]
      %v2948 = vlaneseq
      %v2949 = vshrl.u32 %v2948, 7
      %v2950 = vsub.s32 0, %v2949
      %v2951 = vrot.slane %v2946, %v2950
      %v2953 = vadd.f32 %v2914, %v2951
      %v2954 = vadd.f32 %v2915, %v2951
      %v2955 = vadd.f32 %v2916, %v2951
      %v2956 = vadd.f32 %v2917, %v2951
      %v2957 = vadd.f32 %v2918, %v2951
      %v2958 = vadd.f32 %v2919, %v2951
      %v2959 = vadd.f32 %v2920, %v2951
      %v2960 = vadd.f32 %v2921, %v2951
      %v2961 = vadd.f32 %v2922, %v2951
      %v2962 = vadd.f32 %v2923, %v2951
      %v2963 = vadd.f32 %v2924, %v2951
      %v2964 = vadd.f32 %v2925, %v2951
      %v2965 = vadd.f32 %v2926, %v2951
      %v2966 = vadd.f32 %v2927, %v2951
      %v2967 = vadd.f32 %v2928, %v2951
      %v2968 = vadd.f32 %v2929, %v2951
      %v2969 = vadd.f32 %v2930, %v2951
      %v2970 = vadd.f32 %v2931, %v2951
      %v2971 = vadd.f32 %v2932, %v2951
      %v2972 = vadd.f32 %v2933, %v2951
      %v2973 = vadd.f32 %v2934, %v2951
      %v2974 = vadd.f32 %v2935, %v2951
      %v2975 = vadd.f32 %v2936, %v2951
      %v2976 = vadd.f32 %v2937, %v2951
      %v2977 = vadd.f32 %v2938, %v2951
      %v2978 = vadd.f32 %v2939, %v2951
      %v2979 = vadd.f32 %v2940, %v2951
      %v2980 = vadd.f32 %v2941, %v2951
      %v2981 = vadd.f32 %v2942, %v2951
      %v2982 = vadd.f32 %v2943, %v2951
      %v2983 = vadd.f32 %v2944, %v2951
      %v2984 = vadd.f32 %v2945, %v2951
      %v2985 = vmax.f32 %v2953, 0.0
      %v2986 = vmax.f32 %v2954, 0.0
      %v2987 = vmax.f32 %v2955, 0.0
      %v2988 = vmax.f32 %v2956, 0.0
      %v2989 = vmax.f32 %v2957, 0.0
      %v2990 = vmax.f32 %v2958, 0.0
      %v2991 = vmax.f32 %v2959, 0.0
      %v2992 = vmax.f32 %v2960, 0.0
      %v2993 = vmax.f32 %v2961, 0.0
      %v2994 = vmax.f32 %v2962, 0.0
      %v2995 = vmax.f32 %v2963, 0.0
      %v2996 = vmax.f32 %v2964, 0.0
      %v2997 = vmax.f32 %v2965, 0.0
      %v2998 = vmax.f32 %v2966, 0.0
      %v2999 = vmax.f32 %v2967, 0.0
      %v3000 = vmax.f32 %v2968, 0.0
      %v3001 = vmax.f32 %v2969, 0.0
      %v3002 = vmax.f32 %v2970, 0.0
      %v3003 = vmax.f32 %v2971, 0.0
      %v3004 = vmax.f32 %v2972, 0.0
      %v3005 = vmax.f32 %v2973, 0.0
      %v3006 = vmax.f32 %v2974, 0.0
      %v3007 = vmax.f32 %v2975, 0.0
      %v3008 = vmax.f32 %v2976, 0.0
      %v3009 = vmax.f32 %v2977, 0.0
      %v3010 = vmax.f32 %v2978, 0.0
      %v3011 = vmax.f32 %v2979, 0.0
      %v3012 = vmax.f32 %v2980, 0.0
      %v3013 = vmax.f32 %v2981, 0.0
      %v3014 = vmax.f32 %v2982, 0.0
      %v3015 = vmax.f32 %v2983, 0.0
      %v3016 = vmax.f32 %v2984, 0.0
      %3017 = vst [vmem:[%s197] sm:$0xff] %v2985
      %3018 = vst [vmem:[%s197 + $0x8] sm:$0xff] %v2986
      %3019 = vst [vmem:[%s197 + $0x10] sm:$0xff] %v2987
      %3020 = vst [vmem:[%s197 + $0x18] sm:$0xff] %v2988
      %3021 = vst [vmem:[%s197 + $0x20] sm:$0xff] %v2989
      %3022 = vst [vmem:[%s197 + $0x28] sm:$0xff] %v2990
      %3023 = vst [vmem:[%s197 + $0x30] sm:$0xff] %v2991
      %3024 = vst [vmem:[%s197 + $0x38] sm:$0xff] %v2992
      %3025 = vst [vmem:[%s197 + $0x40] sm:$0xff] %v2993
      %3026 = vst [vmem:[%s197 + $0x48] sm:$0xff] %v2994
      %3027 = vst [vmem:[%s197 + $0x50] sm:$0xff] %v2995
      %3028 = vst [vmem:[%s197 + $0x58] sm:$0xff] %v2996
      %3029 = vst [vmem:[%s197 + $0x60] sm:$0xff] %v2997
      %3030 = vst [vmem:[%s197 + $0x68] sm:$0xff] %v2998
      %3031 = vst [vmem:[%s197 + $0x70] sm:$0xff] %v2999
      %3032 = vst [vmem:[%s197 + $0x78] sm:$0xff] %v3000
      %3033 = vst [vmem:[%s197 + $0x80] sm:$0xff] %v3001
      %3034 = vst [vmem:[%s197 + $0x88] sm:$0xff] %v3002
      %3035 = vst [vmem:[%s197 + $0x90] sm:$0xff] %v3003
      %3036 = vst [vmem:[%s197 + $0x98] sm:$0xff] %v3004
      %3037 = vst [vmem:[%s197 + $0xa0] sm:$0xff] %v3005
      %3038 = vst [vmem:[%s197 + $0xa8] sm:$0xff] %v3006
      %3039 = vst [vmem:[%s197 + $0xb0] sm:$0xff] %v3007
      %3040 = vst [vmem:[%s197 + $0xb8] sm:$0xff] %v3008
      %3041 = vst [vmem:[%s197 + $0xc0] sm:$0xff] %v3009
      %3042 = vst [vmem:[%s197 + $0xc8] sm:$0xff] %v3010
      %3043 = vst [vmem:[%s197 + $0xd0] sm:$0xff] %v3011
      %3044 = vst [vmem:[%s197 + $0xd8] sm:$0xff] %v3012
      %3045 = vst [vmem:[%s197 + $0xe0] sm:$0xff] %v3013
      %3046 = vst [vmem:[%s197 + $0xe8] sm:$0xff] %v3014
      %3047 = vst [vmem:[%s197 + $0xf0] sm:$0xff] %v3015
      %3048 = vst [vmem:[%s197 + $0xf8] sm:$0xff] %v3016
      %s3049 = smul.u32 32, %s15
      %p3050 = scmp.lt.s32.totalorder %s3049, 63
      %s3051 = scalar_select %p3050, %s3049, 63
      %s3052 = smul.addr %s3051, 8
      %s3053 = scalar_lea.vmem %s4, %s3052
      // Predicated region
      $region37: #{_lambda_.7} parent=35 // pred_check
        %p3054 = pneg %p122
      $region38: #{_lambda_.7} parent=35 // pred_check_branch
        %3056 = sbr.rel (%p3054) target = $region40
      $region39: #{_lambda_.7} parent=35 // pred_region
        %s3057 = smul.u32 32, %s15
      $region40: #{_lambda_.7} parent=35 // pred_fallthru
        _
    $region36: #{_lambda_.7} parent=5 // pred_fallthru
      _
    %p3058 = scmp.le.s32.totalorder 2, %s10
    // Predicated region
    $region41: #{_lambda_.7} parent=5 // pred_check
      %p3059 = pneg %p3058
    $region42: #{_lambda_.7} parent=5 // pred_check_branch
      %3061 = sbr.rel (%p3059) target = $region44
    $region43: #{_lambda_.7} parent=5 // pred_region
      %s3062 = ssub.s32 %s10, 2
      // Predicated region
      $region45: #{_lambda_.7} parent=43 // pred_check
        %p3063 = pneg %p128
      $region46: #{_lambda_.7} parent=43 // pred_check_branch
        %3065 = sbr.rel (%p3063) target = $region48
      $region47: #{_lambda_.7} parent=43 // pred_region
        %s3066 = smul.u32 32, %s16
        %p3067 = scmp.lt.s32.totalorder %s3066, 63
        %s3068 = scalar_select %p3067, %s3066, 63
        %s3069 = smul.addr %s3068, 8
        %s3070 = scalar_lea.vmem %s4, %s3069
      $region48: #{_lambda_.7} parent=43 // pred_fallthru
        _
    $region44: #{_lambda_.7} parent=5 // pred_fallthru
      _
  $region6: #{_lambda_.7} parent=0 // loop_footer
    %s14 = sadd.s32 1, %s10
  $region7: #{_lambda_.7} parent=0 // loop_footer_branch
    %9 = sbr.rel target = $region3
  $region8: #{_lambda_.7} parent=0 // loop_exit
    _

</llo_original>
